<compile_context>
chip_gen: v5e
topology: v5e:2x2
jax: 0.10.0
libtpu: 0.0.40
codegen_flags: <defaults>
</compile_context>

<pallas_src>
import jax
import jax.numpy as jnp
import numpy as np
from jax.experimental import pallas as pl
from jax.experimental.pallas import tpu as pltpu

HIDDEN = 512  # nn.LSTM hidden_size fixed inside the PyTorch module


def _make_kernel(B, T_abc, C):
    H = HIDDEN

    def kernel(abc_ref, d_ref, wx_ref, wh_ref, b_ref, wo_ref, bo_ref, out_ref):
        wx = wx_ref[...]                                  # [Din, 4H] bf16
        wh = wh_ref[...]                                  # [H, 4H]   bf16
        bias = b_ref[...]                                 # [1, 4H]   f32 (= b_ih + b_hh)

        x_abc = abc_ref[...].astype(jnp.bfloat16)         # [B, T, Din]
        x_d = d_ref[...].astype(jnp.bfloat16)             # [B, C, Din]
        Din = x_abc.shape[-1]

        def gates(g):
            # PyTorch nn.LSTM gate order: i, f, g, o.
            return (jax.nn.sigmoid(g[..., 0 * H:1 * H]),
                    jax.nn.sigmoid(g[..., 1 * H:2 * H]),
                    jnp.tanh(g[..., 2 * H:3 * H]),
                    jax.nn.sigmoid(g[..., 3 * H:4 * H]))

        # ---- shared prefix over A, B, C (computed once, not once per choice) ----
        h = jnp.zeros((B, H), jnp.float32)
        c = jnp.zeros((B, H), jnp.float32)
        for t in range(T_abc):
            g = jnp.dot(x_abc[:, t, :], wx, preferred_element_type=jnp.float32) + bias
            if t > 0:  # h == 0 at t == 0; skip the dead recurrent matmul
                g = g + jnp.dot(h.astype(jnp.bfloat16), wh,
                                preferred_element_type=jnp.float32)
            i_g, f_g, g_g, o_g = gates(g)
            c = f_g * c + i_g * g_g
            h = o_g * jnp.tanh(c)

        # ---- final step: one batched choice projection; recurrent term is shared ----
        gx_d = jnp.dot(x_d.reshape(B * C, Din), wx,
                       preferred_element_type=jnp.float32).reshape(B, C, 4 * H)
        hwh = jnp.dot(h.astype(jnp.bfloat16), wh,
                      preferred_element_type=jnp.float32)          # [B, 4H]
        g_last = gx_d + hwh[:, None, :] + bias                     # broadcast, no tile copies
        i_g, f_g, g_g, o_g = gates(g_last)
        c_last = f_g * c[:, None, :] + i_g * g_g                   # [B, C, H]
        h_last = o_g * jnp.tanh(c_last)                            # [B, C, H]

        # Linear(512 -> 1) as a VPU broadcast-multiply + reduction (no N=1 MXU matmul).
        score = jnp.sum(h_last * wo_ref[...], axis=-1) + bo_ref[...]   # [B, C]
        out_ref[...] = score.astype(out_ref.dtype)

    return kernel


def scoring_model_forward(ABC, D_choices, kernel_params):
    """ABC: [B, T_abc, in_dim], D_choices: [B, C, in_dim] -> scores [B, C] (float32)."""
    wx_bf, wh_bf, b, wo_row, bo = kernel_params
    B, T_abc, Din = ABC.shape
    C = D_choices.shape[1]
    H = HIDDEN

    grid_spec = pltpu.PrefetchScalarGridSpec(
        num_scalar_prefetch=0,
        grid=(1,),
        in_specs=[
            pl.BlockSpec((B, T_abc, Din), lambda i: (0, 0, 0)),   # ABC (full array)
            pl.BlockSpec((B, C, Din), lambda i: (0, 0, 0)),       # D_choices (full array)
            pl.BlockSpec((Din, 4 * H), lambda i: (0, 0)),         # W_ih^T (bf16)
            pl.BlockSpec((H, 4 * H), lambda i: (0, 0)),           # W_hh^T (bf16)
            pl.BlockSpec((1, 4 * H), lambda i: (0, 0)),           # bias_ih + bias_hh (f32)
            pl.BlockSpec((1, H), lambda i: (0, 0)),               # score_out weight row
            pl.BlockSpec((1, 1), lambda i: (0, 0)),               # score_out bias
        ],
        out_specs=pl.BlockSpec((B, C), lambda i: (0, 0)),
    )
    return pl.pallas_call(
        _make_kernel(B, T_abc, C),
        out_shape=jax.ShapeDtypeStruct((B, C), jnp.float32),
        grid_spec=grid_spec,
        compiler_params=pltpu.CompilerParams(
            dimension_semantics=("arbitrary",),
            vmem_limit_bytes=8 * 1024 * 1024,
        ),
    )(ABC, D_choices, wx_bf, wh_bf, b, wo_row, bo)


def init_params(key, in_dim):
    """Deterministic init mirroring PyTorch nn.LSTM / nn.Linear (U(-1/sqrt(H), 1/sqrt(H))).

    Returns (kernel_params, ref_params):
      kernel_params: right-multiply layouts with the MXU weights pre-cast to bf16 ONCE
                     (avoids a per-call f32->bf16 cast op / extra HBM traffic).
      ref_params:    f32 layouts for the pure-JAX reference.
    """
    k = 1.0 / np.sqrt(HIDDEN)
    ks = jax.random.split(key, 6)
    w_ih = jax.random.uniform(ks[0], (4 * HIDDEN, in_dim), jnp.float32, -k, k)   # weight_ih_l0
    w_hh = jax.random.uniform(ks[1], (4 * HIDDEN, HIDDEN), jnp.float32, -k, k)   # weight_hh_l0
    b_ih = jax.random.uniform(ks[2], (4 * HIDDEN,), jnp.float32, -k, k)
    b_hh = jax.random.uniform(ks[3], (4 * HIDDEN,), jnp.float32, -k, k)
    w_out = jax.random.uniform(ks[4], (1, HIDDEN), jnp.float32, -k, k)           # score_out.weight
    b_out = jax.random.uniform(ks[5], (1,), jnp.float32, -k, k)                  # score_out.bias

    b_sum = (b_ih + b_hh).reshape(1, 4 * HIDDEN)
    kernel_params = (
        jnp.transpose(w_ih).astype(jnp.bfloat16),   # [in_dim, 4H] bf16 (MXU feed)
        jnp.transpose(w_hh).astype(jnp.bfloat16),   # [H, 4H]      bf16 (MXU feed)
        b_sum,                                      # [1, 4H]      f32
        w_out,                                      # [1, H]       f32 (VPU reduce row)
        b_out.reshape(1, 1),                        # [1, 1]       f32
    )
    ref_params = (
        jnp.transpose(w_ih),                        # [in_dim, 4H] f32
        jnp.transpose(w_hh),                        # [H, 4H]      f32
        b_sum,
        jnp.transpose(w_out),                       # [H, 1]
        b_out.reshape(1, 1),
    )
    return kernel_params, ref_params


def reference_forward(ABC, D_choices, ref_params):
    """Pure-JAX f32 reference matching the PyTorch forward (for sanity check)."""
    wx, wh, b, wo, bo = ref_params
    B = ABC.shape[0]
    C = D_choices.shape[1]
    scores = []
    for d in range(C):
        x_seq = jnp.concatenate([ABC, D_choices[:, d:d + 1, :]], axis=1)
        h = jnp.zeros((B, HIDDEN), jnp.float32)
        c = jnp.zeros((B, HIDDEN), jnp.float32)
        for t in range(x_seq.shape[1]):
            gates = x_seq[:, t, :] @ wx + h @ wh + b
            i_g = jax.nn.sigmoid(gates[:, 0 * HIDDEN:1 * HIDDEN])
            f_g = jax.nn.sigmoid(gates[:, 1 * HIDDEN:2 * HIDDEN])
            g_g = jnp.tanh(gates[:, 2 * HIDDEN:3 * HIDDEN])
            o_g = jax.nn.sigmoid(gates[:, 3 * HIDDEN:4 * HIDDEN])
            c = f_g * c + i_g * g_g
            h = o_g * jnp.tanh(c)
        scores.append(h @ wo + bo)
    return jnp.concatenate(scores, axis=1)


if __name__ == "__main__":
    key = jax.random.PRNGKey(0)
    k1, k2, kp = jax.random.split(key, 3)

    B, in_dim, num_choices = 2, 32, 4
    ABC = jax.random.normal(k1, (B, 3, in_dim), jnp.float32)
    D_choices = jax.random.normal(k2, (B, num_choices, in_dim), jnp.float32)
    kernel_params, ref_params = init_params(kp, in_dim)

    scores = scoring_model_forward(ABC, D_choices, kernel_params)
    scores = jax.block_until_ready(scores)

    ref = reference_forward(ABC, D_choices, ref_params)
    np.testing.assert_allclose(np.asarray(scores), np.asarray(ref), rtol=2e-2, atol=2e-2)

    print("KERNEL_OK")
</pallas_src>

<mosaic_0001>
module attributes {stable_mosaic.version = 11 : i64} {
  func.func @kernel(%arg0: i32, %arg1: memref<2x3x32xf32, #tpu.memory_space<vmem>>, %arg2: memref<2x4x32xf32, #tpu.memory_space<vmem>>, %arg3: memref<32x2048xbf16, #tpu.memory_space<vmem>>, %arg4: memref<512x2048xbf16, #tpu.memory_space<vmem>>, %arg5: memref<1x2048xf32, #tpu.memory_space<vmem>>, %arg6: memref<1x512xf32, #tpu.memory_space<vmem>>, %arg7: memref<1x1xf32, #tpu.memory_space<vmem>>, %arg8: memref<2x4xf32, #tpu.memory_space<vmem>>) attributes {dimension_semantics = [#tpu.dimension_semantics<arbitrary>], iteration_bounds = array<i64: 1>, scalar_prefetch = 0 : i64, scratch_operands = 0 : i64, tpu.core_type = #tpu.core_type<tc>, window_params = [{pipeline_mode = #tpu.pipeline_mode<synchronous>, transform_indices = @transform_0, window_bounds = array<i64: 2, 3, 32>}, {pipeline_mode = #tpu.pipeline_mode<synchronous>, transform_indices = @transform_1, window_bounds = array<i64: 2, 4, 32>}, {pipeline_mode = #tpu.pipeline_mode<synchronous>, transform_indices = @transform_2, window_bounds = array<i64: 32, 2048>}, {pipeline_mode = #tpu.pipeline_mode<synchronous>, transform_indices = @transform_3, window_bounds = array<i64: 512, 2048>}, {pipeline_mode = #tpu.pipeline_mode<synchronous>, transform_indices = @transform_4, window_bounds = array<i64: 1, 2048>}, {pipeline_mode = #tpu.pipeline_mode<synchronous>, transform_indices = @transform_5, window_bounds = array<i64: 1, 512>}, {pipeline_mode = #tpu.pipeline_mode<synchronous>, transform_indices = @transform_6, window_bounds = array<i64: 1, 1>}, {pipeline_mode = #tpu.pipeline_mode<synchronous>, transform_indices = @transform_7, window_bounds = array<i64: 2, 4>}]} {
    %c0 = arith.constant 0 : index
    %c0_0 = arith.constant 0 : index
    %0 = vector.load %arg3[%c0, %c0_0] : memref<32x2048xbf16, #tpu.memory_space<vmem>>, vector<32x2048xbf16>
    %c0_1 = arith.constant 0 : index
    %c0_2 = arith.constant 0 : index
    %1 = vector.load %arg4[%c0_1, %c0_2] : memref<512x2048xbf16, #tpu.memory_space<vmem>>, vector<512x2048xbf16>
    %c0_3 = arith.constant 0 : index
    %c0_4 = arith.constant 0 : index
    %2 = vector.load %arg5[%c0_3, %c0_4] : memref<1x2048xf32, #tpu.memory_space<vmem>>, vector<1x2048xf32>
    %c0_5 = arith.constant 0 : index
    %c0_6 = arith.constant 0 : index
    %c0_7 = arith.constant 0 : index
    %3 = vector.load %arg1[%c0_5, %c0_6, %c0_7] : memref<2x3x32xf32, #tpu.memory_space<vmem>>, vector<2x3x32xf32>
    %4 = arith.truncf %3 : vector<2x3x32xf32> to vector<2x3x32xbf16>
    %c0_8 = arith.constant 0 : index
    %c0_9 = arith.constant 0 : index
    %c0_10 = arith.constant 0 : index
    %5 = vector.load %arg2[%c0_8, %c0_9, %c0_10] : memref<2x4x32xf32, #tpu.memory_space<vmem>>, vector<2x4x32xf32>
    %6 = arith.truncf %5 : vector<2x4x32xf32> to vector<2x4x32xbf16>
    %cst = arith.constant 0.000000e+00 : f32
    %7 = vector.broadcast %cst : f32 to vector<2x512xf32>
    %8 = vector.extract_strided_slice %4 {offsets = [0, 0, 0], sizes = [2, 1, 32], strides = [1, 1, 1]} : vector<2x3x32xbf16> to vector<2x1x32xbf16>
    %9 = vector.shape_cast %8 : vector<2x1x32xbf16> to vector<2x32xbf16>
    %cst_11 = arith.constant dense<0.000000e+00> : vector<2x2048xf32>
    %10 = tpu.matmul %9, %0, %cst_11 {dimension_numbers = #tpu.dot_dimension_numbers<[1], [0], [0], [1], [0, 0, 1, 1], [], []>} : vector<2x32xbf16>, vector<32x2048xbf16>, vector<2x2048xf32> -> vector<2x2048xf32>
    %11 = vector.broadcast %2 : vector<1x2048xf32> to vector<2x2048xf32>
    %12 = arith.addf %10, %11 : vector<2x2048xf32>
    %13 = vector.extract_strided_slice %12 {offsets = [0, 0], sizes = [2, 512], strides = [1, 1]} : vector<2x2048xf32> to vector<2x512xf32>
    %14 = arith.negf %13 : vector<2x512xf32>
    %15 = math.exp %14 : vector<2x512xf32>
    %cst_12 = arith.constant 1.000000e+00 : f32
    %16 = vector.broadcast %cst_12 : f32 to vector<2x512xf32>
    %17 = arith.addf %16, %15 : vector<2x512xf32>
    %18 = arith.divf %16, %17 : vector<2x512xf32>
    %19 = vector.extract_strided_slice %12 {offsets = [0, 512], sizes = [2, 512], strides = [1, 1]} : vector<2x2048xf32> to vector<2x512xf32>
    %20 = arith.negf %19 : vector<2x512xf32>
    %21 = math.exp %20 : vector<2x512xf32>
    %cst_13 = arith.constant 1.000000e+00 : f32
    %22 = vector.broadcast %cst_13 : f32 to vector<2x512xf32>
    %23 = arith.addf %22, %21 : vector<2x512xf32>
    %24 = arith.divf %22, %23 : vector<2x512xf32>
    %25 = vector.extract_strided_slice %12 {offsets = [0, 1024], sizes = [2, 512], strides = [1, 1]} : vector<2x2048xf32> to vector<2x512xf32>
    %26 = math.tanh %25 : vector<2x512xf32>
    %27 = vector.extract_strided_slice %12 {offsets = [0, 1536], sizes = [2, 512], strides = [1, 1]} : vector<2x2048xf32> to vector<2x512xf32>
    %28 = arith.negf %27 : vector<2x512xf32>
    %29 = math.exp %28 : vector<2x512xf32>
    %cst_14 = arith.constant 1.000000e+00 : f32
    %30 = vector.broadcast %cst_14 : f32 to vector<2x512xf32>
    %31 = arith.addf %30, %29 : vector<2x512xf32>
    %32 = arith.divf %30, %31 : vector<2x512xf32>
    %33 = arith.mulf %24, %7 : vector<2x512xf32>
    %34 = arith.mulf %18, %26 : vector<2x512xf32>
    %35 = arith.addf %33, %34 : vector<2x512xf32>
    %36 = math.tanh %35 : vector<2x512xf32>
    %37 = arith.mulf %32, %36 : vector<2x512xf32>
    %38 = vector.extract_strided_slice %4 {offsets = [0, 1, 0], sizes = [2, 1, 32], strides = [1, 1, 1]} : vector<2x3x32xbf16> to vector<2x1x32xbf16>
    %39 = vector.shape_cast %38 : vector<2x1x32xbf16> to vector<2x32xbf16>
    %cst_15 = arith.constant dense<0.000000e+00> : vector<2x2048xf32>
    %40 = tpu.matmul %39, %0, %cst_15 {dimension_numbers = #tpu.dot_dimension_numbers<[1], [0], [0], [1], [0, 0, 1, 1], [], []>} : vector<2x32xbf16>, vector<32x2048xbf16>, vector<2x2048xf32> -> vector<2x2048xf32>
    %41 = vector.broadcast %2 : vector<1x2048xf32> to vector<2x2048xf32>
    %42 = arith.addf %40, %41 : vector<2x2048xf32>
    %43 = arith.truncf %37 : vector<2x512xf32> to vector<2x512xbf16>
    %cst_16 = arith.constant dense<0.000000e+00> : vector<2x2048xf32>
    %44 = tpu.matmul %43, %1, %cst_16 {dimension_numbers = #tpu.dot_dimension_numbers<[1], [0], [0], [1], [0, 0, 1, 1], [], []>} : vector<2x512xbf16>, vector<512x2048xbf16>, vector<2x2048xf32> -> vector<2x2048xf32>
    %45 = arith.addf %42, %44 : vector<2x2048xf32>
    %46 = vector.extract_strided_slice %45 {offsets = [0, 0], sizes = [2, 512], strides = [1, 1]} : vector<2x2048xf32> to vector<2x512xf32>
    %47 = arith.negf %46 : vector<2x512xf32>
    %48 = math.exp %47 : vector<2x512xf32>
    %cst_17 = arith.constant 1.000000e+00 : f32
    %49 = vector.broadcast %cst_17 : f32 to vector<2x512xf32>
    %50 = arith.addf %49, %48 : vector<2x512xf32>
    %51 = arith.divf %49, %50 : vector<2x512xf32>
    %52 = vector.extract_strided_slice %45 {offsets = [0, 512], sizes = [2, 512], strides = [1, 1]} : vector<2x2048xf32> to vector<2x512xf32>
    %53 = arith.negf %52 : vector<2x512xf32>
    %54 = math.exp %53 : vector<2x512xf32>
    %cst_18 = arith.constant 1.000000e+00 : f32
    %55 = vector.broadcast %cst_18 : f32 to vector<2x512xf32>
    %56 = arith.addf %55, %54 : vector<2x512xf32>
    %57 = arith.divf %55, %56 : vector<2x512xf32>
    %58 = vector.extract_strided_slice %45 {offsets = [0, 1024], sizes = [2, 512], strides = [1, 1]} : vector<2x2048xf32> to vector<2x512xf32>
    %59 = math.tanh %58 : vector<2x512xf32>
    %60 = vector.extract_strided_slice %45 {offsets = [0, 1536], sizes = [2, 512], strides = [1, 1]} : vector<2x2048xf32> to vector<2x512xf32>
    %61 = arith.negf %60 : vector<2x512xf32>
    %62 = math.exp %61 : vector<2x512xf32>
    %cst_19 = arith.constant 1.000000e+00 : f32
    %63 = vector.broadcast %cst_19 : f32 to vector<2x512xf32>
    %64 = arith.addf %63, %62 : vector<2x512xf32>
    %65 = arith.divf %63, %64 : vector<2x512xf32>
    %66 = arith.mulf %57, %35 : vector<2x512xf32>
    %67 = arith.mulf %51, %59 : vector<2x512xf32>
    %68 = arith.addf %66, %67 : vector<2x512xf32>
    %69 = math.tanh %68 : vector<2x512xf32>
    %70 = arith.mulf %65, %69 : vector<2x512xf32>
    %71 = vector.extract_strided_slice %4 {offsets = [0, 2, 0], sizes = [2, 1, 32], strides = [1, 1, 1]} : vector<2x3x32xbf16> to vector<2x1x32xbf16>
    %72 = vector.shape_cast %71 : vector<2x1x32xbf16> to vector<2x32xbf16>
    %cst_20 = arith.constant dense<0.000000e+00> : vector<2x2048xf32>
    %73 = tpu.matmul %72, %0, %cst_20 {dimension_numbers = #tpu.dot_dimension_numbers<[1], [0], [0], [1], [0, 0, 1, 1], [], []>} : vector<2x32xbf16>, vector<32x2048xbf16>, vector<2x2048xf32> -> vector<2x2048xf32>
    %74 = vector.broadcast %2 : vector<1x2048xf32> to vector<2x2048xf32>
    %75 = arith.addf %73, %74 : vector<2x2048xf32>
    %76 = arith.truncf %70 : vector<2x512xf32> to vector<2x512xbf16>
    %cst_21 = arith.constant dense<0.000000e+00> : vector<2x2048xf32>
    %77 = tpu.matmul %76, %1, %cst_21 {dimension_numbers = #tpu.dot_dimension_numbers<[1], [0], [0], [1], [0, 0, 1, 1], [], []>} : vector<2x512xbf16>, vector<512x2048xbf16>, vector<2x2048xf32> -> vector<2x2048xf32>
    %78 = arith.addf %75, %77 : vector<2x2048xf32>
    %79 = vector.extract_strided_slice %78 {offsets = [0, 0], sizes = [2, 512], strides = [1, 1]} : vector<2x2048xf32> to vector<2x512xf32>
    %80 = arith.negf %79 : vector<2x512xf32>
    %81 = math.exp %80 : vector<2x512xf32>
    %cst_22 = arith.constant 1.000000e+00 : f32
    %82 = vector.broadcast %cst_22 : f32 to vector<2x512xf32>
    %83 = arith.addf %82, %81 : vector<2x512xf32>
    %84 = arith.divf %82, %83 : vector<2x512xf32>
    %85 = vector.extract_strided_slice %78 {offsets = [0, 512], sizes = [2, 512], strides = [1, 1]} : vector<2x2048xf32> to vector<2x512xf32>
    %86 = arith.negf %85 : vector<2x512xf32>
    %87 = math.exp %86 : vector<2x512xf32>
    %cst_23 = arith.constant 1.000000e+00 : f32
    %88 = vector.broadcast %cst_23 : f32 to vector<2x512xf32>
    %89 = arith.addf %88, %87 : vector<2x512xf32>
    %90 = arith.divf %88, %89 : vector<2x512xf32>
    %91 = vector.extract_strided_slice %78 {offsets = [0, 1024], sizes = [2, 512], strides = [1, 1]} : vector<2x2048xf32> to vector<2x512xf32>
    %92 = math.tanh %91 : vector<2x512xf32>
    %93 = vector.extract_strided_slice %78 {offsets = [0, 1536], sizes = [2, 512], strides = [1, 1]} : vector<2x2048xf32> to vector<2x512xf32>
    %94 = arith.negf %93 : vector<2x512xf32>
    %95 = math.exp %94 : vector<2x512xf32>
    %cst_24 = arith.constant 1.000000e+00 : f32
    %96 = vector.broadcast %cst_24 : f32 to vector<2x512xf32>
    %97 = arith.addf %96, %95 : vector<2x512xf32>
    %98 = arith.divf %96, %97 : vector<2x512xf32>
    %99 = arith.mulf %90, %68 : vector<2x512xf32>
    %100 = arith.mulf %84, %92 : vector<2x512xf32>
    %101 = arith.addf %99, %100 : vector<2x512xf32>
    %102 = math.tanh %101 : vector<2x512xf32>
    %103 = arith.mulf %98, %102 : vector<2x512xf32>
    %104 = vector.shape_cast %6 : vector<2x4x32xbf16> to vector<8x32xbf16>
    %cst_25 = arith.constant dense<0.000000e+00> : vector<8x2048xf32>
    %105 = tpu.matmul %104, %0, %cst_25 {dimension_numbers = #tpu.dot_dimension_numbers<[1], [0], [0], [1], [0, 0, 1, 1], [], []>} : vector<8x32xbf16>, vector<32x2048xbf16>, vector<8x2048xf32> -> vector<8x2048xf32>
    %106 = vector.shape_cast %105 : vector<8x2048xf32> to vector<2x4x2048xf32>
    %107 = arith.truncf %103 : vector<2x512xf32> to vector<2x512xbf16>
    %cst_26 = arith.constant dense<0.000000e+00> : vector<2x2048xf32>
    %108 = tpu.matmul %107, %1, %cst_26 {dimension_numbers = #tpu.dot_dimension_numbers<[1], [0], [0], [1], [0, 0, 1, 1], [], []>} : vector<2x512xbf16>, vector<512x2048xbf16>, vector<2x2048xf32> -> vector<2x2048xf32>
    %109 = vector.shape_cast %108 : vector<2x2048xf32> to vector<2x1x2048xf32>
    %110 = vector.broadcast %109 : vector<2x1x2048xf32> to vector<2x4x2048xf32>
    %111 = arith.addf %106, %110 : vector<2x4x2048xf32>
    %112 = vector.shape_cast %2 : vector<1x2048xf32> to vector<1x1x2048xf32>
    %113 = vector.broadcast %112 : vector<1x1x2048xf32> to vector<2x4x2048xf32>
    %114 = arith.addf %111, %113 : vector<2x4x2048xf32>
    %115 = vector.extract_strided_slice %114 {offsets = [0, 0, 0], sizes = [2, 4, 512], strides = [1, 1, 1]} : vector<2x4x2048xf32> to vector<2x4x512xf32>
    %116 = arith.negf %115 : vector<2x4x512xf32>
    %117 = math.exp %116 : vector<2x4x512xf32>
    %cst_27 = arith.constant 1.000000e+00 : f32
    %118 = vector.broadcast %cst_27 : f32 to vector<2x4x512xf32>
    %119 = arith.addf %118, %117 : vector<2x4x512xf32>
    %120 = arith.divf %118, %119 : vector<2x4x512xf32>
    %121 = vector.extract_strided_slice %114 {offsets = [0, 0, 512], sizes = [2, 4, 512], strides = [1, 1, 1]} : vector<2x4x2048xf32> to vector<2x4x512xf32>
    %122 = arith.negf %121 : vector<2x4x512xf32>
    %123 = math.exp %122 : vector<2x4x512xf32>
    %cst_28 = arith.constant 1.000000e+00 : f32
    %124 = vector.broadcast %cst_28 : f32 to vector<2x4x512xf32>
    %125 = arith.addf %124, %123 : vector<2x4x512xf32>
    %126 = arith.divf %124, %125 : vector<2x4x512xf32>
    %127 = vector.extract_strided_slice %114 {offsets = [0, 0, 1024], sizes = [2, 4, 512], strides = [1, 1, 1]} : vector<2x4x2048xf32> to vector<2x4x512xf32>
    %128 = math.tanh %127 : vector<2x4x512xf32>
    %129 = vector.extract_strided_slice %114 {offsets = [0, 0, 1536], sizes = [2, 4, 512], strides = [1, 1, 1]} : vector<2x4x2048xf32> to vector<2x4x512xf32>
    %130 = arith.negf %129 : vector<2x4x512xf32>
    %131 = math.exp %130 : vector<2x4x512xf32>
    %cst_29 = arith.constant 1.000000e+00 : f32
    %132 = vector.broadcast %cst_29 : f32 to vector<2x4x512xf32>
    %133 = arith.addf %132, %131 : vector<2x4x512xf32>
    %134 = arith.divf %132, %133 : vector<2x4x512xf32>
    %135 = vector.shape_cast %101 : vector<2x512xf32> to vector<2x1x512xf32>
    %136 = vector.broadcast %135 : vector<2x1x512xf32> to vector<2x4x512xf32>
    %137 = arith.mulf %126, %136 : vector<2x4x512xf32>
    %138 = arith.mulf %120, %128 : vector<2x4x512xf32>
    %139 = arith.addf %137, %138 : vector<2x4x512xf32>
    %140 = math.tanh %139 : vector<2x4x512xf32>
    %141 = arith.mulf %134, %140 : vector<2x4x512xf32>
    %c0_30 = arith.constant 0 : index
    %c0_31 = arith.constant 0 : index
    %142 = vector.load %arg6[%c0_30, %c0_31] : memref<1x512xf32, #tpu.memory_space<vmem>>, vector<1x512xf32>
    %143 = vector.shape_cast %142 : vector<1x512xf32> to vector<1x1x512xf32>
    %144 = vector.broadcast %143 : vector<1x1x512xf32> to vector<2x4x512xf32>
    %145 = arith.mulf %141, %144 : vector<2x4x512xf32>
    %cst_32 = arith.constant dense<0.000000e+00> : vector<2x4xf32>
    %146 = vector.multi_reduction <add>, %145, %cst_32 [2] : vector<2x4x512xf32> to vector<2x4xf32>
    %c0_33 = arith.constant 0 : index
    %c0_34 = arith.constant 0 : index
    %147 = vector.load %arg7[%c0_33, %c0_34] : memref<1x1xf32, #tpu.memory_space<vmem>>, vector<1x1xf32>
    %148 = vector.broadcast %147 : vector<1x1xf32> to vector<2x4xf32>
    %149 = arith.addf %146, %148 : vector<2x4xf32>
    %c0_35 = arith.constant 0 : index
    %c0_36 = arith.constant 0 : index
    %150 = vector.load %arg8[%c0_35, %c0_36] : memref<2x4xf32, #tpu.memory_space<vmem>>, vector<2x4xf32>
    tpu.vector_store %arg8[%c0_35, %c0_36], %149 {strides = array<i32>} : memref<2x4xf32, #tpu.memory_space<vmem>>, vector<2x4xf32>,
    return
  }
  func.func @transform_0(%arg0: i32) -> (i32, i32, i32) {
    %c0_i32 = arith.constant 0 : i32
    %c0_i32_0 = arith.constant 0 : i32
    %c0_i32_1 = arith.constant 0 : i32
    %c0_i32_2 = arith.constant 0 : i32
    return %c0_i32, %c0_i32_0, %c0_i32_1 : i32, i32, i32
  }
  func.func @transform_1(%arg0: i32) -> (i32, i32, i32) {
    %c0_i32 = arith.constant 0 : i32
    %c0_i32_0 = arith.constant 0 : i32
    %c0_i32_1 = arith.constant 0 : i32
    %c0_i32_2 = arith.constant 0 : i32
    return %c0_i32, %c0_i32_0, %c0_i32_1 : i32, i32, i32
  }
  func.func @transform_2(%arg0: i32) -> (i32, i32) {
    %c0_i32 = arith.constant 0 : i32
    %c0_i32_0 = arith.constant 0 : i32
    %c0_i32_1 = arith.constant 0 : i32
    return %c0_i32, %c0_i32_0 : i32, i32
  }
  func.func @transform_3(%arg0: i32) -> (i32, i32) {
    %c0_i32 = arith.constant 0 : i32
    %c0_i32_0 = arith.constant 0 : i32
    %c0_i32_1 = arith.constant 0 : i32
    return %c0_i32, %c0_i32_0 : i32, i32
  }
  func.func @transform_4(%arg0: i32) -> (i32, i32) {
    %c0_i32 = arith.constant 0 : i32
    %c0_i32_0 = arith.constant 0 : i32
    %c0_i32_1 = arith.constant 0 : i32
    return %c0_i32, %c0_i32_0 : i32, i32
  }
  func.func @transform_5(%arg0: i32) -> (i32, i32) {
    %c0_i32 = arith.constant 0 : i32
    %c0_i32_0 = arith.constant 0 : i32
    %c0_i32_1 = arith.constant 0 : i32
    return %c0_i32, %c0_i32_0 : i32, i32
  }
  func.func @transform_6(%arg0: i32) -> (i32, i32) {
    %c0_i32 = arith.constant 0 : i32
    %c0_i32_0 = arith.constant 0 : i32
    %c0_i32_1 = arith.constant 0 : i32
    return %c0_i32, %c0_i32_0 : i32, i32
  }
  func.func @transform_7(%arg0: i32) -> (i32, i32) {
    %c0_i32 = arith.constant 0 : i32
    %c0_i32_0 = arith.constant 0 : i32
    %c0_i32_1 = arith.constant 0 : i32
    return %c0_i32, %c0_i32_0 : i32, i32
  }
}

</mosaic_0001>

<llo_original>
// kernel: tpu_custom_call.1
$region0: #{tpu_custom_call.1}
  #allocation0 [shape = 'u32[]', space=smem, size = 0x4, offset = 0x4, fixed_abs, tag = 'smem constant byte address 0x4 - core index']
  #allocation1 [shape = 'u32[72,128]{1,0:T(1,128)}', space=vmem, size = 0x9000, scoped, tag = 'internal scratch']
  #allocation2 [shape = 'f32[1,1]{1,0:T(1,128)S(1)}', space=vmem, size = 0x200, scoped, tag = 'scoped memory for tpu_custom_call.1']
  %s0 = inlined_call_operand.vmem [shape: f32[2,3,32], index: 0, kind: input, shape index: {}]
  %s1 = inlined_call_operand.hbm [shape: f32[2,4,32], index: 1, kind: input, shape index: {}]
  %s2 = inlined_call_operand.hbm [shape: bf16[32,2048], index: 2, kind: input, shape index: {}]
  %s3 = inlined_call_operand.hbm [shape: bf16[512,2048], index: 3, kind: input, shape index: {}]
  %s4 = inlined_call_operand.hbm [shape: f32[1,2048], index: 4, kind: input, shape index: {}]
  %s5 = inlined_call_operand.hbm [shape: f32[1,512], index: 5, kind: input, shape index: {}]
  %s6 = inlined_call_operand.<no memory space> [shape: f32[1,1], index: 6, kind: input, shape index: {}]
  %s7 = inlined_call_operand.hbm [shape: f32[2,4], index: 7, kind: output, shape index: {}]
  %s8 = sld [smem:[#allocation0]]
  $region58: #{tpu_custom_call.1} parent=0
    _
  %s10 = ssub.s32 1, %s8
  %s11 = scalar_select 0, %s10, %s8
  %v12 = vstv %s6
  %13 = vst [vmem:[#allocation2] sm:$0x1] %v12
  $region1: #{tpu_custom_call.1} parent=0
    #allocation3 [shape = 'u8[4096]{0}', space=vmem, size = 0x1000, scoped, tag = 'input window, operand 1, single buffered']
    #allocation4 [shape = 's32[1]{0}', space=sflag, size = 0x4, scoped, tag = 'scoped memory for tpu_custom_call.1']
    #allocation5 [shape = 's32[1]{0}', space=sflag, size = 0x4, scoped, tag = 'scoped memory for tpu_custom_call.1']
    #allocation6 [shape = 'u8[131072]{0}', space=vmem, size = 0x20000, scoped, tag = 'input window, operand 2, single buffered']
    #allocation7 [shape = 's32[1]{0}', space=sflag, size = 0x4, scoped, tag = 'scoped memory for tpu_custom_call.1']
    #allocation8 [shape = 'u8[2097152]{0}', space=vmem, size = 0x200000, scoped, tag = 'input window, operand 3, single buffered']
    #allocation9 [shape = 'u8[8192]{0}', space=vmem, size = 0x2000, scoped, tag = 'input window, operand 4, single buffered']
    #allocation10 [shape = 's32[1]{0}', space=sflag, size = 0x4, scoped, tag = 'scoped memory for tpu_custom_call.1']
    #allocation11 [shape = 'u8[2048]{0}', space=vmem, size = 0x800, scoped, tag = 'input window, operand 5, single buffered']
    #allocation12 [shape = 'u8[1024]{0}', space=vmem, size = 0x400, scoped, tag = 'output window, operand 0, single buffered']
    %14 = vsyncpa [#allocation4], 0
    %15 = vsyncpa [#allocation7], 0
    %16 = vsyncpa [#allocation10], 0
    %17 = vsyncpa [#allocation5], 0
    // Predicated region
    $region2: #{tpu_custom_call.1} parent=1 // pred_check
      _
    $region3: #{tpu_custom_call.1} parent=1 // pred_check_branch
      %19 = sbr.rel (0) target = $region5
    $region4: #{tpu_custom_call.1} parent=1 // pred_region
      _
    $region5: #{tpu_custom_call.1} parent=1 // pred_fallthru
      _
    // Predicated region
    $region6: #{tpu_custom_call.1} parent=1 // pred_check
      _
    $region7: #{tpu_custom_call.1} parent=1 // pred_check_branch
      %21 = sbr.rel (0) target = $region9
    $region8: #{tpu_custom_call.1} parent=1 // pred_region
      %23 = vsyncadd [#allocation4], 0
      %s24 = sshll.u32 %s1, 4
      %s25 = int_to_ptr.hbm [resolvable:$true] %s24
      %s26 = sshll.u32 [#allocation3], 4
      %s27 = int_to_ptr.vmem [resolvable:$true] %s26
      %32 = dma.hbm_to_vmem [thread:$0]  %s25, 128, %s27, [#allocation4], 64, 64, 4
    $region9: #{tpu_custom_call.1} parent=1 // pred_fallthru
      _
    // Predicated region
    $region10: #{tpu_custom_call.1} parent=1 // pred_check
      _
    $region11: #{tpu_custom_call.1} parent=1 // pred_check_branch
      %34 = sbr.rel (0) target = $region13
    $region12: #{tpu_custom_call.1} parent=1 // pred_region
      %36 = vsyncadd [#allocation7], 0
      %s37 = sshll.u32 %s2, 4
      %s38 = int_to_ptr.hbm [resolvable:$true] %s37
      %s39 = sshll.u32 [#allocation6], 4
      %s40 = int_to_ptr.vmem [resolvable:$true] %s39
      %45 = dma.hbm_to_vmem [thread:$0]  %s38, 4096, %s40, [#allocation7], 1024, 1024, 64
    $region13: #{tpu_custom_call.1} parent=1 // pred_fallthru
      _
    // Predicated region
    $region14: #{tpu_custom_call.1} parent=1 // pred_check
      _
    $region15: #{tpu_custom_call.1} parent=1 // pred_check_branch
      %47 = sbr.rel (0) target = $region17
    $region16: #{tpu_custom_call.1} parent=1 // pred_region
      %49 = vsyncadd [#allocation7], 0
      %s50 = sshll.u32 %s3, 4
      %s51 = int_to_ptr.hbm [resolvable:$true] %s50
      %s52 = sshll.u32 [#allocation8], 4
      %s53 = int_to_ptr.vmem [resolvable:$true] %s52
      %58 = dma.hbm_to_vmem [thread:$0]  %s51, 65536, %s53, [#allocation7], 1024, 1024, 64
    $region17: #{tpu_custom_call.1} parent=1 // pred_fallthru
      _
    // Predicated region
    $region18: #{tpu_custom_call.1} parent=1 // pred_check
      _
    $region19: #{tpu_custom_call.1} parent=1 // pred_check_branch
      %60 = sbr.rel (0) target = $region21
    $region20: #{tpu_custom_call.1} parent=1 // pred_region
      %62 = vsyncadd [#allocation10], 0
      %s64 = sshll.u32 %s4, 4
      %s65 = int_to_ptr.hbm [resolvable:$true] %s64
      %s66 = sshll.u32 [#allocation9], 4
      %s67 = int_to_ptr.vmem [resolvable:$true] %s66
      %69 = dma.hbm_to_vmem [thread:$0]  %s65, 256, %s67, [#allocation10]
    $region21: #{tpu_custom_call.1} parent=1 // pred_fallthru
      _
    // Predicated region
    $region22: #{tpu_custom_call.1} parent=1 // pred_check
      _
    $region23: #{tpu_custom_call.1} parent=1 // pred_check_branch
      %71 = sbr.rel (0) target = $region25
    $region24: #{tpu_custom_call.1} parent=1 // pred_region
      %73 = vsyncadd [#allocation10], 0
      %s75 = sshll.u32 %s5, 4
      %s76 = int_to_ptr.hbm [resolvable:$true] %s75
      %s77 = sshll.u32 [#allocation11], 4
      %s78 = int_to_ptr.vmem [resolvable:$true] %s77
      %80 = dma.hbm_to_vmem [thread:$0]  %s76, 64, %s78, [#allocation10]
    $region25: #{tpu_custom_call.1} parent=1 // pred_fallthru
      _
    // Predicated region
    $region26: #{tpu_custom_call.1} parent=1 // pred_check
      _
    $region27: #{tpu_custom_call.1} parent=1 // pred_check_branch
      %82 = sbr.rel (0) target = $region29
    $region28: #{tpu_custom_call.1} parent=1 // pred_region
      _
    $region29: #{tpu_custom_call.1} parent=1 // pred_fallthru
      _
    // Predicated region
    $region30: #{tpu_custom_call.1} parent=1 // pred_check
      _
    $region31: #{tpu_custom_call.1} parent=1 // pred_check_branch
      %84 = sbr.rel (0) target = $region33
    $region32: #{tpu_custom_call.1} parent=1 // pred_region
      %86 = dma.done [#allocation4], 128
    $region33: #{tpu_custom_call.1} parent=1 // pred_fallthru
      _
    // Predicated region
    $region34: #{tpu_custom_call.1} parent=1 // pred_check
      _
    $region35: #{tpu_custom_call.1} parent=1 // pred_check_branch
      %88 = sbr.rel (0) target = $region37
    $region36: #{tpu_custom_call.1} parent=1 // pred_region
      %90 = dma.done [#allocation7], 4096
    $region37: #{tpu_custom_call.1} parent=1 // pred_fallthru
      _
    // Predicated region
    $region38: #{tpu_custom_call.1} parent=1 // pred_check
      _
    $region39: #{tpu_custom_call.1} parent=1 // pred_check_branch
      %92 = sbr.rel (0) target = $region41
    $region40: #{tpu_custom_call.1} parent=1 // pred_region
      %94 = dma.done [#allocation7], 65536
    $region41: #{tpu_custom_call.1} parent=1 // pred_fallthru
      _
    // Predicated region
    $region42: #{tpu_custom_call.1} parent=1 // pred_check
      _
    $region43: #{tpu_custom_call.1} parent=1 // pred_check_branch
      %96 = sbr.rel (0) target = $region45
    $region44: #{tpu_custom_call.1} parent=1 // pred_region
      %98 = dma.done [#allocation10], 256
    $region45: #{tpu_custom_call.1} parent=1 // pred_fallthru
      _
    // Predicated region
    $region46: #{tpu_custom_call.1} parent=1 // pred_check
      _
    $region47: #{tpu_custom_call.1} parent=1 // pred_check_branch
      %100 = sbr.rel (0) target = $region49
    $region48: #{tpu_custom_call.1} parent=1 // pred_region
      %102 = dma.done [#allocation10], 64
    $region49: #{tpu_custom_call.1} parent=1 // pred_fallthru
      _
    %v104 = vld [vmem:[#allocation6] sm:$0xff]
    %v105 = vld [vmem:[#allocation6 + $0x8] sm:$0xff]
    %v106 = vld [vmem:[#allocation6 + $0x10] sm:$0xff]
    %v107 = vld [vmem:[#allocation6 + $0x18] sm:$0xff]
    %v108 = vld [vmem:[#allocation6 + $0x20] sm:$0xff]
    %v109 = vld [vmem:[#allocation6 + $0x28] sm:$0xff]
    %v110 = vld [vmem:[#allocation6 + $0x30] sm:$0xff]
    %v111 = vld [vmem:[#allocation6 + $0x38] sm:$0xff]
    %v112 = vld [vmem:[#allocation6 + $0x40] sm:$0xff]
    %v113 = vld [vmem:[#allocation6 + $0x48] sm:$0xff]
    %v114 = vld [vmem:[#allocation6 + $0x50] sm:$0xff]
    %v115 = vld [vmem:[#allocation6 + $0x58] sm:$0xff]
    %v116 = vld [vmem:[#allocation6 + $0x60] sm:$0xff]
    %v117 = vld [vmem:[#allocation6 + $0x68] sm:$0xff]
    %v118 = vld [vmem:[#allocation6 + $0x70] sm:$0xff]
    %v119 = vld [vmem:[#allocation6 + $0x78] sm:$0xff]
    %v120 = vld [vmem:[#allocation6 + $0x80] sm:$0xff]
    %v121 = vld [vmem:[#allocation6 + $0x88] sm:$0xff]
    %v122 = vld [vmem:[#allocation6 + $0x90] sm:$0xff]
    %v123 = vld [vmem:[#allocation6 + $0x98] sm:$0xff]
    %v124 = vld [vmem:[#allocation6 + $0xa0] sm:$0xff]
    %v125 = vld [vmem:[#allocation6 + $0xa8] sm:$0xff]
    %v126 = vld [vmem:[#allocation6 + $0xb0] sm:$0xff]
    %v127 = vld [vmem:[#allocation6 + $0xb8] sm:$0xff]
    %v128 = vld [vmem:[#allocation6 + $0xc0] sm:$0xff]
    %v129 = vld [vmem:[#allocation6 + $0xc8] sm:$0xff]
    %v130 = vld [vmem:[#allocation6 + $0xd0] sm:$0xff]
    %v131 = vld [vmem:[#allocation6 + $0xd8] sm:$0xff]
    %v132 = vld [vmem:[#allocation6 + $0xe0] sm:$0xff]
    %v133 = vld [vmem:[#allocation6 + $0xe8] sm:$0xff]
    %v134 = vld [vmem:[#allocation6 + $0xf0] sm:$0xff]
    %v135 = vld [vmem:[#allocation6 + $0xf8] sm:$0xff]
    %v136 = vld [vmem:[#allocation8] sm:$0xff]
    %v137 = vld [vmem:[#allocation8 + $0x8] sm:$0xff]
    %v138 = vld [vmem:[#allocation8 + $0x10] sm:$0xff]
    %v139 = vld [vmem:[#allocation8 + $0x18] sm:$0xff]
    %v140 = vld [vmem:[#allocation8 + $0x20] sm:$0xff]
    %v141 = vld [vmem:[#allocation8 + $0x28] sm:$0xff]
    %v142 = vld [vmem:[#allocation8 + $0x30] sm:$0xff]
    %v143 = vld [vmem:[#allocation8 + $0x38] sm:$0xff]
    %v144 = vld [vmem:[#allocation8 + $0x40] sm:$0xff]
    %v145 = vld [vmem:[#allocation8 + $0x48] sm:$0xff]
    %v146 = vld [vmem:[#allocation8 + $0x50] sm:$0xff]
    %v147 = vld [vmem:[#allocation8 + $0x58] sm:$0xff]
    %v148 = vld [vmem:[#allocation8 + $0x60] sm:$0xff]
    %v149 = vld [vmem:[#allocation8 + $0x68] sm:$0xff]
    %v150 = vld [vmem:[#allocation8 + $0x70] sm:$0xff]
    %v151 = vld [vmem:[#allocation8 + $0x78] sm:$0xff]
    %v152 = vld [vmem:[#allocation8 + $0x80] sm:$0xff]
    %v153 = vld [vmem:[#allocation8 + $0x88] sm:$0xff]
    %v154 = vld [vmem:[#allocation8 + $0x90] sm:$0xff]
    %v155 = vld [vmem:[#allocation8 + $0x98] sm:$0xff]
    %v156 = vld [vmem:[#allocation8 + $0xa0] sm:$0xff]
    %v157 = vld [vmem:[#allocation8 + $0xa8] sm:$0xff]
    %v158 = vld [vmem:[#allocation8 + $0xb0] sm:$0xff]
    %v159 = vld [vmem:[#allocation8 + $0xb8] sm:$0xff]
    %v160 = vld [vmem:[#allocation8 + $0xc0] sm:$0xff]
    %v161 = vld [vmem:[#allocation8 + $0xc8] sm:$0xff]
    %v162 = vld [vmem:[#allocation8 + $0xd0] sm:$0xff]
    %v163 = vld [vmem:[#allocation8 + $0xd8] sm:$0xff]
    %v164 = vld [vmem:[#allocation8 + $0xe0] sm:$0xff]
    %v165 = vld [vmem:[#allocation8 + $0xe8] sm:$0xff]
    %v166 = vld [vmem:[#allocation8 + $0xf0] sm:$0xff]
    %v167 = vld [vmem:[#allocation8 + $0xf8] sm:$0xff]
    %v168 = vld [vmem:[#allocation8 + $0x100] sm:$0xff]
    %v169 = vld [vmem:[#allocation8 + $0x108] sm:$0xff]
    %v170 = vld [vmem:[#allocation8 + $0x110] sm:$0xff]
    %v171 = vld [vmem:[#allocation8 + $0x118] sm:$0xff]
    %v172 = vld [vmem:[#allocation8 + $0x120] sm:$0xff]
    %v173 = vld [vmem:[#allocation8 + $0x128] sm:$0xff]
    %v174 = vld [vmem:[#allocation8 + $0x130] sm:$0xff]
    %v175 = vld [vmem:[#allocation8 + $0x138] sm:$0xff]
    %v176 = vld [vmem:[#allocation8 + $0x140] sm:$0xff]
    %v177 = vld [vmem:[#allocation8 + $0x148] sm:$0xff]
    %v178 = vld [vmem:[#allocation8 + $0x150] sm:$0xff]
    %v179 = vld [vmem:[#allocation8 + $0x158] sm:$0xff]
    %v180 = vld [vmem:[#allocation8 + $0x160] sm:$0xff]
    %v181 = vld [vmem:[#allocation8 + $0x168] sm:$0xff]
    %v182 = vld [vmem:[#allocation8 + $0x170] sm:$0xff]
    %v183 = vld [vmem:[#allocation8 + $0x178] sm:$0xff]
    %v184 = vld [vmem:[#allocation8 + $0x180] sm:$0xff]
    %v185 = vld [vmem:[#allocation8 + $0x188] sm:$0xff]
    %v186 = vld [vmem:[#allocation8 + $0x190] sm:$0xff]
    %v187 = vld [vmem:[#allocation8 + $0x198] sm:$0xff]
    %v188 = vld [vmem:[#allocation8 + $0x1a0] sm:$0xff]
    %v189 = vld [vmem:[#allocation8 + $0x1a8] sm:$0xff]
    %v190 = vld [vmem:[#allocation8 + $0x1b0] sm:$0xff]
    %v191 = vld [vmem:[#allocation8 + $0x1b8] sm:$0xff]
    %v192 = vld [vmem:[#allocation8 + $0x1c0] sm:$0xff]
    %v193 = vld [vmem:[#allocation8 + $0x1c8] sm:$0xff]
    %v194 = vld [vmem:[#allocation8 + $0x1d0] sm:$0xff]
    %v195 = vld [vmem:[#allocation8 + $0x1d8] sm:$0xff]
    %v196 = vld [vmem:[#allocation8 + $0x1e0] sm:$0xff]
    %v197 = vld [vmem:[#allocation8 + $0x1e8] sm:$0xff]
    %v198 = vld [vmem:[#allocation8 + $0x1f0] sm:$0xff]
    %v199 = vld [vmem:[#allocation8 + $0x1f8] sm:$0xff]
    %v200 = vld [vmem:[#allocation8 + $0x200] sm:$0xff]
    %v201 = vld [vmem:[#allocation8 + $0x208] sm:$0xff]
    %v202 = vld [vmem:[#allocation8 + $0x210] sm:$0xff]
    %v203 = vld [vmem:[#allocation8 + $0x218] sm:$0xff]
    %v204 = vld [vmem:[#allocation8 + $0x220] sm:$0xff]
    %v205 = vld [vmem:[#allocation8 + $0x228] sm:$0xff]
    %v206 = vld [vmem:[#allocation8 + $0x230] sm:$0xff]
    %v207 = vld [vmem:[#allocation8 + $0x238] sm:$0xff]
    %v208 = vld [vmem:[#allocation8 + $0x240] sm:$0xff]
    %v209 = vld [vmem:[#allocation8 + $0x248] sm:$0xff]
    %v210 = vld [vmem:[#allocation8 + $0x250] sm:$0xff]
    %v211 = vld [vmem:[#allocation8 + $0x258] sm:$0xff]
    %v212 = vld [vmem:[#allocation8 + $0x260] sm:$0xff]
    %v213 = vld [vmem:[#allocation8 + $0x268] sm:$0xff]
    %v214 = vld [vmem:[#allocation8 + $0x270] sm:$0xff]
    %v215 = vld [vmem:[#allocation8 + $0x278] sm:$0xff]
    %v216 = vld [vmem:[#allocation8 + $0x280] sm:$0xff]
    %v217 = vld [vmem:[#allocation8 + $0x288] sm:$0xff]
    %v218 = vld [vmem:[#allocation8 + $0x290] sm:$0xff]
    %v219 = vld [vmem:[#allocation8 + $0x298] sm:$0xff]
    %v220 = vld [vmem:[#allocation8 + $0x2a0] sm:$0xff]
    %v221 = vld [vmem:[#allocation8 + $0x2a8] sm:$0xff]
    %v222 = vld [vmem:[#allocation8 + $0x2b0] sm:$0xff]
    %v223 = vld [vmem:[#allocation8 + $0x2b8] sm:$0xff]
    %v224 = vld [vmem:[#allocation8 + $0x2c0] sm:$0xff]
    %v225 = vld [vmem:[#allocation8 + $0x2c8] sm:$0xff]
    %v226 = vld [vmem:[#allocation8 + $0x2d0] sm:$0xff]
    %v227 = vld [vmem:[#allocation8 + $0x2d8] sm:$0xff]
    %v228 = vld [vmem:[#allocation8 + $0x2e0] sm:$0xff]
    %v229 = vld [vmem:[#allocation8 + $0x2e8] sm:$0xff]
    %v230 = vld [vmem:[#allocation8 + $0x2f0] sm:$0xff]
    %v231 = vld [vmem:[#allocation8 + $0x2f8] sm:$0xff]
    %v232 = vld [vmem:[#allocation8 + $0x300] sm:$0xff]
    %v233 = vld [vmem:[#allocation8 + $0x308] sm:$0xff]
    %v234 = vld [vmem:[#allocation8 + $0x310] sm:$0xff]
    %v235 = vld [vmem:[#allocation8 + $0x318] sm:$0xff]
    %v236 = vld [vmem:[#allocation8 + $0x320] sm:$0xff]
    %v237 = vld [vmem:[#allocation8 + $0x328] sm:$0xff]
    %v238 = vld [vmem:[#allocation8 + $0x330] sm:$0xff]
    %v239 = vld [vmem:[#allocation8 + $0x338] sm:$0xff]
    %v240 = vld [vmem:[#allocation8 + $0x340] sm:$0xff]
    %v241 = vld [vmem:[#allocation8 + $0x348] sm:$0xff]
    %v242 = vld [vmem:[#allocation8 + $0x350] sm:$0xff]
    %v243 = vld [vmem:[#allocation8 + $0x358] sm:$0xff]
    %v244 = vld [vmem:[#allocation8 + $0x360] sm:$0xff]
    %v245 = vld [vmem:[#allocation8 + $0x368] sm:$0xff]
    %v246 = vld [vmem:[#allocation8 + $0x370] sm:$0xff]
    %v247 = vld [vmem:[#allocation8 + $0x378] sm:$0xff]
    %v248 = vld [vmem:[#allocation8 + $0x380] sm:$0xff]
    %v249 = vld [vmem:[#allocation8 + $0x388] sm:$0xff]
    %v250 = vld [vmem:[#allocation8 + $0x390] sm:$0xff]
    %v251 = vld [vmem:[#allocation8 + $0x398] sm:$0xff]
    %v252 = vld [vmem:[#allocation8 + $0x3a0] sm:$0xff]
    %v253 = vld [vmem:[#allocation8 + $0x3a8] sm:$0xff]
    %v254 = vld [vmem:[#allocation8 + $0x3b0] sm:$0xff]
    %v255 = vld [vmem:[#allocation8 + $0x3b8] sm:$0xff]
    %v256 = vld [vmem:[#allocation8 + $0x3c0] sm:$0xff]
    %v257 = vld [vmem:[#allocation8 + $0x3c8] sm:$0xff]
    %v258 = vld [vmem:[#allocation8 + $0x3d0] sm:$0xff]
    %v259 = vld [vmem:[#allocation8 + $0x3d8] sm:$0xff]
    %v260 = vld [vmem:[#allocation8 + $0x3e0] sm:$0xff]
    %v261 = vld [vmem:[#allocation8 + $0x3e8] sm:$0xff]
    %v262 = vld [vmem:[#allocation8 + $0x3f0] sm:$0xff]
    %v263 = vld [vmem:[#allocation8 + $0x3f8] sm:$0xff]
    %v264 = vld [vmem:[#allocation8 + $0x400] sm:$0xff]
    %v265 = vld [vmem:[#allocation8 + $0x408] sm:$0xff]
    %v266 = vld [vmem:[#allocation8 + $0x410] sm:$0xff]
    %v267 = vld [vmem:[#allocation8 + $0x418] sm:$0xff]
    %v268 = vld [vmem:[#allocation8 + $0x420] sm:$0xff]
    %v269 = vld [vmem:[#allocation8 + $0x428] sm:$0xff]
    %v270 = vld [vmem:[#allocation8 + $0x430] sm:$0xff]
    %v271 = vld [vmem:[#allocation8 + $0x438] sm:$0xff]
    %v272 = vld [vmem:[#allocation8 + $0x440] sm:$0xff]
    %v273 = vld [vmem:[#allocation8 + $0x448] sm:$0xff]
    %v274 = vld [vmem:[#allocation8 + $0x450] sm:$0xff]
    %v275 = vld [vmem:[#allocation8 + $0x458] sm:$0xff]
    %v276 = vld [vmem:[#allocation8 + $0x460] sm:$0xff]
    %v277 = vld [vmem:[#allocation8 + $0x468] sm:$0xff]
    %v278 = vld [vmem:[#allocation8 + $0x470] sm:$0xff]
    %v279 = vld [vmem:[#allocation8 + $0x478] sm:$0xff]
    %v280 = vld [vmem:[#allocation8 + $0x480] sm:$0xff]
    %v281 = vld [vmem:[#allocation8 + $0x488] sm:$0xff]
    %v282 = vld [vmem:[#allocation8 + $0x490] sm:$0xff]
    %v283 = vld [vmem:[#allocation8 + $0x498] sm:$0xff]
    %v284 = vld [vmem:[#allocation8 + $0x4a0] sm:$0xff]
    %v285 = vld [vmem:[#allocation8 + $0x4a8] sm:$0xff]
    %v286 = vld [vmem:[#allocation8 + $0x4b0] sm:$0xff]
    %v287 = vld [vmem:[#allocation8 + $0x4b8] sm:$0xff]
    %v288 = vld [vmem:[#allocation8 + $0x4c0] sm:$0xff]
    %v289 = vld [vmem:[#allocation8 + $0x4c8] sm:$0xff]
    %v290 = vld [vmem:[#allocation8 + $0x4d0] sm:$0xff]
    %v291 = vld [vmem:[#allocation8 + $0x4d8] sm:$0xff]
    %v292 = vld [vmem:[#allocation8 + $0x4e0] sm:$0xff]
    %v293 = vld [vmem:[#allocation8 + $0x4e8] sm:$0xff]
    %v294 = vld [vmem:[#allocation8 + $0x4f0] sm:$0xff]
    %v295 = vld [vmem:[#allocation8 + $0x4f8] sm:$0xff]
    %v296 = vld [vmem:[#allocation8 + $0x500] sm:$0xff]
    %v297 = vld [vmem:[#allocation8 + $0x508] sm:$0xff]
    %v298 = vld [vmem:[#allocation8 + $0x510] sm:$0xff]
    %v299 = vld [vmem:[#allocation8 + $0x518] sm:$0xff]
    %v300 = vld [vmem:[#allocation8 + $0x520] sm:$0xff]
    %v301 = vld [vmem:[#allocation8 + $0x528] sm:$0xff]
    %v302 = vld [vmem:[#allocation8 + $0x530] sm:$0xff]
    %v303 = vld [vmem:[#allocation8 + $0x538] sm:$0xff]
    %v304 = vld [vmem:[#allocation8 + $0x540] sm:$0xff]
    %v305 = vld [vmem:[#allocation8 + $0x548] sm:$0xff]
    %v306 = vld [vmem:[#allocation8 + $0x550] sm:$0xff]
    %v307 = vld [vmem:[#allocation8 + $0x558] sm:$0xff]
    %v308 = vld [vmem:[#allocation8 + $0x560] sm:$0xff]
    %v309 = vld [vmem:[#allocation8 + $0x568] sm:$0xff]
    %v310 = vld [vmem:[#allocation8 + $0x570] sm:$0xff]
    %v311 = vld [vmem:[#allocation8 + $0x578] sm:$0xff]
    %v312 = vld [vmem:[#allocation8 + $0x580] sm:$0xff]
    %v313 = vld [vmem:[#allocation8 + $0x588] sm:$0xff]
    %v314 = vld [vmem:[#allocation8 + $0x590] sm:$0xff]
    %v315 = vld [vmem:[#allocation8 + $0x598] sm:$0xff]
    %v316 = vld [vmem:[#allocation8 + $0x5a0] sm:$0xff]
    %v317 = vld [vmem:[#allocation8 + $0x5a8] sm:$0xff]
    %v318 = vld [vmem:[#allocation8 + $0x5b0] sm:$0xff]
    %v319 = vld [vmem:[#allocation8 + $0x5b8] sm:$0xff]
    %v320 = vld [vmem:[#allocation8 + $0x5c0] sm:$0xff]
    %v321 = vld [vmem:[#allocation8 + $0x5c8] sm:$0xff]
    %v322 = vld [vmem:[#allocation8 + $0x5d0] sm:$0xff]
    %v323 = vld [vmem:[#allocation8 + $0x5d8] sm:$0xff]
    %v324 = vld [vmem:[#allocation8 + $0x5e0] sm:$0xff]
    %v325 = vld [vmem:[#allocation8 + $0x5e8] sm:$0xff]
    %v326 = vld [vmem:[#allocation8 + $0x5f0] sm:$0xff]
    %v327 = vld [vmem:[#allocation8 + $0x5f8] sm:$0xff]
    %v328 = vld [vmem:[#allocation8 + $0x600] sm:$0xff]
    %v329 = vld [vmem:[#allocation8 + $0x608] sm:$0xff]
    %v330 = vld [vmem:[#allocation8 + $0x610] sm:$0xff]
    %v331 = vld [vmem:[#allocation8 + $0x618] sm:$0xff]
    %v332 = vld [vmem:[#allocation8 + $0x620] sm:$0xff]
    %v333 = vld [vmem:[#allocation8 + $0x628] sm:$0xff]
    %v334 = vld [vmem:[#allocation8 + $0x630] sm:$0xff]
    %v335 = vld [vmem:[#allocation8 + $0x638] sm:$0xff]
    %v336 = vld [vmem:[#allocation8 + $0x640] sm:$0xff]
    %v337 = vld [vmem:[#allocation8 + $0x648] sm:$0xff]
    %v338 = vld [vmem:[#allocation8 + $0x650] sm:$0xff]
    %v339 = vld [vmem:[#allocation8 + $0x658] sm:$0xff]
    %v340 = vld [vmem:[#allocation8 + $0x660] sm:$0xff]
    %v341 = vld [vmem:[#allocation8 + $0x668] sm:$0xff]
    %v342 = vld [vmem:[#allocation8 + $0x670] sm:$0xff]
    %v343 = vld [vmem:[#allocation8 + $0x678] sm:$0xff]
    %v344 = vld [vmem:[#allocation8 + $0x680] sm:$0xff]
    %v345 = vld [vmem:[#allocation8 + $0x688] sm:$0xff]
    %v346 = vld [vmem:[#allocation8 + $0x690] sm:$0xff]
    %v347 = vld [vmem:[#allocation8 + $0x698] sm:$0xff]
    %v348 = vld [vmem:[#allocation8 + $0x6a0] sm:$0xff]
    %v349 = vld [vmem:[#allocation8 + $0x6a8] sm:$0xff]
    %v350 = vld [vmem:[#allocation8 + $0x6b0] sm:$0xff]
    %v351 = vld [vmem:[#allocation8 + $0x6b8] sm:$0xff]
    %v352 = vld [vmem:[#allocation8 + $0x6c0] sm:$0xff]
    %v353 = vld [vmem:[#allocation8 + $0x6c8] sm:$0xff]
    %v354 = vld [vmem:[#allocation8 + $0x6d0] sm:$0xff]
    %v355 = vld [vmem:[#allocation8 + $0x6d8] sm:$0xff]
    %v356 = vld [vmem:[#allocation8 + $0x6e0] sm:$0xff]
    %v357 = vld [vmem:[#allocation8 + $0x6e8] sm:$0xff]
    %v358 = vld [vmem:[#allocation8 + $0x6f0] sm:$0xff]
    %v359 = vld [vmem:[#allocation8 + $0x6f8] sm:$0xff]
    %v360 = vld [vmem:[#allocation8 + $0x700] sm:$0xff]
    %v361 = vld [vmem:[#allocation8 + $0x708] sm:$0xff]
    %v362 = vld [vmem:[#allocation8 + $0x710] sm:$0xff]
    %v363 = vld [vmem:[#allocation8 + $0x718] sm:$0xff]
    %v364 = vld [vmem:[#allocation8 + $0x720] sm:$0xff]
    %v365 = vld [vmem:[#allocation8 + $0x728] sm:$0xff]
    %v366 = vld [vmem:[#allocation8 + $0x730] sm:$0xff]
    %v367 = vld [vmem:[#allocation8 + $0x738] sm:$0xff]
    %v368 = vld [vmem:[#allocation8 + $0x740] sm:$0xff]
    %v369 = vld [vmem:[#allocation8 + $0x748] sm:$0xff]
    %v370 = vld [vmem:[#allocation8 + $0x750] sm:$0xff]
    %v371 = vld [vmem:[#allocation8 + $0x758] sm:$0xff]
    %v372 = vld [vmem:[#allocation8 + $0x760] sm:$0xff]
    %v373 = vld [vmem:[#allocation8 + $0x768] sm:$0xff]
    %v374 = vld [vmem:[#allocation8 + $0x770] sm:$0xff]
    %v375 = vld [vmem:[#allocation8 + $0x778] sm:$0xff]
    %v376 = vld [vmem:[#allocation8 + $0x780] sm:$0xff]
    %v377 = vld [vmem:[#allocation8 + $0x788] sm:$0xff]
    %v378 = vld [vmem:[#allocation8 + $0x790] sm:$0xff]
    %v379 = vld [vmem:[#allocation8 + $0x798] sm:$0xff]
    %v380 = vld [vmem:[#allocation8 + $0x7a0] sm:$0xff]
    %v381 = vld [vmem:[#allocation8 + $0x7a8] sm:$0xff]
    %v382 = vld [vmem:[#allocation8 + $0x7b0] sm:$0xff]
    %v383 = vld [vmem:[#allocation8 + $0x7b8] sm:$0xff]
    %v384 = vld [vmem:[#allocation8 + $0x7c0] sm:$0xff]
    %v385 = vld [vmem:[#allocation8 + $0x7c8] sm:$0xff]
    %v386 = vld [vmem:[#allocation8 + $0x7d0] sm:$0xff]
    %v387 = vld [vmem:[#allocation8 + $0x7d8] sm:$0xff]
    %v388 = vld [vmem:[#allocation8 + $0x7e0] sm:$0xff]
    %v389 = vld [vmem:[#allocation8 + $0x7e8] sm:$0xff]
    %v390 = vld [vmem:[#allocation8 + $0x7f0] sm:$0xff]
    %v391 = vld [vmem:[#allocation8 + $0x7f8] sm:$0xff]
    %v392 = vld [vmem:[#allocation8 + $0x800] sm:$0xff]
    %v393 = vld [vmem:[#allocation8 + $0x808] sm:$0xff]
    %v394 = vld [vmem:[#allocation8 + $0x810] sm:$0xff]
    %v395 = vld [vmem:[#allocation8 + $0x818] sm:$0xff]
    %v396 = vld [vmem:[#allocation8 + $0x820] sm:$0xff]
    %v397 = vld [vmem:[#allocation8 + $0x828] sm:$0xff]
    %v398 = vld [vmem:[#allocation8 + $0x830] sm:$0xff]
    %v399 = vld [vmem:[#allocation8 + $0x838] sm:$0xff]
    %v400 = vld [vmem:[#allocation8 + $0x840] sm:$0xff]
    %v401 = vld [vmem:[#allocation8 + $0x848] sm:$0xff]
    %v402 = vld [vmem:[#allocation8 + $0x850] sm:$0xff]
    %v403 = vld [vmem:[#allocation8 + $0x858] sm:$0xff]
    %v404 = vld [vmem:[#allocation8 + $0x860] sm:$0xff]
    %v405 = vld [vmem:[#allocation8 + $0x868] sm:$0xff]
    %v406 = vld [vmem:[#allocation8 + $0x870] sm:$0xff]
    %v407 = vld [vmem:[#allocation8 + $0x878] sm:$0xff]
    %v408 = vld [vmem:[#allocation8 + $0x880] sm:$0xff]
    %v409 = vld [vmem:[#allocation8 + $0x888] sm:$0xff]
    %v410 = vld [vmem:[#allocation8 + $0x890] sm:$0xff]
    %v411 = vld [vmem:[#allocation8 + $0x898] sm:$0xff]
    %v412 = vld [vmem:[#allocation8 + $0x8a0] sm:$0xff]
    %v413 = vld [vmem:[#allocation8 + $0x8a8] sm:$0xff]
    %v414 = vld [vmem:[#allocation8 + $0x8b0] sm:$0xff]
    %v415 = vld [vmem:[#allocation8 + $0x8b8] sm:$0xff]
    %v416 = vld [vmem:[#allocation8 + $0x8c0] sm:$0xff]
    %v417 = vld [vmem:[#allocation8 + $0x8c8] sm:$0xff]
    %v418 = vld [vmem:[#allocation8 + $0x8d0] sm:$0xff]
    %v419 = vld [vmem:[#allocation8 + $0x8d8] sm:$0xff]
    %v420 = vld [vmem:[#allocation8 + $0x8e0] sm:$0xff]
    %v421 = vld [vmem:[#allocation8 + $0x8e8] sm:$0xff]
    %v422 = vld [vmem:[#allocation8 + $0x8f0] sm:$0xff]
    %v423 = vld [vmem:[#allocation8 + $0x8f8] sm:$0xff]
    %v424 = vld [vmem:[#allocation8 + $0x900] sm:$0xff]
    %v425 = vld [vmem:[#allocation8 + $0x908] sm:$0xff]
    %v426 = vld [vmem:[#allocation8 + $0x910] sm:$0xff]
    %v427 = vld [vmem:[#allocation8 + $0x918] sm:$0xff]
    %v428 = vld [vmem:[#allocation8 + $0x920] sm:$0xff]
    %v429 = vld [vmem:[#allocation8 + $0x928] sm:$0xff]
    %v430 = vld [vmem:[#allocation8 + $0x930] sm:$0xff]
    %v431 = vld [vmem:[#allocation8 + $0x938] sm:$0xff]
    %v432 = vld [vmem:[#allocation8 + $0x940] sm:$0xff]
    %v433 = vld [vmem:[#allocation8 + $0x948] sm:$0xff]
    %v434 = vld [vmem:[#allocation8 + $0x950] sm:$0xff]
    %v435 = vld [vmem:[#allocation8 + $0x958] sm:$0xff]
    %v436 = vld [vmem:[#allocation8 + $0x960] sm:$0xff]
    %v437 = vld [vmem:[#allocation8 + $0x968] sm:$0xff]
    %v438 = vld [vmem:[#allocation8 + $0x970] sm:$0xff]
    %v439 = vld [vmem:[#allocation8 + $0x978] sm:$0xff]
    %v440 = vld [vmem:[#allocation8 + $0x980] sm:$0xff]
    %v441 = vld [vmem:[#allocation8 + $0x988] sm:$0xff]
    %v442 = vld [vmem:[#allocation8 + $0x990] sm:$0xff]
    %v443 = vld [vmem:[#allocation8 + $0x998] sm:$0xff]
    %v444 = vld [vmem:[#allocation8 + $0x9a0] sm:$0xff]
    %v445 = vld [vmem:[#allocation8 + $0x9a8] sm:$0xff]
    %v446 = vld [vmem:[#allocation8 + $0x9b0] sm:$0xff]
    %v447 = vld [vmem:[#allocation8 + $0x9b8] sm:$0xff]
    %v448 = vld [vmem:[#allocation8 + $0x9c0] sm:$0xff]
    %v449 = vld [vmem:[#allocation8 + $0x9c8] sm:$0xff]
    %v450 = vld [vmem:[#allocation8 + $0x9d0] sm:$0xff]
    %v451 = vld [vmem:[#allocation8 + $0x9d8] sm:$0xff]
    %v452 = vld [vmem:[#allocation8 + $0x9e0] sm:$0xff]
    %v453 = vld [vmem:[#allocation8 + $0x9e8] sm:$0xff]
    %v454 = vld [vmem:[#allocation8 + $0x9f0] sm:$0xff]
    %v455 = vld [vmem:[#allocation8 + $0x9f8] sm:$0xff]
    %v456 = vld [vmem:[#allocation8 + $0xa00] sm:$0xff]
    %v457 = vld [vmem:[#allocation8 + $0xa08] sm:$0xff]
    %v458 = vld [vmem:[#allocation8 + $0xa10] sm:$0xff]
    %v459 = vld [vmem:[#allocation8 + $0xa18] sm:$0xff]
    %v460 = vld [vmem:[#allocation8 + $0xa20] sm:$0xff]
    %v461 = vld [vmem:[#allocation8 + $0xa28] sm:$0xff]
    %v462 = vld [vmem:[#allocation8 + $0xa30] sm:$0xff]
    %v463 = vld [vmem:[#allocation8 + $0xa38] sm:$0xff]
    %v464 = vld [vmem:[#allocation8 + $0xa40] sm:$0xff]
    %v465 = vld [vmem:[#allocation8 + $0xa48] sm:$0xff]
    %v466 = vld [vmem:[#allocation8 + $0xa50] sm:$0xff]
    %v467 = vld [vmem:[#allocation8 + $0xa58] sm:$0xff]
    %v468 = vld [vmem:[#allocation8 + $0xa60] sm:$0xff]
    %v469 = vld [vmem:[#allocation8 + $0xa68] sm:$0xff]
    %v470 = vld [vmem:[#allocation8 + $0xa70] sm:$0xff]
    %v471 = vld [vmem:[#allocation8 + $0xa78] sm:$0xff]
    %v472 = vld [vmem:[#allocation8 + $0xa80] sm:$0xff]
    %v473 = vld [vmem:[#allocation8 + $0xa88] sm:$0xff]
    %v474 = vld [vmem:[#allocation8 + $0xa90] sm:$0xff]
    %v475 = vld [vmem:[#allocation8 + $0xa98] sm:$0xff]
    %v476 = vld [vmem:[#allocation8 + $0xaa0] sm:$0xff]
    %v477 = vld [vmem:[#allocation8 + $0xaa8] sm:$0xff]
    %v478 = vld [vmem:[#allocation8 + $0xab0] sm:$0xff]
    %v479 = vld [vmem:[#allocation8 + $0xab8] sm:$0xff]
    %v480 = vld [vmem:[#allocation8 + $0xac0] sm:$0xff]
    %v481 = vld [vmem:[#allocation8 + $0xac8] sm:$0xff]
    %v482 = vld [vmem:[#allocation8 + $0xad0] sm:$0xff]
    %v483 = vld [vmem:[#allocation8 + $0xad8] sm:$0xff]
    %v484 = vld [vmem:[#allocation8 + $0xae0] sm:$0xff]
    %v485 = vld [vmem:[#allocation8 + $0xae8] sm:$0xff]
    %v486 = vld [vmem:[#allocation8 + $0xaf0] sm:$0xff]
    %v487 = vld [vmem:[#allocation8 + $0xaf8] sm:$0xff]
    %v488 = vld [vmem:[#allocation8 + $0xb00] sm:$0xff]
    %v489 = vld [vmem:[#allocation8 + $0xb08] sm:$0xff]
    %v490 = vld [vmem:[#allocation8 + $0xb10] sm:$0xff]
    %v491 = vld [vmem:[#allocation8 + $0xb18] sm:$0xff]
    %v492 = vld [vmem:[#allocation8 + $0xb20] sm:$0xff]
    %v493 = vld [vmem:[#allocation8 + $0xb28] sm:$0xff]
    %v494 = vld [vmem:[#allocation8 + $0xb30] sm:$0xff]
    %v495 = vld [vmem:[#allocation8 + $0xb38] sm:$0xff]
    %v496 = vld [vmem:[#allocation8 + $0xb40] sm:$0xff]
    %v497 = vld [vmem:[#allocation8 + $0xb48] sm:$0xff]
    %v498 = vld [vmem:[#allocation8 + $0xb50] sm:$0xff]
    %v499 = vld [vmem:[#allocation8 + $0xb58] sm:$0xff]
    %v500 = vld [vmem:[#allocation8 + $0xb60] sm:$0xff]
    %v501 = vld [vmem:[#allocation8 + $0xb68] sm:$0xff]
    %v502 = vld [vmem:[#allocation8 + $0xb70] sm:$0xff]
    %v503 = vld [vmem:[#allocation8 + $0xb78] sm:$0xff]
    %v504 = vld [vmem:[#allocation8 + $0xb80] sm:$0xff]
    %v505 = vld [vmem:[#allocation8 + $0xb88] sm:$0xff]
    %v506 = vld [vmem:[#allocation8 + $0xb90] sm:$0xff]
    %v507 = vld [vmem:[#allocation8 + $0xb98] sm:$0xff]
    %v508 = vld [vmem:[#allocation8 + $0xba0] sm:$0xff]
    %v509 = vld [vmem:[#allocation8 + $0xba8] sm:$0xff]
    %v510 = vld [vmem:[#allocation8 + $0xbb0] sm:$0xff]
    %v511 = vld [vmem:[#allocation8 + $0xbb8] sm:$0xff]
    %v512 = vld [vmem:[#allocation8 + $0xbc0] sm:$0xff]
    %v513 = vld [vmem:[#allocation8 + $0xbc8] sm:$0xff]
    %v514 = vld [vmem:[#allocation8 + $0xbd0] sm:$0xff]
    %v515 = vld [vmem:[#allocation8 + $0xbd8] sm:$0xff]
    %v516 = vld [vmem:[#allocation8 + $0xbe0] sm:$0xff]
    %v517 = vld [vmem:[#allocation8 + $0xbe8] sm:$0xff]
    %v518 = vld [vmem:[#allocation8 + $0xbf0] sm:$0xff]
    %v519 = vld [vmem:[#allocation8 + $0xbf8] sm:$0xff]
    %v520 = vld [vmem:[#allocation8 + $0xc00] sm:$0xff]
    %v521 = vld [vmem:[#allocation8 + $0xc08] sm:$0xff]
    %v522 = vld [vmem:[#allocation8 + $0xc10] sm:$0xff]
    %v523 = vld [vmem:[#allocation8 + $0xc18] sm:$0xff]
    %v524 = vld [vmem:[#allocation8 + $0xc20] sm:$0xff]
    %v525 = vld [vmem:[#allocation8 + $0xc28] sm:$0xff]
    %v526 = vld [vmem:[#allocation8 + $0xc30] sm:$0xff]
    %v527 = vld [vmem:[#allocation8 + $0xc38] sm:$0xff]
    %v528 = vld [vmem:[#allocation8 + $0xc40] sm:$0xff]
    %v529 = vld [vmem:[#allocation8 + $0xc48] sm:$0xff]
    %v530 = vld [vmem:[#allocation8 + $0xc50] sm:$0xff]
    %v531 = vld [vmem:[#allocation8 + $0xc58] sm:$0xff]
    %v532 = vld [vmem:[#allocation8 + $0xc60] sm:$0xff]
    %v533 = vld [vmem:[#allocation8 + $0xc68] sm:$0xff]
    %v534 = vld [vmem:[#allocation8 + $0xc70] sm:$0xff]
    %v535 = vld [vmem:[#allocation8 + $0xc78] sm:$0xff]
    %v536 = vld [vmem:[#allocation8 + $0xc80] sm:$0xff]
    %v537 = vld [vmem:[#allocation8 + $0xc88] sm:$0xff]
    %v538 = vld [vmem:[#allocation8 + $0xc90] sm:$0xff]
    %v539 = vld [vmem:[#allocation8 + $0xc98] sm:$0xff]
    %v540 = vld [vmem:[#allocation8 + $0xca0] sm:$0xff]
    %v541 = vld [vmem:[#allocation8 + $0xca8] sm:$0xff]
    %v542 = vld [vmem:[#allocation8 + $0xcb0] sm:$0xff]
    %v543 = vld [vmem:[#allocation8 + $0xcb8] sm:$0xff]
    %v544 = vld [vmem:[#allocation8 + $0xcc0] sm:$0xff]
    %v545 = vld [vmem:[#allocation8 + $0xcc8] sm:$0xff]
    %v546 = vld [vmem:[#allocation8 + $0xcd0] sm:$0xff]
    %v547 = vld [vmem:[#allocation8 + $0xcd8] sm:$0xff]
    %v548 = vld [vmem:[#allocation8 + $0xce0] sm:$0xff]
    %v549 = vld [vmem:[#allocation8 + $0xce8] sm:$0xff]
    %v550 = vld [vmem:[#allocation8 + $0xcf0] sm:$0xff]
    %v551 = vld [vmem:[#allocation8 + $0xcf8] sm:$0xff]
    %v552 = vld [vmem:[#allocation8 + $0xd00] sm:$0xff]
    %v553 = vld [vmem:[#allocation8 + $0xd08] sm:$0xff]
    %v554 = vld [vmem:[#allocation8 + $0xd10] sm:$0xff]
    %v555 = vld [vmem:[#allocation8 + $0xd18] sm:$0xff]
    %v556 = vld [vmem:[#allocation8 + $0xd20] sm:$0xff]
    %v557 = vld [vmem:[#allocation8 + $0xd28] sm:$0xff]
    %v558 = vld [vmem:[#allocation8 + $0xd30] sm:$0xff]
    %v559 = vld [vmem:[#allocation8 + $0xd38] sm:$0xff]
    %v560 = vld [vmem:[#allocation8 + $0xd40] sm:$0xff]
    %v561 = vld [vmem:[#allocation8 + $0xd48] sm:$0xff]
    %v562 = vld [vmem:[#allocation8 + $0xd50] sm:$0xff]
    %v563 = vld [vmem:[#allocation8 + $0xd58] sm:$0xff]
    %v564 = vld [vmem:[#allocation8 + $0xd60] sm:$0xff]
    %v565 = vld [vmem:[#allocation8 + $0xd68] sm:$0xff]
    %v566 = vld [vmem:[#allocation8 + $0xd70] sm:$0xff]
    %v567 = vld [vmem:[#allocation8 + $0xd78] sm:$0xff]
    %v568 = vld [vmem:[#allocation8 + $0xd80] sm:$0xff]
    %v569 = vld [vmem:[#allocation8 + $0xd88] sm:$0xff]
    %v570 = vld [vmem:[#allocation8 + $0xd90] sm:$0xff]
    %v571 = vld [vmem:[#allocation8 + $0xd98] sm:$0xff]
    %v572 = vld [vmem:[#allocation8 + $0xda0] sm:$0xff]
    %v573 = vld [vmem:[#allocation8 + $0xda8] sm:$0xff]
    %v574 = vld [vmem:[#allocation8 + $0xdb0] sm:$0xff]
    %v575 = vld [vmem:[#allocation8 + $0xdb8] sm:$0xff]
    %v576 = vld [vmem:[#allocation8 + $0xdc0] sm:$0xff]
    %v577 = vld [vmem:[#allocation8 + $0xdc8] sm:$0xff]
    %v578 = vld [vmem:[#allocation8 + $0xdd0] sm:$0xff]
    %v579 = vld [vmem:[#allocation8 + $0xdd8] sm:$0xff]
    %v580 = vld [vmem:[#allocation8 + $0xde0] sm:$0xff]
    %v581 = vld [vmem:[#allocation8 + $0xde8] sm:$0xff]
    %v582 = vld [vmem:[#allocation8 + $0xdf0] sm:$0xff]
    %v583 = vld [vmem:[#allocation8 + $0xdf8] sm:$0xff]
    %v584 = vld [vmem:[#allocation8 + $0xe00] sm:$0xff]
    %v585 = vld [vmem:[#allocation8 + $0xe08] sm:$0xff]
    %v586 = vld [vmem:[#allocation8 + $0xe10] sm:$0xff]
    %v587 = vld [vmem:[#allocation8 + $0xe18] sm:$0xff]
    %v588 = vld [vmem:[#allocation8 + $0xe20] sm:$0xff]
    %v589 = vld [vmem:[#allocation8 + $0xe28] sm:$0xff]
    %v590 = vld [vmem:[#allocation8 + $0xe30] sm:$0xff]
    %v591 = vld [vmem:[#allocation8 + $0xe38] sm:$0xff]
    %v592 = vld [vmem:[#allocation8 + $0xe40] sm:$0xff]
    %v593 = vld [vmem:[#allocation8 + $0xe48] sm:$0xff]
    %v594 = vld [vmem:[#allocation8 + $0xe50] sm:$0xff]
    %v595 = vld [vmem:[#allocation8 + $0xe58] sm:$0xff]
    %v596 = vld [vmem:[#allocation8 + $0xe60] sm:$0xff]
    %v597 = vld [vmem:[#allocation8 + $0xe68] sm:$0xff]
    %v598 = vld [vmem:[#allocation8 + $0xe70] sm:$0xff]
    %v599 = vld [vmem:[#allocation8 + $0xe78] sm:$0xff]
    %v600 = vld [vmem:[#allocation8 + $0xe80] sm:$0xff]
    %v601 = vld [vmem:[#allocation8 + $0xe88] sm:$0xff]
    %v602 = vld [vmem:[#allocation8 + $0xe90] sm:$0xff]
    %v603 = vld [vmem:[#allocation8 + $0xe98] sm:$0xff]
    %v604 = vld [vmem:[#allocation8 + $0xea0] sm:$0xff]
    %v605 = vld [vmem:[#allocation8 + $0xea8] sm:$0xff]
    %v606 = vld [vmem:[#allocation8 + $0xeb0] sm:$0xff]
    %v607 = vld [vmem:[#allocation8 + $0xeb8] sm:$0xff]
    %v608 = vld [vmem:[#allocation8 + $0xec0] sm:$0xff]
    %v609 = vld [vmem:[#allocation8 + $0xec8] sm:$0xff]
    %v610 = vld [vmem:[#allocation8 + $0xed0] sm:$0xff]
    %v611 = vld [vmem:[#allocation8 + $0xed8] sm:$0xff]
    %v612 = vld [vmem:[#allocation8 + $0xee0] sm:$0xff]
    %v613 = vld [vmem:[#allocation8 + $0xee8] sm:$0xff]
    %v614 = vld [vmem:[#allocation8 + $0xef0] sm:$0xff]
    %v615 = vld [vmem:[#allocation8 + $0xef8] sm:$0xff]
    %v616 = vld [vmem:[#allocation8 + $0xf00] sm:$0xff]
    %v617 = vld [vmem:[#allocation8 + $0xf08] sm:$0xff]
    %v618 = vld [vmem:[#allocation8 + $0xf10] sm:$0xff]
    %v619 = vld [vmem:[#allocation8 + $0xf18] sm:$0xff]
    %v620 = vld [vmem:[#allocation8 + $0xf20] sm:$0xff]
    %v621 = vld [vmem:[#allocation8 + $0xf28] sm:$0xff]
    %v622 = vld [vmem:[#allocation8 + $0xf30] sm:$0xff]
    %v623 = vld [vmem:[#allocation8 + $0xf38] sm:$0xff]
    %v624 = vld [vmem:[#allocation8 + $0xf40] sm:$0xff]
    %v625 = vld [vmem:[#allocation8 + $0xf48] sm:$0xff]
    %v626 = vld [vmem:[#allocation8 + $0xf50] sm:$0xff]
    %v627 = vld [vmem:[#allocation8 + $0xf58] sm:$0xff]
    %v628 = vld [vmem:[#allocation8 + $0xf60] sm:$0xff]
    %v629 = vld [vmem:[#allocation8 + $0xf68] sm:$0xff]
    %v630 = vld [vmem:[#allocation8 + $0xf70] sm:$0xff]
    %v631 = vld [vmem:[#allocation8 + $0xf78] sm:$0xff]
    %v632 = vld [vmem:[#allocation8 + $0xf80] sm:$0xff]
    %v633 = vld [vmem:[#allocation8 + $0xf88] sm:$0xff]
    %v634 = vld [vmem:[#allocation8 + $0xf90] sm:$0xff]
    %v635 = vld [vmem:[#allocation8 + $0xf98] sm:$0xff]
    %v636 = vld [vmem:[#allocation8 + $0xfa0] sm:$0xff]
    %v637 = vld [vmem:[#allocation8 + $0xfa8] sm:$0xff]
    %v638 = vld [vmem:[#allocation8 + $0xfb0] sm:$0xff]
    %v639 = vld [vmem:[#allocation8 + $0xfb8] sm:$0xff]
    %v640 = vld [vmem:[#allocation8 + $0xfc0] sm:$0xff]
    %v641 = vld [vmem:[#allocation8 + $0xfc8] sm:$0xff]
    %v642 = vld [vmem:[#allocation8 + $0xfd0] sm:$0xff]
    %v643 = vld [vmem:[#allocation8 + $0xfd8] sm:$0xff]
    %v644 = vld [vmem:[#allocation8 + $0xfe0] sm:$0xff]
    %v645 = vld [vmem:[#allocation8 + $0xfe8] sm:$0xff]
    %v646 = vld [vmem:[#allocation8 + $0xff0] sm:$0xff]
    %v647 = vld [vmem:[#allocation8 + $0xff8] sm:$0xff]
    %v648 = vld [vmem:[#allocation9] sm:$0xff]
    %v649 = vld [vmem:[#allocation9 + $0x8] sm:$0xff]
    %v650 = vld [vmem:[%s0] sm:$0x7]
    %v651 = vld [vmem:[%s0 + $0x4] sm:$0x7]
    %v652 = vpack.c.bf16 %v650, %v650
    %v653 = vpack.c.bf16 %v651, %v651
    %v654 = vld [vmem:[#allocation3] sm:$0xf]
    %v655 = vld [vmem:[#allocation3 + $0x4] sm:$0xf]
    %v656 = vpack.c.bf16 %v654, %v654
    %v657 = vpack.c.bf16 %v655, %v655
    %v660 = vperm.slane %v648, 0
    %v661 = vperm.slane %v648, 1
    %v662 = vperm.slane %v648, 2
    %v663 = vperm.slane %v648, 3
    %v664 = vperm.slane %v648, 4
    %v665 = vperm.slane %v648, 5
    %v666 = vperm.slane %v648, 6
    %v667 = vperm.slane %v648, 7
    %v668 = vperm.slane %v649, 0
    %v669 = vperm.slane %v649, 1
    %v670 = vperm.slane %v649, 2
    %v671 = vperm.slane %v649, 3
    %v672 = vperm.slane %v649, 4
    %v673 = vperm.slane %v649, 5
    %v674 = vperm.slane %v649, 6
    %v675 = vperm.slane %v649, 7
    %v694 = vunpack.c.l.b16 %v652
    %v695 = vunpack.c.l.b16 %v653
    %v696 = vpack.c.b16 %v694, %v694
    %v697 = vpack.c.b16 %v695, %v695
    %v698 = vunpack.c.l.b16 %v696
    %v699 = vunpack.c.l.b16 %v697
    %v700 = vrot.slane %v699, 7
    %vm701 = vcmask 1041409
    %v702 = vsel %vm701, %v700, %v698
    %v703 = vpack.c.b16 %v702, %v702
    %v736 = vunpack.c.l.b16 %v104
    %v737 = vunpack.c.h.b16 %v104
    %v738 = vunpack.c.l.b16 %v105
    %v739 = vunpack.c.h.b16 %v105
    %v740 = vunpack.c.l.b16 %v106
    %v741 = vunpack.c.h.b16 %v106
    %v742 = vunpack.c.l.b16 %v107
    %v743 = vunpack.c.h.b16 %v107
    %v744 = vunpack.c.l.b16 %v108
    %v745 = vunpack.c.h.b16 %v108
    %v746 = vunpack.c.l.b16 %v109
    %v747 = vunpack.c.h.b16 %v109
    %v748 = vunpack.c.l.b16 %v110
    %v749 = vunpack.c.h.b16 %v110
    %v750 = vunpack.c.l.b16 %v111
    %v751 = vunpack.c.h.b16 %v111
    %v752 = vunpack.c.l.b16 %v112
    %v753 = vunpack.c.h.b16 %v112
    %v754 = vunpack.c.l.b16 %v113
    %v755 = vunpack.c.h.b16 %v113
    %v756 = vunpack.c.l.b16 %v114
    %v757 = vunpack.c.h.b16 %v114
    %v758 = vunpack.c.l.b16 %v115
    %v759 = vunpack.c.h.b16 %v115
    %v760 = vunpack.c.l.b16 %v116
    %v761 = vunpack.c.h.b16 %v116
    %v762 = vunpack.c.l.b16 %v117
    %v763 = vunpack.c.h.b16 %v117
    %v764 = vunpack.c.l.b16 %v118
    %v765 = vunpack.c.h.b16 %v118
    %v766 = vunpack.c.l.b16 %v119
    %v767 = vunpack.c.h.b16 %v119
    %v768 = vunpack.c.l.b16 %v120
    %v769 = vunpack.c.h.b16 %v120
    %v770 = vunpack.c.l.b16 %v121
    %v771 = vunpack.c.h.b16 %v121
    %v772 = vunpack.c.l.b16 %v122
    %v773 = vunpack.c.h.b16 %v122
    %v774 = vunpack.c.l.b16 %v123
    %v775 = vunpack.c.h.b16 %v123
    %v776 = vunpack.c.l.b16 %v124
    %v777 = vunpack.c.h.b16 %v124
    %v778 = vunpack.c.l.b16 %v125
    %v779 = vunpack.c.h.b16 %v125
    %v780 = vunpack.c.l.b16 %v126
    %v781 = vunpack.c.h.b16 %v126
    %v782 = vunpack.c.l.b16 %v127
    %v783 = vunpack.c.h.b16 %v127
    %v784 = vunpack.c.l.b16 %v128
    %v785 = vunpack.c.h.b16 %v128
    %v786 = vunpack.c.l.b16 %v129
    %v787 = vunpack.c.h.b16 %v129
    %v788 = vunpack.c.l.b16 %v130
    %v789 = vunpack.c.h.b16 %v130
    %v790 = vunpack.c.l.b16 %v131
    %v791 = vunpack.c.h.b16 %v131
    %v792 = vunpack.c.l.b16 %v132
    %v793 = vunpack.c.h.b16 %v132
    %v794 = vunpack.c.l.b16 %v133
    %v795 = vunpack.c.h.b16 %v133
    %v796 = vunpack.c.l.b16 %v134
    %v797 = vunpack.c.h.b16 %v134
    %v798 = vunpack.c.l.b16 %v135
    %v799 = vunpack.c.h.b16 %v135
    %v800 = vpack.c.b16 %v752, %v736
    %v801 = vpack.c.b16 %v753, %v737
    %v802 = vpack.c.b16 %v754, %v738
    %v803 = vpack.c.b16 %v755, %v739
    %v804 = vpack.c.b16 %v756, %v740
    %v805 = vpack.c.b16 %v757, %v741
    %v806 = vpack.c.b16 %v758, %v742
    %v807 = vpack.c.b16 %v759, %v743
    %v808 = vpack.c.b16 %v760, %v744
    %v809 = vpack.c.b16 %v761, %v745
    %v810 = vpack.c.b16 %v762, %v746
    %v811 = vpack.c.b16 %v763, %v747
    %v812 = vpack.c.b16 %v764, %v748
    %v813 = vpack.c.b16 %v765, %v749
    %v814 = vpack.c.b16 %v766, %v750
    %v815 = vpack.c.b16 %v767, %v751
    %v816 = vpack.c.b16 %v784, %v768
    %v817 = vpack.c.b16 %v785, %v769
    %v818 = vpack.c.b16 %v786, %v770
    %v819 = vpack.c.b16 %v787, %v771
    %v820 = vpack.c.b16 %v788, %v772
    %v821 = vpack.c.b16 %v789, %v773
    %v822 = vpack.c.b16 %v790, %v774
    %v823 = vpack.c.b16 %v791, %v775
    %v824 = vpack.c.b16 %v792, %v776
    %v825 = vpack.c.b16 %v793, %v777
    %v826 = vpack.c.b16 %v794, %v778
    %v827 = vpack.c.b16 %v795, %v779
    %v828 = vpack.c.b16 %v796, %v780
    %v829 = vpack.c.b16 %v797, %v781
    %v830 = vpack.c.b16 %v798, %v782
    %v831 = vpack.c.b16 %v799, %v783
    %vm864 = vcmask 261120
    %v866 = vsel %vm864, %v703, 0
    %868 = vmatpush.bf16.msra.mxu0 0
    %869 = vmatpush.bf16.msra.mxu0 0
    %870 = vmatpush.bf16.msra.mxu0 0
    %871 = vmatpush.bf16.msra.mxu0 0
    %872 = vmatpush.bf16.msra.mxu0 0
    %873 = vmatpush.bf16.msra.mxu0 0
    %874 = vmatpush.bf16.msra.mxu0 %v816
    %875 = vmatpush.bf16.msra.mxu0 %v800
    %876 = vmatmul.bf16.gmra.mxu0 %v866
    %v877 = vpop.f32.mrf.mxu0
    %v878 = vadd.f32 %v660, %v877
    %v879 = vpop.f32.mrf.mxu0
    %880 = vdwg.mxu0
    %881 = vmatpush.bf16.msra.mxu0 0
    %882 = vmatpush.bf16.msra.mxu0 0
    %883 = vmatpush.bf16.msra.mxu0 0
    %884 = vmatpush.bf16.msra.mxu0 0
    %885 = vmatpush.bf16.msra.mxu0 0
    %886 = vmatpush.bf16.msra.mxu0 0
    %887 = vmatpush.bf16.msra.mxu0 %v817
    %888 = vmatpush.bf16.msra.mxu0 %v801
    %889 = vmatmul.bf16.gmra.mxu0 %v866
    %v890 = vpop.f32.mrf.mxu0
    %v891 = vadd.f32 %v661, %v890
    %v892 = vpop.f32.mrf.mxu0
    %893 = vdwg.mxu0
    %894 = vmatpush.bf16.msra.mxu0 0
    %895 = vmatpush.bf16.msra.mxu0 0
    %896 = vmatpush.bf16.msra.mxu0 0
    %897 = vmatpush.bf16.msra.mxu0 0
    %898 = vmatpush.bf16.msra.mxu0 0
    %899 = vmatpush.bf16.msra.mxu0 0
    %900 = vmatpush.bf16.msra.mxu0 %v818
    %901 = vmatpush.bf16.msra.mxu0 %v802
    %902 = vmatmul.bf16.gmra.mxu0 %v866
    %v903 = vpop.f32.mrf.mxu0
    %v904 = vadd.f32 %v662, %v903
    %v905 = vpop.f32.mrf.mxu0
    %906 = vdwg.mxu0
    %907 = vmatpush.bf16.msra.mxu0 0
    %908 = vmatpush.bf16.msra.mxu0 0
    %909 = vmatpush.bf16.msra.mxu0 0
    %910 = vmatpush.bf16.msra.mxu0 0
    %911 = vmatpush.bf16.msra.mxu0 0
    %912 = vmatpush.bf16.msra.mxu0 0
    %913 = vmatpush.bf16.msra.mxu0 %v819
    %914 = vmatpush.bf16.msra.mxu0 %v803
    %915 = vmatmul.bf16.gmra.mxu0 %v866
    %v916 = vpop.f32.mrf.mxu0
    %v917 = vadd.f32 %v663, %v916
    %v918 = vpop.f32.mrf.mxu0
    %919 = vdwg.mxu0
    %920 = vmatpush.bf16.msra.mxu0 0
    %921 = vmatpush.bf16.msra.mxu0 0
    %922 = vmatpush.bf16.msra.mxu0 0
    %923 = vmatpush.bf16.msra.mxu0 0
    %924 = vmatpush.bf16.msra.mxu0 0
    %925 = vmatpush.bf16.msra.mxu0 0
    %926 = vmatpush.bf16.msra.mxu0 %v820
    %927 = vmatpush.bf16.msra.mxu0 %v804
    %928 = vmatmul.bf16.gmra.mxu0 %v866
    %v929 = vpop.f32.mrf.mxu0
    %v930 = vadd.f32 %v664, %v929
    %v931 = vpop.f32.mrf.mxu0
    %932 = vdwg.mxu0
    %933 = vmatpush.bf16.msra.mxu0 0
    %934 = vmatpush.bf16.msra.mxu0 0
    %935 = vmatpush.bf16.msra.mxu0 0
    %936 = vmatpush.bf16.msra.mxu0 0
    %937 = vmatpush.bf16.msra.mxu0 0
    %938 = vmatpush.bf16.msra.mxu0 0
    %939 = vmatpush.bf16.msra.mxu0 %v821
    %940 = vmatpush.bf16.msra.mxu0 %v805
    %941 = vmatmul.bf16.gmra.mxu0 %v866
    %v942 = vpop.f32.mrf.mxu0
    %v943 = vadd.f32 %v665, %v942
    %v944 = vpop.f32.mrf.mxu0
    %945 = vdwg.mxu0
    %946 = vmatpush.bf16.msra.mxu0 0
    %947 = vmatpush.bf16.msra.mxu0 0
    %948 = vmatpush.bf16.msra.mxu0 0
    %949 = vmatpush.bf16.msra.mxu0 0
    %950 = vmatpush.bf16.msra.mxu0 0
    %951 = vmatpush.bf16.msra.mxu0 0
    %952 = vmatpush.bf16.msra.mxu0 %v822
    %953 = vmatpush.bf16.msra.mxu0 %v806
    %954 = vmatmul.bf16.gmra.mxu0 %v866
    %v955 = vpop.f32.mrf.mxu0
    %v956 = vadd.f32 %v666, %v955
    %v957 = vpop.f32.mrf.mxu0
    %958 = vdwg.mxu0
    %959 = vmatpush.bf16.msra.mxu0 0
    %960 = vmatpush.bf16.msra.mxu0 0
    %961 = vmatpush.bf16.msra.mxu0 0
    %962 = vmatpush.bf16.msra.mxu0 0
    %963 = vmatpush.bf16.msra.mxu0 0
    %964 = vmatpush.bf16.msra.mxu0 0
    %965 = vmatpush.bf16.msra.mxu0 %v823
    %966 = vmatpush.bf16.msra.mxu0 %v807
    %967 = vmatmul.bf16.gmra.mxu0 %v866
    %v968 = vpop.f32.mrf.mxu0
    %v969 = vadd.f32 %v667, %v968
    %v970 = vpop.f32.mrf.mxu0
    %971 = vdwg.mxu0
    %972 = vmatpush.bf16.msra.mxu0 0
    %973 = vmatpush.bf16.msra.mxu0 0
    %974 = vmatpush.bf16.msra.mxu0 0
    %975 = vmatpush.bf16.msra.mxu0 0
    %976 = vmatpush.bf16.msra.mxu0 0
    %977 = vmatpush.bf16.msra.mxu0 0
    %978 = vmatpush.bf16.msra.mxu0 %v824
    %979 = vmatpush.bf16.msra.mxu0 %v808
    %980 = vmatmul.bf16.gmra.mxu0 %v866
    %v981 = vpop.f32.mrf.mxu0
    %v982 = vadd.f32 %v668, %v981
    %v983 = vpop.f32.mrf.mxu0
    %984 = vdwg.mxu0
    %985 = vmatpush.bf16.msra.mxu0 0
    %986 = vmatpush.bf16.msra.mxu0 0
    %987 = vmatpush.bf16.msra.mxu0 0
    %988 = vmatpush.bf16.msra.mxu0 0
    %989 = vmatpush.bf16.msra.mxu0 0
    %990 = vmatpush.bf16.msra.mxu0 0
    %991 = vmatpush.bf16.msra.mxu0 %v825
    %992 = vmatpush.bf16.msra.mxu0 %v809
    %993 = vmatmul.bf16.gmra.mxu0 %v866
    %v994 = vpop.f32.mrf.mxu0
    %v995 = vadd.f32 %v669, %v994
    %v996 = vpop.f32.mrf.mxu0
    %997 = vdwg.mxu0
    %998 = vmatpush.bf16.msra.mxu0 0
    %999 = vmatpush.bf16.msra.mxu0 0
    %1000 = vmatpush.bf16.msra.mxu0 0
    %1001 = vmatpush.bf16.msra.mxu0 0
    %1002 = vmatpush.bf16.msra.mxu0 0
    %1003 = vmatpush.bf16.msra.mxu0 0
    %1004 = vmatpush.bf16.msra.mxu0 %v826
    %1005 = vmatpush.bf16.msra.mxu0 %v810
    %1006 = vmatmul.bf16.gmra.mxu0 %v866
    %v1007 = vpop.f32.mrf.mxu0
    %v1008 = vadd.f32 %v670, %v1007
    %v1009 = vpop.f32.mrf.mxu0
    %1010 = vdwg.mxu0
    %1011 = vmatpush.bf16.msra.mxu0 0
    %1012 = vmatpush.bf16.msra.mxu0 0
    %1013 = vmatpush.bf16.msra.mxu0 0
    %1014 = vmatpush.bf16.msra.mxu0 0
    %1015 = vmatpush.bf16.msra.mxu0 0
    %1016 = vmatpush.bf16.msra.mxu0 0
    %1017 = vmatpush.bf16.msra.mxu0 %v827
    %1018 = vmatpush.bf16.msra.mxu0 %v811
    %1019 = vmatmul.bf16.gmra.mxu0 %v866
    %v1020 = vpop.f32.mrf.mxu0
    %v1021 = vadd.f32 %v671, %v1020
    %v1022 = vpop.f32.mrf.mxu0
    %1023 = vdwg.mxu0
    %1024 = vmatpush.bf16.msra.mxu0 0
    %1025 = vmatpush.bf16.msra.mxu0 0
    %1026 = vmatpush.bf16.msra.mxu0 0
    %1027 = vmatpush.bf16.msra.mxu0 0
    %1028 = vmatpush.bf16.msra.mxu0 0
    %1029 = vmatpush.bf16.msra.mxu0 0
    %1030 = vmatpush.bf16.msra.mxu0 %v828
    %1031 = vmatpush.bf16.msra.mxu0 %v812
    %1032 = vmatmul.bf16.gmra.mxu0 %v866
    %v1033 = vpop.f32.mrf.mxu0
    %v1034 = vadd.f32 %v672, %v1033
    %v1035 = vpop.f32.mrf.mxu0
    %1036 = vdwg.mxu0
    %1037 = vmatpush.bf16.msra.mxu0 0
    %1038 = vmatpush.bf16.msra.mxu0 0
    %1039 = vmatpush.bf16.msra.mxu0 0
    %1040 = vmatpush.bf16.msra.mxu0 0
    %1041 = vmatpush.bf16.msra.mxu0 0
    %1042 = vmatpush.bf16.msra.mxu0 0
    %1043 = vmatpush.bf16.msra.mxu0 %v829
    %1044 = vmatpush.bf16.msra.mxu0 %v813
    %1045 = vmatmul.bf16.gmra.mxu0 %v866
    %v1046 = vpop.f32.mrf.mxu0
    %v1047 = vadd.f32 %v673, %v1046
    %v1048 = vpop.f32.mrf.mxu0
    %1049 = vdwg.mxu0
    %1050 = vmatpush.bf16.msra.mxu0 0
    %1051 = vmatpush.bf16.msra.mxu0 0
    %1052 = vmatpush.bf16.msra.mxu0 0
    %1053 = vmatpush.bf16.msra.mxu0 0
    %1054 = vmatpush.bf16.msra.mxu0 0
    %1055 = vmatpush.bf16.msra.mxu0 0
    %1056 = vmatpush.bf16.msra.mxu0 %v830
    %1057 = vmatpush.bf16.msra.mxu0 %v814
    %1058 = vmatmul.bf16.gmra.mxu0 %v866
    %v1059 = vpop.f32.mrf.mxu0
    %v1060 = vadd.f32 %v674, %v1059
    %v1061 = vpop.f32.mrf.mxu0
    %1062 = vdwg.mxu0
    %1063 = vmatpush.bf16.msra.mxu0 0
    %1064 = vmatpush.bf16.msra.mxu0 0
    %1065 = vmatpush.bf16.msra.mxu0 0
    %1066 = vmatpush.bf16.msra.mxu0 0
    %1067 = vmatpush.bf16.msra.mxu0 0
    %1068 = vmatpush.bf16.msra.mxu0 0
    %1069 = vmatpush.bf16.msra.mxu0 %v831
    %1070 = vmatpush.bf16.msra.mxu0 %v815
    %1071 = vmatmul.bf16.gmra.mxu0 %v866
    %v1072 = vpop.f32.mrf.mxu0
    %v1073 = vadd.f32 %v675, %v1072
    %v1074 = vpop.f32.mrf.mxu0
    %1075 = vdwg.mxu0
    %v1076 = vxor.u32 %v878, 2147483648
    %v1077 = vxor.u32 %v891, 2147483648
    %v1078 = vxor.u32 %v904, 2147483648
    %v1079 = vxor.u32 %v917, 2147483648
    %v1080 = vmul.f32 %v1076, 1.442695
    %v1081 = vpow.pop %v1080
    %v1082 = vmul.f32 %v1077, 1.442695
    %v1083 = vpow.pop %v1082
    %v1084 = vmul.f32 %v1078, 1.442695
    %v1085 = vpow.pop %v1084
    %v1086 = vmul.f32 %v1079, 1.442695
    %v1087 = vpow.pop %v1086
    %v1088 = vadd.f32 %v1081, 1.0
    %v1089 = vadd.f32 %v1083, 1.0
    %v1090 = vadd.f32 %v1085, 1.0
    %v1091 = vadd.f32 %v1087, 1.0
    %v1092 = vrcp.pop %v1088
    %v1093 = vmul.f32 %v1088, %v1092
    %v1094 = vsub.f32 1.0, %v1093
    %v1095 = vmul.f32 %v1092, %v1094
    %v1096 = vadd.f32 %v1092, %v1095
    %vm1097 = vweird.f32 %v1088
    %vm1098 = vweird.f32 %v1092
    %vm1099 = vmor %vm1097, %vm1098
    %v1100 = vsel %vm1099, %v1092, %v1096
    %v1101 = vand.u32 2147483647, %v1088
    %vm1102 = vcmp.eq.f32.partialorder %v1101, 8.507059e+37
    %v1103 = vand.u32 %v1088, 2147483648
    %v1104 = vor.u32 1.1754944e-38, %v1103
    %v1105 = vsel %vm1102, %v1104, %v1100
    %v1106 = vmul.f32 1.0, %v1105
    %v1107 = vrcp.pop %v1089
    %v1108 = vmul.f32 %v1089, %v1107
    %v1109 = vsub.f32 1.0, %v1108
    %v1110 = vmul.f32 %v1107, %v1109
    %v1111 = vadd.f32 %v1107, %v1110
    %vm1112 = vweird.f32 %v1089
    %vm1113 = vweird.f32 %v1107
    %vm1114 = vmor %vm1112, %vm1113
    %v1115 = vsel %vm1114, %v1107, %v1111
    %v1116 = vand.u32 2147483647, %v1089
    %vm1117 = vcmp.eq.f32.partialorder %v1116, 8.507059e+37
    %v1118 = vand.u32 %v1089, 2147483648
    %v1119 = vor.u32 1.1754944e-38, %v1118
    %v1120 = vsel %vm1117, %v1119, %v1115
    %v1121 = vmul.f32 1.0, %v1120
    %v1122 = vrcp.pop %v1090
    %v1123 = vmul.f32 %v1090, %v1122
    %v1124 = vsub.f32 1.0, %v1123
    %v1125 = vmul.f32 %v1122, %v1124
    %v1126 = vadd.f32 %v1122, %v1125
    %vm1127 = vweird.f32 %v1090
    %vm1128 = vweird.f32 %v1122
    %vm1129 = vmor %vm1127, %vm1128
    %v1130 = vsel %vm1129, %v1122, %v1126
    %v1131 = vand.u32 2147483647, %v1090
    %vm1132 = vcmp.eq.f32.partialorder %v1131, 8.507059e+37
    %v1133 = vand.u32 %v1090, 2147483648
    %v1134 = vor.u32 1.1754944e-38, %v1133
    %v1135 = vsel %vm1132, %v1134, %v1130
    %v1136 = vmul.f32 1.0, %v1135
    %v1137 = vrcp.pop %v1091
    %v1138 = vmul.f32 %v1091, %v1137
    %v1139 = vsub.f32 1.0, %v1138
    %v1140 = vmul.f32 %v1137, %v1139
    %v1141 = vadd.f32 %v1137, %v1140
    %vm1142 = vweird.f32 %v1091
    %vm1143 = vweird.f32 %v1137
    %vm1144 = vmor %vm1142, %vm1143
    %v1145 = vsel %vm1144, %v1137, %v1141
    %v1146 = vand.u32 2147483647, %v1091
    %vm1147 = vcmp.eq.f32.partialorder %v1146, 8.507059e+37
    %v1148 = vand.u32 %v1091, 2147483648
    %v1149 = vor.u32 1.1754944e-38, %v1148
    %v1150 = vsel %vm1147, %v1149, %v1145
    %v1151 = vmul.f32 1.0, %v1150
    %v1152 = vxor.u32 %v930, 2147483648
    %v1153 = vxor.u32 %v943, 2147483648
    %v1154 = vxor.u32 %v956, 2147483648
    %v1155 = vxor.u32 %v969, 2147483648
    %v1156 = vmul.f32 %v1152, 1.442695
    %v1157 = vpow.pop %v1156
    %v1158 = vmul.f32 %v1153, 1.442695
    %v1159 = vpow.pop %v1158
    %v1160 = vmul.f32 %v1154, 1.442695
    %v1161 = vpow.pop %v1160
    %v1162 = vmul.f32 %v1155, 1.442695
    %v1163 = vpow.pop %v1162
    %v1164 = vadd.f32 %v1157, 1.0
    %v1165 = vadd.f32 %v1159, 1.0
    %v1166 = vadd.f32 %v1161, 1.0
    %v1167 = vadd.f32 %v1163, 1.0
    %v1168 = vrcp.pop %v1164
    %v1169 = vmul.f32 %v1164, %v1168
    %v1170 = vsub.f32 1.0, %v1169
    %v1171 = vmul.f32 %v1168, %v1170
    %v1172 = vadd.f32 %v1168, %v1171
    %vm1173 = vweird.f32 %v1164
    %vm1174 = vweird.f32 %v1168
    %vm1175 = vmor %vm1173, %vm1174
    %v1176 = vsel %vm1175, %v1168, %v1172
    %v1177 = vand.u32 2147483647, %v1164
    %vm1178 = vcmp.eq.f32.partialorder %v1177, 8.507059e+37
    %v1179 = vand.u32 %v1164, 2147483648
    %v1180 = vor.u32 1.1754944e-38, %v1179
    %v1181 = vsel %vm1178, %v1180, %v1176
    %v1182 = vmul.f32 1.0, %v1181
    %v1183 = vrcp.pop %v1165
    %v1184 = vmul.f32 %v1165, %v1183
    %v1185 = vsub.f32 1.0, %v1184
    %v1186 = vmul.f32 %v1183, %v1185
    %v1187 = vadd.f32 %v1183, %v1186
    %vm1188 = vweird.f32 %v1165
    %vm1189 = vweird.f32 %v1183
    %vm1190 = vmor %vm1188, %vm1189
    %v1191 = vsel %vm1190, %v1183, %v1187
    %v1192 = vand.u32 2147483647, %v1165
    %vm1193 = vcmp.eq.f32.partialorder %v1192, 8.507059e+37
    %v1194 = vand.u32 %v1165, 2147483648
    %v1195 = vor.u32 1.1754944e-38, %v1194
    %v1196 = vsel %vm1193, %v1195, %v1191
    %v1197 = vmul.f32 1.0, %v1196
    %v1198 = vrcp.pop %v1166
    %v1199 = vmul.f32 %v1166, %v1198
    %v1200 = vsub.f32 1.0, %v1199
    %v1201 = vmul.f32 %v1198, %v1200
    %v1202 = vadd.f32 %v1198, %v1201
    %vm1203 = vweird.f32 %v1166
    %vm1204 = vweird.f32 %v1198
    %vm1205 = vmor %vm1203, %vm1204
    %v1206 = vsel %vm1205, %v1198, %v1202
    %v1207 = vand.u32 2147483647, %v1166
    %vm1208 = vcmp.eq.f32.partialorder %v1207, 8.507059e+37
    %v1209 = vand.u32 %v1166, 2147483648
    %v1210 = vor.u32 1.1754944e-38, %v1209
    %v1211 = vsel %vm1208, %v1210, %v1206
    %v1212 = vmul.f32 1.0, %v1211
    %v1213 = vrcp.pop %v1167
    %v1214 = vmul.f32 %v1167, %v1213
    %v1215 = vsub.f32 1.0, %v1214
    %v1216 = vmul.f32 %v1213, %v1215
    %v1217 = vadd.f32 %v1213, %v1216
    %vm1218 = vweird.f32 %v1167
    %vm1219 = vweird.f32 %v1213
    %vm1220 = vmor %vm1218, %vm1219
    %v1221 = vsel %vm1220, %v1213, %v1217
    %v1222 = vand.u32 2147483647, %v1167
    %vm1223 = vcmp.eq.f32.partialorder %v1222, 8.507059e+37
    %v1224 = vand.u32 %v1167, 2147483648
    %v1225 = vor.u32 1.1754944e-38, %v1224
    %v1226 = vsel %vm1223, %v1225, %v1221
    %v1227 = vmul.f32 1.0, %v1226
    %v1228 = vtanh.pop %v982
    %v1229 = vtanh.pop %v995
    %v1230 = vtanh.pop %v1008
    %v1231 = vtanh.pop %v1021
    %v1232 = vxor.u32 %v1034, 2147483648
    %v1233 = vxor.u32 %v1047, 2147483648
    %v1234 = vxor.u32 %v1060, 2147483648
    %v1235 = vxor.u32 %v1073, 2147483648
    %v1236 = vmul.f32 %v1232, 1.442695
    %v1237 = vpow.pop %v1236
    %v1238 = vmul.f32 %v1233, 1.442695
    %v1239 = vpow.pop %v1238
    %v1240 = vmul.f32 %v1234, 1.442695
    %v1241 = vpow.pop %v1240
    %v1242 = vmul.f32 %v1235, 1.442695
    %v1243 = vpow.pop %v1242
    %v1244 = vadd.f32 %v1237, 1.0
    %v1245 = vadd.f32 %v1239, 1.0
    %v1246 = vadd.f32 %v1241, 1.0
    %v1247 = vadd.f32 %v1243, 1.0
    %v1248 = vrcp.pop %v1244
    %v1249 = vmul.f32 %v1244, %v1248
    %v1250 = vsub.f32 1.0, %v1249
    %v1251 = vmul.f32 %v1248, %v1250
    %v1252 = vadd.f32 %v1248, %v1251
    %vm1253 = vweird.f32 %v1244
    %vm1254 = vweird.f32 %v1248
    %vm1255 = vmor %vm1253, %vm1254
    %v1256 = vsel %vm1255, %v1248, %v1252
    %v1257 = vand.u32 2147483647, %v1244
    %vm1258 = vcmp.eq.f32.partialorder %v1257, 8.507059e+37
    %v1259 = vand.u32 %v1244, 2147483648
    %v1260 = vor.u32 1.1754944e-38, %v1259
    %v1261 = vsel %vm1258, %v1260, %v1256
    %v1262 = vmul.f32 1.0, %v1261
    %v1263 = vrcp.pop %v1245
    %v1264 = vmul.f32 %v1245, %v1263
    %v1265 = vsub.f32 1.0, %v1264
    %v1266 = vmul.f32 %v1263, %v1265
    %v1267 = vadd.f32 %v1263, %v1266
    %vm1268 = vweird.f32 %v1245
    %vm1269 = vweird.f32 %v1263
    %vm1270 = vmor %vm1268, %vm1269
    %v1271 = vsel %vm1270, %v1263, %v1267
    %v1272 = vand.u32 2147483647, %v1245
    %vm1273 = vcmp.eq.f32.partialorder %v1272, 8.507059e+37
    %v1274 = vand.u32 %v1245, 2147483648
    %v1275 = vor.u32 1.1754944e-38, %v1274
    %v1276 = vsel %vm1273, %v1275, %v1271
    %v1277 = vmul.f32 1.0, %v1276
    %v1278 = vrcp.pop %v1246
    %v1279 = vmul.f32 %v1246, %v1278
    %v1280 = vsub.f32 1.0, %v1279
    %v1281 = vmul.f32 %v1278, %v1280
    %v1282 = vadd.f32 %v1278, %v1281
    %vm1283 = vweird.f32 %v1246
    %vm1284 = vweird.f32 %v1278
    %vm1285 = vmor %vm1283, %vm1284
    %v1286 = vsel %vm1285, %v1278, %v1282
    %v1287 = vand.u32 2147483647, %v1246
    %vm1288 = vcmp.eq.f32.partialorder %v1287, 8.507059e+37
    %v1289 = vand.u32 %v1246, 2147483648
    %v1290 = vor.u32 1.1754944e-38, %v1289
    %v1291 = vsel %vm1288, %v1290, %v1286
    %v1292 = vmul.f32 1.0, %v1291
    %v1293 = vrcp.pop %v1247
    %v1294 = vmul.f32 %v1247, %v1293
    %v1295 = vsub.f32 1.0, %v1294
    %v1296 = vmul.f32 %v1293, %v1295
    %v1297 = vadd.f32 %v1293, %v1296
    %vm1298 = vweird.f32 %v1247
    %vm1299 = vweird.f32 %v1293
    %vm1300 = vmor %vm1298, %vm1299
    %v1301 = vsel %vm1300, %v1293, %v1297
    %v1302 = vand.u32 2147483647, %v1247
    %vm1303 = vcmp.eq.f32.partialorder %v1302, 8.507059e+37
    %v1304 = vand.u32 %v1247, 2147483648
    %v1305 = vor.u32 1.1754944e-38, %v1304
    %v1306 = vsel %vm1303, %v1305, %v1301
    %v1307 = vmul.f32 1.0, %v1306
    %v1308 = vmul.f32 %v1182, 0.0
    %v1309 = vmul.f32 %v1197, 0.0
    %v1310 = vmul.f32 %v1212, 0.0
    %v1311 = vmul.f32 %v1227, 0.0
    %v1312 = vmul.f32 %v1106, %v1228
    %v1313 = vmul.f32 %v1121, %v1229
    %v1314 = vmul.f32 %v1136, %v1230
    %v1315 = vmul.f32 %v1151, %v1231
    %v1316 = vadd.f32 %v1308, %v1312
    %v1317 = vadd.f32 %v1309, %v1313
    %v1318 = vadd.f32 %v1310, %v1314
    %v1319 = vadd.f32 %v1311, %v1315
    %v1320 = vtanh.pop %v1316
    %v1321 = vtanh.pop %v1317
    %v1322 = vtanh.pop %v1318
    %v1323 = vtanh.pop %v1319
    %v1324 = vmul.f32 %v1262, %v1320
    %v1325 = vmul.f32 %v1277, %v1321
    %v1326 = vmul.f32 %v1292, %v1322
    %v1327 = vmul.f32 %v1307, %v1323
    %v1328 = vrot.slane %v698, 1
    %v1329 = vsel %vm701, %v699, %v1328
    %v1330 = vpack.c.b16 %v1329, %v1329
    %v1332 = vsel %vm864, %v1330, 0
    %1334 = vmatpush.bf16.msra.mxu0 0
    %1335 = vmatpush.bf16.msra.mxu0 0
    %1336 = vmatpush.bf16.msra.mxu0 0
    %1337 = vmatpush.bf16.msra.mxu0 0
    %1338 = vmatpush.bf16.msra.mxu0 0
    %1339 = vmatpush.bf16.msra.mxu0 0
    %1340 = vmatpush.bf16.msra.mxu0 %v816
    %1341 = vmatpush.bf16.msra.mxu0 %v800
    %1342 = vmatmul.bf16.gmra.mxu0 %v1332
    %v1343 = vpop.f32.mrf.mxu0
    %v1344 = vadd.f32 %v660, %v1343
    %v1345 = vpop.f32.mrf.mxu0
    %1346 = vdwg.mxu0
    %1347 = vmatpush.bf16.msra.mxu0 0
    %1348 = vmatpush.bf16.msra.mxu0 0
    %1349 = vmatpush.bf16.msra.mxu0 0
    %1350 = vmatpush.bf16.msra.mxu0 0
    %1351 = vmatpush.bf16.msra.mxu0 0
    %1352 = vmatpush.bf16.msra.mxu0 0
    %1353 = vmatpush.bf16.msra.mxu0 %v817
    %1354 = vmatpush.bf16.msra.mxu0 %v801
    %1355 = vmatmul.bf16.gmra.mxu0 %v1332
    %v1356 = vpop.f32.mrf.mxu0
    %v1357 = vadd.f32 %v661, %v1356
    %v1358 = vpop.f32.mrf.mxu0
    %1359 = vdwg.mxu0
    %1360 = vmatpush.bf16.msra.mxu0 0
    %1361 = vmatpush.bf16.msra.mxu0 0
    %1362 = vmatpush.bf16.msra.mxu0 0
    %1363 = vmatpush.bf16.msra.mxu0 0
    %1364 = vmatpush.bf16.msra.mxu0 0
    %1365 = vmatpush.bf16.msra.mxu0 0
    %1366 = vmatpush.bf16.msra.mxu0 %v818
    %1367 = vmatpush.bf16.msra.mxu0 %v802
    %1368 = vmatmul.bf16.gmra.mxu0 %v1332
    %v1369 = vpop.f32.mrf.mxu0
    %v1370 = vadd.f32 %v662, %v1369
    %v1371 = vpop.f32.mrf.mxu0
    %1372 = vdwg.mxu0
    %1373 = vmatpush.bf16.msra.mxu0 0
    %1374 = vmatpush.bf16.msra.mxu0 0
    %1375 = vmatpush.bf16.msra.mxu0 0
    %1376 = vmatpush.bf16.msra.mxu0 0
    %1377 = vmatpush.bf16.msra.mxu0 0
    %1378 = vmatpush.bf16.msra.mxu0 0
    %1379 = vmatpush.bf16.msra.mxu0 %v819
    %1380 = vmatpush.bf16.msra.mxu0 %v803
    %1381 = vmatmul.bf16.gmra.mxu0 %v1332
    %v1382 = vpop.f32.mrf.mxu0
    %v1383 = vadd.f32 %v663, %v1382
    %v1384 = vpop.f32.mrf.mxu0
    %1385 = vdwg.mxu0
    %1386 = vmatpush.bf16.msra.mxu0 0
    %1387 = vmatpush.bf16.msra.mxu0 0
    %1388 = vmatpush.bf16.msra.mxu0 0
    %1389 = vmatpush.bf16.msra.mxu0 0
    %1390 = vmatpush.bf16.msra.mxu0 0
    %1391 = vmatpush.bf16.msra.mxu0 0
    %1392 = vmatpush.bf16.msra.mxu0 %v820
    %1393 = vmatpush.bf16.msra.mxu0 %v804
    %1394 = vmatmul.bf16.gmra.mxu0 %v1332
    %v1395 = vpop.f32.mrf.mxu0
    %v1396 = vadd.f32 %v664, %v1395
    %v1397 = vpop.f32.mrf.mxu0
    %1398 = vdwg.mxu0
    %1399 = vmatpush.bf16.msra.mxu0 0
    %1400 = vmatpush.bf16.msra.mxu0 0
    %1401 = vmatpush.bf16.msra.mxu0 0
    %1402 = vmatpush.bf16.msra.mxu0 0
    %1403 = vmatpush.bf16.msra.mxu0 0
    %1404 = vmatpush.bf16.msra.mxu0 0
    %1405 = vmatpush.bf16.msra.mxu0 %v821
    %1406 = vmatpush.bf16.msra.mxu0 %v805
    %1407 = vmatmul.bf16.gmra.mxu0 %v1332
    %v1408 = vpop.f32.mrf.mxu0
    %v1409 = vadd.f32 %v665, %v1408
    %v1410 = vpop.f32.mrf.mxu0
    %1411 = vdwg.mxu0
    %1412 = vmatpush.bf16.msra.mxu0 0
    %1413 = vmatpush.bf16.msra.mxu0 0
    %1414 = vmatpush.bf16.msra.mxu0 0
    %1415 = vmatpush.bf16.msra.mxu0 0
    %1416 = vmatpush.bf16.msra.mxu0 0
    %1417 = vmatpush.bf16.msra.mxu0 0
    %1418 = vmatpush.bf16.msra.mxu0 %v822
    %1419 = vmatpush.bf16.msra.mxu0 %v806
    %1420 = vmatmul.bf16.gmra.mxu0 %v1332
    %v1421 = vpop.f32.mrf.mxu0
    %v1422 = vadd.f32 %v666, %v1421
    %v1423 = vpop.f32.mrf.mxu0
    %1424 = vdwg.mxu0
    %1425 = vmatpush.bf16.msra.mxu0 0
    %1426 = vmatpush.bf16.msra.mxu0 0
    %1427 = vmatpush.bf16.msra.mxu0 0
    %1428 = vmatpush.bf16.msra.mxu0 0
    %1429 = vmatpush.bf16.msra.mxu0 0
    %1430 = vmatpush.bf16.msra.mxu0 0
    %1431 = vmatpush.bf16.msra.mxu0 %v823
    %1432 = vmatpush.bf16.msra.mxu0 %v807
    %1433 = vmatmul.bf16.gmra.mxu0 %v1332
    %v1434 = vpop.f32.mrf.mxu0
    %v1435 = vadd.f32 %v667, %v1434
    %v1436 = vpop.f32.mrf.mxu0
    %1437 = vdwg.mxu0
    %1438 = vmatpush.bf16.msra.mxu0 0
    %1439 = vmatpush.bf16.msra.mxu0 0
    %1440 = vmatpush.bf16.msra.mxu0 0
    %1441 = vmatpush.bf16.msra.mxu0 0
    %1442 = vmatpush.bf16.msra.mxu0 0
    %1443 = vmatpush.bf16.msra.mxu0 0
    %1444 = vmatpush.bf16.msra.mxu0 %v824
    %1445 = vmatpush.bf16.msra.mxu0 %v808
    %1446 = vmatmul.bf16.gmra.mxu0 %v1332
    %v1447 = vpop.f32.mrf.mxu0
    %v1448 = vadd.f32 %v668, %v1447
    %v1449 = vpop.f32.mrf.mxu0
    %1450 = vdwg.mxu0
    %1451 = vmatpush.bf16.msra.mxu0 0
    %1452 = vmatpush.bf16.msra.mxu0 0
    %1453 = vmatpush.bf16.msra.mxu0 0
    %1454 = vmatpush.bf16.msra.mxu0 0
    %1455 = vmatpush.bf16.msra.mxu0 0
    %1456 = vmatpush.bf16.msra.mxu0 0
    %1457 = vmatpush.bf16.msra.mxu0 %v825
    %1458 = vmatpush.bf16.msra.mxu0 %v809
    %1459 = vmatmul.bf16.gmra.mxu0 %v1332
    %v1460 = vpop.f32.mrf.mxu0
    %v1461 = vadd.f32 %v669, %v1460
    %v1462 = vpop.f32.mrf.mxu0
    %1463 = vdwg.mxu0
    %1464 = vmatpush.bf16.msra.mxu0 0
    %1465 = vmatpush.bf16.msra.mxu0 0
    %1466 = vmatpush.bf16.msra.mxu0 0
    %1467 = vmatpush.bf16.msra.mxu0 0
    %1468 = vmatpush.bf16.msra.mxu0 0
    %1469 = vmatpush.bf16.msra.mxu0 0
    %1470 = vmatpush.bf16.msra.mxu0 %v826
    %1471 = vmatpush.bf16.msra.mxu0 %v810
    %1472 = vmatmul.bf16.gmra.mxu0 %v1332
    %v1473 = vpop.f32.mrf.mxu0
    %v1474 = vadd.f32 %v670, %v1473
    %v1475 = vpop.f32.mrf.mxu0
    %1476 = vdwg.mxu0
    %1477 = vmatpush.bf16.msra.mxu0 0
    %1478 = vmatpush.bf16.msra.mxu0 0
    %1479 = vmatpush.bf16.msra.mxu0 0
    %1480 = vmatpush.bf16.msra.mxu0 0
    %1481 = vmatpush.bf16.msra.mxu0 0
    %1482 = vmatpush.bf16.msra.mxu0 0
    %1483 = vmatpush.bf16.msra.mxu0 %v827
    %1484 = vmatpush.bf16.msra.mxu0 %v811
    %1485 = vmatmul.bf16.gmra.mxu0 %v1332
    %v1486 = vpop.f32.mrf.mxu0
    %v1487 = vadd.f32 %v671, %v1486
    %v1488 = vpop.f32.mrf.mxu0
    %1489 = vdwg.mxu0
    %1490 = vmatpush.bf16.msra.mxu0 0
    %1491 = vmatpush.bf16.msra.mxu0 0
    %1492 = vmatpush.bf16.msra.mxu0 0
    %1493 = vmatpush.bf16.msra.mxu0 0
    %1494 = vmatpush.bf16.msra.mxu0 0
    %1495 = vmatpush.bf16.msra.mxu0 0
    %1496 = vmatpush.bf16.msra.mxu0 %v828
    %1497 = vmatpush.bf16.msra.mxu0 %v812
    %1498 = vmatmul.bf16.gmra.mxu0 %v1332
    %v1499 = vpop.f32.mrf.mxu0
    %v1500 = vadd.f32 %v672, %v1499
    %v1501 = vpop.f32.mrf.mxu0
    %1502 = vdwg.mxu0
    %1503 = vmatpush.bf16.msra.mxu0 0
    %1504 = vmatpush.bf16.msra.mxu0 0
    %1505 = vmatpush.bf16.msra.mxu0 0
    %1506 = vmatpush.bf16.msra.mxu0 0
    %1507 = vmatpush.bf16.msra.mxu0 0
    %1508 = vmatpush.bf16.msra.mxu0 0
    %1509 = vmatpush.bf16.msra.mxu0 %v829
    %1510 = vmatpush.bf16.msra.mxu0 %v813
    %1511 = vmatmul.bf16.gmra.mxu0 %v1332
    %v1512 = vpop.f32.mrf.mxu0
    %v1513 = vadd.f32 %v673, %v1512
    %v1514 = vpop.f32.mrf.mxu0
    %1515 = vdwg.mxu0
    %1516 = vmatpush.bf16.msra.mxu0 0
    %1517 = vmatpush.bf16.msra.mxu0 0
    %1518 = vmatpush.bf16.msra.mxu0 0
    %1519 = vmatpush.bf16.msra.mxu0 0
    %1520 = vmatpush.bf16.msra.mxu0 0
    %1521 = vmatpush.bf16.msra.mxu0 0
    %1522 = vmatpush.bf16.msra.mxu0 %v830
    %1523 = vmatpush.bf16.msra.mxu0 %v814
    %1524 = vmatmul.bf16.gmra.mxu0 %v1332
    %v1525 = vpop.f32.mrf.mxu0
    %v1526 = vadd.f32 %v674, %v1525
    %v1527 = vpop.f32.mrf.mxu0
    %1528 = vdwg.mxu0
    %1529 = vmatpush.bf16.msra.mxu0 0
    %1530 = vmatpush.bf16.msra.mxu0 0
    %1531 = vmatpush.bf16.msra.mxu0 0
    %1532 = vmatpush.bf16.msra.mxu0 0
    %1533 = vmatpush.bf16.msra.mxu0 0
    %1534 = vmatpush.bf16.msra.mxu0 0
    %1535 = vmatpush.bf16.msra.mxu0 %v831
    %1536 = vmatpush.bf16.msra.mxu0 %v815
    %1537 = vmatmul.bf16.gmra.mxu0 %v1332
    %v1538 = vpop.f32.mrf.mxu0
    %v1539 = vadd.f32 %v675, %v1538
    %v1540 = vpop.f32.mrf.mxu0
    %1541 = vdwg.mxu0
    %v1542 = vpack.c.bf16 %v1324, %v1324
    %v1543 = vpack.c.bf16 %v1325, %v1325
    %v1544 = vpack.c.bf16 %v1326, %v1326
    %v1545 = vpack.c.bf16 %v1327, %v1327
    %v2058 = vunpack.c.l.b16 %v136
    %v2059 = vunpack.c.h.b16 %v136
    %v2060 = vunpack.c.l.b16 %v137
    %v2061 = vunpack.c.h.b16 %v137
    %v2062 = vunpack.c.l.b16 %v138
    %v2063 = vunpack.c.h.b16 %v138
    %v2064 = vunpack.c.l.b16 %v139
    %v2065 = vunpack.c.h.b16 %v139
    %v2066 = vunpack.c.l.b16 %v140
    %v2067 = vunpack.c.h.b16 %v140
    %v2068 = vunpack.c.l.b16 %v141
    %v2069 = vunpack.c.h.b16 %v141
    %v2070 = vunpack.c.l.b16 %v142
    %v2071 = vunpack.c.h.b16 %v142
    %v2072 = vunpack.c.l.b16 %v143
    %v2073 = vunpack.c.h.b16 %v143
    %v2074 = vunpack.c.l.b16 %v144
    %v2075 = vunpack.c.h.b16 %v144
    %v2076 = vunpack.c.l.b16 %v145
    %v2077 = vunpack.c.h.b16 %v145
    %v2078 = vunpack.c.l.b16 %v146
    %v2079 = vunpack.c.h.b16 %v146
    %v2080 = vunpack.c.l.b16 %v147
    %v2081 = vunpack.c.h.b16 %v147
    %v2082 = vunpack.c.l.b16 %v148
    %v2083 = vunpack.c.h.b16 %v148
    %v2084 = vunpack.c.l.b16 %v149
    %v2085 = vunpack.c.h.b16 %v149
    %v2086 = vunpack.c.l.b16 %v150
    %v2087 = vunpack.c.h.b16 %v150
    %v2088 = vunpack.c.l.b16 %v151
    %v2089 = vunpack.c.h.b16 %v151
    %v2090 = vunpack.c.l.b16 %v152
    %v2091 = vunpack.c.h.b16 %v152
    %v2092 = vunpack.c.l.b16 %v153
    %v2093 = vunpack.c.h.b16 %v153
    %v2094 = vunpack.c.l.b16 %v154
    %v2095 = vunpack.c.h.b16 %v154
    %v2096 = vunpack.c.l.b16 %v155
    %v2097 = vunpack.c.h.b16 %v155
    %v2098 = vunpack.c.l.b16 %v156
    %v2099 = vunpack.c.h.b16 %v156
    %v2100 = vunpack.c.l.b16 %v157
    %v2101 = vunpack.c.h.b16 %v157
    %v2102 = vunpack.c.l.b16 %v158
    %v2103 = vunpack.c.h.b16 %v158
    %v2104 = vunpack.c.l.b16 %v159
    %v2105 = vunpack.c.h.b16 %v159
    %v2106 = vunpack.c.l.b16 %v160
    %v2107 = vunpack.c.h.b16 %v160
    %v2108 = vunpack.c.l.b16 %v161
    %v2109 = vunpack.c.h.b16 %v161
    %v2110 = vunpack.c.l.b16 %v162
    %v2111 = vunpack.c.h.b16 %v162
    %v2112 = vunpack.c.l.b16 %v163
    %v2113 = vunpack.c.h.b16 %v163
    %v2114 = vunpack.c.l.b16 %v164
    %v2115 = vunpack.c.h.b16 %v164
    %v2116 = vunpack.c.l.b16 %v165
    %v2117 = vunpack.c.h.b16 %v165
    %v2118 = vunpack.c.l.b16 %v166
    %v2119 = vunpack.c.h.b16 %v166
    %v2120 = vunpack.c.l.b16 %v167
    %v2121 = vunpack.c.h.b16 %v167
    %v2122 = vunpack.c.l.b16 %v168
    %v2123 = vunpack.c.h.b16 %v168
    %v2124 = vunpack.c.l.b16 %v169
    %v2125 = vunpack.c.h.b16 %v169
    %v2126 = vunpack.c.l.b16 %v170
    %v2127 = vunpack.c.h.b16 %v170
    %v2128 = vunpack.c.l.b16 %v171
    %v2129 = vunpack.c.h.b16 %v171
    %v2130 = vunpack.c.l.b16 %v172
    %v2131 = vunpack.c.h.b16 %v172
    %v2132 = vunpack.c.l.b16 %v173
    %v2133 = vunpack.c.h.b16 %v173
    %v2134 = vunpack.c.l.b16 %v174
    %v2135 = vunpack.c.h.b16 %v174
    %v2136 = vunpack.c.l.b16 %v175
    %v2137 = vunpack.c.h.b16 %v175
    %v2138 = vunpack.c.l.b16 %v176
    %v2139 = vunpack.c.h.b16 %v176
    %v2140 = vunpack.c.l.b16 %v177
    %v2141 = vunpack.c.h.b16 %v177
    %v2142 = vunpack.c.l.b16 %v178
    %v2143 = vunpack.c.h.b16 %v178
    %v2144 = vunpack.c.l.b16 %v179
    %v2145 = vunpack.c.h.b16 %v179
    %v2146 = vunpack.c.l.b16 %v180
    %v2147 = vunpack.c.h.b16 %v180
    %v2148 = vunpack.c.l.b16 %v181
    %v2149 = vunpack.c.h.b16 %v181
    %v2150 = vunpack.c.l.b16 %v182
    %v2151 = vunpack.c.h.b16 %v182
    %v2152 = vunpack.c.l.b16 %v183
    %v2153 = vunpack.c.h.b16 %v183
    %v2154 = vunpack.c.l.b16 %v184
    %v2155 = vunpack.c.h.b16 %v184
    %v2156 = vunpack.c.l.b16 %v185
    %v2157 = vunpack.c.h.b16 %v185
    %v2158 = vunpack.c.l.b16 %v186
    %v2159 = vunpack.c.h.b16 %v186
    %v2160 = vunpack.c.l.b16 %v187
    %v2161 = vunpack.c.h.b16 %v187
    %v2162 = vunpack.c.l.b16 %v188
    %v2163 = vunpack.c.h.b16 %v188
    %v2164 = vunpack.c.l.b16 %v189
    %v2165 = vunpack.c.h.b16 %v189
    %v2166 = vunpack.c.l.b16 %v190
    %v2167 = vunpack.c.h.b16 %v190
    %v2168 = vunpack.c.l.b16 %v191
    %v2169 = vunpack.c.h.b16 %v191
    %v2170 = vunpack.c.l.b16 %v192
    %v2171 = vunpack.c.h.b16 %v192
    %v2172 = vunpack.c.l.b16 %v193
    %v2173 = vunpack.c.h.b16 %v193
    %v2174 = vunpack.c.l.b16 %v194
    %v2175 = vunpack.c.h.b16 %v194
    %v2176 = vunpack.c.l.b16 %v195
    %v2177 = vunpack.c.h.b16 %v195
    %v2178 = vunpack.c.l.b16 %v196
    %v2179 = vunpack.c.h.b16 %v196
    %v2180 = vunpack.c.l.b16 %v197
    %v2181 = vunpack.c.h.b16 %v197
    %v2182 = vunpack.c.l.b16 %v198
    %v2183 = vunpack.c.h.b16 %v198
    %v2184 = vunpack.c.l.b16 %v199
    %v2185 = vunpack.c.h.b16 %v199
    %v2186 = vunpack.c.l.b16 %v200
    %v2187 = vunpack.c.h.b16 %v200
    %v2188 = vunpack.c.l.b16 %v201
    %v2189 = vunpack.c.h.b16 %v201
    %v2190 = vunpack.c.l.b16 %v202
    %v2191 = vunpack.c.h.b16 %v202
    %v2192 = vunpack.c.l.b16 %v203
    %v2193 = vunpack.c.h.b16 %v203
    %v2194 = vunpack.c.l.b16 %v204
    %v2195 = vunpack.c.h.b16 %v204
    %v2196 = vunpack.c.l.b16 %v205
    %v2197 = vunpack.c.h.b16 %v205
    %v2198 = vunpack.c.l.b16 %v206
    %v2199 = vunpack.c.h.b16 %v206
    %v2200 = vunpack.c.l.b16 %v207
    %v2201 = vunpack.c.h.b16 %v207
    %v2202 = vunpack.c.l.b16 %v208
    %v2203 = vunpack.c.h.b16 %v208
    %v2204 = vunpack.c.l.b16 %v209
    %v2205 = vunpack.c.h.b16 %v209
    %v2206 = vunpack.c.l.b16 %v210
    %v2207 = vunpack.c.h.b16 %v210
    %v2208 = vunpack.c.l.b16 %v211
    %v2209 = vunpack.c.h.b16 %v211
    %v2210 = vunpack.c.l.b16 %v212
    %v2211 = vunpack.c.h.b16 %v212
    %v2212 = vunpack.c.l.b16 %v213
    %v2213 = vunpack.c.h.b16 %v213
    %v2214 = vunpack.c.l.b16 %v214
    %v2215 = vunpack.c.h.b16 %v214
    %v2216 = vunpack.c.l.b16 %v215
    %v2217 = vunpack.c.h.b16 %v215
    %v2218 = vunpack.c.l.b16 %v216
    %v2219 = vunpack.c.h.b16 %v216
    %v2220 = vunpack.c.l.b16 %v217
    %v2221 = vunpack.c.h.b16 %v217
    %v2222 = vunpack.c.l.b16 %v218
    %v2223 = vunpack.c.h.b16 %v218
    %v2224 = vunpack.c.l.b16 %v219
    %v2225 = vunpack.c.h.b16 %v219
    %v2226 = vunpack.c.l.b16 %v220
    %v2227 = vunpack.c.h.b16 %v220
    %v2228 = vunpack.c.l.b16 %v221
    %v2229 = vunpack.c.h.b16 %v221
    %v2230 = vunpack.c.l.b16 %v222
    %v2231 = vunpack.c.h.b16 %v222
    %v2232 = vunpack.c.l.b16 %v223
    %v2233 = vunpack.c.h.b16 %v223
    %v2234 = vunpack.c.l.b16 %v224
    %v2235 = vunpack.c.h.b16 %v224
    %v2236 = vunpack.c.l.b16 %v225
    %v2237 = vunpack.c.h.b16 %v225
    %v2238 = vunpack.c.l.b16 %v226
    %v2239 = vunpack.c.h.b16 %v226
    %v2240 = vunpack.c.l.b16 %v227
    %v2241 = vunpack.c.h.b16 %v227
    %v2242 = vunpack.c.l.b16 %v228
    %v2243 = vunpack.c.h.b16 %v228
    %v2244 = vunpack.c.l.b16 %v229
    %v2245 = vunpack.c.h.b16 %v229
    %v2246 = vunpack.c.l.b16 %v230
    %v2247 = vunpack.c.h.b16 %v230
    %v2248 = vunpack.c.l.b16 %v231
    %v2249 = vunpack.c.h.b16 %v231
    %v2250 = vunpack.c.l.b16 %v232
    %v2251 = vunpack.c.h.b16 %v232
    %v2252 = vunpack.c.l.b16 %v233
    %v2253 = vunpack.c.h.b16 %v233
    %v2254 = vunpack.c.l.b16 %v234
    %v2255 = vunpack.c.h.b16 %v234
    %v2256 = vunpack.c.l.b16 %v235
    %v2257 = vunpack.c.h.b16 %v235
    %v2258 = vunpack.c.l.b16 %v236
    %v2259 = vunpack.c.h.b16 %v236
    %v2260 = vunpack.c.l.b16 %v237
    %v2261 = vunpack.c.h.b16 %v237
    %v2262 = vunpack.c.l.b16 %v238
    %v2263 = vunpack.c.h.b16 %v238
    %v2264 = vunpack.c.l.b16 %v239
    %v2265 = vunpack.c.h.b16 %v239
    %v2266 = vunpack.c.l.b16 %v240
    %v2267 = vunpack.c.h.b16 %v240
    %v2268 = vunpack.c.l.b16 %v241
    %v2269 = vunpack.c.h.b16 %v241
    %v2270 = vunpack.c.l.b16 %v242
    %v2271 = vunpack.c.h.b16 %v242
    %v2272 = vunpack.c.l.b16 %v243
    %v2273 = vunpack.c.h.b16 %v243
    %v2274 = vunpack.c.l.b16 %v244
    %v2275 = vunpack.c.h.b16 %v244
    %v2276 = vunpack.c.l.b16 %v245
    %v2277 = vunpack.c.h.b16 %v245
    %v2278 = vunpack.c.l.b16 %v246
    %v2279 = vunpack.c.h.b16 %v246
    %v2280 = vunpack.c.l.b16 %v247
    %v2281 = vunpack.c.h.b16 %v247
    %v2282 = vunpack.c.l.b16 %v248
    %v2283 = vunpack.c.h.b16 %v248
    %v2284 = vunpack.c.l.b16 %v249
    %v2285 = vunpack.c.h.b16 %v249
    %v2286 = vunpack.c.l.b16 %v250
    %v2287 = vunpack.c.h.b16 %v250
    %v2288 = vunpack.c.l.b16 %v251
    %v2289 = vunpack.c.h.b16 %v251
    %v2290 = vunpack.c.l.b16 %v252
    %v2291 = vunpack.c.h.b16 %v252
    %v2292 = vunpack.c.l.b16 %v253
    %v2293 = vunpack.c.h.b16 %v253
    %v2294 = vunpack.c.l.b16 %v254
    %v2295 = vunpack.c.h.b16 %v254
    %v2296 = vunpack.c.l.b16 %v255
    %v2297 = vunpack.c.h.b16 %v255
    %v2298 = vunpack.c.l.b16 %v256
    %v2299 = vunpack.c.h.b16 %v256
    %v2300 = vunpack.c.l.b16 %v257
    %v2301 = vunpack.c.h.b16 %v257
    %v2302 = vunpack.c.l.b16 %v258
    %v2303 = vunpack.c.h.b16 %v258
    %v2304 = vunpack.c.l.b16 %v259
    %v2305 = vunpack.c.h.b16 %v259
    %v2306 = vunpack.c.l.b16 %v260
    %v2307 = vunpack.c.h.b16 %v260
    %v2308 = vunpack.c.l.b16 %v261
    %v2309 = vunpack.c.h.b16 %v261
    %v2310 = vunpack.c.l.b16 %v262
    %v2311 = vunpack.c.h.b16 %v262
    %v2312 = vunpack.c.l.b16 %v263
    %v2313 = vunpack.c.h.b16 %v263
    %v2314 = vunpack.c.l.b16 %v264
    %v2315 = vunpack.c.h.b16 %v264
    %v2316 = vunpack.c.l.b16 %v265
    %v2317 = vunpack.c.h.b16 %v265
    %v2318 = vunpack.c.l.b16 %v266
    %v2319 = vunpack.c.h.b16 %v266
    %v2320 = vunpack.c.l.b16 %v267
    %v2321 = vunpack.c.h.b16 %v267
    %v2322 = vunpack.c.l.b16 %v268
    %v2323 = vunpack.c.h.b16 %v268
    %v2324 = vunpack.c.l.b16 %v269
    %v2325 = vunpack.c.h.b16 %v269
    %v2326 = vunpack.c.l.b16 %v270
    %v2327 = vunpack.c.h.b16 %v270
    %v2328 = vunpack.c.l.b16 %v271
    %v2329 = vunpack.c.h.b16 %v271
    %v2330 = vunpack.c.l.b16 %v272
    %v2331 = vunpack.c.h.b16 %v272
    %v2332 = vunpack.c.l.b16 %v273
    %v2333 = vunpack.c.h.b16 %v273
    %v2334 = vunpack.c.l.b16 %v274
    %v2335 = vunpack.c.h.b16 %v274
    %v2336 = vunpack.c.l.b16 %v275
    %v2337 = vunpack.c.h.b16 %v275
    %v2338 = vunpack.c.l.b16 %v276
    %v2339 = vunpack.c.h.b16 %v276
    %v2340 = vunpack.c.l.b16 %v277
    %v2341 = vunpack.c.h.b16 %v277
    %v2342 = vunpack.c.l.b16 %v278
    %v2343 = vunpack.c.h.b16 %v278
    %v2344 = vunpack.c.l.b16 %v279
    %v2345 = vunpack.c.h.b16 %v279
    %v2346 = vunpack.c.l.b16 %v280
    %v2347 = vunpack.c.h.b16 %v280
    %v2348 = vunpack.c.l.b16 %v281
    %v2349 = vunpack.c.h.b16 %v281
    %v2350 = vunpack.c.l.b16 %v282
    %v2351 = vunpack.c.h.b16 %v282
    %v2352 = vunpack.c.l.b16 %v283
    %v2353 = vunpack.c.h.b16 %v283
    %v2354 = vunpack.c.l.b16 %v284
    %v2355 = vunpack.c.h.b16 %v284
    %v2356 = vunpack.c.l.b16 %v285
    %v2357 = vunpack.c.h.b16 %v285
    %v2358 = vunpack.c.l.b16 %v286
    %v2359 = vunpack.c.h.b16 %v286
    %v2360 = vunpack.c.l.b16 %v287
    %v2361 = vunpack.c.h.b16 %v287
    %v2362 = vunpack.c.l.b16 %v288
    %v2363 = vunpack.c.h.b16 %v288
    %v2364 = vunpack.c.l.b16 %v289
    %v2365 = vunpack.c.h.b16 %v289
    %v2366 = vunpack.c.l.b16 %v290
    %v2367 = vunpack.c.h.b16 %v290
    %v2368 = vunpack.c.l.b16 %v291
    %v2369 = vunpack.c.h.b16 %v291
    %v2370 = vunpack.c.l.b16 %v292
    %v2371 = vunpack.c.h.b16 %v292
    %v2372 = vunpack.c.l.b16 %v293
    %v2373 = vunpack.c.h.b16 %v293
    %v2374 = vunpack.c.l.b16 %v294
    %v2375 = vunpack.c.h.b16 %v294
    %v2376 = vunpack.c.l.b16 %v295
    %v2377 = vunpack.c.h.b16 %v295
    %v2378 = vunpack.c.l.b16 %v296
    %v2379 = vunpack.c.h.b16 %v296
    %v2380 = vunpack.c.l.b16 %v297
    %v2381 = vunpack.c.h.b16 %v297
    %v2382 = vunpack.c.l.b16 %v298
    %v2383 = vunpack.c.h.b16 %v298
    %v2384 = vunpack.c.l.b16 %v299
    %v2385 = vunpack.c.h.b16 %v299
    %v2386 = vunpack.c.l.b16 %v300
    %v2387 = vunpack.c.h.b16 %v300
    %v2388 = vunpack.c.l.b16 %v301
    %v2389 = vunpack.c.h.b16 %v301
    %v2390 = vunpack.c.l.b16 %v302
    %v2391 = vunpack.c.h.b16 %v302
    %v2392 = vunpack.c.l.b16 %v303
    %v2393 = vunpack.c.h.b16 %v303
    %v2394 = vunpack.c.l.b16 %v304
    %v2395 = vunpack.c.h.b16 %v304
    %v2396 = vunpack.c.l.b16 %v305
    %v2397 = vunpack.c.h.b16 %v305
    %v2398 = vunpack.c.l.b16 %v306
    %v2399 = vunpack.c.h.b16 %v306
    %v2400 = vunpack.c.l.b16 %v307
    %v2401 = vunpack.c.h.b16 %v307
    %v2402 = vunpack.c.l.b16 %v308
    %v2403 = vunpack.c.h.b16 %v308
    %v2404 = vunpack.c.l.b16 %v309
    %v2405 = vunpack.c.h.b16 %v309
    %v2406 = vunpack.c.l.b16 %v310
    %v2407 = vunpack.c.h.b16 %v310
    %v2408 = vunpack.c.l.b16 %v311
    %v2409 = vunpack.c.h.b16 %v311
    %v2410 = vunpack.c.l.b16 %v312
    %v2411 = vunpack.c.h.b16 %v312
    %v2412 = vunpack.c.l.b16 %v313
    %v2413 = vunpack.c.h.b16 %v313
    %v2414 = vunpack.c.l.b16 %v314
    %v2415 = vunpack.c.h.b16 %v314
    %v2416 = vunpack.c.l.b16 %v315
    %v2417 = vunpack.c.h.b16 %v315
    %v2418 = vunpack.c.l.b16 %v316
    %v2419 = vunpack.c.h.b16 %v316
    %v2420 = vunpack.c.l.b16 %v317
    %v2421 = vunpack.c.h.b16 %v317
    %v2422 = vunpack.c.l.b16 %v318
    %v2423 = vunpack.c.h.b16 %v318
    %v2424 = vunpack.c.l.b16 %v319
    %v2425 = vunpack.c.h.b16 %v319
    %v2426 = vunpack.c.l.b16 %v320
    %v2427 = vunpack.c.h.b16 %v320
    %v2428 = vunpack.c.l.b16 %v321
    %v2429 = vunpack.c.h.b16 %v321
    %v2430 = vunpack.c.l.b16 %v322
    %v2431 = vunpack.c.h.b16 %v322
    %v2432 = vunpack.c.l.b16 %v323
    %v2433 = vunpack.c.h.b16 %v323
    %v2434 = vunpack.c.l.b16 %v324
    %v2435 = vunpack.c.h.b16 %v324
    %v2436 = vunpack.c.l.b16 %v325
    %v2437 = vunpack.c.h.b16 %v325
    %v2438 = vunpack.c.l.b16 %v326
    %v2439 = vunpack.c.h.b16 %v326
    %v2440 = vunpack.c.l.b16 %v327
    %v2441 = vunpack.c.h.b16 %v327
    %v2442 = vunpack.c.l.b16 %v328
    %v2443 = vunpack.c.h.b16 %v328
    %v2444 = vunpack.c.l.b16 %v329
    %v2445 = vunpack.c.h.b16 %v329
    %v2446 = vunpack.c.l.b16 %v330
    %v2447 = vunpack.c.h.b16 %v330
    %v2448 = vunpack.c.l.b16 %v331
    %v2449 = vunpack.c.h.b16 %v331
    %v2450 = vunpack.c.l.b16 %v332
    %v2451 = vunpack.c.h.b16 %v332
    %v2452 = vunpack.c.l.b16 %v333
    %v2453 = vunpack.c.h.b16 %v333
    %v2454 = vunpack.c.l.b16 %v334
    %v2455 = vunpack.c.h.b16 %v334
    %v2456 = vunpack.c.l.b16 %v335
    %v2457 = vunpack.c.h.b16 %v335
    %v2458 = vunpack.c.l.b16 %v336
    %v2459 = vunpack.c.h.b16 %v336
    %v2460 = vunpack.c.l.b16 %v337
    %v2461 = vunpack.c.h.b16 %v337
    %v2462 = vunpack.c.l.b16 %v338
    %v2463 = vunpack.c.h.b16 %v338
    %v2464 = vunpack.c.l.b16 %v339
    %v2465 = vunpack.c.h.b16 %v339
    %v2466 = vunpack.c.l.b16 %v340
    %v2467 = vunpack.c.h.b16 %v340
    %v2468 = vunpack.c.l.b16 %v341
    %v2469 = vunpack.c.h.b16 %v341
    %v2470 = vunpack.c.l.b16 %v342
    %v2471 = vunpack.c.h.b16 %v342
    %v2472 = vunpack.c.l.b16 %v343
    %v2473 = vunpack.c.h.b16 %v343
    %v2474 = vunpack.c.l.b16 %v344
    %v2475 = vunpack.c.h.b16 %v344
    %v2476 = vunpack.c.l.b16 %v345
    %v2477 = vunpack.c.h.b16 %v345
    %v2478 = vunpack.c.l.b16 %v346
    %v2479 = vunpack.c.h.b16 %v346
    %v2480 = vunpack.c.l.b16 %v347
    %v2481 = vunpack.c.h.b16 %v347
    %v2482 = vunpack.c.l.b16 %v348
    %v2483 = vunpack.c.h.b16 %v348
    %v2484 = vunpack.c.l.b16 %v349
    %v2485 = vunpack.c.h.b16 %v349
    %v2486 = vunpack.c.l.b16 %v350
    %v2487 = vunpack.c.h.b16 %v350
    %v2488 = vunpack.c.l.b16 %v351
    %v2489 = vunpack.c.h.b16 %v351
    %v2490 = vunpack.c.l.b16 %v352
    %v2491 = vunpack.c.h.b16 %v352
    %v2492 = vunpack.c.l.b16 %v353
    %v2493 = vunpack.c.h.b16 %v353
    %v2494 = vunpack.c.l.b16 %v354
    %v2495 = vunpack.c.h.b16 %v354
    %v2496 = vunpack.c.l.b16 %v355
    %v2497 = vunpack.c.h.b16 %v355
    %v2498 = vunpack.c.l.b16 %v356
    %v2499 = vunpack.c.h.b16 %v356
    %v2500 = vunpack.c.l.b16 %v357
    %v2501 = vunpack.c.h.b16 %v357
    %v2502 = vunpack.c.l.b16 %v358
    %v2503 = vunpack.c.h.b16 %v358
    %v2504 = vunpack.c.l.b16 %v359
    %v2505 = vunpack.c.h.b16 %v359
    %v2506 = vunpack.c.l.b16 %v360
    %v2507 = vunpack.c.h.b16 %v360
    %v2508 = vunpack.c.l.b16 %v361
    %v2509 = vunpack.c.h.b16 %v361
    %v2510 = vunpack.c.l.b16 %v362
    %v2511 = vunpack.c.h.b16 %v362
    %v2512 = vunpack.c.l.b16 %v363
    %v2513 = vunpack.c.h.b16 %v363
    %v2514 = vunpack.c.l.b16 %v364
    %v2515 = vunpack.c.h.b16 %v364
    %v2516 = vunpack.c.l.b16 %v365
    %v2517 = vunpack.c.h.b16 %v365
    %v2518 = vunpack.c.l.b16 %v366
    %v2519 = vunpack.c.h.b16 %v366
    %v2520 = vunpack.c.l.b16 %v367
    %v2521 = vunpack.c.h.b16 %v367
    %v2522 = vunpack.c.l.b16 %v368
    %v2523 = vunpack.c.h.b16 %v368
    %v2524 = vunpack.c.l.b16 %v369
    %v2525 = vunpack.c.h.b16 %v369
    %v2526 = vunpack.c.l.b16 %v370
    %v2527 = vunpack.c.h.b16 %v370
    %v2528 = vunpack.c.l.b16 %v371
    %v2529 = vunpack.c.h.b16 %v371
    %v2530 = vunpack.c.l.b16 %v372
    %v2531 = vunpack.c.h.b16 %v372
    %v2532 = vunpack.c.l.b16 %v373
    %v2533 = vunpack.c.h.b16 %v373
    %v2534 = vunpack.c.l.b16 %v374
    %v2535 = vunpack.c.h.b16 %v374
    %v2536 = vunpack.c.l.b16 %v375
    %v2537 = vunpack.c.h.b16 %v375
    %v2538 = vunpack.c.l.b16 %v376
    %v2539 = vunpack.c.h.b16 %v376
    %v2540 = vunpack.c.l.b16 %v377
    %v2541 = vunpack.c.h.b16 %v377
    %v2542 = vunpack.c.l.b16 %v378
    %v2543 = vunpack.c.h.b16 %v378
    %v2544 = vunpack.c.l.b16 %v379
    %v2545 = vunpack.c.h.b16 %v379
    %v2546 = vunpack.c.l.b16 %v380
    %v2547 = vunpack.c.h.b16 %v380
    %v2548 = vunpack.c.l.b16 %v381
    %v2549 = vunpack.c.h.b16 %v381
    %v2550 = vunpack.c.l.b16 %v382
    %v2551 = vunpack.c.h.b16 %v382
    %v2552 = vunpack.c.l.b16 %v383
    %v2553 = vunpack.c.h.b16 %v383
    %v2554 = vunpack.c.l.b16 %v384
    %v2555 = vunpack.c.h.b16 %v384
    %v2556 = vunpack.c.l.b16 %v385
    %v2557 = vunpack.c.h.b16 %v385
    %v2558 = vunpack.c.l.b16 %v386
    %v2559 = vunpack.c.h.b16 %v386
    %v2560 = vunpack.c.l.b16 %v387
    %v2561 = vunpack.c.h.b16 %v387
    %v2562 = vunpack.c.l.b16 %v388
    %v2563 = vunpack.c.h.b16 %v388
    %v2564 = vunpack.c.l.b16 %v389
    %v2565 = vunpack.c.h.b16 %v389
    %v2566 = vunpack.c.l.b16 %v390
    %v2567 = vunpack.c.h.b16 %v390
    %v2568 = vunpack.c.l.b16 %v391
    %v2569 = vunpack.c.h.b16 %v391
    %v2570 = vunpack.c.l.b16 %v392
    %v2571 = vunpack.c.h.b16 %v392
    %v2572 = vunpack.c.l.b16 %v393
    %v2573 = vunpack.c.h.b16 %v393
    %v2574 = vunpack.c.l.b16 %v394
    %v2575 = vunpack.c.h.b16 %v394
    %v2576 = vunpack.c.l.b16 %v395
    %v2577 = vunpack.c.h.b16 %v395
    %v2578 = vunpack.c.l.b16 %v396
    %v2579 = vunpack.c.h.b16 %v396
    %v2580 = vunpack.c.l.b16 %v397
    %v2581 = vunpack.c.h.b16 %v397
    %v2582 = vunpack.c.l.b16 %v398
    %v2583 = vunpack.c.h.b16 %v398
    %v2584 = vunpack.c.l.b16 %v399
    %v2585 = vunpack.c.h.b16 %v399
    %v2586 = vunpack.c.l.b16 %v400
    %v2587 = vunpack.c.h.b16 %v400
    %v2588 = vunpack.c.l.b16 %v401
    %v2589 = vunpack.c.h.b16 %v401
    %v2590 = vunpack.c.l.b16 %v402
    %v2591 = vunpack.c.h.b16 %v402
    %v2592 = vunpack.c.l.b16 %v403
    %v2593 = vunpack.c.h.b16 %v403
    %v2594 = vunpack.c.l.b16 %v404
    %v2595 = vunpack.c.h.b16 %v404
    %v2596 = vunpack.c.l.b16 %v405
    %v2597 = vunpack.c.h.b16 %v405
    %v2598 = vunpack.c.l.b16 %v406
    %v2599 = vunpack.c.h.b16 %v406
    %v2600 = vunpack.c.l.b16 %v407
    %v2601 = vunpack.c.h.b16 %v407
    %v2602 = vunpack.c.l.b16 %v408
    %v2603 = vunpack.c.h.b16 %v408
    %v2604 = vunpack.c.l.b16 %v409
    %v2605 = vunpack.c.h.b16 %v409
    %v2606 = vunpack.c.l.b16 %v410
    %v2607 = vunpack.c.h.b16 %v410
    %v2608 = vunpack.c.l.b16 %v411
    %v2609 = vunpack.c.h.b16 %v411
    %v2610 = vunpack.c.l.b16 %v412
    %v2611 = vunpack.c.h.b16 %v412
    %v2612 = vunpack.c.l.b16 %v413
    %v2613 = vunpack.c.h.b16 %v413
    %v2614 = vunpack.c.l.b16 %v414
    %v2615 = vunpack.c.h.b16 %v414
    %v2616 = vunpack.c.l.b16 %v415
    %v2617 = vunpack.c.h.b16 %v415
    %v2618 = vunpack.c.l.b16 %v416
    %v2619 = vunpack.c.h.b16 %v416
    %v2620 = vunpack.c.l.b16 %v417
    %v2621 = vunpack.c.h.b16 %v417
    %v2622 = vunpack.c.l.b16 %v418
    %v2623 = vunpack.c.h.b16 %v418
    %v2624 = vunpack.c.l.b16 %v419
    %v2625 = vunpack.c.h.b16 %v419
    %v2626 = vunpack.c.l.b16 %v420
    %v2627 = vunpack.c.h.b16 %v420
    %v2628 = vunpack.c.l.b16 %v421
    %v2629 = vunpack.c.h.b16 %v421
    %v2630 = vunpack.c.l.b16 %v422
    %v2631 = vunpack.c.h.b16 %v422
    %v2632 = vunpack.c.l.b16 %v423
    %v2633 = vunpack.c.h.b16 %v423
    %v2634 = vunpack.c.l.b16 %v424
    %v2635 = vunpack.c.h.b16 %v424
    %v2636 = vunpack.c.l.b16 %v425
    %v2637 = vunpack.c.h.b16 %v425
    %v2638 = vunpack.c.l.b16 %v426
    %v2639 = vunpack.c.h.b16 %v426
    %v2640 = vunpack.c.l.b16 %v427
    %v2641 = vunpack.c.h.b16 %v427
    %v2642 = vunpack.c.l.b16 %v428
    %v2643 = vunpack.c.h.b16 %v428
    %v2644 = vunpack.c.l.b16 %v429
    %v2645 = vunpack.c.h.b16 %v429
    %v2646 = vunpack.c.l.b16 %v430
    %v2647 = vunpack.c.h.b16 %v430
    %v2648 = vunpack.c.l.b16 %v431
    %v2649 = vunpack.c.h.b16 %v431
    %v2650 = vunpack.c.l.b16 %v432
    %v2651 = vunpack.c.h.b16 %v432
    %v2652 = vunpack.c.l.b16 %v433
    %v2653 = vunpack.c.h.b16 %v433
    %v2654 = vunpack.c.l.b16 %v434
    %v2655 = vunpack.c.h.b16 %v434
    %v2656 = vunpack.c.l.b16 %v435
    %v2657 = vunpack.c.h.b16 %v435
    %v2658 = vunpack.c.l.b16 %v436
    %v2659 = vunpack.c.h.b16 %v436
    %v2660 = vunpack.c.l.b16 %v437
    %v2661 = vunpack.c.h.b16 %v437
    %v2662 = vunpack.c.l.b16 %v438
    %v2663 = vunpack.c.h.b16 %v438
    %v2664 = vunpack.c.l.b16 %v439
    %v2665 = vunpack.c.h.b16 %v439
    %v2666 = vunpack.c.l.b16 %v440
    %v2667 = vunpack.c.h.b16 %v440
    %v2668 = vunpack.c.l.b16 %v441
    %v2669 = vunpack.c.h.b16 %v441
    %v2670 = vunpack.c.l.b16 %v442
    %v2671 = vunpack.c.h.b16 %v442
    %v2672 = vunpack.c.l.b16 %v443
    %v2673 = vunpack.c.h.b16 %v443
    %v2674 = vunpack.c.l.b16 %v444
    %v2675 = vunpack.c.h.b16 %v444
    %v2676 = vunpack.c.l.b16 %v445
    %v2677 = vunpack.c.h.b16 %v445
    %v2678 = vunpack.c.l.b16 %v446
    %v2679 = vunpack.c.h.b16 %v446
    %v2680 = vunpack.c.l.b16 %v447
    %v2681 = vunpack.c.h.b16 %v447
    %v2682 = vunpack.c.l.b16 %v448
    %v2683 = vunpack.c.h.b16 %v448
    %v2684 = vunpack.c.l.b16 %v449
    %v2685 = vunpack.c.h.b16 %v449
    %v2686 = vunpack.c.l.b16 %v450
    %v2687 = vunpack.c.h.b16 %v450
    %v2688 = vunpack.c.l.b16 %v451
    %v2689 = vunpack.c.h.b16 %v451
    %v2690 = vunpack.c.l.b16 %v452
    %v2691 = vunpack.c.h.b16 %v452
    %v2692 = vunpack.c.l.b16 %v453
    %v2693 = vunpack.c.h.b16 %v453
    %v2694 = vunpack.c.l.b16 %v454
    %v2695 = vunpack.c.h.b16 %v454
    %v2696 = vunpack.c.l.b16 %v455
    %v2697 = vunpack.c.h.b16 %v455
    %v2698 = vunpack.c.l.b16 %v456
    %v2699 = vunpack.c.h.b16 %v456
    %v2700 = vunpack.c.l.b16 %v457
    %v2701 = vunpack.c.h.b16 %v457
    %v2702 = vunpack.c.l.b16 %v458
    %v2703 = vunpack.c.h.b16 %v458
    %v2704 = vunpack.c.l.b16 %v459
    %v2705 = vunpack.c.h.b16 %v459
    %v2706 = vunpack.c.l.b16 %v460
    %v2707 = vunpack.c.h.b16 %v460
    %v2708 = vunpack.c.l.b16 %v461
    %v2709 = vunpack.c.h.b16 %v461
    %v2710 = vunpack.c.l.b16 %v462
    %v2711 = vunpack.c.h.b16 %v462
    %v2712 = vunpack.c.l.b16 %v463
    %v2713 = vunpack.c.h.b16 %v463
    %v2714 = vunpack.c.l.b16 %v464
    %v2715 = vunpack.c.h.b16 %v464
    %v2716 = vunpack.c.l.b16 %v465
    %v2717 = vunpack.c.h.b16 %v465
    %v2718 = vunpack.c.l.b16 %v466
    %v2719 = vunpack.c.h.b16 %v466
    %v2720 = vunpack.c.l.b16 %v467
    %v2721 = vunpack.c.h.b16 %v467
    %v2722 = vunpack.c.l.b16 %v468
    %v2723 = vunpack.c.h.b16 %v468
    %v2724 = vunpack.c.l.b16 %v469
    %v2725 = vunpack.c.h.b16 %v469
    %v2726 = vunpack.c.l.b16 %v470
    %v2727 = vunpack.c.h.b16 %v470
    %v2728 = vunpack.c.l.b16 %v471
    %v2729 = vunpack.c.h.b16 %v471
    %v2730 = vunpack.c.l.b16 %v472
    %v2731 = vunpack.c.h.b16 %v472
    %v2732 = vunpack.c.l.b16 %v473
    %v2733 = vunpack.c.h.b16 %v473
    %v2734 = vunpack.c.l.b16 %v474
    %v2735 = vunpack.c.h.b16 %v474
    %v2736 = vunpack.c.l.b16 %v475
    %v2737 = vunpack.c.h.b16 %v475
    %v2738 = vunpack.c.l.b16 %v476
    %v2739 = vunpack.c.h.b16 %v476
    %v2740 = vunpack.c.l.b16 %v477
    %v2741 = vunpack.c.h.b16 %v477
    %v2742 = vunpack.c.l.b16 %v478
    %v2743 = vunpack.c.h.b16 %v478
    %v2744 = vunpack.c.l.b16 %v479
    %v2745 = vunpack.c.h.b16 %v479
    %v2746 = vunpack.c.l.b16 %v480
    %v2747 = vunpack.c.h.b16 %v480
    %v2748 = vunpack.c.l.b16 %v481
    %v2749 = vunpack.c.h.b16 %v481
    %v2750 = vunpack.c.l.b16 %v482
    %v2751 = vunpack.c.h.b16 %v482
    %v2752 = vunpack.c.l.b16 %v483
    %v2753 = vunpack.c.h.b16 %v483
    %v2754 = vunpack.c.l.b16 %v484
    %v2755 = vunpack.c.h.b16 %v484
    %v2756 = vunpack.c.l.b16 %v485
    %v2757 = vunpack.c.h.b16 %v485
    %v2758 = vunpack.c.l.b16 %v486
    %v2759 = vunpack.c.h.b16 %v486
    %v2760 = vunpack.c.l.b16 %v487
    %v2761 = vunpack.c.h.b16 %v487
    %v2762 = vunpack.c.l.b16 %v488
    %v2763 = vunpack.c.h.b16 %v488
    %v2764 = vunpack.c.l.b16 %v489
    %v2765 = vunpack.c.h.b16 %v489
    %v2766 = vunpack.c.l.b16 %v490
    %v2767 = vunpack.c.h.b16 %v490
    %v2768 = vunpack.c.l.b16 %v491
    %v2769 = vunpack.c.h.b16 %v491
    %v2770 = vunpack.c.l.b16 %v492
    %v2771 = vunpack.c.h.b16 %v492
    %v2772 = vunpack.c.l.b16 %v493
    %v2773 = vunpack.c.h.b16 %v493
    %v2774 = vunpack.c.l.b16 %v494
    %v2775 = vunpack.c.h.b16 %v494
    %v2776 = vunpack.c.l.b16 %v495
    %v2777 = vunpack.c.h.b16 %v495
    %v2778 = vunpack.c.l.b16 %v496
    %v2779 = vunpack.c.h.b16 %v496
    %v2780 = vunpack.c.l.b16 %v497
    %v2781 = vunpack.c.h.b16 %v497
    %v2782 = vunpack.c.l.b16 %v498
    %v2783 = vunpack.c.h.b16 %v498
    %v2784 = vunpack.c.l.b16 %v499
    %v2785 = vunpack.c.h.b16 %v499
    %v2786 = vunpack.c.l.b16 %v500
    %v2787 = vunpack.c.h.b16 %v500
    %v2788 = vunpack.c.l.b16 %v501
    %v2789 = vunpack.c.h.b16 %v501
    %v2790 = vunpack.c.l.b16 %v502
    %v2791 = vunpack.c.h.b16 %v502
    %v2792 = vunpack.c.l.b16 %v503
    %v2793 = vunpack.c.h.b16 %v503
    %v2794 = vunpack.c.l.b16 %v504
    %v2795 = vunpack.c.h.b16 %v504
    %v2796 = vunpack.c.l.b16 %v505
    %v2797 = vunpack.c.h.b16 %v505
    %v2798 = vunpack.c.l.b16 %v506
    %v2799 = vunpack.c.h.b16 %v506
    %v2800 = vunpack.c.l.b16 %v507
    %v2801 = vunpack.c.h.b16 %v507
    %v2802 = vunpack.c.l.b16 %v508
    %v2803 = vunpack.c.h.b16 %v508
    %v2804 = vunpack.c.l.b16 %v509
    %v2805 = vunpack.c.h.b16 %v509
    %v2806 = vunpack.c.l.b16 %v510
    %v2807 = vunpack.c.h.b16 %v510
    %v2808 = vunpack.c.l.b16 %v511
    %v2809 = vunpack.c.h.b16 %v511
    %v2810 = vunpack.c.l.b16 %v512
    %v2811 = vunpack.c.h.b16 %v512
    %v2812 = vunpack.c.l.b16 %v513
    %v2813 = vunpack.c.h.b16 %v513
    %v2814 = vunpack.c.l.b16 %v514
    %v2815 = vunpack.c.h.b16 %v514
    %v2816 = vunpack.c.l.b16 %v515
    %v2817 = vunpack.c.h.b16 %v515
    %v2818 = vunpack.c.l.b16 %v516
    %v2819 = vunpack.c.h.b16 %v516
    %v2820 = vunpack.c.l.b16 %v517
    %v2821 = vunpack.c.h.b16 %v517
    %v2822 = vunpack.c.l.b16 %v518
    %v2823 = vunpack.c.h.b16 %v518
    %v2824 = vunpack.c.l.b16 %v519
    %v2825 = vunpack.c.h.b16 %v519
    %v2826 = vunpack.c.l.b16 %v520
    %v2827 = vunpack.c.h.b16 %v520
    %v2828 = vunpack.c.l.b16 %v521
    %v2829 = vunpack.c.h.b16 %v521
    %v2830 = vunpack.c.l.b16 %v522
    %v2831 = vunpack.c.h.b16 %v522
    %v2832 = vunpack.c.l.b16 %v523
    %v2833 = vunpack.c.h.b16 %v523
    %v2834 = vunpack.c.l.b16 %v524
    %v2835 = vunpack.c.h.b16 %v524
    %v2836 = vunpack.c.l.b16 %v525
    %v2837 = vunpack.c.h.b16 %v525
    %v2838 = vunpack.c.l.b16 %v526
    %v2839 = vunpack.c.h.b16 %v526
    %v2840 = vunpack.c.l.b16 %v527
    %v2841 = vunpack.c.h.b16 %v527
    %v2842 = vunpack.c.l.b16 %v528
    %v2843 = vunpack.c.h.b16 %v528
    %v2844 = vunpack.c.l.b16 %v529
    %v2845 = vunpack.c.h.b16 %v529
    %v2846 = vunpack.c.l.b16 %v530
    %v2847 = vunpack.c.h.b16 %v530
    %v2848 = vunpack.c.l.b16 %v531
    %v2849 = vunpack.c.h.b16 %v531
    %v2850 = vunpack.c.l.b16 %v532
    %v2851 = vunpack.c.h.b16 %v532
    %v2852 = vunpack.c.l.b16 %v533
    %v2853 = vunpack.c.h.b16 %v533
    %v2854 = vunpack.c.l.b16 %v534
    %v2855 = vunpack.c.h.b16 %v534
    %v2856 = vunpack.c.l.b16 %v535
    %v2857 = vunpack.c.h.b16 %v535
    %v2858 = vunpack.c.l.b16 %v536
    %v2859 = vunpack.c.h.b16 %v536
    %v2860 = vunpack.c.l.b16 %v537
    %v2861 = vunpack.c.h.b16 %v537
    %v2862 = vunpack.c.l.b16 %v538
    %v2863 = vunpack.c.h.b16 %v538
    %v2864 = vunpack.c.l.b16 %v539
    %v2865 = vunpack.c.h.b16 %v539
    %v2866 = vunpack.c.l.b16 %v540
    %v2867 = vunpack.c.h.b16 %v540
    %v2868 = vunpack.c.l.b16 %v541
    %v2869 = vunpack.c.h.b16 %v541
    %v2870 = vunpack.c.l.b16 %v542
    %v2871 = vunpack.c.h.b16 %v542
    %v2872 = vunpack.c.l.b16 %v543
    %v2873 = vunpack.c.h.b16 %v543
    %v2874 = vunpack.c.l.b16 %v544
    %v2875 = vunpack.c.h.b16 %v544
    %v2876 = vunpack.c.l.b16 %v545
    %v2877 = vunpack.c.h.b16 %v545
    %v2878 = vunpack.c.l.b16 %v546
    %v2879 = vunpack.c.h.b16 %v546
    %v2880 = vunpack.c.l.b16 %v547
    %v2881 = vunpack.c.h.b16 %v547
    %v2882 = vunpack.c.l.b16 %v548
    %v2883 = vunpack.c.h.b16 %v548
    %v2884 = vunpack.c.l.b16 %v549
    %v2885 = vunpack.c.h.b16 %v549
    %v2886 = vunpack.c.l.b16 %v550
    %v2887 = vunpack.c.h.b16 %v550
    %v2888 = vunpack.c.l.b16 %v551
    %v2889 = vunpack.c.h.b16 %v551
    %v2890 = vunpack.c.l.b16 %v552
    %v2891 = vunpack.c.h.b16 %v552
    %v2892 = vunpack.c.l.b16 %v553
    %v2893 = vunpack.c.h.b16 %v553
    %v2894 = vunpack.c.l.b16 %v554
    %v2895 = vunpack.c.h.b16 %v554
    %v2896 = vunpack.c.l.b16 %v555
    %v2897 = vunpack.c.h.b16 %v555
    %v2898 = vunpack.c.l.b16 %v556
    %v2899 = vunpack.c.h.b16 %v556
    %v2900 = vunpack.c.l.b16 %v557
    %v2901 = vunpack.c.h.b16 %v557
    %v2902 = vunpack.c.l.b16 %v558
    %v2903 = vunpack.c.h.b16 %v558
    %v2904 = vunpack.c.l.b16 %v559
    %v2905 = vunpack.c.h.b16 %v559
    %v2906 = vunpack.c.l.b16 %v560
    %v2907 = vunpack.c.h.b16 %v560
    %v2908 = vunpack.c.l.b16 %v561
    %v2909 = vunpack.c.h.b16 %v561
    %v2910 = vunpack.c.l.b16 %v562
    %v2911 = vunpack.c.h.b16 %v562
    %v2912 = vunpack.c.l.b16 %v563
    %v2913 = vunpack.c.h.b16 %v563
    %v2914 = vunpack.c.l.b16 %v564
    %v2915 = vunpack.c.h.b16 %v564
    %v2916 = vunpack.c.l.b16 %v565
    %v2917 = vunpack.c.h.b16 %v565
    %v2918 = vunpack.c.l.b16 %v566
    %v2919 = vunpack.c.h.b16 %v566
    %v2920 = vunpack.c.l.b16 %v567
    %v2921 = vunpack.c.h.b16 %v567
    %v2922 = vunpack.c.l.b16 %v568
    %v2923 = vunpack.c.h.b16 %v568
    %v2924 = vunpack.c.l.b16 %v569
    %v2925 = vunpack.c.h.b16 %v569
    %v2926 = vunpack.c.l.b16 %v570
    %v2927 = vunpack.c.h.b16 %v570
    %v2928 = vunpack.c.l.b16 %v571
    %v2929 = vunpack.c.h.b16 %v571
    %v2930 = vunpack.c.l.b16 %v572
    %v2931 = vunpack.c.h.b16 %v572
    %v2932 = vunpack.c.l.b16 %v573
    %v2933 = vunpack.c.h.b16 %v573
    %v2934 = vunpack.c.l.b16 %v574
    %v2935 = vunpack.c.h.b16 %v574
    %v2936 = vunpack.c.l.b16 %v575
    %v2937 = vunpack.c.h.b16 %v575
    %v2938 = vunpack.c.l.b16 %v576
    %v2939 = vunpack.c.h.b16 %v576
    %v2940 = vunpack.c.l.b16 %v577
    %v2941 = vunpack.c.h.b16 %v577
    %v2942 = vunpack.c.l.b16 %v578
    %v2943 = vunpack.c.h.b16 %v578
    %v2944 = vunpack.c.l.b16 %v579
    %v2945 = vunpack.c.h.b16 %v579
    %v2946 = vunpack.c.l.b16 %v580
    %v2947 = vunpack.c.h.b16 %v580
    %v2948 = vunpack.c.l.b16 %v581
    %v2949 = vunpack.c.h.b16 %v581
    %v2950 = vunpack.c.l.b16 %v582
    %v2951 = vunpack.c.h.b16 %v582
    %v2952 = vunpack.c.l.b16 %v583
    %v2953 = vunpack.c.h.b16 %v583
    %v2954 = vunpack.c.l.b16 %v584
    %v2955 = vunpack.c.h.b16 %v584
    %v2956 = vunpack.c.l.b16 %v585
    %v2957 = vunpack.c.h.b16 %v585
    %v2958 = vunpack.c.l.b16 %v586
    %v2959 = vunpack.c.h.b16 %v586
    %v2960 = vunpack.c.l.b16 %v587
    %v2961 = vunpack.c.h.b16 %v587
    %v2962 = vunpack.c.l.b16 %v588
    %v2963 = vunpack.c.h.b16 %v588
    %v2964 = vunpack.c.l.b16 %v589
    %v2965 = vunpack.c.h.b16 %v589
    %v2966 = vunpack.c.l.b16 %v590
    %v2967 = vunpack.c.h.b16 %v590
    %v2968 = vunpack.c.l.b16 %v591
    %v2969 = vunpack.c.h.b16 %v591
    %v2970 = vunpack.c.l.b16 %v592
    %v2971 = vunpack.c.h.b16 %v592
    %v2972 = vunpack.c.l.b16 %v593
    %v2973 = vunpack.c.h.b16 %v593
    %v2974 = vunpack.c.l.b16 %v594
    %v2975 = vunpack.c.h.b16 %v594
    %v2976 = vunpack.c.l.b16 %v595
    %v2977 = vunpack.c.h.b16 %v595
    %v2978 = vunpack.c.l.b16 %v596
    %v2979 = vunpack.c.h.b16 %v596
    %v2980 = vunpack.c.l.b16 %v597
    %v2981 = vunpack.c.h.b16 %v597
    %v2982 = vunpack.c.l.b16 %v598
    %v2983 = vunpack.c.h.b16 %v598
    %v2984 = vunpack.c.l.b16 %v599
    %v2985 = vunpack.c.h.b16 %v599
    %v2986 = vunpack.c.l.b16 %v600
    %v2987 = vunpack.c.h.b16 %v600
    %v2988 = vunpack.c.l.b16 %v601
    %v2989 = vunpack.c.h.b16 %v601
    %v2990 = vunpack.c.l.b16 %v602
    %v2991 = vunpack.c.h.b16 %v602
    %v2992 = vunpack.c.l.b16 %v603
    %v2993 = vunpack.c.h.b16 %v603
    %v2994 = vunpack.c.l.b16 %v604
    %v2995 = vunpack.c.h.b16 %v604
    %v2996 = vunpack.c.l.b16 %v605
    %v2997 = vunpack.c.h.b16 %v605
    %v2998 = vunpack.c.l.b16 %v606
    %v2999 = vunpack.c.h.b16 %v606
    %v3000 = vunpack.c.l.b16 %v607
    %v3001 = vunpack.c.h.b16 %v607
    %v3002 = vunpack.c.l.b16 %v608
    %v3003 = vunpack.c.h.b16 %v608
    %v3004 = vunpack.c.l.b16 %v609
    %v3005 = vunpack.c.h.b16 %v609
    %v3006 = vunpack.c.l.b16 %v610
    %v3007 = vunpack.c.h.b16 %v610
    %v3008 = vunpack.c.l.b16 %v611
    %v3009 = vunpack.c.h.b16 %v611
    %v3010 = vunpack.c.l.b16 %v612
    %v3011 = vunpack.c.h.b16 %v612
    %v3012 = vunpack.c.l.b16 %v613
    %v3013 = vunpack.c.h.b16 %v613
    %v3014 = vunpack.c.l.b16 %v614
    %v3015 = vunpack.c.h.b16 %v614
    %v3016 = vunpack.c.l.b16 %v615
    %v3017 = vunpack.c.h.b16 %v615
    %v3018 = vunpack.c.l.b16 %v616
    %v3019 = vunpack.c.h.b16 %v616
    %v3020 = vunpack.c.l.b16 %v617
    %v3021 = vunpack.c.h.b16 %v617
    %v3022 = vunpack.c.l.b16 %v618
    %v3023 = vunpack.c.h.b16 %v618
    %v3024 = vunpack.c.l.b16 %v619
    %v3025 = vunpack.c.h.b16 %v619
    %v3026 = vunpack.c.l.b16 %v620
    %v3027 = vunpack.c.h.b16 %v620
    %v3028 = vunpack.c.l.b16 %v621
    %v3029 = vunpack.c.h.b16 %v621
    %v3030 = vunpack.c.l.b16 %v622
    %v3031 = vunpack.c.h.b16 %v622
    %v3032 = vunpack.c.l.b16 %v623
    %v3033 = vunpack.c.h.b16 %v623
    %v3034 = vunpack.c.l.b16 %v624
    %v3035 = vunpack.c.h.b16 %v624
    %v3036 = vunpack.c.l.b16 %v625
    %v3037 = vunpack.c.h.b16 %v625
    %v3038 = vunpack.c.l.b16 %v626
    %v3039 = vunpack.c.h.b16 %v626
    %v3040 = vunpack.c.l.b16 %v627
    %v3041 = vunpack.c.h.b16 %v627
    %v3042 = vunpack.c.l.b16 %v628
    %v3043 = vunpack.c.h.b16 %v628
    %v3044 = vunpack.c.l.b16 %v629
    %v3045 = vunpack.c.h.b16 %v629
    %v3046 = vunpack.c.l.b16 %v630
    %v3047 = vunpack.c.h.b16 %v630
    %v3048 = vunpack.c.l.b16 %v631
    %v3049 = vunpack.c.h.b16 %v631
    %v3050 = vunpack.c.l.b16 %v632
    %v3051 = vunpack.c.h.b16 %v632
    %v3052 = vunpack.c.l.b16 %v633
    %v3053 = vunpack.c.h.b16 %v633
    %v3054 = vunpack.c.l.b16 %v634
    %v3055 = vunpack.c.h.b16 %v634
    %v3056 = vunpack.c.l.b16 %v635
    %v3057 = vunpack.c.h.b16 %v635
    %v3058 = vunpack.c.l.b16 %v636
    %v3059 = vunpack.c.h.b16 %v636
    %v3060 = vunpack.c.l.b16 %v637
    %v3061 = vunpack.c.h.b16 %v637
    %v3062 = vunpack.c.l.b16 %v638
    %v3063 = vunpack.c.h.b16 %v638
    %v3064 = vunpack.c.l.b16 %v639
    %v3065 = vunpack.c.h.b16 %v639
    %v3066 = vunpack.c.l.b16 %v640
    %v3067 = vunpack.c.h.b16 %v640
    %v3068 = vunpack.c.l.b16 %v641
    %v3069 = vunpack.c.h.b16 %v641
    %v3070 = vunpack.c.l.b16 %v642
    %v3071 = vunpack.c.h.b16 %v642
    %v3072 = vunpack.c.l.b16 %v643
    %v3073 = vunpack.c.h.b16 %v643
    %v3074 = vunpack.c.l.b16 %v644
    %v3075 = vunpack.c.h.b16 %v644
    %v3076 = vunpack.c.l.b16 %v645
    %v3077 = vunpack.c.h.b16 %v645
    %v3078 = vunpack.c.l.b16 %v646
    %v3079 = vunpack.c.h.b16 %v646
    %v3080 = vunpack.c.l.b16 %v647
    %v3081 = vunpack.c.h.b16 %v647
    %v3082 = vpack.c.b16 %v2074, %v2058
    %v3083 = vpack.c.b16 %v2075, %v2059
    %v3084 = vpack.c.b16 %v2076, %v2060
    %v3085 = vpack.c.b16 %v2077, %v2061
    %v3086 = vpack.c.b16 %v2078, %v2062
    %v3087 = vpack.c.b16 %v2079, %v2063
    %v3088 = vpack.c.b16 %v2080, %v2064
    %v3089 = vpack.c.b16 %v2081, %v2065
    %v3090 = vpack.c.b16 %v2082, %v2066
    %v3091 = vpack.c.b16 %v2083, %v2067
    %v3092 = vpack.c.b16 %v2084, %v2068
    %v3093 = vpack.c.b16 %v2085, %v2069
    %v3094 = vpack.c.b16 %v2086, %v2070
    %v3095 = vpack.c.b16 %v2087, %v2071
    %v3096 = vpack.c.b16 %v2088, %v2072
    %v3097 = vpack.c.b16 %v2089, %v2073
    %v3098 = vpack.c.b16 %v2106, %v2090
    %v3099 = vpack.c.b16 %v2107, %v2091
    %v3100 = vpack.c.b16 %v2108, %v2092
    %v3101 = vpack.c.b16 %v2109, %v2093
    %v3102 = vpack.c.b16 %v2110, %v2094
    %v3103 = vpack.c.b16 %v2111, %v2095
    %v3104 = vpack.c.b16 %v2112, %v2096
    %v3105 = vpack.c.b16 %v2113, %v2097
    %v3106 = vpack.c.b16 %v2114, %v2098
    %v3107 = vpack.c.b16 %v2115, %v2099
    %v3108 = vpack.c.b16 %v2116, %v2100
    %v3109 = vpack.c.b16 %v2117, %v2101
    %v3110 = vpack.c.b16 %v2118, %v2102
    %v3111 = vpack.c.b16 %v2119, %v2103
    %v3112 = vpack.c.b16 %v2120, %v2104
    %v3113 = vpack.c.b16 %v2121, %v2105
    %v3114 = vpack.c.b16 %v2138, %v2122
    %v3115 = vpack.c.b16 %v2139, %v2123
    %v3116 = vpack.c.b16 %v2140, %v2124
    %v3117 = vpack.c.b16 %v2141, %v2125
    %v3118 = vpack.c.b16 %v2142, %v2126
    %v3119 = vpack.c.b16 %v2143, %v2127
    %v3120 = vpack.c.b16 %v2144, %v2128
    %v3121 = vpack.c.b16 %v2145, %v2129
    %v3122 = vpack.c.b16 %v2146, %v2130
    %v3123 = vpack.c.b16 %v2147, %v2131
    %v3124 = vpack.c.b16 %v2148, %v2132
    %v3125 = vpack.c.b16 %v2149, %v2133
    %v3126 = vpack.c.b16 %v2150, %v2134
    %v3127 = vpack.c.b16 %v2151, %v2135
    %v3128 = vpack.c.b16 %v2152, %v2136
    %v3129 = vpack.c.b16 %v2153, %v2137
    %v3130 = vpack.c.b16 %v2170, %v2154
    %v3131 = vpack.c.b16 %v2171, %v2155
    %v3132 = vpack.c.b16 %v2172, %v2156
    %v3133 = vpack.c.b16 %v2173, %v2157
    %v3134 = vpack.c.b16 %v2174, %v2158
    %v3135 = vpack.c.b16 %v2175, %v2159
    %v3136 = vpack.c.b16 %v2176, %v2160
    %v3137 = vpack.c.b16 %v2177, %v2161
    %v3138 = vpack.c.b16 %v2178, %v2162
    %v3139 = vpack.c.b16 %v2179, %v2163
    %v3140 = vpack.c.b16 %v2180, %v2164
    %v3141 = vpack.c.b16 %v2181, %v2165
    %v3142 = vpack.c.b16 %v2182, %v2166
    %v3143 = vpack.c.b16 %v2183, %v2167
    %v3144 = vpack.c.b16 %v2184, %v2168
    %v3145 = vpack.c.b16 %v2185, %v2169
    %v3146 = vpack.c.b16 %v2202, %v2186
    %v3147 = vpack.c.b16 %v2203, %v2187
    %v3148 = vpack.c.b16 %v2204, %v2188
    %v3149 = vpack.c.b16 %v2205, %v2189
    %v3150 = vpack.c.b16 %v2206, %v2190
    %v3151 = vpack.c.b16 %v2207, %v2191
    %v3152 = vpack.c.b16 %v2208, %v2192
    %v3153 = vpack.c.b16 %v2209, %v2193
    %v3154 = vpack.c.b16 %v2210, %v2194
    %v3155 = vpack.c.b16 %v2211, %v2195
    %v3156 = vpack.c.b16 %v2212, %v2196
    %v3157 = vpack.c.b16 %v2213, %v2197
    %v3158 = vpack.c.b16 %v2214, %v2198
    %v3159 = vpack.c.b16 %v2215, %v2199
    %v3160 = vpack.c.b16 %v2216, %v2200
    %v3161 = vpack.c.b16 %v2217, %v2201
    %v3162 = vpack.c.b16 %v2234, %v2218
    %v3163 = vpack.c.b16 %v2235, %v2219
    %v3164 = vpack.c.b16 %v2236, %v2220
    %v3165 = vpack.c.b16 %v2237, %v2221
    %v3166 = vpack.c.b16 %v2238, %v2222
    %v3167 = vpack.c.b16 %v2239, %v2223
    %v3168 = vpack.c.b16 %v2240, %v2224
    %v3169 = vpack.c.b16 %v2241, %v2225
    %v3170 = vpack.c.b16 %v2242, %v2226
    %v3171 = vpack.c.b16 %v2243, %v2227
    %v3172 = vpack.c.b16 %v2244, %v2228
    %v3173 = vpack.c.b16 %v2245, %v2229
    %v3174 = vpack.c.b16 %v2246, %v2230
    %v3175 = vpack.c.b16 %v2247, %v2231
    %v3176 = vpack.c.b16 %v2248, %v2232
    %v3177 = vpack.c.b16 %v2249, %v2233
    %v3178 = vpack.c.b16 %v2266, %v2250
    %v3179 = vpack.c.b16 %v2267, %v2251
    %v3180 = vpack.c.b16 %v2268, %v2252
    %v3181 = vpack.c.b16 %v2269, %v2253
    %v3182 = vpack.c.b16 %v2270, %v2254
    %v3183 = vpack.c.b16 %v2271, %v2255
    %v3184 = vpack.c.b16 %v2272, %v2256
    %v3185 = vpack.c.b16 %v2273, %v2257
    %v3186 = vpack.c.b16 %v2274, %v2258
    %v3187 = vpack.c.b16 %v2275, %v2259
    %v3188 = vpack.c.b16 %v2276, %v2260
    %v3189 = vpack.c.b16 %v2277, %v2261
    %v3190 = vpack.c.b16 %v2278, %v2262
    %v3191 = vpack.c.b16 %v2279, %v2263
    %v3192 = vpack.c.b16 %v2280, %v2264
    %v3193 = vpack.c.b16 %v2281, %v2265
    %v3194 = vpack.c.b16 %v2298, %v2282
    %v3195 = vpack.c.b16 %v2299, %v2283
    %v3196 = vpack.c.b16 %v2300, %v2284
    %v3197 = vpack.c.b16 %v2301, %v2285
    %v3198 = vpack.c.b16 %v2302, %v2286
    %v3199 = vpack.c.b16 %v2303, %v2287
    %v3200 = vpack.c.b16 %v2304, %v2288
    %v3201 = vpack.c.b16 %v2305, %v2289
    %v3202 = vpack.c.b16 %v2306, %v2290
    %v3203 = vpack.c.b16 %v2307, %v2291
    %v3204 = vpack.c.b16 %v2308, %v2292
    %v3205 = vpack.c.b16 %v2309, %v2293
    %v3206 = vpack.c.b16 %v2310, %v2294
    %v3207 = vpack.c.b16 %v2311, %v2295
    %v3208 = vpack.c.b16 %v2312, %v2296
    %v3209 = vpack.c.b16 %v2313, %v2297
    %v3210 = vpack.c.b16 %v2330, %v2314
    %v3211 = vpack.c.b16 %v2331, %v2315
    %v3212 = vpack.c.b16 %v2332, %v2316
    %v3213 = vpack.c.b16 %v2333, %v2317
    %v3214 = vpack.c.b16 %v2334, %v2318
    %v3215 = vpack.c.b16 %v2335, %v2319
    %v3216 = vpack.c.b16 %v2336, %v2320
    %v3217 = vpack.c.b16 %v2337, %v2321
    %v3218 = vpack.c.b16 %v2338, %v2322
    %v3219 = vpack.c.b16 %v2339, %v2323
    %v3220 = vpack.c.b16 %v2340, %v2324
    %v3221 = vpack.c.b16 %v2341, %v2325
    %v3222 = vpack.c.b16 %v2342, %v2326
    %v3223 = vpack.c.b16 %v2343, %v2327
    %v3224 = vpack.c.b16 %v2344, %v2328
    %v3225 = vpack.c.b16 %v2345, %v2329
    %v3226 = vpack.c.b16 %v2362, %v2346
    %v3227 = vpack.c.b16 %v2363, %v2347
    %v3228 = vpack.c.b16 %v2364, %v2348
    %v3229 = vpack.c.b16 %v2365, %v2349
    %v3230 = vpack.c.b16 %v2366, %v2350
    %v3231 = vpack.c.b16 %v2367, %v2351
    %v3232 = vpack.c.b16 %v2368, %v2352
    %v3233 = vpack.c.b16 %v2369, %v2353
    %v3234 = vpack.c.b16 %v2370, %v2354
    %v3235 = vpack.c.b16 %v2371, %v2355
    %v3236 = vpack.c.b16 %v2372, %v2356
    %v3237 = vpack.c.b16 %v2373, %v2357
    %v3238 = vpack.c.b16 %v2374, %v2358
    %v3239 = vpack.c.b16 %v2375, %v2359
    %v3240 = vpack.c.b16 %v2376, %v2360
    %v3241 = vpack.c.b16 %v2377, %v2361
    %v3242 = vpack.c.b16 %v2394, %v2378
    %v3243 = vpack.c.b16 %v2395, %v2379
    %v3244 = vpack.c.b16 %v2396, %v2380
    %v3245 = vpack.c.b16 %v2397, %v2381
    %v3246 = vpack.c.b16 %v2398, %v2382
    %v3247 = vpack.c.b16 %v2399, %v2383
    %v3248 = vpack.c.b16 %v2400, %v2384
    %v3249 = vpack.c.b16 %v2401, %v2385
    %v3250 = vpack.c.b16 %v2402, %v2386
    %v3251 = vpack.c.b16 %v2403, %v2387
    %v3252 = vpack.c.b16 %v2404, %v2388
    %v3253 = vpack.c.b16 %v2405, %v2389
    %v3254 = vpack.c.b16 %v2406, %v2390
    %v3255 = vpack.c.b16 %v2407, %v2391
    %v3256 = vpack.c.b16 %v2408, %v2392
    %v3257 = vpack.c.b16 %v2409, %v2393
    %v3258 = vpack.c.b16 %v2426, %v2410
    %v3259 = vpack.c.b16 %v2427, %v2411
    %v3260 = vpack.c.b16 %v2428, %v2412
    %v3261 = vpack.c.b16 %v2429, %v2413
    %v3262 = vpack.c.b16 %v2430, %v2414
    %v3263 = vpack.c.b16 %v2431, %v2415
    %v3264 = vpack.c.b16 %v2432, %v2416
    %v3265 = vpack.c.b16 %v2433, %v2417
    %v3266 = vpack.c.b16 %v2434, %v2418
    %v3267 = vpack.c.b16 %v2435, %v2419
    %v3268 = vpack.c.b16 %v2436, %v2420
    %v3269 = vpack.c.b16 %v2437, %v2421
    %v3270 = vpack.c.b16 %v2438, %v2422
    %v3271 = vpack.c.b16 %v2439, %v2423
    %v3272 = vpack.c.b16 %v2440, %v2424
    %v3273 = vpack.c.b16 %v2441, %v2425
    %v3274 = vpack.c.b16 %v2458, %v2442
    %v3275 = vpack.c.b16 %v2459, %v2443
    %v3276 = vpack.c.b16 %v2460, %v2444
    %v3277 = vpack.c.b16 %v2461, %v2445
    %v3278 = vpack.c.b16 %v2462, %v2446
    %v3279 = vpack.c.b16 %v2463, %v2447
    %v3280 = vpack.c.b16 %v2464, %v2448
    %v3281 = vpack.c.b16 %v2465, %v2449
    %v3282 = vpack.c.b16 %v2466, %v2450
    %v3283 = vpack.c.b16 %v2467, %v2451
    %v3284 = vpack.c.b16 %v2468, %v2452
    %v3285 = vpack.c.b16 %v2469, %v2453
    %v3286 = vpack.c.b16 %v2470, %v2454
    %v3287 = vpack.c.b16 %v2471, %v2455
    %v3288 = vpack.c.b16 %v2472, %v2456
    %v3289 = vpack.c.b16 %v2473, %v2457
    %v3290 = vpack.c.b16 %v2490, %v2474
    %v3291 = vpack.c.b16 %v2491, %v2475
    %v3292 = vpack.c.b16 %v2492, %v2476
    %v3293 = vpack.c.b16 %v2493, %v2477
    %v3294 = vpack.c.b16 %v2494, %v2478
    %v3295 = vpack.c.b16 %v2495, %v2479
    %v3296 = vpack.c.b16 %v2496, %v2480
    %v3297 = vpack.c.b16 %v2497, %v2481
    %v3298 = vpack.c.b16 %v2498, %v2482
    %v3299 = vpack.c.b16 %v2499, %v2483
    %v3300 = vpack.c.b16 %v2500, %v2484
    %v3301 = vpack.c.b16 %v2501, %v2485
    %v3302 = vpack.c.b16 %v2502, %v2486
    %v3303 = vpack.c.b16 %v2503, %v2487
    %v3304 = vpack.c.b16 %v2504, %v2488
    %v3305 = vpack.c.b16 %v2505, %v2489
    %v3306 = vpack.c.b16 %v2522, %v2506
    %v3307 = vpack.c.b16 %v2523, %v2507
    %v3308 = vpack.c.b16 %v2524, %v2508
    %v3309 = vpack.c.b16 %v2525, %v2509
    %v3310 = vpack.c.b16 %v2526, %v2510
    %v3311 = vpack.c.b16 %v2527, %v2511
    %v3312 = vpack.c.b16 %v2528, %v2512
    %v3313 = vpack.c.b16 %v2529, %v2513
    %v3314 = vpack.c.b16 %v2530, %v2514
    %v3315 = vpack.c.b16 %v2531, %v2515
    %v3316 = vpack.c.b16 %v2532, %v2516
    %v3317 = vpack.c.b16 %v2533, %v2517
    %v3318 = vpack.c.b16 %v2534, %v2518
    %v3319 = vpack.c.b16 %v2535, %v2519
    %v3320 = vpack.c.b16 %v2536, %v2520
    %v3321 = vpack.c.b16 %v2537, %v2521
    %v3322 = vpack.c.b16 %v2554, %v2538
    %v3323 = vpack.c.b16 %v2555, %v2539
    %v3324 = vpack.c.b16 %v2556, %v2540
    %v3325 = vpack.c.b16 %v2557, %v2541
    %v3326 = vpack.c.b16 %v2558, %v2542
    %v3327 = vpack.c.b16 %v2559, %v2543
    %v3328 = vpack.c.b16 %v2560, %v2544
    %v3329 = vpack.c.b16 %v2561, %v2545
    %v3330 = vpack.c.b16 %v2562, %v2546
    %v3331 = vpack.c.b16 %v2563, %v2547
    %v3332 = vpack.c.b16 %v2564, %v2548
    %v3333 = vpack.c.b16 %v2565, %v2549
    %v3334 = vpack.c.b16 %v2566, %v2550
    %v3335 = vpack.c.b16 %v2567, %v2551
    %v3336 = vpack.c.b16 %v2568, %v2552
    %v3337 = vpack.c.b16 %v2569, %v2553
    %v3338 = vpack.c.b16 %v2586, %v2570
    %v3339 = vpack.c.b16 %v2587, %v2571
    %v3340 = vpack.c.b16 %v2588, %v2572
    %v3341 = vpack.c.b16 %v2589, %v2573
    %v3342 = vpack.c.b16 %v2590, %v2574
    %v3343 = vpack.c.b16 %v2591, %v2575
    %v3344 = vpack.c.b16 %v2592, %v2576
    %v3345 = vpack.c.b16 %v2593, %v2577
    %v3346 = vpack.c.b16 %v2594, %v2578
    %v3347 = vpack.c.b16 %v2595, %v2579
    %v3348 = vpack.c.b16 %v2596, %v2580
    %v3349 = vpack.c.b16 %v2597, %v2581
    %v3350 = vpack.c.b16 %v2598, %v2582
    %v3351 = vpack.c.b16 %v2599, %v2583
    %v3352 = vpack.c.b16 %v2600, %v2584
    %v3353 = vpack.c.b16 %v2601, %v2585
    %v3354 = vpack.c.b16 %v2618, %v2602
    %v3355 = vpack.c.b16 %v2619, %v2603
    %v3356 = vpack.c.b16 %v2620, %v2604
    %v3357 = vpack.c.b16 %v2621, %v2605
    %v3358 = vpack.c.b16 %v2622, %v2606
    %v3359 = vpack.c.b16 %v2623, %v2607
    %v3360 = vpack.c.b16 %v2624, %v2608
    %v3361 = vpack.c.b16 %v2625, %v2609
    %v3362 = vpack.c.b16 %v2626, %v2610
    %v3363 = vpack.c.b16 %v2627, %v2611
    %v3364 = vpack.c.b16 %v2628, %v2612
    %v3365 = vpack.c.b16 %v2629, %v2613
    %v3366 = vpack.c.b16 %v2630, %v2614
    %v3367 = vpack.c.b16 %v2631, %v2615
    %v3368 = vpack.c.b16 %v2632, %v2616
    %v3369 = vpack.c.b16 %v2633, %v2617
    %v3370 = vpack.c.b16 %v2650, %v2634
    %v3371 = vpack.c.b16 %v2651, %v2635
    %v3372 = vpack.c.b16 %v2652, %v2636
    %v3373 = vpack.c.b16 %v2653, %v2637
    %v3374 = vpack.c.b16 %v2654, %v2638
    %v3375 = vpack.c.b16 %v2655, %v2639
    %v3376 = vpack.c.b16 %v2656, %v2640
    %v3377 = vpack.c.b16 %v2657, %v2641
    %v3378 = vpack.c.b16 %v2658, %v2642
    %v3379 = vpack.c.b16 %v2659, %v2643
    %v3380 = vpack.c.b16 %v2660, %v2644
    %v3381 = vpack.c.b16 %v2661, %v2645
    %v3382 = vpack.c.b16 %v2662, %v2646
    %v3383 = vpack.c.b16 %v2663, %v2647
    %v3384 = vpack.c.b16 %v2664, %v2648
    %v3385 = vpack.c.b16 %v2665, %v2649
    %v3386 = vpack.c.b16 %v2682, %v2666
    %v3387 = vpack.c.b16 %v2683, %v2667
    %v3388 = vpack.c.b16 %v2684, %v2668
    %v3389 = vpack.c.b16 %v2685, %v2669
    %v3390 = vpack.c.b16 %v2686, %v2670
    %v3391 = vpack.c.b16 %v2687, %v2671
    %v3392 = vpack.c.b16 %v2688, %v2672
    %v3393 = vpack.c.b16 %v2689, %v2673
    %v3394 = vpack.c.b16 %v2690, %v2674
    %v3395 = vpack.c.b16 %v2691, %v2675
    %v3396 = vpack.c.b16 %v2692, %v2676
    %v3397 = vpack.c.b16 %v2693, %v2677
    %v3398 = vpack.c.b16 %v2694, %v2678
    %v3399 = vpack.c.b16 %v2695, %v2679
    %v3400 = vpack.c.b16 %v2696, %v2680
    %v3401 = vpack.c.b16 %v2697, %v2681
    %v3402 = vpack.c.b16 %v2714, %v2698
    %v3403 = vpack.c.b16 %v2715, %v2699
    %v3404 = vpack.c.b16 %v2716, %v2700
    %v3405 = vpack.c.b16 %v2717, %v2701
    %v3406 = vpack.c.b16 %v2718, %v2702
    %v3407 = vpack.c.b16 %v2719, %v2703
    %v3408 = vpack.c.b16 %v2720, %v2704
    %v3409 = vpack.c.b16 %v2721, %v2705
    %v3410 = vpack.c.b16 %v2722, %v2706
    %v3411 = vpack.c.b16 %v2723, %v2707
    %v3412 = vpack.c.b16 %v2724, %v2708
    %v3413 = vpack.c.b16 %v2725, %v2709
    %v3414 = vpack.c.b16 %v2726, %v2710
    %v3415 = vpack.c.b16 %v2727, %v2711
    %v3416 = vpack.c.b16 %v2728, %v2712
    %v3417 = vpack.c.b16 %v2729, %v2713
    %v3418 = vpack.c.b16 %v2746, %v2730
    %v3419 = vpack.c.b16 %v2747, %v2731
    %v3420 = vpack.c.b16 %v2748, %v2732
    %v3421 = vpack.c.b16 %v2749, %v2733
    %v3422 = vpack.c.b16 %v2750, %v2734
    %v3423 = vpack.c.b16 %v2751, %v2735
    %v3424 = vpack.c.b16 %v2752, %v2736
    %v3425 = vpack.c.b16 %v2753, %v2737
    %v3426 = vpack.c.b16 %v2754, %v2738
    %v3427 = vpack.c.b16 %v2755, %v2739
    %v3428 = vpack.c.b16 %v2756, %v2740
    %v3429 = vpack.c.b16 %v2757, %v2741
    %v3430 = vpack.c.b16 %v2758, %v2742
    %v3431 = vpack.c.b16 %v2759, %v2743
    %v3432 = vpack.c.b16 %v2760, %v2744
    %v3433 = vpack.c.b16 %v2761, %v2745
    %v3434 = vpack.c.b16 %v2778, %v2762
    %v3435 = vpack.c.b16 %v2779, %v2763
    %v3436 = vpack.c.b16 %v2780, %v2764
    %v3437 = vpack.c.b16 %v2781, %v2765
    %v3438 = vpack.c.b16 %v2782, %v2766
    %v3439 = vpack.c.b16 %v2783, %v2767
    %v3440 = vpack.c.b16 %v2784, %v2768
    %v3441 = vpack.c.b16 %v2785, %v2769
    %v3442 = vpack.c.b16 %v2786, %v2770
    %v3443 = vpack.c.b16 %v2787, %v2771
    %v3444 = vpack.c.b16 %v2788, %v2772
    %v3445 = vpack.c.b16 %v2789, %v2773
    %v3446 = vpack.c.b16 %v2790, %v2774
    %v3447 = vpack.c.b16 %v2791, %v2775
    %v3448 = vpack.c.b16 %v2792, %v2776
    %v3449 = vpack.c.b16 %v2793, %v2777
    %v3450 = vpack.c.b16 %v2810, %v2794
    %v3451 = vpack.c.b16 %v2811, %v2795
    %v3452 = vpack.c.b16 %v2812, %v2796
    %v3453 = vpack.c.b16 %v2813, %v2797
    %v3454 = vpack.c.b16 %v2814, %v2798
    %v3455 = vpack.c.b16 %v2815, %v2799
    %v3456 = vpack.c.b16 %v2816, %v2800
    %v3457 = vpack.c.b16 %v2817, %v2801
    %v3458 = vpack.c.b16 %v2818, %v2802
    %v3459 = vpack.c.b16 %v2819, %v2803
    %v3460 = vpack.c.b16 %v2820, %v2804
    %v3461 = vpack.c.b16 %v2821, %v2805
    %v3462 = vpack.c.b16 %v2822, %v2806
    %v3463 = vpack.c.b16 %v2823, %v2807
    %v3464 = vpack.c.b16 %v2824, %v2808
    %v3465 = vpack.c.b16 %v2825, %v2809
    %v3466 = vpack.c.b16 %v2842, %v2826
    %v3467 = vpack.c.b16 %v2843, %v2827
    %v3468 = vpack.c.b16 %v2844, %v2828
    %v3469 = vpack.c.b16 %v2845, %v2829
    %v3470 = vpack.c.b16 %v2846, %v2830
    %v3471 = vpack.c.b16 %v2847, %v2831
    %v3472 = vpack.c.b16 %v2848, %v2832
    %v3473 = vpack.c.b16 %v2849, %v2833
    %v3474 = vpack.c.b16 %v2850, %v2834
    %v3475 = vpack.c.b16 %v2851, %v2835
    %v3476 = vpack.c.b16 %v2852, %v2836
    %v3477 = vpack.c.b16 %v2853, %v2837
    %v3478 = vpack.c.b16 %v2854, %v2838
    %v3479 = vpack.c.b16 %v2855, %v2839
    %v3480 = vpack.c.b16 %v2856, %v2840
    %v3481 = vpack.c.b16 %v2857, %v2841
    %v3482 = vpack.c.b16 %v2874, %v2858
    %v3483 = vpack.c.b16 %v2875, %v2859
    %v3484 = vpack.c.b16 %v2876, %v2860
    %v3485 = vpack.c.b16 %v2877, %v2861
    %v3486 = vpack.c.b16 %v2878, %v2862
    %v3487 = vpack.c.b16 %v2879, %v2863
    %v3488 = vpack.c.b16 %v2880, %v2864
    %v3489 = vpack.c.b16 %v2881, %v2865
    %v3490 = vpack.c.b16 %v2882, %v2866
    %v3491 = vpack.c.b16 %v2883, %v2867
    %v3492 = vpack.c.b16 %v2884, %v2868
    %v3493 = vpack.c.b16 %v2885, %v2869
    %v3494 = vpack.c.b16 %v2886, %v2870
    %v3495 = vpack.c.b16 %v2887, %v2871
    %v3496 = vpack.c.b16 %v2888, %v2872
    %v3497 = vpack.c.b16 %v2889, %v2873
    %v3498 = vpack.c.b16 %v2906, %v2890
    %v3499 = vpack.c.b16 %v2907, %v2891
    %v3500 = vpack.c.b16 %v2908, %v2892
    %v3501 = vpack.c.b16 %v2909, %v2893
    %v3502 = vpack.c.b16 %v2910, %v2894
    %v3503 = vpack.c.b16 %v2911, %v2895
    %v3504 = vpack.c.b16 %v2912, %v2896
    %v3505 = vpack.c.b16 %v2913, %v2897
    %v3506 = vpack.c.b16 %v2914, %v2898
    %v3507 = vpack.c.b16 %v2915, %v2899
    %v3508 = vpack.c.b16 %v2916, %v2900
    %v3509 = vpack.c.b16 %v2917, %v2901
    %v3510 = vpack.c.b16 %v2918, %v2902
    %v3511 = vpack.c.b16 %v2919, %v2903
    %v3512 = vpack.c.b16 %v2920, %v2904
    %v3513 = vpack.c.b16 %v2921, %v2905
    %v3514 = vpack.c.b16 %v2938, %v2922
    %v3515 = vpack.c.b16 %v2939, %v2923
    %v3516 = vpack.c.b16 %v2940, %v2924
    %v3517 = vpack.c.b16 %v2941, %v2925
    %v3518 = vpack.c.b16 %v2942, %v2926
    %v3519 = vpack.c.b16 %v2943, %v2927
    %v3520 = vpack.c.b16 %v2944, %v2928
    %v3521 = vpack.c.b16 %v2945, %v2929
    %v3522 = vpack.c.b16 %v2946, %v2930
    %v3523 = vpack.c.b16 %v2947, %v2931
    %v3524 = vpack.c.b16 %v2948, %v2932
    %v3525 = vpack.c.b16 %v2949, %v2933
    %v3526 = vpack.c.b16 %v2950, %v2934
    %v3527 = vpack.c.b16 %v2951, %v2935
    %v3528 = vpack.c.b16 %v2952, %v2936
    %v3529 = vpack.c.b16 %v2953, %v2937
    %v3530 = vpack.c.b16 %v2970, %v2954
    %v3531 = vpack.c.b16 %v2971, %v2955
    %v3532 = vpack.c.b16 %v2972, %v2956
    %v3533 = vpack.c.b16 %v2973, %v2957
    %v3534 = vpack.c.b16 %v2974, %v2958
    %v3535 = vpack.c.b16 %v2975, %v2959
    %v3536 = vpack.c.b16 %v2976, %v2960
    %v3537 = vpack.c.b16 %v2977, %v2961
    %v3538 = vpack.c.b16 %v2978, %v2962
    %v3539 = vpack.c.b16 %v2979, %v2963
    %v3540 = vpack.c.b16 %v2980, %v2964
    %v3541 = vpack.c.b16 %v2981, %v2965
    %v3542 = vpack.c.b16 %v2982, %v2966
    %v3543 = vpack.c.b16 %v2983, %v2967
    %v3544 = vpack.c.b16 %v2984, %v2968
    %v3545 = vpack.c.b16 %v2985, %v2969
    %v3546 = vpack.c.b16 %v3002, %v2986
    %v3547 = vpack.c.b16 %v3003, %v2987
    %v3548 = vpack.c.b16 %v3004, %v2988
    %v3549 = vpack.c.b16 %v3005, %v2989
    %v3550 = vpack.c.b16 %v3006, %v2990
    %v3551 = vpack.c.b16 %v3007, %v2991
    %v3552 = vpack.c.b16 %v3008, %v2992
    %v3553 = vpack.c.b16 %v3009, %v2993
    %v3554 = vpack.c.b16 %v3010, %v2994
    %v3555 = vpack.c.b16 %v3011, %v2995
    %v3556 = vpack.c.b16 %v3012, %v2996
    %v3557 = vpack.c.b16 %v3013, %v2997
    %v3558 = vpack.c.b16 %v3014, %v2998
    %v3559 = vpack.c.b16 %v3015, %v2999
    %v3560 = vpack.c.b16 %v3016, %v3000
    %v3561 = vpack.c.b16 %v3017, %v3001
    %v3562 = vpack.c.b16 %v3034, %v3018
    %v3563 = vpack.c.b16 %v3035, %v3019
    %v3564 = vpack.c.b16 %v3036, %v3020
    %v3565 = vpack.c.b16 %v3037, %v3021
    %v3566 = vpack.c.b16 %v3038, %v3022
    %v3567 = vpack.c.b16 %v3039, %v3023
    %v3568 = vpack.c.b16 %v3040, %v3024
    %v3569 = vpack.c.b16 %v3041, %v3025
    %v3570 = vpack.c.b16 %v3042, %v3026
    %v3571 = vpack.c.b16 %v3043, %v3027
    %v3572 = vpack.c.b16 %v3044, %v3028
    %v3573 = vpack.c.b16 %v3045, %v3029
    %v3574 = vpack.c.b16 %v3046, %v3030
    %v3575 = vpack.c.b16 %v3047, %v3031
    %v3576 = vpack.c.b16 %v3048, %v3032
    %v3577 = vpack.c.b16 %v3049, %v3033
    %v3578 = vpack.c.b16 %v3066, %v3050
    %v3579 = vpack.c.b16 %v3067, %v3051
    %v3580 = vpack.c.b16 %v3068, %v3052
    %v3581 = vpack.c.b16 %v3069, %v3053
    %v3582 = vpack.c.b16 %v3070, %v3054
    %v3583 = vpack.c.b16 %v3071, %v3055
    %v3584 = vpack.c.b16 %v3072, %v3056
    %v3585 = vpack.c.b16 %v3073, %v3057
    %v3586 = vpack.c.b16 %v3074, %v3058
    %v3587 = vpack.c.b16 %v3075, %v3059
    %v3588 = vpack.c.b16 %v3076, %v3060
    %v3589 = vpack.c.b16 %v3077, %v3061
    %v3590 = vpack.c.b16 %v3078, %v3062
    %v3591 = vpack.c.b16 %v3079, %v3063
    %v3592 = vpack.c.b16 %v3080, %v3064
    %v3593 = vpack.c.b16 %v3081, %v3065
    %4106 = vmatpush.bf16.msra.mxu0 %v3194
    %4107 = vmatpush.bf16.msra.mxu0 %v3178
    %4108 = vmatpush.bf16.msra.mxu0 %v3162
    %4109 = vmatpush.bf16.msra.mxu0 %v3146
    %4110 = vmatpush.bf16.msra.mxu0 %v3130
    %4111 = vmatpush.bf16.msra.mxu0 %v3114
    %4112 = vmatpush.bf16.msra.mxu0 %v3098
    %4113 = vmatpush.bf16.msra.mxu0 %v3082
    %4114 = vmatmul.bf16.gmra.mxu0 %v1542
    %v4115 = vpop.f32.mrf.mxu0
    %v4116 = vadd.f32 0.0, %v4115
    %v4117 = vpop.f32.mrf.mxu0
    %4118 = vdwg.mxu0
    %4119 = vmatpush.bf16.msra.mxu0 %v3322
    %4120 = vmatpush.bf16.msra.mxu0 %v3306
    %4121 = vmatpush.bf16.msra.mxu0 %v3290
    %4122 = vmatpush.bf16.msra.mxu0 %v3274
    %4123 = vmatpush.bf16.msra.mxu0 %v3258
    %4124 = vmatpush.bf16.msra.mxu0 %v3242
    %4125 = vmatpush.bf16.msra.mxu0 %v3226
    %4126 = vmatpush.bf16.msra.mxu0 %v3210
    %4127 = vmatmul.bf16.gmra.mxu0 %v1543
    %v4128 = vpop.f32.mrf.mxu0
    %v4129 = vadd.f32 %v4116, %v4128
    %v4130 = vpop.f32.mrf.mxu0
    %4131 = vdwg.mxu0
    %4132 = vmatpush.bf16.msra.mxu0 %v3450
    %4133 = vmatpush.bf16.msra.mxu0 %v3434
    %4134 = vmatpush.bf16.msra.mxu0 %v3418
    %4135 = vmatpush.bf16.msra.mxu0 %v3402
    %4136 = vmatpush.bf16.msra.mxu0 %v3386
    %4137 = vmatpush.bf16.msra.mxu0 %v3370
    %4138 = vmatpush.bf16.msra.mxu0 %v3354
    %4139 = vmatpush.bf16.msra.mxu0 %v3338
    %4140 = vmatmul.bf16.gmra.mxu0 %v1544
    %v4141 = vpop.f32.mrf.mxu0
    %v4142 = vadd.f32 %v4129, %v4141
    %v4143 = vpop.f32.mrf.mxu0
    %4144 = vdwg.mxu0
    %4145 = vmatpush.bf16.msra.mxu0 %v3578
    %4146 = vmatpush.bf16.msra.mxu0 %v3562
    %4147 = vmatpush.bf16.msra.mxu0 %v3546
    %4148 = vmatpush.bf16.msra.mxu0 %v3530
    %4149 = vmatpush.bf16.msra.mxu0 %v3514
    %4150 = vmatpush.bf16.msra.mxu0 %v3498
    %4151 = vmatpush.bf16.msra.mxu0 %v3482
    %4152 = vmatpush.bf16.msra.mxu0 %v3466
    %4153 = vmatmul.bf16.gmra.mxu0 %v1545
    %v4154 = vpop.f32.mrf.mxu0
    %v4155 = vadd.f32 %v4142, %v4154
    %v4156 = vpop.f32.mrf.mxu0
    %4157 = vdwg.mxu0
    %4158 = vmatpush.bf16.msra.mxu0 %v3195
    %4159 = vmatpush.bf16.msra.mxu0 %v3179
    %4160 = vmatpush.bf16.msra.mxu0 %v3163
    %4161 = vmatpush.bf16.msra.mxu0 %v3147
    %4162 = vmatpush.bf16.msra.mxu0 %v3131
    %4163 = vmatpush.bf16.msra.mxu0 %v3115
    %4164 = vmatpush.bf16.msra.mxu0 %v3099
    %4165 = vmatpush.bf16.msra.mxu0 %v3083
    %4166 = vmatmul.bf16.gmra.mxu0 %v1542
    %v4167 = vpop.f32.mrf.mxu0
    %v4168 = vadd.f32 0.0, %v4167
    %v4169 = vpop.f32.mrf.mxu0
    %4170 = vdwg.mxu0
    %4171 = vmatpush.bf16.msra.mxu0 %v3323
    %4172 = vmatpush.bf16.msra.mxu0 %v3307
    %4173 = vmatpush.bf16.msra.mxu0 %v3291
    %4174 = vmatpush.bf16.msra.mxu0 %v3275
    %4175 = vmatpush.bf16.msra.mxu0 %v3259
    %4176 = vmatpush.bf16.msra.mxu0 %v3243
    %4177 = vmatpush.bf16.msra.mxu0 %v3227
    %4178 = vmatpush.bf16.msra.mxu0 %v3211
    %4179 = vmatmul.bf16.gmra.mxu0 %v1543
    %v4180 = vpop.f32.mrf.mxu0
    %v4181 = vadd.f32 %v4168, %v4180
    %v4182 = vpop.f32.mrf.mxu0
    %4183 = vdwg.mxu0
    %4184 = vmatpush.bf16.msra.mxu0 %v3451
    %4185 = vmatpush.bf16.msra.mxu0 %v3435
    %4186 = vmatpush.bf16.msra.mxu0 %v3419
    %4187 = vmatpush.bf16.msra.mxu0 %v3403
    %4188 = vmatpush.bf16.msra.mxu0 %v3387
    %4189 = vmatpush.bf16.msra.mxu0 %v3371
    %4190 = vmatpush.bf16.msra.mxu0 %v3355
    %4191 = vmatpush.bf16.msra.mxu0 %v3339
    %4192 = vmatmul.bf16.gmra.mxu0 %v1544
    %v4193 = vpop.f32.mrf.mxu0
    %v4194 = vadd.f32 %v4181, %v4193
    %v4195 = vpop.f32.mrf.mxu0
    %4196 = vdwg.mxu0
    %4197 = vmatpush.bf16.msra.mxu0 %v3579
    %4198 = vmatpush.bf16.msra.mxu0 %v3563
    %4199 = vmatpush.bf16.msra.mxu0 %v3547
    %4200 = vmatpush.bf16.msra.mxu0 %v3531
    %4201 = vmatpush.bf16.msra.mxu0 %v3515
    %4202 = vmatpush.bf16.msra.mxu0 %v3499
    %4203 = vmatpush.bf16.msra.mxu0 %v3483
    %4204 = vmatpush.bf16.msra.mxu0 %v3467
    %4205 = vmatmul.bf16.gmra.mxu0 %v1545
    %v4206 = vpop.f32.mrf.mxu0
    %v4207 = vadd.f32 %v4194, %v4206
    %v4208 = vpop.f32.mrf.mxu0
    %4209 = vdwg.mxu0
    %4210 = vmatpush.bf16.msra.mxu0 %v3196
    %4211 = vmatpush.bf16.msra.mxu0 %v3180
    %4212 = vmatpush.bf16.msra.mxu0 %v3164
    %4213 = vmatpush.bf16.msra.mxu0 %v3148
    %4214 = vmatpush.bf16.msra.mxu0 %v3132
    %4215 = vmatpush.bf16.msra.mxu0 %v3116
    %4216 = vmatpush.bf16.msra.mxu0 %v3100
    %4217 = vmatpush.bf16.msra.mxu0 %v3084
    %4218 = vmatmul.bf16.gmra.mxu0 %v1542
    %v4219 = vpop.f32.mrf.mxu0
    %v4220 = vadd.f32 0.0, %v4219
    %v4221 = vpop.f32.mrf.mxu0
    %4222 = vdwg.mxu0
    %4223 = vmatpush.bf16.msra.mxu0 %v3324
    %4224 = vmatpush.bf16.msra.mxu0 %v3308
    %4225 = vmatpush.bf16.msra.mxu0 %v3292
    %4226 = vmatpush.bf16.msra.mxu0 %v3276
    %4227 = vmatpush.bf16.msra.mxu0 %v3260
    %4228 = vmatpush.bf16.msra.mxu0 %v3244
    %4229 = vmatpush.bf16.msra.mxu0 %v3228
    %4230 = vmatpush.bf16.msra.mxu0 %v3212
    %4231 = vmatmul.bf16.gmra.mxu0 %v1543
    %v4232 = vpop.f32.mrf.mxu0
    %v4233 = vadd.f32 %v4220, %v4232
    %v4234 = vpop.f32.mrf.mxu0
    %4235 = vdwg.mxu0
    %4236 = vmatpush.bf16.msra.mxu0 %v3452
    %4237 = vmatpush.bf16.msra.mxu0 %v3436
    %4238 = vmatpush.bf16.msra.mxu0 %v3420
    %4239 = vmatpush.bf16.msra.mxu0 %v3404
    %4240 = vmatpush.bf16.msra.mxu0 %v3388
    %4241 = vmatpush.bf16.msra.mxu0 %v3372
    %4242 = vmatpush.bf16.msra.mxu0 %v3356
    %4243 = vmatpush.bf16.msra.mxu0 %v3340
    %4244 = vmatmul.bf16.gmra.mxu0 %v1544
    %v4245 = vpop.f32.mrf.mxu0
    %v4246 = vadd.f32 %v4233, %v4245
    %v4247 = vpop.f32.mrf.mxu0
    %4248 = vdwg.mxu0
    %4249 = vmatpush.bf16.msra.mxu0 %v3580
    %4250 = vmatpush.bf16.msra.mxu0 %v3564
    %4251 = vmatpush.bf16.msra.mxu0 %v3548
    %4252 = vmatpush.bf16.msra.mxu0 %v3532
    %4253 = vmatpush.bf16.msra.mxu0 %v3516
    %4254 = vmatpush.bf16.msra.mxu0 %v3500
    %4255 = vmatpush.bf16.msra.mxu0 %v3484
    %4256 = vmatpush.bf16.msra.mxu0 %v3468
    %4257 = vmatmul.bf16.gmra.mxu0 %v1545
    %v4258 = vpop.f32.mrf.mxu0
    %v4259 = vadd.f32 %v4246, %v4258
    %v4260 = vpop.f32.mrf.mxu0
    %4261 = vdwg.mxu0
    %4262 = vmatpush.bf16.msra.mxu0 %v3197
    %4263 = vmatpush.bf16.msra.mxu0 %v3181
    %4264 = vmatpush.bf16.msra.mxu0 %v3165
    %4265 = vmatpush.bf16.msra.mxu0 %v3149
    %4266 = vmatpush.bf16.msra.mxu0 %v3133
    %4267 = vmatpush.bf16.msra.mxu0 %v3117
    %4268 = vmatpush.bf16.msra.mxu0 %v3101
    %4269 = vmatpush.bf16.msra.mxu0 %v3085
    %4270 = vmatmul.bf16.gmra.mxu0 %v1542
    %v4271 = vpop.f32.mrf.mxu0
    %v4272 = vadd.f32 0.0, %v4271
    %v4273 = vpop.f32.mrf.mxu0
    %4274 = vdwg.mxu0
    %4275 = vmatpush.bf16.msra.mxu0 %v3325
    %4276 = vmatpush.bf16.msra.mxu0 %v3309
    %4277 = vmatpush.bf16.msra.mxu0 %v3293
    %4278 = vmatpush.bf16.msra.mxu0 %v3277
    %4279 = vmatpush.bf16.msra.mxu0 %v3261
    %4280 = vmatpush.bf16.msra.mxu0 %v3245
    %4281 = vmatpush.bf16.msra.mxu0 %v3229
    %4282 = vmatpush.bf16.msra.mxu0 %v3213
    %4283 = vmatmul.bf16.gmra.mxu0 %v1543
    %v4284 = vpop.f32.mrf.mxu0
    %v4285 = vadd.f32 %v4272, %v4284
    %v4286 = vpop.f32.mrf.mxu0
    %4287 = vdwg.mxu0
    %4288 = vmatpush.bf16.msra.mxu0 %v3453
    %4289 = vmatpush.bf16.msra.mxu0 %v3437
    %4290 = vmatpush.bf16.msra.mxu0 %v3421
    %4291 = vmatpush.bf16.msra.mxu0 %v3405
    %4292 = vmatpush.bf16.msra.mxu0 %v3389
    %4293 = vmatpush.bf16.msra.mxu0 %v3373
    %4294 = vmatpush.bf16.msra.mxu0 %v3357
    %4295 = vmatpush.bf16.msra.mxu0 %v3341
    %4296 = vmatmul.bf16.gmra.mxu0 %v1544
    %v4297 = vpop.f32.mrf.mxu0
    %v4298 = vadd.f32 %v4285, %v4297
    %v4299 = vpop.f32.mrf.mxu0
    %4300 = vdwg.mxu0
    %4301 = vmatpush.bf16.msra.mxu0 %v3581
    %4302 = vmatpush.bf16.msra.mxu0 %v3565
    %4303 = vmatpush.bf16.msra.mxu0 %v3549
    %4304 = vmatpush.bf16.msra.mxu0 %v3533
    %4305 = vmatpush.bf16.msra.mxu0 %v3517
    %4306 = vmatpush.bf16.msra.mxu0 %v3501
    %4307 = vmatpush.bf16.msra.mxu0 %v3485
    %4308 = vmatpush.bf16.msra.mxu0 %v3469
    %4309 = vmatmul.bf16.gmra.mxu0 %v1545
    %v4310 = vpop.f32.mrf.mxu0
    %v4311 = vadd.f32 %v4298, %v4310
    %v4312 = vpop.f32.mrf.mxu0
    %4313 = vdwg.mxu0
    %4314 = vmatpush.bf16.msra.mxu0 %v3198
    %4315 = vmatpush.bf16.msra.mxu0 %v3182
    %4316 = vmatpush.bf16.msra.mxu0 %v3166
    %4317 = vmatpush.bf16.msra.mxu0 %v3150
    %4318 = vmatpush.bf16.msra.mxu0 %v3134
    %4319 = vmatpush.bf16.msra.mxu0 %v3118
    %4320 = vmatpush.bf16.msra.mxu0 %v3102
    %4321 = vmatpush.bf16.msra.mxu0 %v3086
    %4322 = vmatmul.bf16.gmra.mxu0 %v1542
    %v4323 = vpop.f32.mrf.mxu0
    %v4324 = vadd.f32 0.0, %v4323
    %v4325 = vpop.f32.mrf.mxu0
    %4326 = vdwg.mxu0
    %4327 = vmatpush.bf16.msra.mxu0 %v3326
    %4328 = vmatpush.bf16.msra.mxu0 %v3310
    %4329 = vmatpush.bf16.msra.mxu0 %v3294
    %4330 = vmatpush.bf16.msra.mxu0 %v3278
    %4331 = vmatpush.bf16.msra.mxu0 %v3262
    %4332 = vmatpush.bf16.msra.mxu0 %v3246
    %4333 = vmatpush.bf16.msra.mxu0 %v3230
    %4334 = vmatpush.bf16.msra.mxu0 %v3214
    %4335 = vmatmul.bf16.gmra.mxu0 %v1543
    %v4336 = vpop.f32.mrf.mxu0
    %v4337 = vadd.f32 %v4324, %v4336
    %v4338 = vpop.f32.mrf.mxu0
    %4339 = vdwg.mxu0
    %4340 = vmatpush.bf16.msra.mxu0 %v3454
    %4341 = vmatpush.bf16.msra.mxu0 %v3438
    %4342 = vmatpush.bf16.msra.mxu0 %v3422
    %4343 = vmatpush.bf16.msra.mxu0 %v3406
    %4344 = vmatpush.bf16.msra.mxu0 %v3390
    %4345 = vmatpush.bf16.msra.mxu0 %v3374
    %4346 = vmatpush.bf16.msra.mxu0 %v3358
    %4347 = vmatpush.bf16.msra.mxu0 %v3342
    %4348 = vmatmul.bf16.gmra.mxu0 %v1544
    %v4349 = vpop.f32.mrf.mxu0
    %v4350 = vadd.f32 %v4337, %v4349
    %v4351 = vpop.f32.mrf.mxu0
    %4352 = vdwg.mxu0
    %4353 = vmatpush.bf16.msra.mxu0 %v3582
    %4354 = vmatpush.bf16.msra.mxu0 %v3566
    %4355 = vmatpush.bf16.msra.mxu0 %v3550
    %4356 = vmatpush.bf16.msra.mxu0 %v3534
    %4357 = vmatpush.bf16.msra.mxu0 %v3518
    %4358 = vmatpush.bf16.msra.mxu0 %v3502
    %4359 = vmatpush.bf16.msra.mxu0 %v3486
    %4360 = vmatpush.bf16.msra.mxu0 %v3470
    %4361 = vmatmul.bf16.gmra.mxu0 %v1545
    %v4362 = vpop.f32.mrf.mxu0
    %v4363 = vadd.f32 %v4350, %v4362
    %v4364 = vpop.f32.mrf.mxu0
    %4365 = vdwg.mxu0
    %4366 = vmatpush.bf16.msra.mxu0 %v3199
    %4367 = vmatpush.bf16.msra.mxu0 %v3183
    %4368 = vmatpush.bf16.msra.mxu0 %v3167
    %4369 = vmatpush.bf16.msra.mxu0 %v3151
    %4370 = vmatpush.bf16.msra.mxu0 %v3135
    %4371 = vmatpush.bf16.msra.mxu0 %v3119
    %4372 = vmatpush.bf16.msra.mxu0 %v3103
    %4373 = vmatpush.bf16.msra.mxu0 %v3087
    %4374 = vmatmul.bf16.gmra.mxu0 %v1542
    %v4375 = vpop.f32.mrf.mxu0
    %v4376 = vadd.f32 0.0, %v4375
    %v4377 = vpop.f32.mrf.mxu0
    %4378 = vdwg.mxu0
    %4379 = vmatpush.bf16.msra.mxu0 %v3327
    %4380 = vmatpush.bf16.msra.mxu0 %v3311
    %4381 = vmatpush.bf16.msra.mxu0 %v3295
    %4382 = vmatpush.bf16.msra.mxu0 %v3279
    %4383 = vmatpush.bf16.msra.mxu0 %v3263
    %4384 = vmatpush.bf16.msra.mxu0 %v3247
    %4385 = vmatpush.bf16.msra.mxu0 %v3231
    %4386 = vmatpush.bf16.msra.mxu0 %v3215
    %4387 = vmatmul.bf16.gmra.mxu0 %v1543
    %v4388 = vpop.f32.mrf.mxu0
    %v4389 = vadd.f32 %v4376, %v4388
    %v4390 = vpop.f32.mrf.mxu0
    %4391 = vdwg.mxu0
    %4392 = vmatpush.bf16.msra.mxu0 %v3455
    %4393 = vmatpush.bf16.msra.mxu0 %v3439
    %4394 = vmatpush.bf16.msra.mxu0 %v3423
    %4395 = vmatpush.bf16.msra.mxu0 %v3407
    %4396 = vmatpush.bf16.msra.mxu0 %v3391
    %4397 = vmatpush.bf16.msra.mxu0 %v3375
    %4398 = vmatpush.bf16.msra.mxu0 %v3359
    %4399 = vmatpush.bf16.msra.mxu0 %v3343
    %4400 = vmatmul.bf16.gmra.mxu0 %v1544
    %v4401 = vpop.f32.mrf.mxu0
    %v4402 = vadd.f32 %v4389, %v4401
    %v4403 = vpop.f32.mrf.mxu0
    %4404 = vdwg.mxu0
    %4405 = vmatpush.bf16.msra.mxu0 %v3583
    %4406 = vmatpush.bf16.msra.mxu0 %v3567
    %4407 = vmatpush.bf16.msra.mxu0 %v3551
    %4408 = vmatpush.bf16.msra.mxu0 %v3535
    %4409 = vmatpush.bf16.msra.mxu0 %v3519
    %4410 = vmatpush.bf16.msra.mxu0 %v3503
    %4411 = vmatpush.bf16.msra.mxu0 %v3487
    %4412 = vmatpush.bf16.msra.mxu0 %v3471
    %4413 = vmatmul.bf16.gmra.mxu0 %v1545
    %v4414 = vpop.f32.mrf.mxu0
    %v4415 = vadd.f32 %v4402, %v4414
    %v4416 = vpop.f32.mrf.mxu0
    %4417 = vdwg.mxu0
    %4418 = vmatpush.bf16.msra.mxu0 %v3200
    %4419 = vmatpush.bf16.msra.mxu0 %v3184
    %4420 = vmatpush.bf16.msra.mxu0 %v3168
    %4421 = vmatpush.bf16.msra.mxu0 %v3152
    %4422 = vmatpush.bf16.msra.mxu0 %v3136
    %4423 = vmatpush.bf16.msra.mxu0 %v3120
    %4424 = vmatpush.bf16.msra.mxu0 %v3104
    %4425 = vmatpush.bf16.msra.mxu0 %v3088
    %4426 = vmatmul.bf16.gmra.mxu0 %v1542
    %v4427 = vpop.f32.mrf.mxu0
    %v4428 = vadd.f32 0.0, %v4427
    %v4429 = vpop.f32.mrf.mxu0
    %4430 = vdwg.mxu0
    %4431 = vmatpush.bf16.msra.mxu0 %v3328
    %4432 = vmatpush.bf16.msra.mxu0 %v3312
    %4433 = vmatpush.bf16.msra.mxu0 %v3296
    %4434 = vmatpush.bf16.msra.mxu0 %v3280
    %4435 = vmatpush.bf16.msra.mxu0 %v3264
    %4436 = vmatpush.bf16.msra.mxu0 %v3248
    %4437 = vmatpush.bf16.msra.mxu0 %v3232
    %4438 = vmatpush.bf16.msra.mxu0 %v3216
    %4439 = vmatmul.bf16.gmra.mxu0 %v1543
    %v4440 = vpop.f32.mrf.mxu0
    %v4441 = vadd.f32 %v4428, %v4440
    %v4442 = vpop.f32.mrf.mxu0
    %4443 = vdwg.mxu0
    %4444 = vmatpush.bf16.msra.mxu0 %v3456
    %4445 = vmatpush.bf16.msra.mxu0 %v3440
    %4446 = vmatpush.bf16.msra.mxu0 %v3424
    %4447 = vmatpush.bf16.msra.mxu0 %v3408
    %4448 = vmatpush.bf16.msra.mxu0 %v3392
    %4449 = vmatpush.bf16.msra.mxu0 %v3376
    %4450 = vmatpush.bf16.msra.mxu0 %v3360
    %4451 = vmatpush.bf16.msra.mxu0 %v3344
    %4452 = vmatmul.bf16.gmra.mxu0 %v1544
    %v4453 = vpop.f32.mrf.mxu0
    %v4454 = vadd.f32 %v4441, %v4453
    %v4455 = vpop.f32.mrf.mxu0
    %4456 = vdwg.mxu0
    %4457 = vmatpush.bf16.msra.mxu0 %v3584
    %4458 = vmatpush.bf16.msra.mxu0 %v3568
    %4459 = vmatpush.bf16.msra.mxu0 %v3552
    %4460 = vmatpush.bf16.msra.mxu0 %v3536
    %4461 = vmatpush.bf16.msra.mxu0 %v3520
    %4462 = vmatpush.bf16.msra.mxu0 %v3504
    %4463 = vmatpush.bf16.msra.mxu0 %v3488
    %4464 = vmatpush.bf16.msra.mxu0 %v3472
    %4465 = vmatmul.bf16.gmra.mxu0 %v1545
    %v4466 = vpop.f32.mrf.mxu0
    %v4467 = vadd.f32 %v4454, %v4466
    %v4468 = vpop.f32.mrf.mxu0
    %4469 = vdwg.mxu0
    %4470 = vmatpush.bf16.msra.mxu0 %v3201
    %4471 = vmatpush.bf16.msra.mxu0 %v3185
    %4472 = vmatpush.bf16.msra.mxu0 %v3169
    %4473 = vmatpush.bf16.msra.mxu0 %v3153
    %4474 = vmatpush.bf16.msra.mxu0 %v3137
    %4475 = vmatpush.bf16.msra.mxu0 %v3121
    %4476 = vmatpush.bf16.msra.mxu0 %v3105
    %4477 = vmatpush.bf16.msra.mxu0 %v3089
    %4478 = vmatmul.bf16.gmra.mxu0 %v1542
    %v4479 = vpop.f32.mrf.mxu0
    %v4480 = vadd.f32 0.0, %v4479
    %v4481 = vpop.f32.mrf.mxu0
    %4482 = vdwg.mxu0
    %4483 = vmatpush.bf16.msra.mxu0 %v3329
    %4484 = vmatpush.bf16.msra.mxu0 %v3313
    %4485 = vmatpush.bf16.msra.mxu0 %v3297
    %4486 = vmatpush.bf16.msra.mxu0 %v3281
    %4487 = vmatpush.bf16.msra.mxu0 %v3265
    %4488 = vmatpush.bf16.msra.mxu0 %v3249
    %4489 = vmatpush.bf16.msra.mxu0 %v3233
    %4490 = vmatpush.bf16.msra.mxu0 %v3217
    %4491 = vmatmul.bf16.gmra.mxu0 %v1543
    %v4492 = vpop.f32.mrf.mxu0
    %v4493 = vadd.f32 %v4480, %v4492
    %v4494 = vpop.f32.mrf.mxu0
    %4495 = vdwg.mxu0
    %4496 = vmatpush.bf16.msra.mxu0 %v3457
    %4497 = vmatpush.bf16.msra.mxu0 %v3441
    %4498 = vmatpush.bf16.msra.mxu0 %v3425
    %4499 = vmatpush.bf16.msra.mxu0 %v3409
    %4500 = vmatpush.bf16.msra.mxu0 %v3393
    %4501 = vmatpush.bf16.msra.mxu0 %v3377
    %4502 = vmatpush.bf16.msra.mxu0 %v3361
    %4503 = vmatpush.bf16.msra.mxu0 %v3345
    %4504 = vmatmul.bf16.gmra.mxu0 %v1544
    %v4505 = vpop.f32.mrf.mxu0
    %v4506 = vadd.f32 %v4493, %v4505
    %v4507 = vpop.f32.mrf.mxu0
    %4508 = vdwg.mxu0
    %4509 = vmatpush.bf16.msra.mxu0 %v3585
    %4510 = vmatpush.bf16.msra.mxu0 %v3569
    %4511 = vmatpush.bf16.msra.mxu0 %v3553
    %4512 = vmatpush.bf16.msra.mxu0 %v3537
    %4513 = vmatpush.bf16.msra.mxu0 %v3521
    %4514 = vmatpush.bf16.msra.mxu0 %v3505
    %4515 = vmatpush.bf16.msra.mxu0 %v3489
    %4516 = vmatpush.bf16.msra.mxu0 %v3473
    %4517 = vmatmul.bf16.gmra.mxu0 %v1545
    %v4518 = vpop.f32.mrf.mxu0
    %v4519 = vadd.f32 %v4506, %v4518
    %v4520 = vpop.f32.mrf.mxu0
    %4521 = vdwg.mxu0
    %4522 = vmatpush.bf16.msra.mxu0 %v3202
    %4523 = vmatpush.bf16.msra.mxu0 %v3186
    %4524 = vmatpush.bf16.msra.mxu0 %v3170
    %4525 = vmatpush.bf16.msra.mxu0 %v3154
    %4526 = vmatpush.bf16.msra.mxu0 %v3138
    %4527 = vmatpush.bf16.msra.mxu0 %v3122
    %4528 = vmatpush.bf16.msra.mxu0 %v3106
    %4529 = vmatpush.bf16.msra.mxu0 %v3090
    %4530 = vmatmul.bf16.gmra.mxu0 %v1542
    %v4531 = vpop.f32.mrf.mxu0
    %v4532 = vadd.f32 0.0, %v4531
    %v4533 = vpop.f32.mrf.mxu0
    %4534 = vdwg.mxu0
    %4535 = vmatpush.bf16.msra.mxu0 %v3330
    %4536 = vmatpush.bf16.msra.mxu0 %v3314
    %4537 = vmatpush.bf16.msra.mxu0 %v3298
    %4538 = vmatpush.bf16.msra.mxu0 %v3282
    %4539 = vmatpush.bf16.msra.mxu0 %v3266
    %4540 = vmatpush.bf16.msra.mxu0 %v3250
    %4541 = vmatpush.bf16.msra.mxu0 %v3234
    %4542 = vmatpush.bf16.msra.mxu0 %v3218
    %4543 = vmatmul.bf16.gmra.mxu0 %v1543
    %v4544 = vpop.f32.mrf.mxu0
    %v4545 = vadd.f32 %v4532, %v4544
    %v4546 = vpop.f32.mrf.mxu0
    %4547 = vdwg.mxu0
    %4548 = vmatpush.bf16.msra.mxu0 %v3458
    %4549 = vmatpush.bf16.msra.mxu0 %v3442
    %4550 = vmatpush.bf16.msra.mxu0 %v3426
    %4551 = vmatpush.bf16.msra.mxu0 %v3410
    %4552 = vmatpush.bf16.msra.mxu0 %v3394
    %4553 = vmatpush.bf16.msra.mxu0 %v3378
    %4554 = vmatpush.bf16.msra.mxu0 %v3362
    %4555 = vmatpush.bf16.msra.mxu0 %v3346
    %4556 = vmatmul.bf16.gmra.mxu0 %v1544
    %v4557 = vpop.f32.mrf.mxu0
    %v4558 = vadd.f32 %v4545, %v4557
    %v4559 = vpop.f32.mrf.mxu0
    %4560 = vdwg.mxu0
    %4561 = vmatpush.bf16.msra.mxu0 %v3586
    %4562 = vmatpush.bf16.msra.mxu0 %v3570
    %4563 = vmatpush.bf16.msra.mxu0 %v3554
    %4564 = vmatpush.bf16.msra.mxu0 %v3538
    %4565 = vmatpush.bf16.msra.mxu0 %v3522
    %4566 = vmatpush.bf16.msra.mxu0 %v3506
    %4567 = vmatpush.bf16.msra.mxu0 %v3490
    %4568 = vmatpush.bf16.msra.mxu0 %v3474
    %4569 = vmatmul.bf16.gmra.mxu0 %v1545
    %v4570 = vpop.f32.mrf.mxu0
    %v4571 = vadd.f32 %v4558, %v4570
    %v4572 = vpop.f32.mrf.mxu0
    %4573 = vdwg.mxu0
    %4574 = vmatpush.bf16.msra.mxu0 %v3203
    %4575 = vmatpush.bf16.msra.mxu0 %v3187
    %4576 = vmatpush.bf16.msra.mxu0 %v3171
    %4577 = vmatpush.bf16.msra.mxu0 %v3155
    %4578 = vmatpush.bf16.msra.mxu0 %v3139
    %4579 = vmatpush.bf16.msra.mxu0 %v3123
    %4580 = vmatpush.bf16.msra.mxu0 %v3107
    %4581 = vmatpush.bf16.msra.mxu0 %v3091
    %4582 = vmatmul.bf16.gmra.mxu0 %v1542
    %v4583 = vpop.f32.mrf.mxu0
    %v4584 = vadd.f32 0.0, %v4583
    %v4585 = vpop.f32.mrf.mxu0
    %4586 = vdwg.mxu0
    %4587 = vmatpush.bf16.msra.mxu0 %v3331
    %4588 = vmatpush.bf16.msra.mxu0 %v3315
    %4589 = vmatpush.bf16.msra.mxu0 %v3299
    %4590 = vmatpush.bf16.msra.mxu0 %v3283
    %4591 = vmatpush.bf16.msra.mxu0 %v3267
    %4592 = vmatpush.bf16.msra.mxu0 %v3251
    %4593 = vmatpush.bf16.msra.mxu0 %v3235
    %4594 = vmatpush.bf16.msra.mxu0 %v3219
    %4595 = vmatmul.bf16.gmra.mxu0 %v1543
    %v4596 = vpop.f32.mrf.mxu0
    %v4597 = vadd.f32 %v4584, %v4596
    %v4598 = vpop.f32.mrf.mxu0
    %4599 = vdwg.mxu0
    %4600 = vmatpush.bf16.msra.mxu0 %v3459
    %4601 = vmatpush.bf16.msra.mxu0 %v3443
    %4602 = vmatpush.bf16.msra.mxu0 %v3427
    %4603 = vmatpush.bf16.msra.mxu0 %v3411
    %4604 = vmatpush.bf16.msra.mxu0 %v3395
    %4605 = vmatpush.bf16.msra.mxu0 %v3379
    %4606 = vmatpush.bf16.msra.mxu0 %v3363
    %4607 = vmatpush.bf16.msra.mxu0 %v3347
    %4608 = vmatmul.bf16.gmra.mxu0 %v1544
    %v4609 = vpop.f32.mrf.mxu0
    %v4610 = vadd.f32 %v4597, %v4609
    %v4611 = vpop.f32.mrf.mxu0
    %4612 = vdwg.mxu0
    %4613 = vmatpush.bf16.msra.mxu0 %v3587
    %4614 = vmatpush.bf16.msra.mxu0 %v3571
    %4615 = vmatpush.bf16.msra.mxu0 %v3555
    %4616 = vmatpush.bf16.msra.mxu0 %v3539
    %4617 = vmatpush.bf16.msra.mxu0 %v3523
    %4618 = vmatpush.bf16.msra.mxu0 %v3507
    %4619 = vmatpush.bf16.msra.mxu0 %v3491
    %4620 = vmatpush.bf16.msra.mxu0 %v3475
    %4621 = vmatmul.bf16.gmra.mxu0 %v1545
    %v4622 = vpop.f32.mrf.mxu0
    %v4623 = vadd.f32 %v4610, %v4622
    %v4624 = vpop.f32.mrf.mxu0
    %4625 = vdwg.mxu0
    %4626 = vmatpush.bf16.msra.mxu0 %v3204
    %4627 = vmatpush.bf16.msra.mxu0 %v3188
    %4628 = vmatpush.bf16.msra.mxu0 %v3172
    %4629 = vmatpush.bf16.msra.mxu0 %v3156
    %4630 = vmatpush.bf16.msra.mxu0 %v3140
    %4631 = vmatpush.bf16.msra.mxu0 %v3124
    %4632 = vmatpush.bf16.msra.mxu0 %v3108
    %4633 = vmatpush.bf16.msra.mxu0 %v3092
    %4634 = vmatmul.bf16.gmra.mxu0 %v1542
    %v4635 = vpop.f32.mrf.mxu0
    %v4636 = vadd.f32 0.0, %v4635
    %v4637 = vpop.f32.mrf.mxu0
    %4638 = vdwg.mxu0
    %4639 = vmatpush.bf16.msra.mxu0 %v3332
    %4640 = vmatpush.bf16.msra.mxu0 %v3316
    %4641 = vmatpush.bf16.msra.mxu0 %v3300
    %4642 = vmatpush.bf16.msra.mxu0 %v3284
    %4643 = vmatpush.bf16.msra.mxu0 %v3268
    %4644 = vmatpush.bf16.msra.mxu0 %v3252
    %4645 = vmatpush.bf16.msra.mxu0 %v3236
    %4646 = vmatpush.bf16.msra.mxu0 %v3220
    %4647 = vmatmul.bf16.gmra.mxu0 %v1543
    %v4648 = vpop.f32.mrf.mxu0
    %v4649 = vadd.f32 %v4636, %v4648
    %v4650 = vpop.f32.mrf.mxu0
    %4651 = vdwg.mxu0
    %4652 = vmatpush.bf16.msra.mxu0 %v3460
    %4653 = vmatpush.bf16.msra.mxu0 %v3444
    %4654 = vmatpush.bf16.msra.mxu0 %v3428
    %4655 = vmatpush.bf16.msra.mxu0 %v3412
    %4656 = vmatpush.bf16.msra.mxu0 %v3396
    %4657 = vmatpush.bf16.msra.mxu0 %v3380
    %4658 = vmatpush.bf16.msra.mxu0 %v3364
    %4659 = vmatpush.bf16.msra.mxu0 %v3348
    %4660 = vmatmul.bf16.gmra.mxu0 %v1544
    %v4661 = vpop.f32.mrf.mxu0
    %v4662 = vadd.f32 %v4649, %v4661
    %v4663 = vpop.f32.mrf.mxu0
    %4664 = vdwg.mxu0
    %4665 = vmatpush.bf16.msra.mxu0 %v3588
    %4666 = vmatpush.bf16.msra.mxu0 %v3572
    %4667 = vmatpush.bf16.msra.mxu0 %v3556
    %4668 = vmatpush.bf16.msra.mxu0 %v3540
    %4669 = vmatpush.bf16.msra.mxu0 %v3524
    %4670 = vmatpush.bf16.msra.mxu0 %v3508
    %4671 = vmatpush.bf16.msra.mxu0 %v3492
    %4672 = vmatpush.bf16.msra.mxu0 %v3476
    %4673 = vmatmul.bf16.gmra.mxu0 %v1545
    %v4674 = vpop.f32.mrf.mxu0
    %v4675 = vadd.f32 %v4662, %v4674
    %v4676 = vpop.f32.mrf.mxu0
    %4677 = vdwg.mxu0
    %4678 = vmatpush.bf16.msra.mxu0 %v3205
    %4679 = vmatpush.bf16.msra.mxu0 %v3189
    %4680 = vmatpush.bf16.msra.mxu0 %v3173
    %4681 = vmatpush.bf16.msra.mxu0 %v3157
    %4682 = vmatpush.bf16.msra.mxu0 %v3141
    %4683 = vmatpush.bf16.msra.mxu0 %v3125
    %4684 = vmatpush.bf16.msra.mxu0 %v3109
    %4685 = vmatpush.bf16.msra.mxu0 %v3093
    %4686 = vmatmul.bf16.gmra.mxu0 %v1542
    %v4687 = vpop.f32.mrf.mxu0
    %v4688 = vadd.f32 0.0, %v4687
    %v4689 = vpop.f32.mrf.mxu0
    %4690 = vdwg.mxu0
    %4691 = vmatpush.bf16.msra.mxu0 %v3333
    %4692 = vmatpush.bf16.msra.mxu0 %v3317
    %4693 = vmatpush.bf16.msra.mxu0 %v3301
    %4694 = vmatpush.bf16.msra.mxu0 %v3285
    %4695 = vmatpush.bf16.msra.mxu0 %v3269
    %4696 = vmatpush.bf16.msra.mxu0 %v3253
    %4697 = vmatpush.bf16.msra.mxu0 %v3237
    %4698 = vmatpush.bf16.msra.mxu0 %v3221
    %4699 = vmatmul.bf16.gmra.mxu0 %v1543
    %v4700 = vpop.f32.mrf.mxu0
    %v4701 = vadd.f32 %v4688, %v4700
    %v4702 = vpop.f32.mrf.mxu0
    %4703 = vdwg.mxu0
    %4704 = vmatpush.bf16.msra.mxu0 %v3461
    %4705 = vmatpush.bf16.msra.mxu0 %v3445
    %4706 = vmatpush.bf16.msra.mxu0 %v3429
    %4707 = vmatpush.bf16.msra.mxu0 %v3413
    %4708 = vmatpush.bf16.msra.mxu0 %v3397
    %4709 = vmatpush.bf16.msra.mxu0 %v3381
    %4710 = vmatpush.bf16.msra.mxu0 %v3365
    %4711 = vmatpush.bf16.msra.mxu0 %v3349
    %4712 = vmatmul.bf16.gmra.mxu0 %v1544
    %v4713 = vpop.f32.mrf.mxu0
    %v4714 = vadd.f32 %v4701, %v4713
    %v4715 = vpop.f32.mrf.mxu0
    %4716 = vdwg.mxu0
    %4717 = vmatpush.bf16.msra.mxu0 %v3589
    %4718 = vmatpush.bf16.msra.mxu0 %v3573
    %4719 = vmatpush.bf16.msra.mxu0 %v3557
    %4720 = vmatpush.bf16.msra.mxu0 %v3541
    %4721 = vmatpush.bf16.msra.mxu0 %v3525
    %4722 = vmatpush.bf16.msra.mxu0 %v3509
    %4723 = vmatpush.bf16.msra.mxu0 %v3493
    %4724 = vmatpush.bf16.msra.mxu0 %v3477
    %4725 = vmatmul.bf16.gmra.mxu0 %v1545
    %v4726 = vpop.f32.mrf.mxu0
    %v4727 = vadd.f32 %v4714, %v4726
    %v4728 = vpop.f32.mrf.mxu0
    %4729 = vdwg.mxu0
    %4730 = vmatpush.bf16.msra.mxu0 %v3206
    %4731 = vmatpush.bf16.msra.mxu0 %v3190
    %4732 = vmatpush.bf16.msra.mxu0 %v3174
    %4733 = vmatpush.bf16.msra.mxu0 %v3158
    %4734 = vmatpush.bf16.msra.mxu0 %v3142
    %4735 = vmatpush.bf16.msra.mxu0 %v3126
    %4736 = vmatpush.bf16.msra.mxu0 %v3110
    %4737 = vmatpush.bf16.msra.mxu0 %v3094
    %4738 = vmatmul.bf16.gmra.mxu0 %v1542
    %v4739 = vpop.f32.mrf.mxu0
    %v4740 = vadd.f32 0.0, %v4739
    %v4741 = vpop.f32.mrf.mxu0
    %4742 = vdwg.mxu0
    %4743 = vmatpush.bf16.msra.mxu0 %v3334
    %4744 = vmatpush.bf16.msra.mxu0 %v3318
    %4745 = vmatpush.bf16.msra.mxu0 %v3302
    %4746 = vmatpush.bf16.msra.mxu0 %v3286
    %4747 = vmatpush.bf16.msra.mxu0 %v3270
    %4748 = vmatpush.bf16.msra.mxu0 %v3254
    %4749 = vmatpush.bf16.msra.mxu0 %v3238
    %4750 = vmatpush.bf16.msra.mxu0 %v3222
    %4751 = vmatmul.bf16.gmra.mxu0 %v1543
    %v4752 = vpop.f32.mrf.mxu0
    %v4753 = vadd.f32 %v4740, %v4752
    %v4754 = vpop.f32.mrf.mxu0
    %4755 = vdwg.mxu0
    %4756 = vmatpush.bf16.msra.mxu0 %v3462
    %4757 = vmatpush.bf16.msra.mxu0 %v3446
    %4758 = vmatpush.bf16.msra.mxu0 %v3430
    %4759 = vmatpush.bf16.msra.mxu0 %v3414
    %4760 = vmatpush.bf16.msra.mxu0 %v3398
    %4761 = vmatpush.bf16.msra.mxu0 %v3382
    %4762 = vmatpush.bf16.msra.mxu0 %v3366
    %4763 = vmatpush.bf16.msra.mxu0 %v3350
    %4764 = vmatmul.bf16.gmra.mxu0 %v1544
    %v4765 = vpop.f32.mrf.mxu0
    %v4766 = vadd.f32 %v4753, %v4765
    %v4767 = vpop.f32.mrf.mxu0
    %4768 = vdwg.mxu0
    %4769 = vmatpush.bf16.msra.mxu0 %v3590
    %4770 = vmatpush.bf16.msra.mxu0 %v3574
    %4771 = vmatpush.bf16.msra.mxu0 %v3558
    %4772 = vmatpush.bf16.msra.mxu0 %v3542
    %4773 = vmatpush.bf16.msra.mxu0 %v3526
    %4774 = vmatpush.bf16.msra.mxu0 %v3510
    %4775 = vmatpush.bf16.msra.mxu0 %v3494
    %4776 = vmatpush.bf16.msra.mxu0 %v3478
    %4777 = vmatmul.bf16.gmra.mxu0 %v1545
    %v4778 = vpop.f32.mrf.mxu0
    %v4779 = vadd.f32 %v4766, %v4778
    %v4780 = vpop.f32.mrf.mxu0
    %4781 = vdwg.mxu0
    %4782 = vmatpush.bf16.msra.mxu0 %v3207
    %4783 = vmatpush.bf16.msra.mxu0 %v3191
    %4784 = vmatpush.bf16.msra.mxu0 %v3175
    %4785 = vmatpush.bf16.msra.mxu0 %v3159
    %4786 = vmatpush.bf16.msra.mxu0 %v3143
    %4787 = vmatpush.bf16.msra.mxu0 %v3127
    %4788 = vmatpush.bf16.msra.mxu0 %v3111
    %4789 = vmatpush.bf16.msra.mxu0 %v3095
    %4790 = vmatmul.bf16.gmra.mxu0 %v1542
    %v4791 = vpop.f32.mrf.mxu0
    %v4792 = vadd.f32 0.0, %v4791
    %v4793 = vpop.f32.mrf.mxu0
    %4794 = vdwg.mxu0
    %4795 = vmatpush.bf16.msra.mxu0 %v3335
    %4796 = vmatpush.bf16.msra.mxu0 %v3319
    %4797 = vmatpush.bf16.msra.mxu0 %v3303
    %4798 = vmatpush.bf16.msra.mxu0 %v3287
    %4799 = vmatpush.bf16.msra.mxu0 %v3271
    %4800 = vmatpush.bf16.msra.mxu0 %v3255
    %4801 = vmatpush.bf16.msra.mxu0 %v3239
    %4802 = vmatpush.bf16.msra.mxu0 %v3223
    %4803 = vmatmul.bf16.gmra.mxu0 %v1543
    %v4804 = vpop.f32.mrf.mxu0
    %v4805 = vadd.f32 %v4792, %v4804
    %v4806 = vpop.f32.mrf.mxu0
    %4807 = vdwg.mxu0
    %4808 = vmatpush.bf16.msra.mxu0 %v3463
    %4809 = vmatpush.bf16.msra.mxu0 %v3447
    %4810 = vmatpush.bf16.msra.mxu0 %v3431
    %4811 = vmatpush.bf16.msra.mxu0 %v3415
    %4812 = vmatpush.bf16.msra.mxu0 %v3399
    %4813 = vmatpush.bf16.msra.mxu0 %v3383
    %4814 = vmatpush.bf16.msra.mxu0 %v3367
    %4815 = vmatpush.bf16.msra.mxu0 %v3351
    %4816 = vmatmul.bf16.gmra.mxu0 %v1544
    %v4817 = vpop.f32.mrf.mxu0
    %v4818 = vadd.f32 %v4805, %v4817
    %v4819 = vpop.f32.mrf.mxu0
    %4820 = vdwg.mxu0
    %4821 = vmatpush.bf16.msra.mxu0 %v3591
    %4822 = vmatpush.bf16.msra.mxu0 %v3575
    %4823 = vmatpush.bf16.msra.mxu0 %v3559
    %4824 = vmatpush.bf16.msra.mxu0 %v3543
    %4825 = vmatpush.bf16.msra.mxu0 %v3527
    %4826 = vmatpush.bf16.msra.mxu0 %v3511
    %4827 = vmatpush.bf16.msra.mxu0 %v3495
    %4828 = vmatpush.bf16.msra.mxu0 %v3479
    %4829 = vmatmul.bf16.gmra.mxu0 %v1545
    %v4830 = vpop.f32.mrf.mxu0
    %v4831 = vadd.f32 %v4818, %v4830
    %v4832 = vpop.f32.mrf.mxu0
    %4833 = vdwg.mxu0
    %4834 = vmatpush.bf16.msra.mxu0 %v3208
    %4835 = vmatpush.bf16.msra.mxu0 %v3192
    %4836 = vmatpush.bf16.msra.mxu0 %v3176
    %4837 = vmatpush.bf16.msra.mxu0 %v3160
    %4838 = vmatpush.bf16.msra.mxu0 %v3144
    %4839 = vmatpush.bf16.msra.mxu0 %v3128
    %4840 = vmatpush.bf16.msra.mxu0 %v3112
    %4841 = vmatpush.bf16.msra.mxu0 %v3096
    %4842 = vmatmul.bf16.gmra.mxu0 %v1542
    %v4843 = vpop.f32.mrf.mxu0
    %v4844 = vadd.f32 0.0, %v4843
    %v4845 = vpop.f32.mrf.mxu0
    %4846 = vdwg.mxu0
    %4847 = vmatpush.bf16.msra.mxu0 %v3336
    %4848 = vmatpush.bf16.msra.mxu0 %v3320
    %4849 = vmatpush.bf16.msra.mxu0 %v3304
    %4850 = vmatpush.bf16.msra.mxu0 %v3288
    %4851 = vmatpush.bf16.msra.mxu0 %v3272
    %4852 = vmatpush.bf16.msra.mxu0 %v3256
    %4853 = vmatpush.bf16.msra.mxu0 %v3240
    %4854 = vmatpush.bf16.msra.mxu0 %v3224
    %4855 = vmatmul.bf16.gmra.mxu0 %v1543
    %v4856 = vpop.f32.mrf.mxu0
    %v4857 = vadd.f32 %v4844, %v4856
    %v4858 = vpop.f32.mrf.mxu0
    %4859 = vdwg.mxu0
    %4860 = vmatpush.bf16.msra.mxu0 %v3464
    %4861 = vmatpush.bf16.msra.mxu0 %v3448
    %4862 = vmatpush.bf16.msra.mxu0 %v3432
    %4863 = vmatpush.bf16.msra.mxu0 %v3416
    %4864 = vmatpush.bf16.msra.mxu0 %v3400
    %4865 = vmatpush.bf16.msra.mxu0 %v3384
    %4866 = vmatpush.bf16.msra.mxu0 %v3368
    %4867 = vmatpush.bf16.msra.mxu0 %v3352
    %4868 = vmatmul.bf16.gmra.mxu0 %v1544
    %v4869 = vpop.f32.mrf.mxu0
    %v4870 = vadd.f32 %v4857, %v4869
    %v4871 = vpop.f32.mrf.mxu0
    %4872 = vdwg.mxu0
    %4873 = vmatpush.bf16.msra.mxu0 %v3592
    %4874 = vmatpush.bf16.msra.mxu0 %v3576
    %4875 = vmatpush.bf16.msra.mxu0 %v3560
    %4876 = vmatpush.bf16.msra.mxu0 %v3544
    %4877 = vmatpush.bf16.msra.mxu0 %v3528
    %4878 = vmatpush.bf16.msra.mxu0 %v3512
    %4879 = vmatpush.bf16.msra.mxu0 %v3496
    %4880 = vmatpush.bf16.msra.mxu0 %v3480
    %4881 = vmatmul.bf16.gmra.mxu0 %v1545
    %v4882 = vpop.f32.mrf.mxu0
    %v4883 = vadd.f32 %v4870, %v4882
    %v4884 = vpop.f32.mrf.mxu0
    %4885 = vdwg.mxu0
    %4886 = vmatpush.bf16.msra.mxu0 %v3209
    %4887 = vmatpush.bf16.msra.mxu0 %v3193
    %4888 = vmatpush.bf16.msra.mxu0 %v3177
    %4889 = vmatpush.bf16.msra.mxu0 %v3161
    %4890 = vmatpush.bf16.msra.mxu0 %v3145
    %4891 = vmatpush.bf16.msra.mxu0 %v3129
    %4892 = vmatpush.bf16.msra.mxu0 %v3113
    %4893 = vmatpush.bf16.msra.mxu0 %v3097
    %4894 = vmatmul.bf16.gmra.mxu0 %v1542
    %v4895 = vpop.f32.mrf.mxu0
    %v4896 = vadd.f32 0.0, %v4895
    %v4897 = vpop.f32.mrf.mxu0
    %4898 = vdwg.mxu0
    %4899 = vmatpush.bf16.msra.mxu0 %v3337
    %4900 = vmatpush.bf16.msra.mxu0 %v3321
    %4901 = vmatpush.bf16.msra.mxu0 %v3305
    %4902 = vmatpush.bf16.msra.mxu0 %v3289
    %4903 = vmatpush.bf16.msra.mxu0 %v3273
    %4904 = vmatpush.bf16.msra.mxu0 %v3257
    %4905 = vmatpush.bf16.msra.mxu0 %v3241
    %4906 = vmatpush.bf16.msra.mxu0 %v3225
    %4907 = vmatmul.bf16.gmra.mxu0 %v1543
    %v4908 = vpop.f32.mrf.mxu0
    %v4909 = vadd.f32 %v4896, %v4908
    %v4910 = vpop.f32.mrf.mxu0
    %4911 = vdwg.mxu0
    %4912 = vmatpush.bf16.msra.mxu0 %v3465
    %4913 = vmatpush.bf16.msra.mxu0 %v3449
    %4914 = vmatpush.bf16.msra.mxu0 %v3433
    %4915 = vmatpush.bf16.msra.mxu0 %v3417
    %4916 = vmatpush.bf16.msra.mxu0 %v3401
    %4917 = vmatpush.bf16.msra.mxu0 %v3385
    %4918 = vmatpush.bf16.msra.mxu0 %v3369
    %4919 = vmatpush.bf16.msra.mxu0 %v3353
    %4920 = vmatmul.bf16.gmra.mxu0 %v1544
    %v4921 = vpop.f32.mrf.mxu0
    %v4922 = vadd.f32 %v4909, %v4921
    %v4923 = vpop.f32.mrf.mxu0
    %4924 = vdwg.mxu0
    %4925 = vmatpush.bf16.msra.mxu0 %v3593
    %4926 = vmatpush.bf16.msra.mxu0 %v3577
    %4927 = vmatpush.bf16.msra.mxu0 %v3561
    %4928 = vmatpush.bf16.msra.mxu0 %v3545
    %4929 = vmatpush.bf16.msra.mxu0 %v3529
    %4930 = vmatpush.bf16.msra.mxu0 %v3513
    %4931 = vmatpush.bf16.msra.mxu0 %v3497
    %4932 = vmatpush.bf16.msra.mxu0 %v3481
    %4933 = vmatmul.bf16.gmra.mxu0 %v1545
    %v4934 = vpop.f32.mrf.mxu0
    %v4935 = vadd.f32 %v4922, %v4934
    %v4936 = vpop.f32.mrf.mxu0
    %4937 = vdwg.mxu0
    %v4938 = vadd.f32 %v1344, %v4155
    %v4939 = vadd.f32 %v1357, %v4207
    %v4940 = vadd.f32 %v1370, %v4259
    %v4941 = vadd.f32 %v1383, %v4311
    %v4942 = vadd.f32 %v1396, %v4363
    %v4943 = vadd.f32 %v1409, %v4415
    %v4944 = vadd.f32 %v1422, %v4467
    %v4945 = vadd.f32 %v1435, %v4519
    %v4946 = vadd.f32 %v1448, %v4571
    %v4947 = vadd.f32 %v1461, %v4623
    %v4948 = vadd.f32 %v1474, %v4675
    %v4949 = vadd.f32 %v1487, %v4727
    %v4950 = vadd.f32 %v1500, %v4779
    %v4951 = vadd.f32 %v1513, %v4831
    %v4952 = vadd.f32 %v1526, %v4883
    %v4953 = vadd.f32 %v1539, %v4935
    %v4954 = vxor.u32 %v4938, 2147483648
    %v4955 = vxor.u32 %v4939, 2147483648
    %v4956 = vxor.u32 %v4940, 2147483648
    %v4957 = vxor.u32 %v4941, 2147483648
    %v4958 = vmul.f32 %v4954, 1.442695
    %v4959 = vpow.pop %v4958
    %v4960 = vmul.f32 %v4955, 1.442695
    %v4961 = vpow.pop %v4960
    %v4962 = vmul.f32 %v4956, 1.442695
    %v4963 = vpow.pop %v4962
    %v4964 = vmul.f32 %v4957, 1.442695
    %v4965 = vpow.pop %v4964
    %v4966 = vadd.f32 %v4959, 1.0
    %v4967 = vadd.f32 %v4961, 1.0
    %v4968 = vadd.f32 %v4963, 1.0
    %v4969 = vadd.f32 %v4965, 1.0
    %v4970 = vrcp.pop %v4966
    %v4971 = vmul.f32 %v4966, %v4970
    %v4972 = vsub.f32 1.0, %v4971
    %v4973 = vmul.f32 %v4970, %v4972
    %v4974 = vadd.f32 %v4970, %v4973
    %vm4975 = vweird.f32 %v4966
    %vm4976 = vweird.f32 %v4970
    %vm4977 = vmor %vm4975, %vm4976
    %v4978 = vsel %vm4977, %v4970, %v4974
    %v4979 = vand.u32 2147483647, %v4966
    %vm4980 = vcmp.eq.f32.partialorder %v4979, 8.507059e+37
    %v4981 = vand.u32 %v4966, 2147483648
    %v4982 = vor.u32 1.1754944e-38, %v4981
    %v4983 = vsel %vm4980, %v4982, %v4978
    %v4984 = vmul.f32 1.0, %v4983
    %v4985 = vrcp.pop %v4967
    %v4986 = vmul.f32 %v4967, %v4985
    %v4987 = vsub.f32 1.0, %v4986
    %v4988 = vmul.f32 %v4985, %v4987
    %v4989 = vadd.f32 %v4985, %v4988
    %vm4990 = vweird.f32 %v4967
    %vm4991 = vweird.f32 %v4985
    %vm4992 = vmor %vm4990, %vm4991
    %v4993 = vsel %vm4992, %v4985, %v4989
    %v4994 = vand.u32 2147483647, %v4967
    %vm4995 = vcmp.eq.f32.partialorder %v4994, 8.507059e+37
    %v4996 = vand.u32 %v4967, 2147483648
    %v4997 = vor.u32 1.1754944e-38, %v4996
    %v4998 = vsel %vm4995, %v4997, %v4993
    %v4999 = vmul.f32 1.0, %v4998
    %v5000 = vrcp.pop %v4968
    %v5001 = vmul.f32 %v4968, %v5000
    %v5002 = vsub.f32 1.0, %v5001
    %v5003 = vmul.f32 %v5000, %v5002
    %v5004 = vadd.f32 %v5000, %v5003
    %vm5005 = vweird.f32 %v4968
    %vm5006 = vweird.f32 %v5000
    %vm5007 = vmor %vm5005, %vm5006
    %v5008 = vsel %vm5007, %v5000, %v5004
    %v5009 = vand.u32 2147483647, %v4968
    %vm5010 = vcmp.eq.f32.partialorder %v5009, 8.507059e+37
    %v5011 = vand.u32 %v4968, 2147483648
    %v5012 = vor.u32 1.1754944e-38, %v5011
    %v5013 = vsel %vm5010, %v5012, %v5008
    %v5014 = vmul.f32 1.0, %v5013
    %v5015 = vrcp.pop %v4969
    %v5016 = vmul.f32 %v4969, %v5015
    %v5017 = vsub.f32 1.0, %v5016
    %v5018 = vmul.f32 %v5015, %v5017
    %v5019 = vadd.f32 %v5015, %v5018
    %vm5020 = vweird.f32 %v4969
    %vm5021 = vweird.f32 %v5015
    %vm5022 = vmor %vm5020, %vm5021
    %v5023 = vsel %vm5022, %v5015, %v5019
    %v5024 = vand.u32 2147483647, %v4969
    %vm5025 = vcmp.eq.f32.partialorder %v5024, 8.507059e+37
    %v5026 = vand.u32 %v4969, 2147483648
    %v5027 = vor.u32 1.1754944e-38, %v5026
    %v5028 = vsel %vm5025, %v5027, %v5023
    %v5029 = vmul.f32 1.0, %v5028
    %v5030 = vxor.u32 %v4942, 2147483648
    %v5031 = vxor.u32 %v4943, 2147483648
    %v5032 = vxor.u32 %v4944, 2147483648
    %v5033 = vxor.u32 %v4945, 2147483648
    %v5034 = vmul.f32 %v5030, 1.442695
    %v5035 = vpow.pop %v5034
    %v5036 = vmul.f32 %v5031, 1.442695
    %v5037 = vpow.pop %v5036
    %v5038 = vmul.f32 %v5032, 1.442695
    %v5039 = vpow.pop %v5038
    %v5040 = vmul.f32 %v5033, 1.442695
    %v5041 = vpow.pop %v5040
    %v5042 = vadd.f32 %v5035, 1.0
    %v5043 = vadd.f32 %v5037, 1.0
    %v5044 = vadd.f32 %v5039, 1.0
    %v5045 = vadd.f32 %v5041, 1.0
    %v5046 = vrcp.pop %v5042
    %v5047 = vmul.f32 %v5042, %v5046
    %v5048 = vsub.f32 1.0, %v5047
    %v5049 = vmul.f32 %v5046, %v5048
    %v5050 = vadd.f32 %v5046, %v5049
    %vm5051 = vweird.f32 %v5042
    %vm5052 = vweird.f32 %v5046
    %vm5053 = vmor %vm5051, %vm5052
    %v5054 = vsel %vm5053, %v5046, %v5050
    %v5055 = vand.u32 2147483647, %v5042
    %vm5056 = vcmp.eq.f32.partialorder %v5055, 8.507059e+37
    %v5057 = vand.u32 %v5042, 2147483648
    %v5058 = vor.u32 1.1754944e-38, %v5057
    %v5059 = vsel %vm5056, %v5058, %v5054
    %v5060 = vmul.f32 1.0, %v5059
    %v5061 = vrcp.pop %v5043
    %v5062 = vmul.f32 %v5043, %v5061
    %v5063 = vsub.f32 1.0, %v5062
    %v5064 = vmul.f32 %v5061, %v5063
    %v5065 = vadd.f32 %v5061, %v5064
    %vm5066 = vweird.f32 %v5043
    %vm5067 = vweird.f32 %v5061
    %vm5068 = vmor %vm5066, %vm5067
    %v5069 = vsel %vm5068, %v5061, %v5065
    %v5070 = vand.u32 2147483647, %v5043
    %vm5071 = vcmp.eq.f32.partialorder %v5070, 8.507059e+37
    %v5072 = vand.u32 %v5043, 2147483648
    %v5073 = vor.u32 1.1754944e-38, %v5072
    %v5074 = vsel %vm5071, %v5073, %v5069
    %v5075 = vmul.f32 1.0, %v5074
    %v5076 = vrcp.pop %v5044
    %v5077 = vmul.f32 %v5044, %v5076
    %v5078 = vsub.f32 1.0, %v5077
    %v5079 = vmul.f32 %v5076, %v5078
    %v5080 = vadd.f32 %v5076, %v5079
    %vm5081 = vweird.f32 %v5044
    %vm5082 = vweird.f32 %v5076
    %vm5083 = vmor %vm5081, %vm5082
    %v5084 = vsel %vm5083, %v5076, %v5080
    %v5085 = vand.u32 2147483647, %v5044
    %vm5086 = vcmp.eq.f32.partialorder %v5085, 8.507059e+37
    %v5087 = vand.u32 %v5044, 2147483648
    %v5088 = vor.u32 1.1754944e-38, %v5087
    %v5089 = vsel %vm5086, %v5088, %v5084
    %v5090 = vmul.f32 1.0, %v5089
    %v5091 = vrcp.pop %v5045
    %v5092 = vmul.f32 %v5045, %v5091
    %v5093 = vsub.f32 1.0, %v5092
    %v5094 = vmul.f32 %v5091, %v5093
    %v5095 = vadd.f32 %v5091, %v5094
    %vm5096 = vweird.f32 %v5045
    %vm5097 = vweird.f32 %v5091
    %vm5098 = vmor %vm5096, %vm5097
    %v5099 = vsel %vm5098, %v5091, %v5095
    %v5100 = vand.u32 2147483647, %v5045
    %vm5101 = vcmp.eq.f32.partialorder %v5100, 8.507059e+37
    %v5102 = vand.u32 %v5045, 2147483648
    %v5103 = vor.u32 1.1754944e-38, %v5102
    %v5104 = vsel %vm5101, %v5103, %v5099
    %v5105 = vmul.f32 1.0, %v5104
    %v5106 = vtanh.pop %v4946
    %v5107 = vtanh.pop %v4947
    %v5108 = vtanh.pop %v4948
    %v5109 = vtanh.pop %v4949
    %v5110 = vxor.u32 %v4950, 2147483648
    %v5111 = vxor.u32 %v4951, 2147483648
    %v5112 = vxor.u32 %v4952, 2147483648
    %v5113 = vxor.u32 %v4953, 2147483648
    %v5114 = vmul.f32 %v5110, 1.442695
    %v5115 = vpow.pop %v5114
    %v5116 = vmul.f32 %v5111, 1.442695
    %v5117 = vpow.pop %v5116
    %v5118 = vmul.f32 %v5112, 1.442695
    %v5119 = vpow.pop %v5118
    %v5120 = vmul.f32 %v5113, 1.442695
    %v5121 = vpow.pop %v5120
    %v5122 = vadd.f32 %v5115, 1.0
    %v5123 = vadd.f32 %v5117, 1.0
    %v5124 = vadd.f32 %v5119, 1.0
    %v5125 = vadd.f32 %v5121, 1.0
    %v5126 = vrcp.pop %v5122
    %v5127 = vmul.f32 %v5122, %v5126
    %v5128 = vsub.f32 1.0, %v5127
    %v5129 = vmul.f32 %v5126, %v5128
    %v5130 = vadd.f32 %v5126, %v5129
    %vm5131 = vweird.f32 %v5122
    %vm5132 = vweird.f32 %v5126
    %vm5133 = vmor %vm5131, %vm5132
    %v5134 = vsel %vm5133, %v5126, %v5130
    %v5135 = vand.u32 2147483647, %v5122
    %vm5136 = vcmp.eq.f32.partialorder %v5135, 8.507059e+37
    %v5137 = vand.u32 %v5122, 2147483648
    %v5138 = vor.u32 1.1754944e-38, %v5137
    %v5139 = vsel %vm5136, %v5138, %v5134
    %v5140 = vmul.f32 1.0, %v5139
    %v5141 = vrcp.pop %v5123
    %v5142 = vmul.f32 %v5123, %v5141
    %v5143 = vsub.f32 1.0, %v5142
    %v5144 = vmul.f32 %v5141, %v5143
    %v5145 = vadd.f32 %v5141, %v5144
    %vm5146 = vweird.f32 %v5123
    %vm5147 = vweird.f32 %v5141
    %vm5148 = vmor %vm5146, %vm5147
    %v5149 = vsel %vm5148, %v5141, %v5145
    %v5150 = vand.u32 2147483647, %v5123
    %vm5151 = vcmp.eq.f32.partialorder %v5150, 8.507059e+37
    %v5152 = vand.u32 %v5123, 2147483648
    %v5153 = vor.u32 1.1754944e-38, %v5152
    %v5154 = vsel %vm5151, %v5153, %v5149
    %v5155 = vmul.f32 1.0, %v5154
    %v5156 = vrcp.pop %v5124
    %v5157 = vmul.f32 %v5124, %v5156
    %v5158 = vsub.f32 1.0, %v5157
    %v5159 = vmul.f32 %v5156, %v5158
    %v5160 = vadd.f32 %v5156, %v5159
    %vm5161 = vweird.f32 %v5124
    %vm5162 = vweird.f32 %v5156
    %vm5163 = vmor %vm5161, %vm5162
    %v5164 = vsel %vm5163, %v5156, %v5160
    %v5165 = vand.u32 2147483647, %v5124
    %vm5166 = vcmp.eq.f32.partialorder %v5165, 8.507059e+37
    %v5167 = vand.u32 %v5124, 2147483648
    %v5168 = vor.u32 1.1754944e-38, %v5167
    %v5169 = vsel %vm5166, %v5168, %v5164
    %v5170 = vmul.f32 1.0, %v5169
    %v5171 = vrcp.pop %v5125
    %v5172 = vmul.f32 %v5125, %v5171
    %v5173 = vsub.f32 1.0, %v5172
    %v5174 = vmul.f32 %v5171, %v5173
    %v5175 = vadd.f32 %v5171, %v5174
    %vm5176 = vweird.f32 %v5125
    %vm5177 = vweird.f32 %v5171
    %vm5178 = vmor %vm5176, %vm5177
    %v5179 = vsel %vm5178, %v5171, %v5175
    %v5180 = vand.u32 2147483647, %v5125
    %vm5181 = vcmp.eq.f32.partialorder %v5180, 8.507059e+37
    %v5182 = vand.u32 %v5125, 2147483648
    %v5183 = vor.u32 1.1754944e-38, %v5182
    %v5184 = vsel %vm5181, %v5183, %v5179
    %v5185 = vmul.f32 1.0, %v5184
    %v5186 = vmul.f32 %v5060, %v1316
    %v5187 = vmul.f32 %v5075, %v1317
    %v5188 = vmul.f32 %v5090, %v1318
    %v5189 = vmul.f32 %v5105, %v1319
    %v5190 = vmul.f32 %v4984, %v5106
    %v5191 = vmul.f32 %v4999, %v5107
    %v5192 = vmul.f32 %v5014, %v5108
    %v5193 = vmul.f32 %v5029, %v5109
    %v5194 = vadd.f32 %v5186, %v5190
    %v5195 = vadd.f32 %v5187, %v5191
    %v5196 = vadd.f32 %v5188, %v5192
    %v5197 = vadd.f32 %v5189, %v5193
    %v5198 = vtanh.pop %v5194
    %v5199 = vtanh.pop %v5195
    %v5200 = vtanh.pop %v5196
    %v5201 = vtanh.pop %v5197
    %v5202 = vmul.f32 %v5140, %v5198
    %v5203 = vmul.f32 %v5155, %v5199
    %v5204 = vmul.f32 %v5170, %v5200
    %v5205 = vmul.f32 %v5185, %v5201
    %v5206 = vrot.slane %v698, 2
    %v5207 = vrot.slane %v699, 1
    %v5208 = vsel %vm701, %v5207, %v5206
    %v5209 = vpack.c.b16 %v5208, %v5208
    %v5211 = vsel %vm864, %v5209, 0
    %5213 = vmatpush.bf16.msra.mxu0 0
    %5214 = vmatpush.bf16.msra.mxu0 0
    %5215 = vmatpush.bf16.msra.mxu0 0
    %5216 = vmatpush.bf16.msra.mxu0 0
    %5217 = vmatpush.bf16.msra.mxu0 0
    %5218 = vmatpush.bf16.msra.mxu0 0
    %5219 = vmatpush.bf16.msra.mxu0 %v816
    %5220 = vmatpush.bf16.msra.mxu0 %v800
    %5221 = vmatmul.bf16.gmra.mxu0 %v5211
    %v5222 = vpop.f32.mrf.mxu0
    %v5223 = vadd.f32 %v660, %v5222
    %v5224 = vpop.f32.mrf.mxu0
    %5225 = vdwg.mxu0
    %5226 = vmatpush.bf16.msra.mxu0 0
    %5227 = vmatpush.bf16.msra.mxu0 0
    %5228 = vmatpush.bf16.msra.mxu0 0
    %5229 = vmatpush.bf16.msra.mxu0 0
    %5230 = vmatpush.bf16.msra.mxu0 0
    %5231 = vmatpush.bf16.msra.mxu0 0
    %5232 = vmatpush.bf16.msra.mxu0 %v817
    %5233 = vmatpush.bf16.msra.mxu0 %v801
    %5234 = vmatmul.bf16.gmra.mxu0 %v5211
    %v5235 = vpop.f32.mrf.mxu0
    %v5236 = vadd.f32 %v661, %v5235
    %v5237 = vpop.f32.mrf.mxu0
    %5238 = vdwg.mxu0
    %5239 = vmatpush.bf16.msra.mxu0 0
    %5240 = vmatpush.bf16.msra.mxu0 0
    %5241 = vmatpush.bf16.msra.mxu0 0
    %5242 = vmatpush.bf16.msra.mxu0 0
    %5243 = vmatpush.bf16.msra.mxu0 0
    %5244 = vmatpush.bf16.msra.mxu0 0
    %5245 = vmatpush.bf16.msra.mxu0 %v818
    %5246 = vmatpush.bf16.msra.mxu0 %v802
    %5247 = vmatmul.bf16.gmra.mxu0 %v5211
    %v5248 = vpop.f32.mrf.mxu0
    %v5249 = vadd.f32 %v662, %v5248
    %v5250 = vpop.f32.mrf.mxu0
    %5251 = vdwg.mxu0
    %5252 = vmatpush.bf16.msra.mxu0 0
    %5253 = vmatpush.bf16.msra.mxu0 0
    %5254 = vmatpush.bf16.msra.mxu0 0
    %5255 = vmatpush.bf16.msra.mxu0 0
    %5256 = vmatpush.bf16.msra.mxu0 0
    %5257 = vmatpush.bf16.msra.mxu0 0
    %5258 = vmatpush.bf16.msra.mxu0 %v819
    %5259 = vmatpush.bf16.msra.mxu0 %v803
    %5260 = vmatmul.bf16.gmra.mxu0 %v5211
    %v5261 = vpop.f32.mrf.mxu0
    %v5262 = vadd.f32 %v663, %v5261
    %v5263 = vpop.f32.mrf.mxu0
    %5264 = vdwg.mxu0
    %5265 = vmatpush.bf16.msra.mxu0 0
    %5266 = vmatpush.bf16.msra.mxu0 0
    %5267 = vmatpush.bf16.msra.mxu0 0
    %5268 = vmatpush.bf16.msra.mxu0 0
    %5269 = vmatpush.bf16.msra.mxu0 0
    %5270 = vmatpush.bf16.msra.mxu0 0
    %5271 = vmatpush.bf16.msra.mxu0 %v820
    %5272 = vmatpush.bf16.msra.mxu0 %v804
    %5273 = vmatmul.bf16.gmra.mxu0 %v5211
    %v5274 = vpop.f32.mrf.mxu0
    %v5275 = vadd.f32 %v664, %v5274
    %v5276 = vpop.f32.mrf.mxu0
    %5277 = vdwg.mxu0
    %5278 = vmatpush.bf16.msra.mxu0 0
    %5279 = vmatpush.bf16.msra.mxu0 0
    %5280 = vmatpush.bf16.msra.mxu0 0
    %5281 = vmatpush.bf16.msra.mxu0 0
    %5282 = vmatpush.bf16.msra.mxu0 0
    %5283 = vmatpush.bf16.msra.mxu0 0
    %5284 = vmatpush.bf16.msra.mxu0 %v821
    %5285 = vmatpush.bf16.msra.mxu0 %v805
    %5286 = vmatmul.bf16.gmra.mxu0 %v5211
    %v5287 = vpop.f32.mrf.mxu0
    %v5288 = vadd.f32 %v665, %v5287
    %v5289 = vpop.f32.mrf.mxu0
    %5290 = vdwg.mxu0
    %5291 = vmatpush.bf16.msra.mxu0 0
    %5292 = vmatpush.bf16.msra.mxu0 0
    %5293 = vmatpush.bf16.msra.mxu0 0
    %5294 = vmatpush.bf16.msra.mxu0 0
    %5295 = vmatpush.bf16.msra.mxu0 0
    %5296 = vmatpush.bf16.msra.mxu0 0
    %5297 = vmatpush.bf16.msra.mxu0 %v822
    %5298 = vmatpush.bf16.msra.mxu0 %v806
    %5299 = vmatmul.bf16.gmra.mxu0 %v5211
    %v5300 = vpop.f32.mrf.mxu0
    %v5301 = vadd.f32 %v666, %v5300
    %v5302 = vpop.f32.mrf.mxu0
    %5303 = vdwg.mxu0
    %5304 = vmatpush.bf16.msra.mxu0 0
    %5305 = vmatpush.bf16.msra.mxu0 0
    %5306 = vmatpush.bf16.msra.mxu0 0
    %5307 = vmatpush.bf16.msra.mxu0 0
    %5308 = vmatpush.bf16.msra.mxu0 0
    %5309 = vmatpush.bf16.msra.mxu0 0
    %5310 = vmatpush.bf16.msra.mxu0 %v823
    %5311 = vmatpush.bf16.msra.mxu0 %v807
    %5312 = vmatmul.bf16.gmra.mxu0 %v5211
    %v5313 = vpop.f32.mrf.mxu0
    %v5314 = vadd.f32 %v667, %v5313
    %v5315 = vpop.f32.mrf.mxu0
    %5316 = vdwg.mxu0
    %5317 = vmatpush.bf16.msra.mxu0 0
    %5318 = vmatpush.bf16.msra.mxu0 0
    %5319 = vmatpush.bf16.msra.mxu0 0
    %5320 = vmatpush.bf16.msra.mxu0 0
    %5321 = vmatpush.bf16.msra.mxu0 0
    %5322 = vmatpush.bf16.msra.mxu0 0
    %5323 = vmatpush.bf16.msra.mxu0 %v824
    %5324 = vmatpush.bf16.msra.mxu0 %v808
    %5325 = vmatmul.bf16.gmra.mxu0 %v5211
    %v5326 = vpop.f32.mrf.mxu0
    %v5327 = vadd.f32 %v668, %v5326
    %v5328 = vpop.f32.mrf.mxu0
    %5329 = vdwg.mxu0
    %5330 = vmatpush.bf16.msra.mxu0 0
    %5331 = vmatpush.bf16.msra.mxu0 0
    %5332 = vmatpush.bf16.msra.mxu0 0
    %5333 = vmatpush.bf16.msra.mxu0 0
    %5334 = vmatpush.bf16.msra.mxu0 0
    %5335 = vmatpush.bf16.msra.mxu0 0
    %5336 = vmatpush.bf16.msra.mxu0 %v825
    %5337 = vmatpush.bf16.msra.mxu0 %v809
    %5338 = vmatmul.bf16.gmra.mxu0 %v5211
    %v5339 = vpop.f32.mrf.mxu0
    %v5340 = vadd.f32 %v669, %v5339
    %v5341 = vpop.f32.mrf.mxu0
    %5342 = vdwg.mxu0
    %5343 = vmatpush.bf16.msra.mxu0 0
    %5344 = vmatpush.bf16.msra.mxu0 0
    %5345 = vmatpush.bf16.msra.mxu0 0
    %5346 = vmatpush.bf16.msra.mxu0 0
    %5347 = vmatpush.bf16.msra.mxu0 0
    %5348 = vmatpush.bf16.msra.mxu0 0
    %5349 = vmatpush.bf16.msra.mxu0 %v826
    %5350 = vmatpush.bf16.msra.mxu0 %v810
    %5351 = vmatmul.bf16.gmra.mxu0 %v5211
    %v5352 = vpop.f32.mrf.mxu0
    %v5353 = vadd.f32 %v670, %v5352
    %v5354 = vpop.f32.mrf.mxu0
    %5355 = vdwg.mxu0
    %5356 = vmatpush.bf16.msra.mxu0 0
    %5357 = vmatpush.bf16.msra.mxu0 0
    %5358 = vmatpush.bf16.msra.mxu0 0
    %5359 = vmatpush.bf16.msra.mxu0 0
    %5360 = vmatpush.bf16.msra.mxu0 0
    %5361 = vmatpush.bf16.msra.mxu0 0
    %5362 = vmatpush.bf16.msra.mxu0 %v827
    %5363 = vmatpush.bf16.msra.mxu0 %v811
    %5364 = vmatmul.bf16.gmra.mxu0 %v5211
    %v5365 = vpop.f32.mrf.mxu0
    %v5366 = vadd.f32 %v671, %v5365
    %v5367 = vpop.f32.mrf.mxu0
    %5368 = vdwg.mxu0
    %5369 = vmatpush.bf16.msra.mxu0 0
    %5370 = vmatpush.bf16.msra.mxu0 0
    %5371 = vmatpush.bf16.msra.mxu0 0
    %5372 = vmatpush.bf16.msra.mxu0 0
    %5373 = vmatpush.bf16.msra.mxu0 0
    %5374 = vmatpush.bf16.msra.mxu0 0
    %5375 = vmatpush.bf16.msra.mxu0 %v828
    %5376 = vmatpush.bf16.msra.mxu0 %v812
    %5377 = vmatmul.bf16.gmra.mxu0 %v5211
    %v5378 = vpop.f32.mrf.mxu0
    %v5379 = vadd.f32 %v672, %v5378
    %v5380 = vpop.f32.mrf.mxu0
    %5381 = vdwg.mxu0
    %5382 = vmatpush.bf16.msra.mxu0 0
    %5383 = vmatpush.bf16.msra.mxu0 0
    %5384 = vmatpush.bf16.msra.mxu0 0
    %5385 = vmatpush.bf16.msra.mxu0 0
    %5386 = vmatpush.bf16.msra.mxu0 0
    %5387 = vmatpush.bf16.msra.mxu0 0
    %5388 = vmatpush.bf16.msra.mxu0 %v829
    %5389 = vmatpush.bf16.msra.mxu0 %v813
    %5390 = vmatmul.bf16.gmra.mxu0 %v5211
    %v5391 = vpop.f32.mrf.mxu0
    %v5392 = vadd.f32 %v673, %v5391
    %v5393 = vpop.f32.mrf.mxu0
    %5394 = vdwg.mxu0
    %5395 = vmatpush.bf16.msra.mxu0 0
    %5396 = vmatpush.bf16.msra.mxu0 0
    %5397 = vmatpush.bf16.msra.mxu0 0
    %5398 = vmatpush.bf16.msra.mxu0 0
    %5399 = vmatpush.bf16.msra.mxu0 0
    %5400 = vmatpush.bf16.msra.mxu0 0
    %5401 = vmatpush.bf16.msra.mxu0 %v830
    %5402 = vmatpush.bf16.msra.mxu0 %v814
    %5403 = vmatmul.bf16.gmra.mxu0 %v5211
    %v5404 = vpop.f32.mrf.mxu0
    %v5405 = vadd.f32 %v674, %v5404
    %v5406 = vpop.f32.mrf.mxu0
    %5407 = vdwg.mxu0
    %5408 = vmatpush.bf16.msra.mxu0 0
    %5409 = vmatpush.bf16.msra.mxu0 0
    %5410 = vmatpush.bf16.msra.mxu0 0
    %5411 = vmatpush.bf16.msra.mxu0 0
    %5412 = vmatpush.bf16.msra.mxu0 0
    %5413 = vmatpush.bf16.msra.mxu0 0
    %5414 = vmatpush.bf16.msra.mxu0 %v831
    %5415 = vmatpush.bf16.msra.mxu0 %v815
    %5416 = vmatmul.bf16.gmra.mxu0 %v5211
    %v5417 = vpop.f32.mrf.mxu0
    %v5418 = vadd.f32 %v675, %v5417
    %v5419 = vpop.f32.mrf.mxu0
    %5420 = vdwg.mxu0
    %v5421 = vpack.c.bf16 %v5202, %v5202
    %v5422 = vpack.c.bf16 %v5203, %v5203
    %v5423 = vpack.c.bf16 %v5204, %v5204
    %v5424 = vpack.c.bf16 %v5205, %v5205
    %5425 = vmatpush.bf16.msra.mxu0 %v3194
    %5426 = vmatpush.bf16.msra.mxu0 %v3178
    %5427 = vmatpush.bf16.msra.mxu0 %v3162
    %5428 = vmatpush.bf16.msra.mxu0 %v3146
    %5429 = vmatpush.bf16.msra.mxu0 %v3130
    %5430 = vmatpush.bf16.msra.mxu0 %v3114
    %5431 = vmatpush.bf16.msra.mxu0 %v3098
    %5432 = vmatpush.bf16.msra.mxu0 %v3082
    %5433 = vmatmul.bf16.gmra.mxu0 %v5421
    %v5434 = vpop.f32.mrf.mxu0
    %v5435 = vadd.f32 0.0, %v5434
    %v5436 = vpop.f32.mrf.mxu0
    %5437 = vdwg.mxu0
    %5438 = vmatpush.bf16.msra.mxu0 %v3322
    %5439 = vmatpush.bf16.msra.mxu0 %v3306
    %5440 = vmatpush.bf16.msra.mxu0 %v3290
    %5441 = vmatpush.bf16.msra.mxu0 %v3274
    %5442 = vmatpush.bf16.msra.mxu0 %v3258
    %5443 = vmatpush.bf16.msra.mxu0 %v3242
    %5444 = vmatpush.bf16.msra.mxu0 %v3226
    %5445 = vmatpush.bf16.msra.mxu0 %v3210
    %5446 = vmatmul.bf16.gmra.mxu0 %v5422
    %v5447 = vpop.f32.mrf.mxu0
    %v5448 = vadd.f32 %v5435, %v5447
    %v5449 = vpop.f32.mrf.mxu0
    %5450 = vdwg.mxu0
    %5451 = vmatpush.bf16.msra.mxu0 %v3450
    %5452 = vmatpush.bf16.msra.mxu0 %v3434
    %5453 = vmatpush.bf16.msra.mxu0 %v3418
    %5454 = vmatpush.bf16.msra.mxu0 %v3402
    %5455 = vmatpush.bf16.msra.mxu0 %v3386
    %5456 = vmatpush.bf16.msra.mxu0 %v3370
    %5457 = vmatpush.bf16.msra.mxu0 %v3354
    %5458 = vmatpush.bf16.msra.mxu0 %v3338
    %5459 = vmatmul.bf16.gmra.mxu0 %v5423
    %v5460 = vpop.f32.mrf.mxu0
    %v5461 = vadd.f32 %v5448, %v5460
    %v5462 = vpop.f32.mrf.mxu0
    %5463 = vdwg.mxu0
    %5464 = vmatpush.bf16.msra.mxu0 %v3578
    %5465 = vmatpush.bf16.msra.mxu0 %v3562
    %5466 = vmatpush.bf16.msra.mxu0 %v3546
    %5467 = vmatpush.bf16.msra.mxu0 %v3530
    %5468 = vmatpush.bf16.msra.mxu0 %v3514
    %5469 = vmatpush.bf16.msra.mxu0 %v3498
    %5470 = vmatpush.bf16.msra.mxu0 %v3482
    %5471 = vmatpush.bf16.msra.mxu0 %v3466
    %5472 = vmatmul.bf16.gmra.mxu0 %v5424
    %v5473 = vpop.f32.mrf.mxu0
    %v5474 = vadd.f32 %v5461, %v5473
    %v5475 = vpop.f32.mrf.mxu0
    %5476 = vdwg.mxu0
    %5477 = vmatpush.bf16.msra.mxu0 %v3195
    %5478 = vmatpush.bf16.msra.mxu0 %v3179
    %5479 = vmatpush.bf16.msra.mxu0 %v3163
    %5480 = vmatpush.bf16.msra.mxu0 %v3147
    %5481 = vmatpush.bf16.msra.mxu0 %v3131
    %5482 = vmatpush.bf16.msra.mxu0 %v3115
    %5483 = vmatpush.bf16.msra.mxu0 %v3099
    %5484 = vmatpush.bf16.msra.mxu0 %v3083
    %5485 = vmatmul.bf16.gmra.mxu0 %v5421
    %v5486 = vpop.f32.mrf.mxu0
    %v5487 = vadd.f32 0.0, %v5486
    %v5488 = vpop.f32.mrf.mxu0
    %5489 = vdwg.mxu0
    %5490 = vmatpush.bf16.msra.mxu0 %v3323
    %5491 = vmatpush.bf16.msra.mxu0 %v3307
    %5492 = vmatpush.bf16.msra.mxu0 %v3291
    %5493 = vmatpush.bf16.msra.mxu0 %v3275
    %5494 = vmatpush.bf16.msra.mxu0 %v3259
    %5495 = vmatpush.bf16.msra.mxu0 %v3243
    %5496 = vmatpush.bf16.msra.mxu0 %v3227
    %5497 = vmatpush.bf16.msra.mxu0 %v3211
    %5498 = vmatmul.bf16.gmra.mxu0 %v5422
    %v5499 = vpop.f32.mrf.mxu0
    %v5500 = vadd.f32 %v5487, %v5499
    %v5501 = vpop.f32.mrf.mxu0
    %5502 = vdwg.mxu0
    %5503 = vmatpush.bf16.msra.mxu0 %v3451
    %5504 = vmatpush.bf16.msra.mxu0 %v3435
    %5505 = vmatpush.bf16.msra.mxu0 %v3419
    %5506 = vmatpush.bf16.msra.mxu0 %v3403
    %5507 = vmatpush.bf16.msra.mxu0 %v3387
    %5508 = vmatpush.bf16.msra.mxu0 %v3371
    %5509 = vmatpush.bf16.msra.mxu0 %v3355
    %5510 = vmatpush.bf16.msra.mxu0 %v3339
    %5511 = vmatmul.bf16.gmra.mxu0 %v5423
    %v5512 = vpop.f32.mrf.mxu0
    %v5513 = vadd.f32 %v5500, %v5512
    %v5514 = vpop.f32.mrf.mxu0
    %5515 = vdwg.mxu0
    %5516 = vmatpush.bf16.msra.mxu0 %v3579
    %5517 = vmatpush.bf16.msra.mxu0 %v3563
    %5518 = vmatpush.bf16.msra.mxu0 %v3547
    %5519 = vmatpush.bf16.msra.mxu0 %v3531
    %5520 = vmatpush.bf16.msra.mxu0 %v3515
    %5521 = vmatpush.bf16.msra.mxu0 %v3499
    %5522 = vmatpush.bf16.msra.mxu0 %v3483
    %5523 = vmatpush.bf16.msra.mxu0 %v3467
    %5524 = vmatmul.bf16.gmra.mxu0 %v5424
    %v5525 = vpop.f32.mrf.mxu0
    %v5526 = vadd.f32 %v5513, %v5525
    %v5527 = vpop.f32.mrf.mxu0
    %5528 = vdwg.mxu0
    %5529 = vmatpush.bf16.msra.mxu0 %v3196
    %5530 = vmatpush.bf16.msra.mxu0 %v3180
    %5531 = vmatpush.bf16.msra.mxu0 %v3164
    %5532 = vmatpush.bf16.msra.mxu0 %v3148
    %5533 = vmatpush.bf16.msra.mxu0 %v3132
    %5534 = vmatpush.bf16.msra.mxu0 %v3116
    %5535 = vmatpush.bf16.msra.mxu0 %v3100
    %5536 = vmatpush.bf16.msra.mxu0 %v3084
    %5537 = vmatmul.bf16.gmra.mxu0 %v5421
    %v5538 = vpop.f32.mrf.mxu0
    %v5539 = vadd.f32 0.0, %v5538
    %v5540 = vpop.f32.mrf.mxu0
    %5541 = vdwg.mxu0
    %5542 = vmatpush.bf16.msra.mxu0 %v3324
    %5543 = vmatpush.bf16.msra.mxu0 %v3308
    %5544 = vmatpush.bf16.msra.mxu0 %v3292
    %5545 = vmatpush.bf16.msra.mxu0 %v3276
    %5546 = vmatpush.bf16.msra.mxu0 %v3260
    %5547 = vmatpush.bf16.msra.mxu0 %v3244
    %5548 = vmatpush.bf16.msra.mxu0 %v3228
    %5549 = vmatpush.bf16.msra.mxu0 %v3212
    %5550 = vmatmul.bf16.gmra.mxu0 %v5422
    %v5551 = vpop.f32.mrf.mxu0
    %v5552 = vadd.f32 %v5539, %v5551
    %v5553 = vpop.f32.mrf.mxu0
    %5554 = vdwg.mxu0
    %5555 = vmatpush.bf16.msra.mxu0 %v3452
    %5556 = vmatpush.bf16.msra.mxu0 %v3436
    %5557 = vmatpush.bf16.msra.mxu0 %v3420
    %5558 = vmatpush.bf16.msra.mxu0 %v3404
    %5559 = vmatpush.bf16.msra.mxu0 %v3388
    %5560 = vmatpush.bf16.msra.mxu0 %v3372
    %5561 = vmatpush.bf16.msra.mxu0 %v3356
    %5562 = vmatpush.bf16.msra.mxu0 %v3340
    %5563 = vmatmul.bf16.gmra.mxu0 %v5423
    %v5564 = vpop.f32.mrf.mxu0
    %v5565 = vadd.f32 %v5552, %v5564
    %v5566 = vpop.f32.mrf.mxu0
    %5567 = vdwg.mxu0
    %5568 = vmatpush.bf16.msra.mxu0 %v3580
    %5569 = vmatpush.bf16.msra.mxu0 %v3564
    %5570 = vmatpush.bf16.msra.mxu0 %v3548
    %5571 = vmatpush.bf16.msra.mxu0 %v3532
    %5572 = vmatpush.bf16.msra.mxu0 %v3516
    %5573 = vmatpush.bf16.msra.mxu0 %v3500
    %5574 = vmatpush.bf16.msra.mxu0 %v3484
    %5575 = vmatpush.bf16.msra.mxu0 %v3468
    %5576 = vmatmul.bf16.gmra.mxu0 %v5424
    %v5577 = vpop.f32.mrf.mxu0
    %v5578 = vadd.f32 %v5565, %v5577
    %v5579 = vpop.f32.mrf.mxu0
    %5580 = vdwg.mxu0
    %5581 = vmatpush.bf16.msra.mxu0 %v3197
    %5582 = vmatpush.bf16.msra.mxu0 %v3181
    %5583 = vmatpush.bf16.msra.mxu0 %v3165
    %5584 = vmatpush.bf16.msra.mxu0 %v3149
    %5585 = vmatpush.bf16.msra.mxu0 %v3133
    %5586 = vmatpush.bf16.msra.mxu0 %v3117
    %5587 = vmatpush.bf16.msra.mxu0 %v3101
    %5588 = vmatpush.bf16.msra.mxu0 %v3085
    %5589 = vmatmul.bf16.gmra.mxu0 %v5421
    %v5590 = vpop.f32.mrf.mxu0
    %v5591 = vadd.f32 0.0, %v5590
    %v5592 = vpop.f32.mrf.mxu0
    %5593 = vdwg.mxu0
    %5594 = vmatpush.bf16.msra.mxu0 %v3325
    %5595 = vmatpush.bf16.msra.mxu0 %v3309
    %5596 = vmatpush.bf16.msra.mxu0 %v3293
    %5597 = vmatpush.bf16.msra.mxu0 %v3277
    %5598 = vmatpush.bf16.msra.mxu0 %v3261
    %5599 = vmatpush.bf16.msra.mxu0 %v3245
    %5600 = vmatpush.bf16.msra.mxu0 %v3229
    %5601 = vmatpush.bf16.msra.mxu0 %v3213
    %5602 = vmatmul.bf16.gmra.mxu0 %v5422
    %v5603 = vpop.f32.mrf.mxu0
    %v5604 = vadd.f32 %v5591, %v5603
    %v5605 = vpop.f32.mrf.mxu0
    %5606 = vdwg.mxu0
    %5607 = vmatpush.bf16.msra.mxu0 %v3453
    %5608 = vmatpush.bf16.msra.mxu0 %v3437
    %5609 = vmatpush.bf16.msra.mxu0 %v3421
    %5610 = vmatpush.bf16.msra.mxu0 %v3405
    %5611 = vmatpush.bf16.msra.mxu0 %v3389
    %5612 = vmatpush.bf16.msra.mxu0 %v3373
    %5613 = vmatpush.bf16.msra.mxu0 %v3357
    %5614 = vmatpush.bf16.msra.mxu0 %v3341
    %5615 = vmatmul.bf16.gmra.mxu0 %v5423
    %v5616 = vpop.f32.mrf.mxu0
    %v5617 = vadd.f32 %v5604, %v5616
    %v5618 = vpop.f32.mrf.mxu0
    %5619 = vdwg.mxu0
    %5620 = vmatpush.bf16.msra.mxu0 %v3581
    %5621 = vmatpush.bf16.msra.mxu0 %v3565
    %5622 = vmatpush.bf16.msra.mxu0 %v3549
    %5623 = vmatpush.bf16.msra.mxu0 %v3533
    %5624 = vmatpush.bf16.msra.mxu0 %v3517
    %5625 = vmatpush.bf16.msra.mxu0 %v3501
    %5626 = vmatpush.bf16.msra.mxu0 %v3485
    %5627 = vmatpush.bf16.msra.mxu0 %v3469
    %5628 = vmatmul.bf16.gmra.mxu0 %v5424
    %v5629 = vpop.f32.mrf.mxu0
    %v5630 = vadd.f32 %v5617, %v5629
    %v5631 = vpop.f32.mrf.mxu0
    %5632 = vdwg.mxu0
    %5633 = vmatpush.bf16.msra.mxu0 %v3198
    %5634 = vmatpush.bf16.msra.mxu0 %v3182
    %5635 = vmatpush.bf16.msra.mxu0 %v3166
    %5636 = vmatpush.bf16.msra.mxu0 %v3150
    %5637 = vmatpush.bf16.msra.mxu0 %v3134
    %5638 = vmatpush.bf16.msra.mxu0 %v3118
    %5639 = vmatpush.bf16.msra.mxu0 %v3102
    %5640 = vmatpush.bf16.msra.mxu0 %v3086
    %5641 = vmatmul.bf16.gmra.mxu0 %v5421
    %v5642 = vpop.f32.mrf.mxu0
    %v5643 = vadd.f32 0.0, %v5642
    %v5644 = vpop.f32.mrf.mxu0
    %5645 = vdwg.mxu0
    %5646 = vmatpush.bf16.msra.mxu0 %v3326
    %5647 = vmatpush.bf16.msra.mxu0 %v3310
    %5648 = vmatpush.bf16.msra.mxu0 %v3294
    %5649 = vmatpush.bf16.msra.mxu0 %v3278
    %5650 = vmatpush.bf16.msra.mxu0 %v3262
    %5651 = vmatpush.bf16.msra.mxu0 %v3246
    %5652 = vmatpush.bf16.msra.mxu0 %v3230
    %5653 = vmatpush.bf16.msra.mxu0 %v3214
    %5654 = vmatmul.bf16.gmra.mxu0 %v5422
    %v5655 = vpop.f32.mrf.mxu0
    %v5656 = vadd.f32 %v5643, %v5655
    %v5657 = vpop.f32.mrf.mxu0
    %5658 = vdwg.mxu0
    %5659 = vmatpush.bf16.msra.mxu0 %v3454
    %5660 = vmatpush.bf16.msra.mxu0 %v3438
    %5661 = vmatpush.bf16.msra.mxu0 %v3422
    %5662 = vmatpush.bf16.msra.mxu0 %v3406
    %5663 = vmatpush.bf16.msra.mxu0 %v3390
    %5664 = vmatpush.bf16.msra.mxu0 %v3374
    %5665 = vmatpush.bf16.msra.mxu0 %v3358
    %5666 = vmatpush.bf16.msra.mxu0 %v3342
    %5667 = vmatmul.bf16.gmra.mxu0 %v5423
    %v5668 = vpop.f32.mrf.mxu0
    %v5669 = vadd.f32 %v5656, %v5668
    %v5670 = vpop.f32.mrf.mxu0
    %5671 = vdwg.mxu0
    %5672 = vmatpush.bf16.msra.mxu0 %v3582
    %5673 = vmatpush.bf16.msra.mxu0 %v3566
    %5674 = vmatpush.bf16.msra.mxu0 %v3550
    %5675 = vmatpush.bf16.msra.mxu0 %v3534
    %5676 = vmatpush.bf16.msra.mxu0 %v3518
    %5677 = vmatpush.bf16.msra.mxu0 %v3502
    %5678 = vmatpush.bf16.msra.mxu0 %v3486
    %5679 = vmatpush.bf16.msra.mxu0 %v3470
    %5680 = vmatmul.bf16.gmra.mxu0 %v5424
    %v5681 = vpop.f32.mrf.mxu0
    %v5682 = vadd.f32 %v5669, %v5681
    %v5683 = vpop.f32.mrf.mxu0
    %5684 = vdwg.mxu0
    %5685 = vmatpush.bf16.msra.mxu0 %v3199
    %5686 = vmatpush.bf16.msra.mxu0 %v3183
    %5687 = vmatpush.bf16.msra.mxu0 %v3167
    %5688 = vmatpush.bf16.msra.mxu0 %v3151
    %5689 = vmatpush.bf16.msra.mxu0 %v3135
    %5690 = vmatpush.bf16.msra.mxu0 %v3119
    %5691 = vmatpush.bf16.msra.mxu0 %v3103
    %5692 = vmatpush.bf16.msra.mxu0 %v3087
    %5693 = vmatmul.bf16.gmra.mxu0 %v5421
    %v5694 = vpop.f32.mrf.mxu0
    %v5695 = vadd.f32 0.0, %v5694
    %v5696 = vpop.f32.mrf.mxu0
    %5697 = vdwg.mxu0
    %5698 = vmatpush.bf16.msra.mxu0 %v3327
    %5699 = vmatpush.bf16.msra.mxu0 %v3311
    %5700 = vmatpush.bf16.msra.mxu0 %v3295
    %5701 = vmatpush.bf16.msra.mxu0 %v3279
    %5702 = vmatpush.bf16.msra.mxu0 %v3263
    %5703 = vmatpush.bf16.msra.mxu0 %v3247
    %5704 = vmatpush.bf16.msra.mxu0 %v3231
    %5705 = vmatpush.bf16.msra.mxu0 %v3215
    %5706 = vmatmul.bf16.gmra.mxu0 %v5422
    %v5707 = vpop.f32.mrf.mxu0
    %v5708 = vadd.f32 %v5695, %v5707
    %v5709 = vpop.f32.mrf.mxu0
    %5710 = vdwg.mxu0
    %5711 = vmatpush.bf16.msra.mxu0 %v3455
    %5712 = vmatpush.bf16.msra.mxu0 %v3439
    %5713 = vmatpush.bf16.msra.mxu0 %v3423
    %5714 = vmatpush.bf16.msra.mxu0 %v3407
    %5715 = vmatpush.bf16.msra.mxu0 %v3391
    %5716 = vmatpush.bf16.msra.mxu0 %v3375
    %5717 = vmatpush.bf16.msra.mxu0 %v3359
    %5718 = vmatpush.bf16.msra.mxu0 %v3343
    %5719 = vmatmul.bf16.gmra.mxu0 %v5423
    %v5720 = vpop.f32.mrf.mxu0
    %v5721 = vadd.f32 %v5708, %v5720
    %v5722 = vpop.f32.mrf.mxu0
    %5723 = vdwg.mxu0
    %5724 = vmatpush.bf16.msra.mxu0 %v3583
    %5725 = vmatpush.bf16.msra.mxu0 %v3567
    %5726 = vmatpush.bf16.msra.mxu0 %v3551
    %5727 = vmatpush.bf16.msra.mxu0 %v3535
    %5728 = vmatpush.bf16.msra.mxu0 %v3519
    %5729 = vmatpush.bf16.msra.mxu0 %v3503
    %5730 = vmatpush.bf16.msra.mxu0 %v3487
    %5731 = vmatpush.bf16.msra.mxu0 %v3471
    %5732 = vmatmul.bf16.gmra.mxu0 %v5424
    %v5733 = vpop.f32.mrf.mxu0
    %v5734 = vadd.f32 %v5721, %v5733
    %v5735 = vpop.f32.mrf.mxu0
    %5736 = vdwg.mxu0
    %5737 = vmatpush.bf16.msra.mxu0 %v3200
    %5738 = vmatpush.bf16.msra.mxu0 %v3184
    %5739 = vmatpush.bf16.msra.mxu0 %v3168
    %5740 = vmatpush.bf16.msra.mxu0 %v3152
    %5741 = vmatpush.bf16.msra.mxu0 %v3136
    %5742 = vmatpush.bf16.msra.mxu0 %v3120
    %5743 = vmatpush.bf16.msra.mxu0 %v3104
    %5744 = vmatpush.bf16.msra.mxu0 %v3088
    %5745 = vmatmul.bf16.gmra.mxu0 %v5421
    %v5746 = vpop.f32.mrf.mxu0
    %v5747 = vadd.f32 0.0, %v5746
    %v5748 = vpop.f32.mrf.mxu0
    %5749 = vdwg.mxu0
    %5750 = vmatpush.bf16.msra.mxu0 %v3328
    %5751 = vmatpush.bf16.msra.mxu0 %v3312
    %5752 = vmatpush.bf16.msra.mxu0 %v3296
    %5753 = vmatpush.bf16.msra.mxu0 %v3280
    %5754 = vmatpush.bf16.msra.mxu0 %v3264
    %5755 = vmatpush.bf16.msra.mxu0 %v3248
    %5756 = vmatpush.bf16.msra.mxu0 %v3232
    %5757 = vmatpush.bf16.msra.mxu0 %v3216
    %5758 = vmatmul.bf16.gmra.mxu0 %v5422
    %v5759 = vpop.f32.mrf.mxu0
    %v5760 = vadd.f32 %v5747, %v5759
    %v5761 = vpop.f32.mrf.mxu0
    %5762 = vdwg.mxu0
    %5763 = vmatpush.bf16.msra.mxu0 %v3456
    %5764 = vmatpush.bf16.msra.mxu0 %v3440
    %5765 = vmatpush.bf16.msra.mxu0 %v3424
    %5766 = vmatpush.bf16.msra.mxu0 %v3408
    %5767 = vmatpush.bf16.msra.mxu0 %v3392
    %5768 = vmatpush.bf16.msra.mxu0 %v3376
    %5769 = vmatpush.bf16.msra.mxu0 %v3360
    %5770 = vmatpush.bf16.msra.mxu0 %v3344
    %5771 = vmatmul.bf16.gmra.mxu0 %v5423
    %v5772 = vpop.f32.mrf.mxu0
    %v5773 = vadd.f32 %v5760, %v5772
    %v5774 = vpop.f32.mrf.mxu0
    %5775 = vdwg.mxu0
    %5776 = vmatpush.bf16.msra.mxu0 %v3584
    %5777 = vmatpush.bf16.msra.mxu0 %v3568
    %5778 = vmatpush.bf16.msra.mxu0 %v3552
    %5779 = vmatpush.bf16.msra.mxu0 %v3536
    %5780 = vmatpush.bf16.msra.mxu0 %v3520
    %5781 = vmatpush.bf16.msra.mxu0 %v3504
    %5782 = vmatpush.bf16.msra.mxu0 %v3488
    %5783 = vmatpush.bf16.msra.mxu0 %v3472
    %5784 = vmatmul.bf16.gmra.mxu0 %v5424
    %v5785 = vpop.f32.mrf.mxu0
    %v5786 = vadd.f32 %v5773, %v5785
    %v5787 = vpop.f32.mrf.mxu0
    %5788 = vdwg.mxu0
    %5789 = vmatpush.bf16.msra.mxu0 %v3201
    %5790 = vmatpush.bf16.msra.mxu0 %v3185
    %5791 = vmatpush.bf16.msra.mxu0 %v3169
    %5792 = vmatpush.bf16.msra.mxu0 %v3153
    %5793 = vmatpush.bf16.msra.mxu0 %v3137
    %5794 = vmatpush.bf16.msra.mxu0 %v3121
    %5795 = vmatpush.bf16.msra.mxu0 %v3105
    %5796 = vmatpush.bf16.msra.mxu0 %v3089
    %5797 = vmatmul.bf16.gmra.mxu0 %v5421
    %v5798 = vpop.f32.mrf.mxu0
    %v5799 = vadd.f32 0.0, %v5798
    %v5800 = vpop.f32.mrf.mxu0
    %5801 = vdwg.mxu0
    %5802 = vmatpush.bf16.msra.mxu0 %v3329
    %5803 = vmatpush.bf16.msra.mxu0 %v3313
    %5804 = vmatpush.bf16.msra.mxu0 %v3297
    %5805 = vmatpush.bf16.msra.mxu0 %v3281
    %5806 = vmatpush.bf16.msra.mxu0 %v3265
    %5807 = vmatpush.bf16.msra.mxu0 %v3249
    %5808 = vmatpush.bf16.msra.mxu0 %v3233
    %5809 = vmatpush.bf16.msra.mxu0 %v3217
    %5810 = vmatmul.bf16.gmra.mxu0 %v5422
    %v5811 = vpop.f32.mrf.mxu0
    %v5812 = vadd.f32 %v5799, %v5811
    %v5813 = vpop.f32.mrf.mxu0
    %5814 = vdwg.mxu0
    %5815 = vmatpush.bf16.msra.mxu0 %v3457
    %5816 = vmatpush.bf16.msra.mxu0 %v3441
    %5817 = vmatpush.bf16.msra.mxu0 %v3425
    %5818 = vmatpush.bf16.msra.mxu0 %v3409
    %5819 = vmatpush.bf16.msra.mxu0 %v3393
    %5820 = vmatpush.bf16.msra.mxu0 %v3377
    %5821 = vmatpush.bf16.msra.mxu0 %v3361
    %5822 = vmatpush.bf16.msra.mxu0 %v3345
    %5823 = vmatmul.bf16.gmra.mxu0 %v5423
    %v5824 = vpop.f32.mrf.mxu0
    %v5825 = vadd.f32 %v5812, %v5824
    %v5826 = vpop.f32.mrf.mxu0
    %5827 = vdwg.mxu0
    %5828 = vmatpush.bf16.msra.mxu0 %v3585
    %5829 = vmatpush.bf16.msra.mxu0 %v3569
    %5830 = vmatpush.bf16.msra.mxu0 %v3553
    %5831 = vmatpush.bf16.msra.mxu0 %v3537
    %5832 = vmatpush.bf16.msra.mxu0 %v3521
    %5833 = vmatpush.bf16.msra.mxu0 %v3505
    %5834 = vmatpush.bf16.msra.mxu0 %v3489
    %5835 = vmatpush.bf16.msra.mxu0 %v3473
    %5836 = vmatmul.bf16.gmra.mxu0 %v5424
    %v5837 = vpop.f32.mrf.mxu0
    %v5838 = vadd.f32 %v5825, %v5837
    %v5839 = vpop.f32.mrf.mxu0
    %5840 = vdwg.mxu0
    %5841 = vmatpush.bf16.msra.mxu0 %v3202
    %5842 = vmatpush.bf16.msra.mxu0 %v3186
    %5843 = vmatpush.bf16.msra.mxu0 %v3170
    %5844 = vmatpush.bf16.msra.mxu0 %v3154
    %5845 = vmatpush.bf16.msra.mxu0 %v3138
    %5846 = vmatpush.bf16.msra.mxu0 %v3122
    %5847 = vmatpush.bf16.msra.mxu0 %v3106
    %5848 = vmatpush.bf16.msra.mxu0 %v3090
    %5849 = vmatmul.bf16.gmra.mxu0 %v5421
    %v5850 = vpop.f32.mrf.mxu0
    %v5851 = vadd.f32 0.0, %v5850
    %v5852 = vpop.f32.mrf.mxu0
    %5853 = vdwg.mxu0
    %5854 = vmatpush.bf16.msra.mxu0 %v3330
    %5855 = vmatpush.bf16.msra.mxu0 %v3314
    %5856 = vmatpush.bf16.msra.mxu0 %v3298
    %5857 = vmatpush.bf16.msra.mxu0 %v3282
    %5858 = vmatpush.bf16.msra.mxu0 %v3266
    %5859 = vmatpush.bf16.msra.mxu0 %v3250
    %5860 = vmatpush.bf16.msra.mxu0 %v3234
    %5861 = vmatpush.bf16.msra.mxu0 %v3218
    %5862 = vmatmul.bf16.gmra.mxu0 %v5422
    %v5863 = vpop.f32.mrf.mxu0
    %v5864 = vadd.f32 %v5851, %v5863
    %v5865 = vpop.f32.mrf.mxu0
    %5866 = vdwg.mxu0
    %5867 = vmatpush.bf16.msra.mxu0 %v3458
    %5868 = vmatpush.bf16.msra.mxu0 %v3442
    %5869 = vmatpush.bf16.msra.mxu0 %v3426
    %5870 = vmatpush.bf16.msra.mxu0 %v3410
    %5871 = vmatpush.bf16.msra.mxu0 %v3394
    %5872 = vmatpush.bf16.msra.mxu0 %v3378
    %5873 = vmatpush.bf16.msra.mxu0 %v3362
    %5874 = vmatpush.bf16.msra.mxu0 %v3346
    %5875 = vmatmul.bf16.gmra.mxu0 %v5423
    %v5876 = vpop.f32.mrf.mxu0
    %v5877 = vadd.f32 %v5864, %v5876
    %v5878 = vpop.f32.mrf.mxu0
    %5879 = vdwg.mxu0
    %5880 = vmatpush.bf16.msra.mxu0 %v3586
    %5881 = vmatpush.bf16.msra.mxu0 %v3570
    %5882 = vmatpush.bf16.msra.mxu0 %v3554
    %5883 = vmatpush.bf16.msra.mxu0 %v3538
    %5884 = vmatpush.bf16.msra.mxu0 %v3522
    %5885 = vmatpush.bf16.msra.mxu0 %v3506
    %5886 = vmatpush.bf16.msra.mxu0 %v3490
    %5887 = vmatpush.bf16.msra.mxu0 %v3474
    %5888 = vmatmul.bf16.gmra.mxu0 %v5424
    %v5889 = vpop.f32.mrf.mxu0
    %v5890 = vadd.f32 %v5877, %v5889
    %v5891 = vpop.f32.mrf.mxu0
    %5892 = vdwg.mxu0
    %5893 = vmatpush.bf16.msra.mxu0 %v3203
    %5894 = vmatpush.bf16.msra.mxu0 %v3187
    %5895 = vmatpush.bf16.msra.mxu0 %v3171
    %5896 = vmatpush.bf16.msra.mxu0 %v3155
    %5897 = vmatpush.bf16.msra.mxu0 %v3139
    %5898 = vmatpush.bf16.msra.mxu0 %v3123
    %5899 = vmatpush.bf16.msra.mxu0 %v3107
    %5900 = vmatpush.bf16.msra.mxu0 %v3091
    %5901 = vmatmul.bf16.gmra.mxu0 %v5421
    %v5902 = vpop.f32.mrf.mxu0
    %v5903 = vadd.f32 0.0, %v5902
    %v5904 = vpop.f32.mrf.mxu0
    %5905 = vdwg.mxu0
    %5906 = vmatpush.bf16.msra.mxu0 %v3331
    %5907 = vmatpush.bf16.msra.mxu0 %v3315
    %5908 = vmatpush.bf16.msra.mxu0 %v3299
    %5909 = vmatpush.bf16.msra.mxu0 %v3283
    %5910 = vmatpush.bf16.msra.mxu0 %v3267
    %5911 = vmatpush.bf16.msra.mxu0 %v3251
    %5912 = vmatpush.bf16.msra.mxu0 %v3235
    %5913 = vmatpush.bf16.msra.mxu0 %v3219
    %5914 = vmatmul.bf16.gmra.mxu0 %v5422
    %v5915 = vpop.f32.mrf.mxu0
    %v5916 = vadd.f32 %v5903, %v5915
    %v5917 = vpop.f32.mrf.mxu0
    %5918 = vdwg.mxu0
    %5919 = vmatpush.bf16.msra.mxu0 %v3459
    %5920 = vmatpush.bf16.msra.mxu0 %v3443
    %5921 = vmatpush.bf16.msra.mxu0 %v3427
    %5922 = vmatpush.bf16.msra.mxu0 %v3411
    %5923 = vmatpush.bf16.msra.mxu0 %v3395
    %5924 = vmatpush.bf16.msra.mxu0 %v3379
    %5925 = vmatpush.bf16.msra.mxu0 %v3363
    %5926 = vmatpush.bf16.msra.mxu0 %v3347
    %5927 = vmatmul.bf16.gmra.mxu0 %v5423
    %v5928 = vpop.f32.mrf.mxu0
    %v5929 = vadd.f32 %v5916, %v5928
    %v5930 = vpop.f32.mrf.mxu0
    %5931 = vdwg.mxu0
    %5932 = vmatpush.bf16.msra.mxu0 %v3587
    %5933 = vmatpush.bf16.msra.mxu0 %v3571
    %5934 = vmatpush.bf16.msra.mxu0 %v3555
    %5935 = vmatpush.bf16.msra.mxu0 %v3539
    %5936 = vmatpush.bf16.msra.mxu0 %v3523
    %5937 = vmatpush.bf16.msra.mxu0 %v3507
    %5938 = vmatpush.bf16.msra.mxu0 %v3491
    %5939 = vmatpush.bf16.msra.mxu0 %v3475
    %5940 = vmatmul.bf16.gmra.mxu0 %v5424
    %v5941 = vpop.f32.mrf.mxu0
    %v5942 = vadd.f32 %v5929, %v5941
    %v5943 = vpop.f32.mrf.mxu0
    %5944 = vdwg.mxu0
    %5945 = vmatpush.bf16.msra.mxu0 %v3204
    %5946 = vmatpush.bf16.msra.mxu0 %v3188
    %5947 = vmatpush.bf16.msra.mxu0 %v3172
    %5948 = vmatpush.bf16.msra.mxu0 %v3156
    %5949 = vmatpush.bf16.msra.mxu0 %v3140
    %5950 = vmatpush.bf16.msra.mxu0 %v3124
    %5951 = vmatpush.bf16.msra.mxu0 %v3108
    %5952 = vmatpush.bf16.msra.mxu0 %v3092
    %5953 = vmatmul.bf16.gmra.mxu0 %v5421
    %v5954 = vpop.f32.mrf.mxu0
    %v5955 = vadd.f32 0.0, %v5954
    %v5956 = vpop.f32.mrf.mxu0
    %5957 = vdwg.mxu0
    %5958 = vmatpush.bf16.msra.mxu0 %v3332
    %5959 = vmatpush.bf16.msra.mxu0 %v3316
    %5960 = vmatpush.bf16.msra.mxu0 %v3300
    %5961 = vmatpush.bf16.msra.mxu0 %v3284
    %5962 = vmatpush.bf16.msra.mxu0 %v3268
    %5963 = vmatpush.bf16.msra.mxu0 %v3252
    %5964 = vmatpush.bf16.msra.mxu0 %v3236
    %5965 = vmatpush.bf16.msra.mxu0 %v3220
    %5966 = vmatmul.bf16.gmra.mxu0 %v5422
    %v5967 = vpop.f32.mrf.mxu0
    %v5968 = vadd.f32 %v5955, %v5967
    %v5969 = vpop.f32.mrf.mxu0
    %5970 = vdwg.mxu0
    %5971 = vmatpush.bf16.msra.mxu0 %v3460
    %5972 = vmatpush.bf16.msra.mxu0 %v3444
    %5973 = vmatpush.bf16.msra.mxu0 %v3428
    %5974 = vmatpush.bf16.msra.mxu0 %v3412
    %5975 = vmatpush.bf16.msra.mxu0 %v3396
    %5976 = vmatpush.bf16.msra.mxu0 %v3380
    %5977 = vmatpush.bf16.msra.mxu0 %v3364
    %5978 = vmatpush.bf16.msra.mxu0 %v3348
    %5979 = vmatmul.bf16.gmra.mxu0 %v5423
    %v5980 = vpop.f32.mrf.mxu0
    %v5981 = vadd.f32 %v5968, %v5980
    %v5982 = vpop.f32.mrf.mxu0
    %5983 = vdwg.mxu0
    %5984 = vmatpush.bf16.msra.mxu0 %v3588
    %5985 = vmatpush.bf16.msra.mxu0 %v3572
    %5986 = vmatpush.bf16.msra.mxu0 %v3556
    %5987 = vmatpush.bf16.msra.mxu0 %v3540
    %5988 = vmatpush.bf16.msra.mxu0 %v3524
    %5989 = vmatpush.bf16.msra.mxu0 %v3508
    %5990 = vmatpush.bf16.msra.mxu0 %v3492
    %5991 = vmatpush.bf16.msra.mxu0 %v3476
    %5992 = vmatmul.bf16.gmra.mxu0 %v5424
    %v5993 = vpop.f32.mrf.mxu0
    %v5994 = vadd.f32 %v5981, %v5993
    %v5995 = vpop.f32.mrf.mxu0
    %5996 = vdwg.mxu0
    %5997 = vmatpush.bf16.msra.mxu0 %v3205
    %5998 = vmatpush.bf16.msra.mxu0 %v3189
    %5999 = vmatpush.bf16.msra.mxu0 %v3173
    %6000 = vmatpush.bf16.msra.mxu0 %v3157
    %6001 = vmatpush.bf16.msra.mxu0 %v3141
    %6002 = vmatpush.bf16.msra.mxu0 %v3125
    %6003 = vmatpush.bf16.msra.mxu0 %v3109
    %6004 = vmatpush.bf16.msra.mxu0 %v3093
    %6005 = vmatmul.bf16.gmra.mxu0 %v5421
    %v6006 = vpop.f32.mrf.mxu0
    %v6007 = vadd.f32 0.0, %v6006
    %v6008 = vpop.f32.mrf.mxu0
    %6009 = vdwg.mxu0
    %6010 = vmatpush.bf16.msra.mxu0 %v3333
    %6011 = vmatpush.bf16.msra.mxu0 %v3317
    %6012 = vmatpush.bf16.msra.mxu0 %v3301
    %6013 = vmatpush.bf16.msra.mxu0 %v3285
    %6014 = vmatpush.bf16.msra.mxu0 %v3269
    %6015 = vmatpush.bf16.msra.mxu0 %v3253
    %6016 = vmatpush.bf16.msra.mxu0 %v3237
    %6017 = vmatpush.bf16.msra.mxu0 %v3221
    %6018 = vmatmul.bf16.gmra.mxu0 %v5422
    %v6019 = vpop.f32.mrf.mxu0
    %v6020 = vadd.f32 %v6007, %v6019
    %v6021 = vpop.f32.mrf.mxu0
    %6022 = vdwg.mxu0
    %6023 = vmatpush.bf16.msra.mxu0 %v3461
    %6024 = vmatpush.bf16.msra.mxu0 %v3445
    %6025 = vmatpush.bf16.msra.mxu0 %v3429
    %6026 = vmatpush.bf16.msra.mxu0 %v3413
    %6027 = vmatpush.bf16.msra.mxu0 %v3397
    %6028 = vmatpush.bf16.msra.mxu0 %v3381
    %6029 = vmatpush.bf16.msra.mxu0 %v3365
    %6030 = vmatpush.bf16.msra.mxu0 %v3349
    %6031 = vmatmul.bf16.gmra.mxu0 %v5423
    %v6032 = vpop.f32.mrf.mxu0
    %v6033 = vadd.f32 %v6020, %v6032
    %v6034 = vpop.f32.mrf.mxu0
    %6035 = vdwg.mxu0
    %6036 = vmatpush.bf16.msra.mxu0 %v3589
    %6037 = vmatpush.bf16.msra.mxu0 %v3573
    %6038 = vmatpush.bf16.msra.mxu0 %v3557
    %6039 = vmatpush.bf16.msra.mxu0 %v3541
    %6040 = vmatpush.bf16.msra.mxu0 %v3525
    %6041 = vmatpush.bf16.msra.mxu0 %v3509
    %6042 = vmatpush.bf16.msra.mxu0 %v3493
    %6043 = vmatpush.bf16.msra.mxu0 %v3477
    %6044 = vmatmul.bf16.gmra.mxu0 %v5424
    %v6045 = vpop.f32.mrf.mxu0
    %v6046 = vadd.f32 %v6033, %v6045
    %v6047 = vpop.f32.mrf.mxu0
    %6048 = vdwg.mxu0
    %6049 = vmatpush.bf16.msra.mxu0 %v3206
    %6050 = vmatpush.bf16.msra.mxu0 %v3190
    %6051 = vmatpush.bf16.msra.mxu0 %v3174
    %6052 = vmatpush.bf16.msra.mxu0 %v3158
    %6053 = vmatpush.bf16.msra.mxu0 %v3142
    %6054 = vmatpush.bf16.msra.mxu0 %v3126
    %6055 = vmatpush.bf16.msra.mxu0 %v3110
    %6056 = vmatpush.bf16.msra.mxu0 %v3094
    %6057 = vmatmul.bf16.gmra.mxu0 %v5421
    %v6058 = vpop.f32.mrf.mxu0
    %v6059 = vadd.f32 0.0, %v6058
    %v6060 = vpop.f32.mrf.mxu0
    %6061 = vdwg.mxu0
    %6062 = vmatpush.bf16.msra.mxu0 %v3334
    %6063 = vmatpush.bf16.msra.mxu0 %v3318
    %6064 = vmatpush.bf16.msra.mxu0 %v3302
    %6065 = vmatpush.bf16.msra.mxu0 %v3286
    %6066 = vmatpush.bf16.msra.mxu0 %v3270
    %6067 = vmatpush.bf16.msra.mxu0 %v3254
    %6068 = vmatpush.bf16.msra.mxu0 %v3238
    %6069 = vmatpush.bf16.msra.mxu0 %v3222
    %6070 = vmatmul.bf16.gmra.mxu0 %v5422
    %v6071 = vpop.f32.mrf.mxu0
    %v6072 = vadd.f32 %v6059, %v6071
    %v6073 = vpop.f32.mrf.mxu0
    %6074 = vdwg.mxu0
    %6075 = vmatpush.bf16.msra.mxu0 %v3462
    %6076 = vmatpush.bf16.msra.mxu0 %v3446
    %6077 = vmatpush.bf16.msra.mxu0 %v3430
    %6078 = vmatpush.bf16.msra.mxu0 %v3414
    %6079 = vmatpush.bf16.msra.mxu0 %v3398
    %6080 = vmatpush.bf16.msra.mxu0 %v3382
    %6081 = vmatpush.bf16.msra.mxu0 %v3366
    %6082 = vmatpush.bf16.msra.mxu0 %v3350
    %6083 = vmatmul.bf16.gmra.mxu0 %v5423
    %v6084 = vpop.f32.mrf.mxu0
    %v6085 = vadd.f32 %v6072, %v6084
    %v6086 = vpop.f32.mrf.mxu0
    %6087 = vdwg.mxu0
    %6088 = vmatpush.bf16.msra.mxu0 %v3590
    %6089 = vmatpush.bf16.msra.mxu0 %v3574
    %6090 = vmatpush.bf16.msra.mxu0 %v3558
    %6091 = vmatpush.bf16.msra.mxu0 %v3542
    %6092 = vmatpush.bf16.msra.mxu0 %v3526
    %6093 = vmatpush.bf16.msra.mxu0 %v3510
    %6094 = vmatpush.bf16.msra.mxu0 %v3494
    %6095 = vmatpush.bf16.msra.mxu0 %v3478
    %6096 = vmatmul.bf16.gmra.mxu0 %v5424
    %v6097 = vpop.f32.mrf.mxu0
    %v6098 = vadd.f32 %v6085, %v6097
    %v6099 = vpop.f32.mrf.mxu0
    %6100 = vdwg.mxu0
    %6101 = vmatpush.bf16.msra.mxu0 %v3207
    %6102 = vmatpush.bf16.msra.mxu0 %v3191
    %6103 = vmatpush.bf16.msra.mxu0 %v3175
    %6104 = vmatpush.bf16.msra.mxu0 %v3159
    %6105 = vmatpush.bf16.msra.mxu0 %v3143
    %6106 = vmatpush.bf16.msra.mxu0 %v3127
    %6107 = vmatpush.bf16.msra.mxu0 %v3111
    %6108 = vmatpush.bf16.msra.mxu0 %v3095
    %6109 = vmatmul.bf16.gmra.mxu0 %v5421
    %v6110 = vpop.f32.mrf.mxu0
    %v6111 = vadd.f32 0.0, %v6110
    %v6112 = vpop.f32.mrf.mxu0
    %6113 = vdwg.mxu0
    %6114 = vmatpush.bf16.msra.mxu0 %v3335
    %6115 = vmatpush.bf16.msra.mxu0 %v3319
    %6116 = vmatpush.bf16.msra.mxu0 %v3303
    %6117 = vmatpush.bf16.msra.mxu0 %v3287
    %6118 = vmatpush.bf16.msra.mxu0 %v3271
    %6119 = vmatpush.bf16.msra.mxu0 %v3255
    %6120 = vmatpush.bf16.msra.mxu0 %v3239
    %6121 = vmatpush.bf16.msra.mxu0 %v3223
    %6122 = vmatmul.bf16.gmra.mxu0 %v5422
    %v6123 = vpop.f32.mrf.mxu0
    %v6124 = vadd.f32 %v6111, %v6123
    %v6125 = vpop.f32.mrf.mxu0
    %6126 = vdwg.mxu0
    %6127 = vmatpush.bf16.msra.mxu0 %v3463
    %6128 = vmatpush.bf16.msra.mxu0 %v3447
    %6129 = vmatpush.bf16.msra.mxu0 %v3431
    %6130 = vmatpush.bf16.msra.mxu0 %v3415
    %6131 = vmatpush.bf16.msra.mxu0 %v3399
    %6132 = vmatpush.bf16.msra.mxu0 %v3383
    %6133 = vmatpush.bf16.msra.mxu0 %v3367
    %6134 = vmatpush.bf16.msra.mxu0 %v3351
    %6135 = vmatmul.bf16.gmra.mxu0 %v5423
    %v6136 = vpop.f32.mrf.mxu0
    %v6137 = vadd.f32 %v6124, %v6136
    %v6138 = vpop.f32.mrf.mxu0
    %6139 = vdwg.mxu0
    %6140 = vmatpush.bf16.msra.mxu0 %v3591
    %6141 = vmatpush.bf16.msra.mxu0 %v3575
    %6142 = vmatpush.bf16.msra.mxu0 %v3559
    %6143 = vmatpush.bf16.msra.mxu0 %v3543
    %6144 = vmatpush.bf16.msra.mxu0 %v3527
    %6145 = vmatpush.bf16.msra.mxu0 %v3511
    %6146 = vmatpush.bf16.msra.mxu0 %v3495
    %6147 = vmatpush.bf16.msra.mxu0 %v3479
    %6148 = vmatmul.bf16.gmra.mxu0 %v5424
    %v6149 = vpop.f32.mrf.mxu0
    %v6150 = vadd.f32 %v6137, %v6149
    %v6151 = vpop.f32.mrf.mxu0
    %6152 = vdwg.mxu0
    %6153 = vmatpush.bf16.msra.mxu0 %v3208
    %6154 = vmatpush.bf16.msra.mxu0 %v3192
    %6155 = vmatpush.bf16.msra.mxu0 %v3176
    %6156 = vmatpush.bf16.msra.mxu0 %v3160
    %6157 = vmatpush.bf16.msra.mxu0 %v3144
    %6158 = vmatpush.bf16.msra.mxu0 %v3128
    %6159 = vmatpush.bf16.msra.mxu0 %v3112
    %6160 = vmatpush.bf16.msra.mxu0 %v3096
    %6161 = vmatmul.bf16.gmra.mxu0 %v5421
    %v6162 = vpop.f32.mrf.mxu0
    %v6163 = vadd.f32 0.0, %v6162
    %v6164 = vpop.f32.mrf.mxu0
    %6165 = vdwg.mxu0
    %6166 = vmatpush.bf16.msra.mxu0 %v3336
    %6167 = vmatpush.bf16.msra.mxu0 %v3320
    %6168 = vmatpush.bf16.msra.mxu0 %v3304
    %6169 = vmatpush.bf16.msra.mxu0 %v3288
    %6170 = vmatpush.bf16.msra.mxu0 %v3272
    %6171 = vmatpush.bf16.msra.mxu0 %v3256
    %6172 = vmatpush.bf16.msra.mxu0 %v3240
    %6173 = vmatpush.bf16.msra.mxu0 %v3224
    %6174 = vmatmul.bf16.gmra.mxu0 %v5422
    %v6175 = vpop.f32.mrf.mxu0
    %v6176 = vadd.f32 %v6163, %v6175
    %v6177 = vpop.f32.mrf.mxu0
    %6178 = vdwg.mxu0
    %6179 = vmatpush.bf16.msra.mxu0 %v3464
    %6180 = vmatpush.bf16.msra.mxu0 %v3448
    %6181 = vmatpush.bf16.msra.mxu0 %v3432
    %6182 = vmatpush.bf16.msra.mxu0 %v3416
    %6183 = vmatpush.bf16.msra.mxu0 %v3400
    %6184 = vmatpush.bf16.msra.mxu0 %v3384
    %6185 = vmatpush.bf16.msra.mxu0 %v3368
    %6186 = vmatpush.bf16.msra.mxu0 %v3352
    %6187 = vmatmul.bf16.gmra.mxu0 %v5423
    %v6188 = vpop.f32.mrf.mxu0
    %v6189 = vadd.f32 %v6176, %v6188
    %v6190 = vpop.f32.mrf.mxu0
    %6191 = vdwg.mxu0
    %6192 = vmatpush.bf16.msra.mxu0 %v3592
    %6193 = vmatpush.bf16.msra.mxu0 %v3576
    %6194 = vmatpush.bf16.msra.mxu0 %v3560
    %6195 = vmatpush.bf16.msra.mxu0 %v3544
    %6196 = vmatpush.bf16.msra.mxu0 %v3528
    %6197 = vmatpush.bf16.msra.mxu0 %v3512
    %6198 = vmatpush.bf16.msra.mxu0 %v3496
    %6199 = vmatpush.bf16.msra.mxu0 %v3480
    %6200 = vmatmul.bf16.gmra.mxu0 %v5424
    %v6201 = vpop.f32.mrf.mxu0
    %v6202 = vadd.f32 %v6189, %v6201
    %v6203 = vpop.f32.mrf.mxu0
    %6204 = vdwg.mxu0
    %6205 = vmatpush.bf16.msra.mxu0 %v3209
    %6206 = vmatpush.bf16.msra.mxu0 %v3193
    %6207 = vmatpush.bf16.msra.mxu0 %v3177
    %6208 = vmatpush.bf16.msra.mxu0 %v3161
    %6209 = vmatpush.bf16.msra.mxu0 %v3145
    %6210 = vmatpush.bf16.msra.mxu0 %v3129
    %6211 = vmatpush.bf16.msra.mxu0 %v3113
    %6212 = vmatpush.bf16.msra.mxu0 %v3097
    %6213 = vmatmul.bf16.gmra.mxu0 %v5421
    %v6214 = vpop.f32.mrf.mxu0
    %v6215 = vadd.f32 0.0, %v6214
    %v6216 = vpop.f32.mrf.mxu0
    %6217 = vdwg.mxu0
    %6218 = vmatpush.bf16.msra.mxu0 %v3337
    %6219 = vmatpush.bf16.msra.mxu0 %v3321
    %6220 = vmatpush.bf16.msra.mxu0 %v3305
    %6221 = vmatpush.bf16.msra.mxu0 %v3289
    %6222 = vmatpush.bf16.msra.mxu0 %v3273
    %6223 = vmatpush.bf16.msra.mxu0 %v3257
    %6224 = vmatpush.bf16.msra.mxu0 %v3241
    %6225 = vmatpush.bf16.msra.mxu0 %v3225
    %6226 = vmatmul.bf16.gmra.mxu0 %v5422
    %v6227 = vpop.f32.mrf.mxu0
    %v6228 = vadd.f32 %v6215, %v6227
    %v6229 = vpop.f32.mrf.mxu0
    %6230 = vdwg.mxu0
    %6231 = vmatpush.bf16.msra.mxu0 %v3465
    %6232 = vmatpush.bf16.msra.mxu0 %v3449
    %6233 = vmatpush.bf16.msra.mxu0 %v3433
    %6234 = vmatpush.bf16.msra.mxu0 %v3417
    %6235 = vmatpush.bf16.msra.mxu0 %v3401
    %6236 = vmatpush.bf16.msra.mxu0 %v3385
    %6237 = vmatpush.bf16.msra.mxu0 %v3369
    %6238 = vmatpush.bf16.msra.mxu0 %v3353
    %6239 = vmatmul.bf16.gmra.mxu0 %v5423
    %v6240 = vpop.f32.mrf.mxu0
    %v6241 = vadd.f32 %v6228, %v6240
    %v6242 = vpop.f32.mrf.mxu0
    %6243 = vdwg.mxu0
    %6244 = vmatpush.bf16.msra.mxu0 %v3593
    %6245 = vmatpush.bf16.msra.mxu0 %v3577
    %6246 = vmatpush.bf16.msra.mxu0 %v3561
    %6247 = vmatpush.bf16.msra.mxu0 %v3545
    %6248 = vmatpush.bf16.msra.mxu0 %v3529
    %6249 = vmatpush.bf16.msra.mxu0 %v3513
    %6250 = vmatpush.bf16.msra.mxu0 %v3497
    %6251 = vmatpush.bf16.msra.mxu0 %v3481
    %6252 = vmatmul.bf16.gmra.mxu0 %v5424
    %v6253 = vpop.f32.mrf.mxu0
    %v6254 = vadd.f32 %v6241, %v6253
    %v6255 = vpop.f32.mrf.mxu0
    %6256 = vdwg.mxu0
    %v6257 = vadd.f32 %v5223, %v5474
    %v6258 = vadd.f32 %v5236, %v5526
    %v6259 = vadd.f32 %v5249, %v5578
    %v6260 = vadd.f32 %v5262, %v5630
    %v6261 = vadd.f32 %v5275, %v5682
    %v6262 = vadd.f32 %v5288, %v5734
    %v6263 = vadd.f32 %v5301, %v5786
    %v6264 = vadd.f32 %v5314, %v5838
    %v6265 = vadd.f32 %v5327, %v5890
    %v6266 = vadd.f32 %v5340, %v5942
    %v6267 = vadd.f32 %v5353, %v5994
    %v6268 = vadd.f32 %v5366, %v6046
    %v6269 = vadd.f32 %v5379, %v6098
    %v6270 = vadd.f32 %v5392, %v6150
    %v6271 = vadd.f32 %v5405, %v6202
    %v6272 = vadd.f32 %v5418, %v6254
    %v6273 = vxor.u32 %v6257, 2147483648
    %v6274 = vxor.u32 %v6258, 2147483648
    %v6275 = vxor.u32 %v6259, 2147483648
    %v6276 = vxor.u32 %v6260, 2147483648
    %v6277 = vmul.f32 %v6273, 1.442695
    %v6278 = vpow.pop %v6277
    %v6279 = vmul.f32 %v6274, 1.442695
    %v6280 = vpow.pop %v6279
    %v6281 = vmul.f32 %v6275, 1.442695
    %v6282 = vpow.pop %v6281
    %v6283 = vmul.f32 %v6276, 1.442695
    %v6284 = vpow.pop %v6283
    %v6285 = vadd.f32 %v6278, 1.0
    %v6286 = vadd.f32 %v6280, 1.0
    %v6287 = vadd.f32 %v6282, 1.0
    %v6288 = vadd.f32 %v6284, 1.0
    %v6289 = vrcp.pop %v6285
    %v6290 = vmul.f32 %v6285, %v6289
    %v6291 = vsub.f32 1.0, %v6290
    %v6292 = vmul.f32 %v6289, %v6291
    %v6293 = vadd.f32 %v6289, %v6292
    %vm6294 = vweird.f32 %v6285
    %vm6295 = vweird.f32 %v6289
    %vm6296 = vmor %vm6294, %vm6295
    %v6297 = vsel %vm6296, %v6289, %v6293
    %v6298 = vand.u32 2147483647, %v6285
    %vm6299 = vcmp.eq.f32.partialorder %v6298, 8.507059e+37
    %v6300 = vand.u32 %v6285, 2147483648
    %v6301 = vor.u32 1.1754944e-38, %v6300
    %v6302 = vsel %vm6299, %v6301, %v6297
    %v6303 = vmul.f32 1.0, %v6302
    %v6304 = vrcp.pop %v6286
    %v6305 = vmul.f32 %v6286, %v6304
    %v6306 = vsub.f32 1.0, %v6305
    %v6307 = vmul.f32 %v6304, %v6306
    %v6308 = vadd.f32 %v6304, %v6307
    %vm6309 = vweird.f32 %v6286
    %vm6310 = vweird.f32 %v6304
    %vm6311 = vmor %vm6309, %vm6310
    %v6312 = vsel %vm6311, %v6304, %v6308
    %v6313 = vand.u32 2147483647, %v6286
    %vm6314 = vcmp.eq.f32.partialorder %v6313, 8.507059e+37
    %v6315 = vand.u32 %v6286, 2147483648
    %v6316 = vor.u32 1.1754944e-38, %v6315
    %v6317 = vsel %vm6314, %v6316, %v6312
    %v6318 = vmul.f32 1.0, %v6317
    %v6319 = vrcp.pop %v6287
    %v6320 = vmul.f32 %v6287, %v6319
    %v6321 = vsub.f32 1.0, %v6320
    %v6322 = vmul.f32 %v6319, %v6321
    %v6323 = vadd.f32 %v6319, %v6322
    %vm6324 = vweird.f32 %v6287
    %vm6325 = vweird.f32 %v6319
    %vm6326 = vmor %vm6324, %vm6325
    %v6327 = vsel %vm6326, %v6319, %v6323
    %v6328 = vand.u32 2147483647, %v6287
    %vm6329 = vcmp.eq.f32.partialorder %v6328, 8.507059e+37
    %v6330 = vand.u32 %v6287, 2147483648
    %v6331 = vor.u32 1.1754944e-38, %v6330
    %v6332 = vsel %vm6329, %v6331, %v6327
    %v6333 = vmul.f32 1.0, %v6332
    %v6334 = vrcp.pop %v6288
    %v6335 = vmul.f32 %v6288, %v6334
    %v6336 = vsub.f32 1.0, %v6335
    %v6337 = vmul.f32 %v6334, %v6336
    %v6338 = vadd.f32 %v6334, %v6337
    %vm6339 = vweird.f32 %v6288
    %vm6340 = vweird.f32 %v6334
    %vm6341 = vmor %vm6339, %vm6340
    %v6342 = vsel %vm6341, %v6334, %v6338
    %v6343 = vand.u32 2147483647, %v6288
    %vm6344 = vcmp.eq.f32.partialorder %v6343, 8.507059e+37
    %v6345 = vand.u32 %v6288, 2147483648
    %v6346 = vor.u32 1.1754944e-38, %v6345
    %v6347 = vsel %vm6344, %v6346, %v6342
    %v6348 = vmul.f32 1.0, %v6347
    %v6349 = vxor.u32 %v6261, 2147483648
    %v6350 = vxor.u32 %v6262, 2147483648
    %v6351 = vxor.u32 %v6263, 2147483648
    %v6352 = vxor.u32 %v6264, 2147483648
    %v6353 = vmul.f32 %v6349, 1.442695
    %v6354 = vpow.pop %v6353
    %v6355 = vmul.f32 %v6350, 1.442695
    %v6356 = vpow.pop %v6355
    %v6357 = vmul.f32 %v6351, 1.442695
    %v6358 = vpow.pop %v6357
    %v6359 = vmul.f32 %v6352, 1.442695
    %v6360 = vpow.pop %v6359
    %v6361 = vadd.f32 %v6354, 1.0
    %v6362 = vadd.f32 %v6356, 1.0
    %v6363 = vadd.f32 %v6358, 1.0
    %v6364 = vadd.f32 %v6360, 1.0
    %v6365 = vrcp.pop %v6361
    %v6366 = vmul.f32 %v6361, %v6365
    %v6367 = vsub.f32 1.0, %v6366
    %v6368 = vmul.f32 %v6365, %v6367
    %v6369 = vadd.f32 %v6365, %v6368
    %vm6370 = vweird.f32 %v6361
    %vm6371 = vweird.f32 %v6365
    %vm6372 = vmor %vm6370, %vm6371
    %v6373 = vsel %vm6372, %v6365, %v6369
    %v6374 = vand.u32 2147483647, %v6361
    %vm6375 = vcmp.eq.f32.partialorder %v6374, 8.507059e+37
    %v6376 = vand.u32 %v6361, 2147483648
    %v6377 = vor.u32 1.1754944e-38, %v6376
    %v6378 = vsel %vm6375, %v6377, %v6373
    %v6379 = vmul.f32 1.0, %v6378
    %v6380 = vrcp.pop %v6362
    %v6381 = vmul.f32 %v6362, %v6380
    %v6382 = vsub.f32 1.0, %v6381
    %v6383 = vmul.f32 %v6380, %v6382
    %v6384 = vadd.f32 %v6380, %v6383
    %vm6385 = vweird.f32 %v6362
    %vm6386 = vweird.f32 %v6380
    %vm6387 = vmor %vm6385, %vm6386
    %v6388 = vsel %vm6387, %v6380, %v6384
    %v6389 = vand.u32 2147483647, %v6362
    %vm6390 = vcmp.eq.f32.partialorder %v6389, 8.507059e+37
    %v6391 = vand.u32 %v6362, 2147483648
    %v6392 = vor.u32 1.1754944e-38, %v6391
    %v6393 = vsel %vm6390, %v6392, %v6388
    %v6394 = vmul.f32 1.0, %v6393
    %v6395 = vrcp.pop %v6363
    %v6396 = vmul.f32 %v6363, %v6395
    %v6397 = vsub.f32 1.0, %v6396
    %v6398 = vmul.f32 %v6395, %v6397
    %v6399 = vadd.f32 %v6395, %v6398
    %vm6400 = vweird.f32 %v6363
    %vm6401 = vweird.f32 %v6395
    %vm6402 = vmor %vm6400, %vm6401
    %v6403 = vsel %vm6402, %v6395, %v6399
    %v6404 = vand.u32 2147483647, %v6363
    %vm6405 = vcmp.eq.f32.partialorder %v6404, 8.507059e+37
    %v6406 = vand.u32 %v6363, 2147483648
    %v6407 = vor.u32 1.1754944e-38, %v6406
    %v6408 = vsel %vm6405, %v6407, %v6403
    %v6409 = vmul.f32 1.0, %v6408
    %v6410 = vrcp.pop %v6364
    %v6411 = vmul.f32 %v6364, %v6410
    %v6412 = vsub.f32 1.0, %v6411
    %v6413 = vmul.f32 %v6410, %v6412
    %v6414 = vadd.f32 %v6410, %v6413
    %vm6415 = vweird.f32 %v6364
    %vm6416 = vweird.f32 %v6410
    %vm6417 = vmor %vm6415, %vm6416
    %v6418 = vsel %vm6417, %v6410, %v6414
    %v6419 = vand.u32 2147483647, %v6364
    %vm6420 = vcmp.eq.f32.partialorder %v6419, 8.507059e+37
    %v6421 = vand.u32 %v6364, 2147483648
    %v6422 = vor.u32 1.1754944e-38, %v6421
    %v6423 = vsel %vm6420, %v6422, %v6418
    %v6424 = vmul.f32 1.0, %v6423
    %v6425 = vtanh.pop %v6265
    %v6426 = vtanh.pop %v6266
    %v6427 = vtanh.pop %v6267
    %v6428 = vtanh.pop %v6268
    %v6429 = vxor.u32 %v6269, 2147483648
    %v6430 = vxor.u32 %v6270, 2147483648
    %v6431 = vxor.u32 %v6271, 2147483648
    %v6432 = vxor.u32 %v6272, 2147483648
    %v6433 = vmul.f32 %v6429, 1.442695
    %v6434 = vpow.pop %v6433
    %v6435 = vmul.f32 %v6430, 1.442695
    %v6436 = vpow.pop %v6435
    %v6437 = vmul.f32 %v6431, 1.442695
    %v6438 = vpow.pop %v6437
    %v6439 = vmul.f32 %v6432, 1.442695
    %v6440 = vpow.pop %v6439
    %v6441 = vadd.f32 %v6434, 1.0
    %v6442 = vadd.f32 %v6436, 1.0
    %v6443 = vadd.f32 %v6438, 1.0
    %v6444 = vadd.f32 %v6440, 1.0
    %v6445 = vrcp.pop %v6441
    %v6446 = vmul.f32 %v6441, %v6445
    %v6447 = vsub.f32 1.0, %v6446
    %v6448 = vmul.f32 %v6445, %v6447
    %v6449 = vadd.f32 %v6445, %v6448
    %vm6450 = vweird.f32 %v6441
    %vm6451 = vweird.f32 %v6445
    %vm6452 = vmor %vm6450, %vm6451
    %v6453 = vsel %vm6452, %v6445, %v6449
    %v6454 = vand.u32 2147483647, %v6441
    %vm6455 = vcmp.eq.f32.partialorder %v6454, 8.507059e+37
    %v6456 = vand.u32 %v6441, 2147483648
    %v6457 = vor.u32 1.1754944e-38, %v6456
    %v6458 = vsel %vm6455, %v6457, %v6453
    %v6459 = vmul.f32 1.0, %v6458
    %v6460 = vrcp.pop %v6442
    %v6461 = vmul.f32 %v6442, %v6460
    %v6462 = vsub.f32 1.0, %v6461
    %v6463 = vmul.f32 %v6460, %v6462
    %v6464 = vadd.f32 %v6460, %v6463
    %vm6465 = vweird.f32 %v6442
    %vm6466 = vweird.f32 %v6460
    %vm6467 = vmor %vm6465, %vm6466
    %v6468 = vsel %vm6467, %v6460, %v6464
    %v6469 = vand.u32 2147483647, %v6442
    %vm6470 = vcmp.eq.f32.partialorder %v6469, 8.507059e+37
    %v6471 = vand.u32 %v6442, 2147483648
    %v6472 = vor.u32 1.1754944e-38, %v6471
    %v6473 = vsel %vm6470, %v6472, %v6468
    %v6474 = vmul.f32 1.0, %v6473
    %v6475 = vrcp.pop %v6443
    %v6476 = vmul.f32 %v6443, %v6475
    %v6477 = vsub.f32 1.0, %v6476
    %v6478 = vmul.f32 %v6475, %v6477
    %v6479 = vadd.f32 %v6475, %v6478
    %vm6480 = vweird.f32 %v6443
    %vm6481 = vweird.f32 %v6475
    %vm6482 = vmor %vm6480, %vm6481
    %v6483 = vsel %vm6482, %v6475, %v6479
    %v6484 = vand.u32 2147483647, %v6443
    %vm6485 = vcmp.eq.f32.partialorder %v6484, 8.507059e+37
    %v6486 = vand.u32 %v6443, 2147483648
    %v6487 = vor.u32 1.1754944e-38, %v6486
    %v6488 = vsel %vm6485, %v6487, %v6483
    %v6489 = vmul.f32 1.0, %v6488
    %v6490 = vrcp.pop %v6444
    %v6491 = vmul.f32 %v6444, %v6490
    %v6492 = vsub.f32 1.0, %v6491
    %v6493 = vmul.f32 %v6490, %v6492
    %v6494 = vadd.f32 %v6490, %v6493
    %vm6495 = vweird.f32 %v6444
    %vm6496 = vweird.f32 %v6490
    %vm6497 = vmor %vm6495, %vm6496
    %v6498 = vsel %vm6497, %v6490, %v6494
    %v6499 = vand.u32 2147483647, %v6444
    %vm6500 = vcmp.eq.f32.partialorder %v6499, 8.507059e+37
    %v6501 = vand.u32 %v6444, 2147483648
    %v6502 = vor.u32 1.1754944e-38, %v6501
    %v6503 = vsel %vm6500, %v6502, %v6498
    %v6504 = vmul.f32 1.0, %v6503
    %v6505 = vmul.f32 %v6379, %v5194
    %v6506 = vmul.f32 %v6394, %v5195
    %v6507 = vmul.f32 %v6409, %v5196
    %v6508 = vmul.f32 %v6424, %v5197
    %v6509 = vmul.f32 %v6303, %v6425
    %v6510 = vmul.f32 %v6318, %v6426
    %v6511 = vmul.f32 %v6333, %v6427
    %v6512 = vmul.f32 %v6348, %v6428
    %v6513 = vadd.f32 %v6505, %v6509
    %v6514 = vadd.f32 %v6506, %v6510
    %v6515 = vadd.f32 %v6507, %v6511
    %v6516 = vadd.f32 %v6508, %v6512
    %v6517 = vtanh.pop %v6513
    %v6518 = vtanh.pop %v6514
    %v6519 = vtanh.pop %v6515
    %v6520 = vtanh.pop %v6516
    %v6521 = vmul.f32 %v6459, %v6517
    %v6522 = vmul.f32 %v6474, %v6518
    %v6523 = vmul.f32 %v6489, %v6519
    %v6524 = vmul.f32 %v6504, %v6520
    %6526 = vst [vmem:[#allocation1] ss:$4 sm:$0xff] %v656
    %s6528 = scalar_lea.vmem [#allocation1], 1
    %6529 = vst [vmem:[%s6528] ss:$4 sm:$0xff] %v657
    %v6530 = vld.sshfl [vmem:[#allocation1] sm:$0xff pattern:$0x73625140]
    %v6531 = vsel %vm864, %v6530, 0
    %6533 = vmatpush.bf16.msra.mxu0 0
    %6534 = vmatpush.bf16.msra.mxu0 0
    %6535 = vmatpush.bf16.msra.mxu0 0
    %6536 = vmatpush.bf16.msra.mxu0 0
    %6537 = vmatpush.bf16.msra.mxu0 0
    %6538 = vmatpush.bf16.msra.mxu0 0
    %6539 = vmatpush.bf16.msra.mxu0 %v816
    %6540 = vmatpush.bf16.msra.mxu0 %v800
    %6541 = vmatmul.bf16.gmra.mxu0 %v6531
    %v6542 = vpop.f32.mrf.mxu0
    %v6543 = vadd.f32 0.0, %v6542
    %v6544 = vpop.f32.mrf.mxu0
    %6545 = vdwg.mxu0
    %6546 = vmatpush.bf16.msra.mxu0 0
    %6547 = vmatpush.bf16.msra.mxu0 0
    %6548 = vmatpush.bf16.msra.mxu0 0
    %6549 = vmatpush.bf16.msra.mxu0 0
    %6550 = vmatpush.bf16.msra.mxu0 0
    %6551 = vmatpush.bf16.msra.mxu0 0
    %6552 = vmatpush.bf16.msra.mxu0 %v817
    %6553 = vmatpush.bf16.msra.mxu0 %v801
    %6554 = vmatmul.bf16.gmra.mxu0 %v6531
    %v6555 = vpop.f32.mrf.mxu0
    %v6556 = vadd.f32 0.0, %v6555
    %v6557 = vpop.f32.mrf.mxu0
    %6558 = vdwg.mxu0
    %6559 = vmatpush.bf16.msra.mxu0 0
    %6560 = vmatpush.bf16.msra.mxu0 0
    %6561 = vmatpush.bf16.msra.mxu0 0
    %6562 = vmatpush.bf16.msra.mxu0 0
    %6563 = vmatpush.bf16.msra.mxu0 0
    %6564 = vmatpush.bf16.msra.mxu0 0
    %6565 = vmatpush.bf16.msra.mxu0 %v818
    %6566 = vmatpush.bf16.msra.mxu0 %v802
    %6567 = vmatmul.bf16.gmra.mxu0 %v6531
    %v6568 = vpop.f32.mrf.mxu0
    %v6569 = vadd.f32 0.0, %v6568
    %v6570 = vpop.f32.mrf.mxu0
    %6571 = vdwg.mxu0
    %6572 = vmatpush.bf16.msra.mxu0 0
    %6573 = vmatpush.bf16.msra.mxu0 0
    %6574 = vmatpush.bf16.msra.mxu0 0
    %6575 = vmatpush.bf16.msra.mxu0 0
    %6576 = vmatpush.bf16.msra.mxu0 0
    %6577 = vmatpush.bf16.msra.mxu0 0
    %6578 = vmatpush.bf16.msra.mxu0 %v819
    %6579 = vmatpush.bf16.msra.mxu0 %v803
    %6580 = vmatmul.bf16.gmra.mxu0 %v6531
    %v6581 = vpop.f32.mrf.mxu0
    %v6582 = vadd.f32 0.0, %v6581
    %v6583 = vpop.f32.mrf.mxu0
    %6584 = vdwg.mxu0
    %6585 = vmatpush.bf16.msra.mxu0 0
    %6586 = vmatpush.bf16.msra.mxu0 0
    %6587 = vmatpush.bf16.msra.mxu0 0
    %6588 = vmatpush.bf16.msra.mxu0 0
    %6589 = vmatpush.bf16.msra.mxu0 0
    %6590 = vmatpush.bf16.msra.mxu0 0
    %6591 = vmatpush.bf16.msra.mxu0 %v820
    %6592 = vmatpush.bf16.msra.mxu0 %v804
    %6593 = vmatmul.bf16.gmra.mxu0 %v6531
    %v6594 = vpop.f32.mrf.mxu0
    %v6595 = vadd.f32 0.0, %v6594
    %v6596 = vpop.f32.mrf.mxu0
    %6597 = vdwg.mxu0
    %6598 = vmatpush.bf16.msra.mxu0 0
    %6599 = vmatpush.bf16.msra.mxu0 0
    %6600 = vmatpush.bf16.msra.mxu0 0
    %6601 = vmatpush.bf16.msra.mxu0 0
    %6602 = vmatpush.bf16.msra.mxu0 0
    %6603 = vmatpush.bf16.msra.mxu0 0
    %6604 = vmatpush.bf16.msra.mxu0 %v821
    %6605 = vmatpush.bf16.msra.mxu0 %v805
    %6606 = vmatmul.bf16.gmra.mxu0 %v6531
    %v6607 = vpop.f32.mrf.mxu0
    %v6608 = vadd.f32 0.0, %v6607
    %v6609 = vpop.f32.mrf.mxu0
    %6610 = vdwg.mxu0
    %6611 = vmatpush.bf16.msra.mxu0 0
    %6612 = vmatpush.bf16.msra.mxu0 0
    %6613 = vmatpush.bf16.msra.mxu0 0
    %6614 = vmatpush.bf16.msra.mxu0 0
    %6615 = vmatpush.bf16.msra.mxu0 0
    %6616 = vmatpush.bf16.msra.mxu0 0
    %6617 = vmatpush.bf16.msra.mxu0 %v822
    %6618 = vmatpush.bf16.msra.mxu0 %v806
    %6619 = vmatmul.bf16.gmra.mxu0 %v6531
    %v6620 = vpop.f32.mrf.mxu0
    %v6621 = vadd.f32 0.0, %v6620
    %v6622 = vpop.f32.mrf.mxu0
    %6623 = vdwg.mxu0
    %6624 = vmatpush.bf16.msra.mxu0 0
    %6625 = vmatpush.bf16.msra.mxu0 0
    %6626 = vmatpush.bf16.msra.mxu0 0
    %6627 = vmatpush.bf16.msra.mxu0 0
    %6628 = vmatpush.bf16.msra.mxu0 0
    %6629 = vmatpush.bf16.msra.mxu0 0
    %6630 = vmatpush.bf16.msra.mxu0 %v823
    %6631 = vmatpush.bf16.msra.mxu0 %v807
    %6632 = vmatmul.bf16.gmra.mxu0 %v6531
    %v6633 = vpop.f32.mrf.mxu0
    %v6634 = vadd.f32 0.0, %v6633
    %v6635 = vpop.f32.mrf.mxu0
    %6636 = vdwg.mxu0
    %6637 = vmatpush.bf16.msra.mxu0 0
    %6638 = vmatpush.bf16.msra.mxu0 0
    %6639 = vmatpush.bf16.msra.mxu0 0
    %6640 = vmatpush.bf16.msra.mxu0 0
    %6641 = vmatpush.bf16.msra.mxu0 0
    %6642 = vmatpush.bf16.msra.mxu0 0
    %6643 = vmatpush.bf16.msra.mxu0 %v824
    %6644 = vmatpush.bf16.msra.mxu0 %v808
    %6645 = vmatmul.bf16.gmra.mxu0 %v6531
    %v6646 = vpop.f32.mrf.mxu0
    %v6647 = vadd.f32 0.0, %v6646
    %v6648 = vpop.f32.mrf.mxu0
    %6649 = vdwg.mxu0
    %6650 = vmatpush.bf16.msra.mxu0 0
    %6651 = vmatpush.bf16.msra.mxu0 0
    %6652 = vmatpush.bf16.msra.mxu0 0
    %6653 = vmatpush.bf16.msra.mxu0 0
    %6654 = vmatpush.bf16.msra.mxu0 0
    %6655 = vmatpush.bf16.msra.mxu0 0
    %6656 = vmatpush.bf16.msra.mxu0 %v825
    %6657 = vmatpush.bf16.msra.mxu0 %v809
    %6658 = vmatmul.bf16.gmra.mxu0 %v6531
    %v6659 = vpop.f32.mrf.mxu0
    %v6660 = vadd.f32 0.0, %v6659
    %v6661 = vpop.f32.mrf.mxu0
    %6662 = vdwg.mxu0
    %6663 = vmatpush.bf16.msra.mxu0 0
    %6664 = vmatpush.bf16.msra.mxu0 0
    %6665 = vmatpush.bf16.msra.mxu0 0
    %6666 = vmatpush.bf16.msra.mxu0 0
    %6667 = vmatpush.bf16.msra.mxu0 0
    %6668 = vmatpush.bf16.msra.mxu0 0
    %6669 = vmatpush.bf16.msra.mxu0 %v826
    %6670 = vmatpush.bf16.msra.mxu0 %v810
    %6671 = vmatmul.bf16.gmra.mxu0 %v6531
    %v6672 = vpop.f32.mrf.mxu0
    %v6673 = vadd.f32 0.0, %v6672
    %v6674 = vpop.f32.mrf.mxu0
    %6675 = vdwg.mxu0
    %6676 = vmatpush.bf16.msra.mxu0 0
    %6677 = vmatpush.bf16.msra.mxu0 0
    %6678 = vmatpush.bf16.msra.mxu0 0
    %6679 = vmatpush.bf16.msra.mxu0 0
    %6680 = vmatpush.bf16.msra.mxu0 0
    %6681 = vmatpush.bf16.msra.mxu0 0
    %6682 = vmatpush.bf16.msra.mxu0 %v827
    %6683 = vmatpush.bf16.msra.mxu0 %v811
    %6684 = vmatmul.bf16.gmra.mxu0 %v6531
    %v6685 = vpop.f32.mrf.mxu0
    %v6686 = vadd.f32 0.0, %v6685
    %v6687 = vpop.f32.mrf.mxu0
    %6688 = vdwg.mxu0
    %6689 = vmatpush.bf16.msra.mxu0 0
    %6690 = vmatpush.bf16.msra.mxu0 0
    %6691 = vmatpush.bf16.msra.mxu0 0
    %6692 = vmatpush.bf16.msra.mxu0 0
    %6693 = vmatpush.bf16.msra.mxu0 0
    %6694 = vmatpush.bf16.msra.mxu0 0
    %6695 = vmatpush.bf16.msra.mxu0 %v828
    %6696 = vmatpush.bf16.msra.mxu0 %v812
    %6697 = vmatmul.bf16.gmra.mxu0 %v6531
    %v6698 = vpop.f32.mrf.mxu0
    %v6699 = vadd.f32 0.0, %v6698
    %v6700 = vpop.f32.mrf.mxu0
    %6701 = vdwg.mxu0
    %6702 = vmatpush.bf16.msra.mxu0 0
    %6703 = vmatpush.bf16.msra.mxu0 0
    %6704 = vmatpush.bf16.msra.mxu0 0
    %6705 = vmatpush.bf16.msra.mxu0 0
    %6706 = vmatpush.bf16.msra.mxu0 0
    %6707 = vmatpush.bf16.msra.mxu0 0
    %6708 = vmatpush.bf16.msra.mxu0 %v829
    %6709 = vmatpush.bf16.msra.mxu0 %v813
    %6710 = vmatmul.bf16.gmra.mxu0 %v6531
    %v6711 = vpop.f32.mrf.mxu0
    %v6712 = vadd.f32 0.0, %v6711
    %v6713 = vpop.f32.mrf.mxu0
    %6714 = vdwg.mxu0
    %6715 = vmatpush.bf16.msra.mxu0 0
    %6716 = vmatpush.bf16.msra.mxu0 0
    %6717 = vmatpush.bf16.msra.mxu0 0
    %6718 = vmatpush.bf16.msra.mxu0 0
    %6719 = vmatpush.bf16.msra.mxu0 0
    %6720 = vmatpush.bf16.msra.mxu0 0
    %6721 = vmatpush.bf16.msra.mxu0 %v830
    %6722 = vmatpush.bf16.msra.mxu0 %v814
    %6723 = vmatmul.bf16.gmra.mxu0 %v6531
    %v6724 = vpop.f32.mrf.mxu0
    %v6725 = vadd.f32 0.0, %v6724
    %v6726 = vpop.f32.mrf.mxu0
    %6727 = vdwg.mxu0
    %6728 = vmatpush.bf16.msra.mxu0 0
    %6729 = vmatpush.bf16.msra.mxu0 0
    %6730 = vmatpush.bf16.msra.mxu0 0
    %6731 = vmatpush.bf16.msra.mxu0 0
    %6732 = vmatpush.bf16.msra.mxu0 0
    %6733 = vmatpush.bf16.msra.mxu0 0
    %6734 = vmatpush.bf16.msra.mxu0 %v831
    %6735 = vmatpush.bf16.msra.mxu0 %v815
    %6736 = vmatmul.bf16.gmra.mxu0 %v6531
    %v6737 = vpop.f32.mrf.mxu0
    %v6738 = vadd.f32 0.0, %v6737
    %v6739 = vpop.f32.mrf.mxu0
    %6740 = vdwg.mxu0
    %v6757 = vrot.slane %v6556, 4
    %v6758 = vrot.slane %v6582, 4
    %v6759 = vrot.slane %v6608, 4
    %v6760 = vrot.slane %v6634, 4
    %v6761 = vrot.slane %v6660, 4
    %v6762 = vrot.slane %v6686, 4
    %v6763 = vrot.slane %v6712, 4
    %v6764 = vrot.slane %v6738, 4
    %vm6765 = vcmask 1043456
    %v6766 = vsel %vm6765, %v6543, %v6757
    %v6767 = vsel %vm6765, %v6569, %v6758
    %v6768 = vsel %vm6765, %v6595, %v6759
    %v6769 = vsel %vm6765, %v6621, %v6760
    %v6770 = vsel %vm6765, %v6647, %v6761
    %v6771 = vsel %vm6765, %v6673, %v6762
    %v6772 = vsel %vm6765, %v6699, %v6763
    %v6773 = vsel %vm6765, %v6725, %v6764
    %v6774 = vsel %vm6765, %v6757, %v6543
    %v6775 = vrot.slane %v6774, 4
    %v6776 = vsel %vm6765, %v6758, %v6569
    %v6777 = vrot.slane %v6776, 4
    %v6778 = vsel %vm6765, %v6759, %v6595
    %v6779 = vrot.slane %v6778, 4
    %v6780 = vsel %vm6765, %v6760, %v6621
    %v6781 = vrot.slane %v6780, 4
    %v6782 = vsel %vm6765, %v6761, %v6647
    %v6783 = vrot.slane %v6782, 4
    %v6784 = vsel %vm6765, %v6762, %v6673
    %v6785 = vrot.slane %v6784, 4
    %v6786 = vsel %vm6765, %v6763, %v6699
    %v6787 = vrot.slane %v6786, 4
    %v6788 = vsel %vm6765, %v6764, %v6725
    %v6789 = vrot.slane %v6788, 4
    %v6806 = vpack.c.bf16 %v6521, %v6521
    %v6807 = vpack.c.bf16 %v6522, %v6522
    %v6808 = vpack.c.bf16 %v6523, %v6523
    %v6809 = vpack.c.bf16 %v6524, %v6524
    %6810 = vmatpush.bf16.msra.mxu0 %v3194
    %6811 = vmatpush.bf16.msra.mxu0 %v3178
    %6812 = vmatpush.bf16.msra.mxu0 %v3162
    %6813 = vmatpush.bf16.msra.mxu0 %v3146
    %6814 = vmatpush.bf16.msra.mxu0 %v3130
    %6815 = vmatpush.bf16.msra.mxu0 %v3114
    %6816 = vmatpush.bf16.msra.mxu0 %v3098
    %6817 = vmatpush.bf16.msra.mxu0 %v3082
    %6818 = vmatmul.bf16.gmra.mxu0 %v6806
    %v6819 = vpop.f32.mrf.mxu0
    %v6820 = vadd.f32 0.0, %v6819
    %v6821 = vpop.f32.mrf.mxu0
    %6822 = vdwg.mxu0
    %6823 = vmatpush.bf16.msra.mxu0 %v3322
    %6824 = vmatpush.bf16.msra.mxu0 %v3306
    %6825 = vmatpush.bf16.msra.mxu0 %v3290
    %6826 = vmatpush.bf16.msra.mxu0 %v3274
    %6827 = vmatpush.bf16.msra.mxu0 %v3258
    %6828 = vmatpush.bf16.msra.mxu0 %v3242
    %6829 = vmatpush.bf16.msra.mxu0 %v3226
    %6830 = vmatpush.bf16.msra.mxu0 %v3210
    %6831 = vmatmul.bf16.gmra.mxu0 %v6807
    %v6832 = vpop.f32.mrf.mxu0
    %v6833 = vadd.f32 %v6820, %v6832
    %v6834 = vpop.f32.mrf.mxu0
    %6835 = vdwg.mxu0
    %6836 = vmatpush.bf16.msra.mxu0 %v3450
    %6837 = vmatpush.bf16.msra.mxu0 %v3434
    %6838 = vmatpush.bf16.msra.mxu0 %v3418
    %6839 = vmatpush.bf16.msra.mxu0 %v3402
    %6840 = vmatpush.bf16.msra.mxu0 %v3386
    %6841 = vmatpush.bf16.msra.mxu0 %v3370
    %6842 = vmatpush.bf16.msra.mxu0 %v3354
    %6843 = vmatpush.bf16.msra.mxu0 %v3338
    %6844 = vmatmul.bf16.gmra.mxu0 %v6808
    %v6845 = vpop.f32.mrf.mxu0
    %v6846 = vadd.f32 %v6833, %v6845
    %v6847 = vpop.f32.mrf.mxu0
    %6848 = vdwg.mxu0
    %6849 = vmatpush.bf16.msra.mxu0 %v3578
    %6850 = vmatpush.bf16.msra.mxu0 %v3562
    %6851 = vmatpush.bf16.msra.mxu0 %v3546
    %6852 = vmatpush.bf16.msra.mxu0 %v3530
    %6853 = vmatpush.bf16.msra.mxu0 %v3514
    %6854 = vmatpush.bf16.msra.mxu0 %v3498
    %6855 = vmatpush.bf16.msra.mxu0 %v3482
    %6856 = vmatpush.bf16.msra.mxu0 %v3466
    %6857 = vmatmul.bf16.gmra.mxu0 %v6809
    %v6858 = vpop.f32.mrf.mxu0
    %v6859 = vadd.f32 %v6846, %v6858
    %v6860 = vpop.f32.mrf.mxu0
    %6861 = vdwg.mxu0
    %6862 = vmatpush.bf16.msra.mxu0 %v3195
    %6863 = vmatpush.bf16.msra.mxu0 %v3179
    %6864 = vmatpush.bf16.msra.mxu0 %v3163
    %6865 = vmatpush.bf16.msra.mxu0 %v3147
    %6866 = vmatpush.bf16.msra.mxu0 %v3131
    %6867 = vmatpush.bf16.msra.mxu0 %v3115
    %6868 = vmatpush.bf16.msra.mxu0 %v3099
    %6869 = vmatpush.bf16.msra.mxu0 %v3083
    %6870 = vmatmul.bf16.gmra.mxu0 %v6806
    %v6871 = vpop.f32.mrf.mxu0
    %v6872 = vadd.f32 0.0, %v6871
    %v6873 = vpop.f32.mrf.mxu0
    %6874 = vdwg.mxu0
    %6875 = vmatpush.bf16.msra.mxu0 %v3323
    %6876 = vmatpush.bf16.msra.mxu0 %v3307
    %6877 = vmatpush.bf16.msra.mxu0 %v3291
    %6878 = vmatpush.bf16.msra.mxu0 %v3275
    %6879 = vmatpush.bf16.msra.mxu0 %v3259
    %6880 = vmatpush.bf16.msra.mxu0 %v3243
    %6881 = vmatpush.bf16.msra.mxu0 %v3227
    %6882 = vmatpush.bf16.msra.mxu0 %v3211
    %6883 = vmatmul.bf16.gmra.mxu0 %v6807
    %v6884 = vpop.f32.mrf.mxu0
    %v6885 = vadd.f32 %v6872, %v6884
    %v6886 = vpop.f32.mrf.mxu0
    %6887 = vdwg.mxu0
    %6888 = vmatpush.bf16.msra.mxu0 %v3451
    %6889 = vmatpush.bf16.msra.mxu0 %v3435
    %6890 = vmatpush.bf16.msra.mxu0 %v3419
    %6891 = vmatpush.bf16.msra.mxu0 %v3403
    %6892 = vmatpush.bf16.msra.mxu0 %v3387
    %6893 = vmatpush.bf16.msra.mxu0 %v3371
    %6894 = vmatpush.bf16.msra.mxu0 %v3355
    %6895 = vmatpush.bf16.msra.mxu0 %v3339
    %6896 = vmatmul.bf16.gmra.mxu0 %v6808
    %v6897 = vpop.f32.mrf.mxu0
    %v6898 = vadd.f32 %v6885, %v6897
    %v6899 = vpop.f32.mrf.mxu0
    %6900 = vdwg.mxu0
    %6901 = vmatpush.bf16.msra.mxu0 %v3579
    %6902 = vmatpush.bf16.msra.mxu0 %v3563
    %6903 = vmatpush.bf16.msra.mxu0 %v3547
    %6904 = vmatpush.bf16.msra.mxu0 %v3531
    %6905 = vmatpush.bf16.msra.mxu0 %v3515
    %6906 = vmatpush.bf16.msra.mxu0 %v3499
    %6907 = vmatpush.bf16.msra.mxu0 %v3483
    %6908 = vmatpush.bf16.msra.mxu0 %v3467
    %6909 = vmatmul.bf16.gmra.mxu0 %v6809
    %v6910 = vpop.f32.mrf.mxu0
    %v6911 = vadd.f32 %v6898, %v6910
    %v6912 = vpop.f32.mrf.mxu0
    %6913 = vdwg.mxu0
    %6914 = vmatpush.bf16.msra.mxu0 %v3196
    %6915 = vmatpush.bf16.msra.mxu0 %v3180
    %6916 = vmatpush.bf16.msra.mxu0 %v3164
    %6917 = vmatpush.bf16.msra.mxu0 %v3148
    %6918 = vmatpush.bf16.msra.mxu0 %v3132
    %6919 = vmatpush.bf16.msra.mxu0 %v3116
    %6920 = vmatpush.bf16.msra.mxu0 %v3100
    %6921 = vmatpush.bf16.msra.mxu0 %v3084
    %6922 = vmatmul.bf16.gmra.mxu0 %v6806
    %v6923 = vpop.f32.mrf.mxu0
    %v6924 = vadd.f32 0.0, %v6923
    %v6925 = vpop.f32.mrf.mxu0
    %6926 = vdwg.mxu0
    %6927 = vmatpush.bf16.msra.mxu0 %v3324
    %6928 = vmatpush.bf16.msra.mxu0 %v3308
    %6929 = vmatpush.bf16.msra.mxu0 %v3292
    %6930 = vmatpush.bf16.msra.mxu0 %v3276
    %6931 = vmatpush.bf16.msra.mxu0 %v3260
    %6932 = vmatpush.bf16.msra.mxu0 %v3244
    %6933 = vmatpush.bf16.msra.mxu0 %v3228
    %6934 = vmatpush.bf16.msra.mxu0 %v3212
    %6935 = vmatmul.bf16.gmra.mxu0 %v6807
    %v6936 = vpop.f32.mrf.mxu0
    %v6937 = vadd.f32 %v6924, %v6936
    %v6938 = vpop.f32.mrf.mxu0
    %6939 = vdwg.mxu0
    %6940 = vmatpush.bf16.msra.mxu0 %v3452
    %6941 = vmatpush.bf16.msra.mxu0 %v3436
    %6942 = vmatpush.bf16.msra.mxu0 %v3420
    %6943 = vmatpush.bf16.msra.mxu0 %v3404
    %6944 = vmatpush.bf16.msra.mxu0 %v3388
    %6945 = vmatpush.bf16.msra.mxu0 %v3372
    %6946 = vmatpush.bf16.msra.mxu0 %v3356
    %6947 = vmatpush.bf16.msra.mxu0 %v3340
    %6948 = vmatmul.bf16.gmra.mxu0 %v6808
    %v6949 = vpop.f32.mrf.mxu0
    %v6950 = vadd.f32 %v6937, %v6949
    %v6951 = vpop.f32.mrf.mxu0
    %6952 = vdwg.mxu0
    %6953 = vmatpush.bf16.msra.mxu0 %v3580
    %6954 = vmatpush.bf16.msra.mxu0 %v3564
    %6955 = vmatpush.bf16.msra.mxu0 %v3548
    %6956 = vmatpush.bf16.msra.mxu0 %v3532
    %6957 = vmatpush.bf16.msra.mxu0 %v3516
    %6958 = vmatpush.bf16.msra.mxu0 %v3500
    %6959 = vmatpush.bf16.msra.mxu0 %v3484
    %6960 = vmatpush.bf16.msra.mxu0 %v3468
    %6961 = vmatmul.bf16.gmra.mxu0 %v6809
    %v6962 = vpop.f32.mrf.mxu0
    %v6963 = vadd.f32 %v6950, %v6962
    %v6964 = vpop.f32.mrf.mxu0
    %6965 = vdwg.mxu0
    %6966 = vmatpush.bf16.msra.mxu0 %v3197
    %6967 = vmatpush.bf16.msra.mxu0 %v3181
    %6968 = vmatpush.bf16.msra.mxu0 %v3165
    %6969 = vmatpush.bf16.msra.mxu0 %v3149
    %6970 = vmatpush.bf16.msra.mxu0 %v3133
    %6971 = vmatpush.bf16.msra.mxu0 %v3117
    %6972 = vmatpush.bf16.msra.mxu0 %v3101
    %6973 = vmatpush.bf16.msra.mxu0 %v3085
    %6974 = vmatmul.bf16.gmra.mxu0 %v6806
    %v6975 = vpop.f32.mrf.mxu0
    %v6976 = vadd.f32 0.0, %v6975
    %v6977 = vpop.f32.mrf.mxu0
    %6978 = vdwg.mxu0
    %6979 = vmatpush.bf16.msra.mxu0 %v3325
    %6980 = vmatpush.bf16.msra.mxu0 %v3309
    %6981 = vmatpush.bf16.msra.mxu0 %v3293
    %6982 = vmatpush.bf16.msra.mxu0 %v3277
    %6983 = vmatpush.bf16.msra.mxu0 %v3261
    %6984 = vmatpush.bf16.msra.mxu0 %v3245
    %6985 = vmatpush.bf16.msra.mxu0 %v3229
    %6986 = vmatpush.bf16.msra.mxu0 %v3213
    %6987 = vmatmul.bf16.gmra.mxu0 %v6807
    %v6988 = vpop.f32.mrf.mxu0
    %v6989 = vadd.f32 %v6976, %v6988
    %v6990 = vpop.f32.mrf.mxu0
    %6991 = vdwg.mxu0
    %6992 = vmatpush.bf16.msra.mxu0 %v3453
    %6993 = vmatpush.bf16.msra.mxu0 %v3437
    %6994 = vmatpush.bf16.msra.mxu0 %v3421
    %6995 = vmatpush.bf16.msra.mxu0 %v3405
    %6996 = vmatpush.bf16.msra.mxu0 %v3389
    %6997 = vmatpush.bf16.msra.mxu0 %v3373
    %6998 = vmatpush.bf16.msra.mxu0 %v3357
    %6999 = vmatpush.bf16.msra.mxu0 %v3341
    %7000 = vmatmul.bf16.gmra.mxu0 %v6808
    %v7001 = vpop.f32.mrf.mxu0
    %v7002 = vadd.f32 %v6989, %v7001
    %v7003 = vpop.f32.mrf.mxu0
    %7004 = vdwg.mxu0
    %7005 = vmatpush.bf16.msra.mxu0 %v3581
    %7006 = vmatpush.bf16.msra.mxu0 %v3565
    %7007 = vmatpush.bf16.msra.mxu0 %v3549
    %7008 = vmatpush.bf16.msra.mxu0 %v3533
    %7009 = vmatpush.bf16.msra.mxu0 %v3517
    %7010 = vmatpush.bf16.msra.mxu0 %v3501
    %7011 = vmatpush.bf16.msra.mxu0 %v3485
    %7012 = vmatpush.bf16.msra.mxu0 %v3469
    %7013 = vmatmul.bf16.gmra.mxu0 %v6809
    %v7014 = vpop.f32.mrf.mxu0
    %v7015 = vadd.f32 %v7002, %v7014
    %v7016 = vpop.f32.mrf.mxu0
    %7017 = vdwg.mxu0
    %7018 = vmatpush.bf16.msra.mxu0 %v3198
    %7019 = vmatpush.bf16.msra.mxu0 %v3182
    %7020 = vmatpush.bf16.msra.mxu0 %v3166
    %7021 = vmatpush.bf16.msra.mxu0 %v3150
    %7022 = vmatpush.bf16.msra.mxu0 %v3134
    %7023 = vmatpush.bf16.msra.mxu0 %v3118
    %7024 = vmatpush.bf16.msra.mxu0 %v3102
    %7025 = vmatpush.bf16.msra.mxu0 %v3086
    %7026 = vmatmul.bf16.gmra.mxu0 %v6806
    %v7027 = vpop.f32.mrf.mxu0
    %v7028 = vadd.f32 0.0, %v7027
    %v7029 = vpop.f32.mrf.mxu0
    %7030 = vdwg.mxu0
    %7031 = vmatpush.bf16.msra.mxu0 %v3326
    %7032 = vmatpush.bf16.msra.mxu0 %v3310
    %7033 = vmatpush.bf16.msra.mxu0 %v3294
    %7034 = vmatpush.bf16.msra.mxu0 %v3278
    %7035 = vmatpush.bf16.msra.mxu0 %v3262
    %7036 = vmatpush.bf16.msra.mxu0 %v3246
    %7037 = vmatpush.bf16.msra.mxu0 %v3230
    %7038 = vmatpush.bf16.msra.mxu0 %v3214
    %7039 = vmatmul.bf16.gmra.mxu0 %v6807
    %v7040 = vpop.f32.mrf.mxu0
    %v7041 = vadd.f32 %v7028, %v7040
    %v7042 = vpop.f32.mrf.mxu0
    %7043 = vdwg.mxu0
    %7044 = vmatpush.bf16.msra.mxu0 %v3454
    %7045 = vmatpush.bf16.msra.mxu0 %v3438
    %7046 = vmatpush.bf16.msra.mxu0 %v3422
    %7047 = vmatpush.bf16.msra.mxu0 %v3406
    %7048 = vmatpush.bf16.msra.mxu0 %v3390
    %7049 = vmatpush.bf16.msra.mxu0 %v3374
    %7050 = vmatpush.bf16.msra.mxu0 %v3358
    %7051 = vmatpush.bf16.msra.mxu0 %v3342
    %7052 = vmatmul.bf16.gmra.mxu0 %v6808
    %v7053 = vpop.f32.mrf.mxu0
    %v7054 = vadd.f32 %v7041, %v7053
    %v7055 = vpop.f32.mrf.mxu0
    %7056 = vdwg.mxu0
    %7057 = vmatpush.bf16.msra.mxu0 %v3582
    %7058 = vmatpush.bf16.msra.mxu0 %v3566
    %7059 = vmatpush.bf16.msra.mxu0 %v3550
    %7060 = vmatpush.bf16.msra.mxu0 %v3534
    %7061 = vmatpush.bf16.msra.mxu0 %v3518
    %7062 = vmatpush.bf16.msra.mxu0 %v3502
    %7063 = vmatpush.bf16.msra.mxu0 %v3486
    %7064 = vmatpush.bf16.msra.mxu0 %v3470
    %7065 = vmatmul.bf16.gmra.mxu0 %v6809
    %v7066 = vpop.f32.mrf.mxu0
    %v7067 = vadd.f32 %v7054, %v7066
    %v7068 = vpop.f32.mrf.mxu0
    %7069 = vdwg.mxu0
    %7070 = vmatpush.bf16.msra.mxu0 %v3199
    %7071 = vmatpush.bf16.msra.mxu0 %v3183
    %7072 = vmatpush.bf16.msra.mxu0 %v3167
    %7073 = vmatpush.bf16.msra.mxu0 %v3151
    %7074 = vmatpush.bf16.msra.mxu0 %v3135
    %7075 = vmatpush.bf16.msra.mxu0 %v3119
    %7076 = vmatpush.bf16.msra.mxu0 %v3103
    %7077 = vmatpush.bf16.msra.mxu0 %v3087
    %7078 = vmatmul.bf16.gmra.mxu0 %v6806
    %v7079 = vpop.f32.mrf.mxu0
    %v7080 = vadd.f32 0.0, %v7079
    %v7081 = vpop.f32.mrf.mxu0
    %7082 = vdwg.mxu0
    %7083 = vmatpush.bf16.msra.mxu0 %v3327
    %7084 = vmatpush.bf16.msra.mxu0 %v3311
    %7085 = vmatpush.bf16.msra.mxu0 %v3295
    %7086 = vmatpush.bf16.msra.mxu0 %v3279
    %7087 = vmatpush.bf16.msra.mxu0 %v3263
    %7088 = vmatpush.bf16.msra.mxu0 %v3247
    %7089 = vmatpush.bf16.msra.mxu0 %v3231
    %7090 = vmatpush.bf16.msra.mxu0 %v3215
    %7091 = vmatmul.bf16.gmra.mxu0 %v6807
    %v7092 = vpop.f32.mrf.mxu0
    %v7093 = vadd.f32 %v7080, %v7092
    %v7094 = vpop.f32.mrf.mxu0
    %7095 = vdwg.mxu0
    %7096 = vmatpush.bf16.msra.mxu0 %v3455
    %7097 = vmatpush.bf16.msra.mxu0 %v3439
    %7098 = vmatpush.bf16.msra.mxu0 %v3423
    %7099 = vmatpush.bf16.msra.mxu0 %v3407
    %7100 = vmatpush.bf16.msra.mxu0 %v3391
    %7101 = vmatpush.bf16.msra.mxu0 %v3375
    %7102 = vmatpush.bf16.msra.mxu0 %v3359
    %7103 = vmatpush.bf16.msra.mxu0 %v3343
    %7104 = vmatmul.bf16.gmra.mxu0 %v6808
    %v7105 = vpop.f32.mrf.mxu0
    %v7106 = vadd.f32 %v7093, %v7105
    %v7107 = vpop.f32.mrf.mxu0
    %7108 = vdwg.mxu0
    %7109 = vmatpush.bf16.msra.mxu0 %v3583
    %7110 = vmatpush.bf16.msra.mxu0 %v3567
    %7111 = vmatpush.bf16.msra.mxu0 %v3551
    %7112 = vmatpush.bf16.msra.mxu0 %v3535
    %7113 = vmatpush.bf16.msra.mxu0 %v3519
    %7114 = vmatpush.bf16.msra.mxu0 %v3503
    %7115 = vmatpush.bf16.msra.mxu0 %v3487
    %7116 = vmatpush.bf16.msra.mxu0 %v3471
    %7117 = vmatmul.bf16.gmra.mxu0 %v6809
    %v7118 = vpop.f32.mrf.mxu0
    %v7119 = vadd.f32 %v7106, %v7118
    %v7120 = vpop.f32.mrf.mxu0
    %7121 = vdwg.mxu0
    %7122 = vmatpush.bf16.msra.mxu0 %v3200
    %7123 = vmatpush.bf16.msra.mxu0 %v3184
    %7124 = vmatpush.bf16.msra.mxu0 %v3168
    %7125 = vmatpush.bf16.msra.mxu0 %v3152
    %7126 = vmatpush.bf16.msra.mxu0 %v3136
    %7127 = vmatpush.bf16.msra.mxu0 %v3120
    %7128 = vmatpush.bf16.msra.mxu0 %v3104
    %7129 = vmatpush.bf16.msra.mxu0 %v3088
    %7130 = vmatmul.bf16.gmra.mxu0 %v6806
    %v7131 = vpop.f32.mrf.mxu0
    %v7132 = vadd.f32 0.0, %v7131
    %v7133 = vpop.f32.mrf.mxu0
    %7134 = vdwg.mxu0
    %7135 = vmatpush.bf16.msra.mxu0 %v3328
    %7136 = vmatpush.bf16.msra.mxu0 %v3312
    %7137 = vmatpush.bf16.msra.mxu0 %v3296
    %7138 = vmatpush.bf16.msra.mxu0 %v3280
    %7139 = vmatpush.bf16.msra.mxu0 %v3264
    %7140 = vmatpush.bf16.msra.mxu0 %v3248
    %7141 = vmatpush.bf16.msra.mxu0 %v3232
    %7142 = vmatpush.bf16.msra.mxu0 %v3216
    %7143 = vmatmul.bf16.gmra.mxu0 %v6807
    %v7144 = vpop.f32.mrf.mxu0
    %v7145 = vadd.f32 %v7132, %v7144
    %v7146 = vpop.f32.mrf.mxu0
    %7147 = vdwg.mxu0
    %7148 = vmatpush.bf16.msra.mxu0 %v3456
    %7149 = vmatpush.bf16.msra.mxu0 %v3440
    %7150 = vmatpush.bf16.msra.mxu0 %v3424
    %7151 = vmatpush.bf16.msra.mxu0 %v3408
    %7152 = vmatpush.bf16.msra.mxu0 %v3392
    %7153 = vmatpush.bf16.msra.mxu0 %v3376
    %7154 = vmatpush.bf16.msra.mxu0 %v3360
    %7155 = vmatpush.bf16.msra.mxu0 %v3344
    %7156 = vmatmul.bf16.gmra.mxu0 %v6808
    %v7157 = vpop.f32.mrf.mxu0
    %v7158 = vadd.f32 %v7145, %v7157
    %v7159 = vpop.f32.mrf.mxu0
    %7160 = vdwg.mxu0
    %7161 = vmatpush.bf16.msra.mxu0 %v3584
    %7162 = vmatpush.bf16.msra.mxu0 %v3568
    %7163 = vmatpush.bf16.msra.mxu0 %v3552
    %7164 = vmatpush.bf16.msra.mxu0 %v3536
    %7165 = vmatpush.bf16.msra.mxu0 %v3520
    %7166 = vmatpush.bf16.msra.mxu0 %v3504
    %7167 = vmatpush.bf16.msra.mxu0 %v3488
    %7168 = vmatpush.bf16.msra.mxu0 %v3472
    %7169 = vmatmul.bf16.gmra.mxu0 %v6809
    %v7170 = vpop.f32.mrf.mxu0
    %v7171 = vadd.f32 %v7158, %v7170
    %v7172 = vpop.f32.mrf.mxu0
    %7173 = vdwg.mxu0
    %7174 = vmatpush.bf16.msra.mxu0 %v3201
    %7175 = vmatpush.bf16.msra.mxu0 %v3185
    %7176 = vmatpush.bf16.msra.mxu0 %v3169
    %7177 = vmatpush.bf16.msra.mxu0 %v3153
    %7178 = vmatpush.bf16.msra.mxu0 %v3137
    %7179 = vmatpush.bf16.msra.mxu0 %v3121
    %7180 = vmatpush.bf16.msra.mxu0 %v3105
    %7181 = vmatpush.bf16.msra.mxu0 %v3089
    %7182 = vmatmul.bf16.gmra.mxu0 %v6806
    %v7183 = vpop.f32.mrf.mxu0
    %v7184 = vadd.f32 0.0, %v7183
    %v7185 = vpop.f32.mrf.mxu0
    %7186 = vdwg.mxu0
    %7187 = vmatpush.bf16.msra.mxu0 %v3329
    %7188 = vmatpush.bf16.msra.mxu0 %v3313
    %7189 = vmatpush.bf16.msra.mxu0 %v3297
    %7190 = vmatpush.bf16.msra.mxu0 %v3281
    %7191 = vmatpush.bf16.msra.mxu0 %v3265
    %7192 = vmatpush.bf16.msra.mxu0 %v3249
    %7193 = vmatpush.bf16.msra.mxu0 %v3233
    %7194 = vmatpush.bf16.msra.mxu0 %v3217
    %7195 = vmatmul.bf16.gmra.mxu0 %v6807
    %v7196 = vpop.f32.mrf.mxu0
    %v7197 = vadd.f32 %v7184, %v7196
    %v7198 = vpop.f32.mrf.mxu0
    %7199 = vdwg.mxu0
    %7200 = vmatpush.bf16.msra.mxu0 %v3457
    %7201 = vmatpush.bf16.msra.mxu0 %v3441
    %7202 = vmatpush.bf16.msra.mxu0 %v3425
    %7203 = vmatpush.bf16.msra.mxu0 %v3409
    %7204 = vmatpush.bf16.msra.mxu0 %v3393
    %7205 = vmatpush.bf16.msra.mxu0 %v3377
    %7206 = vmatpush.bf16.msra.mxu0 %v3361
    %7207 = vmatpush.bf16.msra.mxu0 %v3345
    %7208 = vmatmul.bf16.gmra.mxu0 %v6808
    %v7209 = vpop.f32.mrf.mxu0
    %v7210 = vadd.f32 %v7197, %v7209
    %v7211 = vpop.f32.mrf.mxu0
    %7212 = vdwg.mxu0
    %7213 = vmatpush.bf16.msra.mxu0 %v3585
    %7214 = vmatpush.bf16.msra.mxu0 %v3569
    %7215 = vmatpush.bf16.msra.mxu0 %v3553
    %7216 = vmatpush.bf16.msra.mxu0 %v3537
    %7217 = vmatpush.bf16.msra.mxu0 %v3521
    %7218 = vmatpush.bf16.msra.mxu0 %v3505
    %7219 = vmatpush.bf16.msra.mxu0 %v3489
    %7220 = vmatpush.bf16.msra.mxu0 %v3473
    %7221 = vmatmul.bf16.gmra.mxu0 %v6809
    %v7222 = vpop.f32.mrf.mxu0
    %v7223 = vadd.f32 %v7210, %v7222
    %v7224 = vpop.f32.mrf.mxu0
    %7225 = vdwg.mxu0
    %7226 = vmatpush.bf16.msra.mxu0 %v3202
    %7227 = vmatpush.bf16.msra.mxu0 %v3186
    %7228 = vmatpush.bf16.msra.mxu0 %v3170
    %7229 = vmatpush.bf16.msra.mxu0 %v3154
    %7230 = vmatpush.bf16.msra.mxu0 %v3138
    %7231 = vmatpush.bf16.msra.mxu0 %v3122
    %7232 = vmatpush.bf16.msra.mxu0 %v3106
    %7233 = vmatpush.bf16.msra.mxu0 %v3090
    %7234 = vmatmul.bf16.gmra.mxu0 %v6806
    %v7235 = vpop.f32.mrf.mxu0
    %v7236 = vadd.f32 0.0, %v7235
    %v7237 = vpop.f32.mrf.mxu0
    %7238 = vdwg.mxu0
    %7239 = vmatpush.bf16.msra.mxu0 %v3330
    %7240 = vmatpush.bf16.msra.mxu0 %v3314
    %7241 = vmatpush.bf16.msra.mxu0 %v3298
    %7242 = vmatpush.bf16.msra.mxu0 %v3282
    %7243 = vmatpush.bf16.msra.mxu0 %v3266
    %7244 = vmatpush.bf16.msra.mxu0 %v3250
    %7245 = vmatpush.bf16.msra.mxu0 %v3234
    %7246 = vmatpush.bf16.msra.mxu0 %v3218
    %7247 = vmatmul.bf16.gmra.mxu0 %v6807
    %v7248 = vpop.f32.mrf.mxu0
    %v7249 = vadd.f32 %v7236, %v7248
    %v7250 = vpop.f32.mrf.mxu0
    %7251 = vdwg.mxu0
    %7252 = vmatpush.bf16.msra.mxu0 %v3458
    %7253 = vmatpush.bf16.msra.mxu0 %v3442
    %7254 = vmatpush.bf16.msra.mxu0 %v3426
    %7255 = vmatpush.bf16.msra.mxu0 %v3410
    %7256 = vmatpush.bf16.msra.mxu0 %v3394
    %7257 = vmatpush.bf16.msra.mxu0 %v3378
    %7258 = vmatpush.bf16.msra.mxu0 %v3362
    %7259 = vmatpush.bf16.msra.mxu0 %v3346
    %7260 = vmatmul.bf16.gmra.mxu0 %v6808
    %v7261 = vpop.f32.mrf.mxu0
    %v7262 = vadd.f32 %v7249, %v7261
    %v7263 = vpop.f32.mrf.mxu0
    %7264 = vdwg.mxu0
    %7265 = vmatpush.bf16.msra.mxu0 %v3586
    %7266 = vmatpush.bf16.msra.mxu0 %v3570
    %7267 = vmatpush.bf16.msra.mxu0 %v3554
    %7268 = vmatpush.bf16.msra.mxu0 %v3538
    %7269 = vmatpush.bf16.msra.mxu0 %v3522
    %7270 = vmatpush.bf16.msra.mxu0 %v3506
    %7271 = vmatpush.bf16.msra.mxu0 %v3490
    %7272 = vmatpush.bf16.msra.mxu0 %v3474
    %7273 = vmatmul.bf16.gmra.mxu0 %v6809
    %v7274 = vpop.f32.mrf.mxu0
    %v7275 = vadd.f32 %v7262, %v7274
    %v7276 = vpop.f32.mrf.mxu0
    %7277 = vdwg.mxu0
    %7278 = vmatpush.bf16.msra.mxu0 %v3203
    %7279 = vmatpush.bf16.msra.mxu0 %v3187
    %7280 = vmatpush.bf16.msra.mxu0 %v3171
    %7281 = vmatpush.bf16.msra.mxu0 %v3155
    %7282 = vmatpush.bf16.msra.mxu0 %v3139
    %7283 = vmatpush.bf16.msra.mxu0 %v3123
    %7284 = vmatpush.bf16.msra.mxu0 %v3107
    %7285 = vmatpush.bf16.msra.mxu0 %v3091
    %7286 = vmatmul.bf16.gmra.mxu0 %v6806
    %v7287 = vpop.f32.mrf.mxu0
    %v7288 = vadd.f32 0.0, %v7287
    %v7289 = vpop.f32.mrf.mxu0
    %7290 = vdwg.mxu0
    %7291 = vmatpush.bf16.msra.mxu0 %v3331
    %7292 = vmatpush.bf16.msra.mxu0 %v3315
    %7293 = vmatpush.bf16.msra.mxu0 %v3299
    %7294 = vmatpush.bf16.msra.mxu0 %v3283
    %7295 = vmatpush.bf16.msra.mxu0 %v3267
    %7296 = vmatpush.bf16.msra.mxu0 %v3251
    %7297 = vmatpush.bf16.msra.mxu0 %v3235
    %7298 = vmatpush.bf16.msra.mxu0 %v3219
    %7299 = vmatmul.bf16.gmra.mxu0 %v6807
    %v7300 = vpop.f32.mrf.mxu0
    %v7301 = vadd.f32 %v7288, %v7300
    %v7302 = vpop.f32.mrf.mxu0
    %7303 = vdwg.mxu0
    %7304 = vmatpush.bf16.msra.mxu0 %v3459
    %7305 = vmatpush.bf16.msra.mxu0 %v3443
    %7306 = vmatpush.bf16.msra.mxu0 %v3427
    %7307 = vmatpush.bf16.msra.mxu0 %v3411
    %7308 = vmatpush.bf16.msra.mxu0 %v3395
    %7309 = vmatpush.bf16.msra.mxu0 %v3379
    %7310 = vmatpush.bf16.msra.mxu0 %v3363
    %7311 = vmatpush.bf16.msra.mxu0 %v3347
    %7312 = vmatmul.bf16.gmra.mxu0 %v6808
    %v7313 = vpop.f32.mrf.mxu0
    %v7314 = vadd.f32 %v7301, %v7313
    %v7315 = vpop.f32.mrf.mxu0
    %7316 = vdwg.mxu0
    %7317 = vmatpush.bf16.msra.mxu0 %v3587
    %7318 = vmatpush.bf16.msra.mxu0 %v3571
    %7319 = vmatpush.bf16.msra.mxu0 %v3555
    %7320 = vmatpush.bf16.msra.mxu0 %v3539
    %7321 = vmatpush.bf16.msra.mxu0 %v3523
    %7322 = vmatpush.bf16.msra.mxu0 %v3507
    %7323 = vmatpush.bf16.msra.mxu0 %v3491
    %7324 = vmatpush.bf16.msra.mxu0 %v3475
    %7325 = vmatmul.bf16.gmra.mxu0 %v6809
    %v7326 = vpop.f32.mrf.mxu0
    %v7327 = vadd.f32 %v7314, %v7326
    %v7328 = vpop.f32.mrf.mxu0
    %7329 = vdwg.mxu0
    %7330 = vmatpush.bf16.msra.mxu0 %v3204
    %7331 = vmatpush.bf16.msra.mxu0 %v3188
    %7332 = vmatpush.bf16.msra.mxu0 %v3172
    %7333 = vmatpush.bf16.msra.mxu0 %v3156
    %7334 = vmatpush.bf16.msra.mxu0 %v3140
    %7335 = vmatpush.bf16.msra.mxu0 %v3124
    %7336 = vmatpush.bf16.msra.mxu0 %v3108
    %7337 = vmatpush.bf16.msra.mxu0 %v3092
    %7338 = vmatmul.bf16.gmra.mxu0 %v6806
    %v7339 = vpop.f32.mrf.mxu0
    %v7340 = vadd.f32 0.0, %v7339
    %v7341 = vpop.f32.mrf.mxu0
    %7342 = vdwg.mxu0
    %7343 = vmatpush.bf16.msra.mxu0 %v3332
    %7344 = vmatpush.bf16.msra.mxu0 %v3316
    %7345 = vmatpush.bf16.msra.mxu0 %v3300
    %7346 = vmatpush.bf16.msra.mxu0 %v3284
    %7347 = vmatpush.bf16.msra.mxu0 %v3268
    %7348 = vmatpush.bf16.msra.mxu0 %v3252
    %7349 = vmatpush.bf16.msra.mxu0 %v3236
    %7350 = vmatpush.bf16.msra.mxu0 %v3220
    %7351 = vmatmul.bf16.gmra.mxu0 %v6807
    %v7352 = vpop.f32.mrf.mxu0
    %v7353 = vadd.f32 %v7340, %v7352
    %v7354 = vpop.f32.mrf.mxu0
    %7355 = vdwg.mxu0
    %7356 = vmatpush.bf16.msra.mxu0 %v3460
    %7357 = vmatpush.bf16.msra.mxu0 %v3444
    %7358 = vmatpush.bf16.msra.mxu0 %v3428
    %7359 = vmatpush.bf16.msra.mxu0 %v3412
    %7360 = vmatpush.bf16.msra.mxu0 %v3396
    %7361 = vmatpush.bf16.msra.mxu0 %v3380
    %7362 = vmatpush.bf16.msra.mxu0 %v3364
    %7363 = vmatpush.bf16.msra.mxu0 %v3348
    %7364 = vmatmul.bf16.gmra.mxu0 %v6808
    %v7365 = vpop.f32.mrf.mxu0
    %v7366 = vadd.f32 %v7353, %v7365
    %v7367 = vpop.f32.mrf.mxu0
    %7368 = vdwg.mxu0
    %7369 = vmatpush.bf16.msra.mxu0 %v3588
    %7370 = vmatpush.bf16.msra.mxu0 %v3572
    %7371 = vmatpush.bf16.msra.mxu0 %v3556
    %7372 = vmatpush.bf16.msra.mxu0 %v3540
    %7373 = vmatpush.bf16.msra.mxu0 %v3524
    %7374 = vmatpush.bf16.msra.mxu0 %v3508
    %7375 = vmatpush.bf16.msra.mxu0 %v3492
    %7376 = vmatpush.bf16.msra.mxu0 %v3476
    %7377 = vmatmul.bf16.gmra.mxu0 %v6809
    %v7378 = vpop.f32.mrf.mxu0
    %v7379 = vadd.f32 %v7366, %v7378
    %v7380 = vpop.f32.mrf.mxu0
    %7381 = vdwg.mxu0
    %7382 = vmatpush.bf16.msra.mxu0 %v3205
    %7383 = vmatpush.bf16.msra.mxu0 %v3189
    %7384 = vmatpush.bf16.msra.mxu0 %v3173
    %7385 = vmatpush.bf16.msra.mxu0 %v3157
    %7386 = vmatpush.bf16.msra.mxu0 %v3141
    %7387 = vmatpush.bf16.msra.mxu0 %v3125
    %7388 = vmatpush.bf16.msra.mxu0 %v3109
    %7389 = vmatpush.bf16.msra.mxu0 %v3093
    %7390 = vmatmul.bf16.gmra.mxu0 %v6806
    %v7391 = vpop.f32.mrf.mxu0
    %v7392 = vadd.f32 0.0, %v7391
    %v7393 = vpop.f32.mrf.mxu0
    %7394 = vdwg.mxu0
    %7395 = vmatpush.bf16.msra.mxu0 %v3333
    %7396 = vmatpush.bf16.msra.mxu0 %v3317
    %7397 = vmatpush.bf16.msra.mxu0 %v3301
    %7398 = vmatpush.bf16.msra.mxu0 %v3285
    %7399 = vmatpush.bf16.msra.mxu0 %v3269
    %7400 = vmatpush.bf16.msra.mxu0 %v3253
    %7401 = vmatpush.bf16.msra.mxu0 %v3237
    %7402 = vmatpush.bf16.msra.mxu0 %v3221
    %7403 = vmatmul.bf16.gmra.mxu0 %v6807
    %v7404 = vpop.f32.mrf.mxu0
    %v7405 = vadd.f32 %v7392, %v7404
    %v7406 = vpop.f32.mrf.mxu0
    %7407 = vdwg.mxu0
    %7408 = vmatpush.bf16.msra.mxu0 %v3461
    %7409 = vmatpush.bf16.msra.mxu0 %v3445
    %7410 = vmatpush.bf16.msra.mxu0 %v3429
    %7411 = vmatpush.bf16.msra.mxu0 %v3413
    %7412 = vmatpush.bf16.msra.mxu0 %v3397
    %7413 = vmatpush.bf16.msra.mxu0 %v3381
    %7414 = vmatpush.bf16.msra.mxu0 %v3365
    %7415 = vmatpush.bf16.msra.mxu0 %v3349
    %7416 = vmatmul.bf16.gmra.mxu0 %v6808
    %v7417 = vpop.f32.mrf.mxu0
    %v7418 = vadd.f32 %v7405, %v7417
    %v7419 = vpop.f32.mrf.mxu0
    %7420 = vdwg.mxu0
    %7421 = vmatpush.bf16.msra.mxu0 %v3589
    %7422 = vmatpush.bf16.msra.mxu0 %v3573
    %7423 = vmatpush.bf16.msra.mxu0 %v3557
    %7424 = vmatpush.bf16.msra.mxu0 %v3541
    %7425 = vmatpush.bf16.msra.mxu0 %v3525
    %7426 = vmatpush.bf16.msra.mxu0 %v3509
    %7427 = vmatpush.bf16.msra.mxu0 %v3493
    %7428 = vmatpush.bf16.msra.mxu0 %v3477
    %7429 = vmatmul.bf16.gmra.mxu0 %v6809
    %v7430 = vpop.f32.mrf.mxu0
    %v7431 = vadd.f32 %v7418, %v7430
    %v7432 = vpop.f32.mrf.mxu0
    %7433 = vdwg.mxu0
    %7434 = vmatpush.bf16.msra.mxu0 %v3206
    %7435 = vmatpush.bf16.msra.mxu0 %v3190
    %7436 = vmatpush.bf16.msra.mxu0 %v3174
    %7437 = vmatpush.bf16.msra.mxu0 %v3158
    %7438 = vmatpush.bf16.msra.mxu0 %v3142
    %7439 = vmatpush.bf16.msra.mxu0 %v3126
    %7440 = vmatpush.bf16.msra.mxu0 %v3110
    %7441 = vmatpush.bf16.msra.mxu0 %v3094
    %7442 = vmatmul.bf16.gmra.mxu0 %v6806
    %v7443 = vpop.f32.mrf.mxu0
    %v7444 = vadd.f32 0.0, %v7443
    %v7445 = vpop.f32.mrf.mxu0
    %7446 = vdwg.mxu0
    %7447 = vmatpush.bf16.msra.mxu0 %v3334
    %7448 = vmatpush.bf16.msra.mxu0 %v3318
    %7449 = vmatpush.bf16.msra.mxu0 %v3302
    %7450 = vmatpush.bf16.msra.mxu0 %v3286
    %7451 = vmatpush.bf16.msra.mxu0 %v3270
    %7452 = vmatpush.bf16.msra.mxu0 %v3254
    %7453 = vmatpush.bf16.msra.mxu0 %v3238
    %7454 = vmatpush.bf16.msra.mxu0 %v3222
    %7455 = vmatmul.bf16.gmra.mxu0 %v6807
    %v7456 = vpop.f32.mrf.mxu0
    %v7457 = vadd.f32 %v7444, %v7456
    %v7458 = vpop.f32.mrf.mxu0
    %7459 = vdwg.mxu0
    %7460 = vmatpush.bf16.msra.mxu0 %v3462
    %7461 = vmatpush.bf16.msra.mxu0 %v3446
    %7462 = vmatpush.bf16.msra.mxu0 %v3430
    %7463 = vmatpush.bf16.msra.mxu0 %v3414
    %7464 = vmatpush.bf16.msra.mxu0 %v3398
    %7465 = vmatpush.bf16.msra.mxu0 %v3382
    %7466 = vmatpush.bf16.msra.mxu0 %v3366
    %7467 = vmatpush.bf16.msra.mxu0 %v3350
    %7468 = vmatmul.bf16.gmra.mxu0 %v6808
    %v7469 = vpop.f32.mrf.mxu0
    %v7470 = vadd.f32 %v7457, %v7469
    %v7471 = vpop.f32.mrf.mxu0
    %7472 = vdwg.mxu0
    %7473 = vmatpush.bf16.msra.mxu0 %v3590
    %7474 = vmatpush.bf16.msra.mxu0 %v3574
    %7475 = vmatpush.bf16.msra.mxu0 %v3558
    %7476 = vmatpush.bf16.msra.mxu0 %v3542
    %7477 = vmatpush.bf16.msra.mxu0 %v3526
    %7478 = vmatpush.bf16.msra.mxu0 %v3510
    %7479 = vmatpush.bf16.msra.mxu0 %v3494
    %7480 = vmatpush.bf16.msra.mxu0 %v3478
    %7481 = vmatmul.bf16.gmra.mxu0 %v6809
    %v7482 = vpop.f32.mrf.mxu0
    %v7483 = vadd.f32 %v7470, %v7482
    %v7484 = vpop.f32.mrf.mxu0
    %7485 = vdwg.mxu0
    %7486 = vmatpush.bf16.msra.mxu0 %v3207
    %7487 = vmatpush.bf16.msra.mxu0 %v3191
    %7488 = vmatpush.bf16.msra.mxu0 %v3175
    %7489 = vmatpush.bf16.msra.mxu0 %v3159
    %7490 = vmatpush.bf16.msra.mxu0 %v3143
    %7491 = vmatpush.bf16.msra.mxu0 %v3127
    %7492 = vmatpush.bf16.msra.mxu0 %v3111
    %7493 = vmatpush.bf16.msra.mxu0 %v3095
    %7494 = vmatmul.bf16.gmra.mxu0 %v6806
    %v7495 = vpop.f32.mrf.mxu0
    %v7496 = vadd.f32 0.0, %v7495
    %v7497 = vpop.f32.mrf.mxu0
    %7498 = vdwg.mxu0
    %7499 = vmatpush.bf16.msra.mxu0 %v3335
    %7500 = vmatpush.bf16.msra.mxu0 %v3319
    %7501 = vmatpush.bf16.msra.mxu0 %v3303
    %7502 = vmatpush.bf16.msra.mxu0 %v3287
    %7503 = vmatpush.bf16.msra.mxu0 %v3271
    %7504 = vmatpush.bf16.msra.mxu0 %v3255
    %7505 = vmatpush.bf16.msra.mxu0 %v3239
    %7506 = vmatpush.bf16.msra.mxu0 %v3223
    %7507 = vmatmul.bf16.gmra.mxu0 %v6807
    %v7508 = vpop.f32.mrf.mxu0
    %v7509 = vadd.f32 %v7496, %v7508
    %v7510 = vpop.f32.mrf.mxu0
    %7511 = vdwg.mxu0
    %7512 = vmatpush.bf16.msra.mxu0 %v3463
    %7513 = vmatpush.bf16.msra.mxu0 %v3447
    %7514 = vmatpush.bf16.msra.mxu0 %v3431
    %7515 = vmatpush.bf16.msra.mxu0 %v3415
    %7516 = vmatpush.bf16.msra.mxu0 %v3399
    %7517 = vmatpush.bf16.msra.mxu0 %v3383
    %7518 = vmatpush.bf16.msra.mxu0 %v3367
    %7519 = vmatpush.bf16.msra.mxu0 %v3351
    %7520 = vmatmul.bf16.gmra.mxu0 %v6808
    %v7521 = vpop.f32.mrf.mxu0
    %v7522 = vadd.f32 %v7509, %v7521
    %v7523 = vpop.f32.mrf.mxu0
    %7524 = vdwg.mxu0
    %7525 = vmatpush.bf16.msra.mxu0 %v3591
    %7526 = vmatpush.bf16.msra.mxu0 %v3575
    %7527 = vmatpush.bf16.msra.mxu0 %v3559
    %7528 = vmatpush.bf16.msra.mxu0 %v3543
    %7529 = vmatpush.bf16.msra.mxu0 %v3527
    %7530 = vmatpush.bf16.msra.mxu0 %v3511
    %7531 = vmatpush.bf16.msra.mxu0 %v3495
    %7532 = vmatpush.bf16.msra.mxu0 %v3479
    %7533 = vmatmul.bf16.gmra.mxu0 %v6809
    %v7534 = vpop.f32.mrf.mxu0
    %v7535 = vadd.f32 %v7522, %v7534
    %v7536 = vpop.f32.mrf.mxu0
    %7537 = vdwg.mxu0
    %7538 = vmatpush.bf16.msra.mxu0 %v3208
    %7539 = vmatpush.bf16.msra.mxu0 %v3192
    %7540 = vmatpush.bf16.msra.mxu0 %v3176
    %7541 = vmatpush.bf16.msra.mxu0 %v3160
    %7542 = vmatpush.bf16.msra.mxu0 %v3144
    %7543 = vmatpush.bf16.msra.mxu0 %v3128
    %7544 = vmatpush.bf16.msra.mxu0 %v3112
    %7545 = vmatpush.bf16.msra.mxu0 %v3096
    %7546 = vmatmul.bf16.gmra.mxu0 %v6806
    %v7547 = vpop.f32.mrf.mxu0
    %v7548 = vadd.f32 0.0, %v7547
    %v7549 = vpop.f32.mrf.mxu0
    %7550 = vdwg.mxu0
    %7551 = vmatpush.bf16.msra.mxu0 %v3336
    %7552 = vmatpush.bf16.msra.mxu0 %v3320
    %7553 = vmatpush.bf16.msra.mxu0 %v3304
    %7554 = vmatpush.bf16.msra.mxu0 %v3288
    %7555 = vmatpush.bf16.msra.mxu0 %v3272
    %7556 = vmatpush.bf16.msra.mxu0 %v3256
    %7557 = vmatpush.bf16.msra.mxu0 %v3240
    %7558 = vmatpush.bf16.msra.mxu0 %v3224
    %7559 = vmatmul.bf16.gmra.mxu0 %v6807
    %v7560 = vpop.f32.mrf.mxu0
    %v7561 = vadd.f32 %v7548, %v7560
    %v7562 = vpop.f32.mrf.mxu0
    %7563 = vdwg.mxu0
    %7564 = vmatpush.bf16.msra.mxu0 %v3464
    %7565 = vmatpush.bf16.msra.mxu0 %v3448
    %7566 = vmatpush.bf16.msra.mxu0 %v3432
    %7567 = vmatpush.bf16.msra.mxu0 %v3416
    %7568 = vmatpush.bf16.msra.mxu0 %v3400
    %7569 = vmatpush.bf16.msra.mxu0 %v3384
    %7570 = vmatpush.bf16.msra.mxu0 %v3368
    %7571 = vmatpush.bf16.msra.mxu0 %v3352
    %7572 = vmatmul.bf16.gmra.mxu0 %v6808
    %v7573 = vpop.f32.mrf.mxu0
    %v7574 = vadd.f32 %v7561, %v7573
    %v7575 = vpop.f32.mrf.mxu0
    %7576 = vdwg.mxu0
    %7577 = vmatpush.bf16.msra.mxu0 %v3592
    %7578 = vmatpush.bf16.msra.mxu0 %v3576
    %7579 = vmatpush.bf16.msra.mxu0 %v3560
    %7580 = vmatpush.bf16.msra.mxu0 %v3544
    %7581 = vmatpush.bf16.msra.mxu0 %v3528
    %7582 = vmatpush.bf16.msra.mxu0 %v3512
    %7583 = vmatpush.bf16.msra.mxu0 %v3496
    %7584 = vmatpush.bf16.msra.mxu0 %v3480
    %7585 = vmatmul.bf16.gmra.mxu0 %v6809
    %v7586 = vpop.f32.mrf.mxu0
    %v7587 = vadd.f32 %v7574, %v7586
    %v7588 = vpop.f32.mrf.mxu0
    %7589 = vdwg.mxu0
    %7590 = vmatpush.bf16.msra.mxu0 %v3209
    %7591 = vmatpush.bf16.msra.mxu0 %v3193
    %7592 = vmatpush.bf16.msra.mxu0 %v3177
    %7593 = vmatpush.bf16.msra.mxu0 %v3161
    %7594 = vmatpush.bf16.msra.mxu0 %v3145
    %7595 = vmatpush.bf16.msra.mxu0 %v3129
    %7596 = vmatpush.bf16.msra.mxu0 %v3113
    %7597 = vmatpush.bf16.msra.mxu0 %v3097
    %7598 = vmatmul.bf16.gmra.mxu0 %v6806
    %v7599 = vpop.f32.mrf.mxu0
    %v7600 = vadd.f32 0.0, %v7599
    %v7601 = vpop.f32.mrf.mxu0
    %7602 = vdwg.mxu0
    %7603 = vmatpush.bf16.msra.mxu0 %v3337
    %7604 = vmatpush.bf16.msra.mxu0 %v3321
    %7605 = vmatpush.bf16.msra.mxu0 %v3305
    %7606 = vmatpush.bf16.msra.mxu0 %v3289
    %7607 = vmatpush.bf16.msra.mxu0 %v3273
    %7608 = vmatpush.bf16.msra.mxu0 %v3257
    %7609 = vmatpush.bf16.msra.mxu0 %v3241
    %7610 = vmatpush.bf16.msra.mxu0 %v3225
    %7611 = vmatmul.bf16.gmra.mxu0 %v6807
    %v7612 = vpop.f32.mrf.mxu0
    %v7613 = vadd.f32 %v7600, %v7612
    %v7614 = vpop.f32.mrf.mxu0
    %7615 = vdwg.mxu0
    %7616 = vmatpush.bf16.msra.mxu0 %v3465
    %7617 = vmatpush.bf16.msra.mxu0 %v3449
    %7618 = vmatpush.bf16.msra.mxu0 %v3433
    %7619 = vmatpush.bf16.msra.mxu0 %v3417
    %7620 = vmatpush.bf16.msra.mxu0 %v3401
    %7621 = vmatpush.bf16.msra.mxu0 %v3385
    %7622 = vmatpush.bf16.msra.mxu0 %v3369
    %7623 = vmatpush.bf16.msra.mxu0 %v3353
    %7624 = vmatmul.bf16.gmra.mxu0 %v6808
    %v7625 = vpop.f32.mrf.mxu0
    %v7626 = vadd.f32 %v7613, %v7625
    %v7627 = vpop.f32.mrf.mxu0
    %7628 = vdwg.mxu0
    %7629 = vmatpush.bf16.msra.mxu0 %v3593
    %7630 = vmatpush.bf16.msra.mxu0 %v3577
    %7631 = vmatpush.bf16.msra.mxu0 %v3561
    %7632 = vmatpush.bf16.msra.mxu0 %v3545
    %7633 = vmatpush.bf16.msra.mxu0 %v3529
    %7634 = vmatpush.bf16.msra.mxu0 %v3513
    %7635 = vmatpush.bf16.msra.mxu0 %v3497
    %7636 = vmatpush.bf16.msra.mxu0 %v3481
    %7637 = vmatmul.bf16.gmra.mxu0 %v6809
    %v7638 = vpop.f32.mrf.mxu0
    %v7639 = vadd.f32 %v7626, %v7638
    %v7640 = vpop.f32.mrf.mxu0
    %7641 = vdwg.mxu0
    %v7658 = vrot.slane %v6911, 7
    %v7659 = vrot.slane %v6963, 6
    %v7660 = vrot.slane %v7015, 5
    %v7661 = vrot.slane %v7067, 4
    %v7662 = vrot.slane %v7119, 3
    %v7663 = vrot.slane %v7171, 2
    %v7664 = vrot.slane %v7223, 1
    %v7665 = vrot.slane %v7327, 7
    %v7666 = vrot.slane %v7379, 6
    %v7667 = vrot.slane %v7431, 5
    %v7668 = vrot.slane %v7483, 4
    %v7669 = vrot.slane %v7535, 3
    %v7670 = vrot.slane %v7587, 2
    %v7671 = vrot.slane %v7639, 1
    %vm7672 = vcmask 1040384
    %v7673 = vsel %vm7672, %v6859, %v7658
    %vm7674 = vcmask 1042434
    %v7675 = vsel %vm7674, %v7659, %v7660
    %vm7676 = vcmask 1041408
    %v7677 = vsel %vm7676, %v7673, %v7675
    %vm7678 = vcmask 1044484
    %v7679 = vsel %vm7678, %v7661, %v7662
    %vm7680 = vcmask 1046534
    %v7681 = vsel %vm7680, %v7663, %v7664
    %vm7682 = vcmask 1045508
    %v7683 = vsel %vm7682, %v7679, %v7681
    %v7684 = vsel %vm6765, %v7677, %v7683
    %v7685 = vsel %vm7672, %v7275, %v7665
    %v7686 = vsel %vm7674, %v7666, %v7667
    %v7687 = vsel %vm7676, %v7685, %v7686
    %v7688 = vsel %vm7678, %v7668, %v7669
    %v7689 = vsel %vm7680, %v7670, %v7671
    %v7690 = vsel %vm7682, %v7688, %v7689
    %v7691 = vsel %vm6765, %v7687, %v7690
    %v7692 = vsel %vm701, %v6859, %v7658
    %vm7693 = vcmask 1043459
    %v7694 = vsel %vm7693, %v7659, %v7660
    %vm7695 = vcmask 1042433
    %v7696 = vsel %vm7695, %v7692, %v7694
    %vm7697 = vcmask 1045509
    %v7698 = vsel %vm7697, %v7661, %v7662
    %vm7699 = vcmask 1046528
    %v7700 = vsel %vm7699, %v7664, %v7663
    %vm7701 = vcmask 1046533
    %v7702 = vsel %vm7701, %v7698, %v7700
    %vm7703 = vcmask 1044481
    %v7704 = vsel %vm7703, %v7696, %v7702
    %v7705 = vrot.slane %v7704, 1
    %v7706 = vsel %vm701, %v7275, %v7665
    %v7707 = vsel %vm7693, %v7666, %v7667
    %v7708 = vsel %vm7695, %v7706, %v7707
    %v7709 = vsel %vm7697, %v7668, %v7669
    %v7710 = vsel %vm7699, %v7671, %v7670
    %v7711 = vsel %vm7701, %v7709, %v7710
    %v7712 = vsel %vm7703, %v7708, %v7711
    %v7713 = vrot.slane %v7712, 1
    %v7714 = vperm.slane %v7684, 0
    %v7715 = vperm.slane %v7684, 1
    %v7716 = vperm.slane %v7684, 2
    %v7717 = vperm.slane %v7684, 3
    %v7718 = vperm.slane %v7684, 4
    %v7719 = vperm.slane %v7684, 5
    %v7720 = vperm.slane %v7684, 6
    %v7721 = vperm.slane %v7684, 7
    %v7722 = vperm.slane %v7691, 0
    %v7723 = vperm.slane %v7691, 1
    %v7724 = vperm.slane %v7691, 2
    %v7725 = vperm.slane %v7691, 3
    %v7726 = vperm.slane %v7691, 4
    %v7727 = vperm.slane %v7691, 5
    %v7728 = vperm.slane %v7691, 6
    %v7729 = vperm.slane %v7691, 7
    %v7730 = vperm.slane %v7705, 0
    %v7731 = vperm.slane %v7705, 1
    %v7732 = vperm.slane %v7705, 2
    %v7733 = vperm.slane %v7705, 3
    %v7734 = vperm.slane %v7705, 4
    %v7735 = vperm.slane %v7705, 5
    %v7736 = vperm.slane %v7705, 6
    %v7737 = vperm.slane %v7705, 7
    %v7738 = vperm.slane %v7713, 0
    %v7739 = vperm.slane %v7713, 1
    %v7740 = vperm.slane %v7713, 2
    %v7741 = vperm.slane %v7713, 3
    %v7742 = vperm.slane %v7713, 4
    %v7743 = vperm.slane %v7713, 5
    %v7744 = vperm.slane %v7713, 6
    %v7745 = vperm.slane %v7713, 7
    %v7746 = vrot.slane %v7715, 4
    %v7747 = vrot.slane %v7717, 4
    %v7748 = vrot.slane %v7719, 4
    %v7749 = vrot.slane %v7721, 4
    %v7750 = vrot.slane %v7723, 4
    %v7751 = vrot.slane %v7725, 4
    %v7752 = vrot.slane %v7727, 4
    %v7753 = vrot.slane %v7729, 4
    %v7754 = vrot.slane %v7731, 4
    %v7755 = vrot.slane %v7733, 4
    %v7756 = vrot.slane %v7735, 4
    %v7757 = vrot.slane %v7737, 4
    %v7758 = vrot.slane %v7739, 4
    %v7759 = vrot.slane %v7741, 4
    %v7760 = vrot.slane %v7743, 4
    %v7761 = vrot.slane %v7745, 4
    %v7762 = vsel %vm6765, %v7714, %v7746
    %v7763 = vsel %vm6765, %v7716, %v7747
    %v7764 = vsel %vm6765, %v7718, %v7748
    %v7765 = vsel %vm6765, %v7720, %v7749
    %v7766 = vsel %vm6765, %v7722, %v7750
    %v7767 = vsel %vm6765, %v7724, %v7751
    %v7768 = vsel %vm6765, %v7726, %v7752
    %v7769 = vsel %vm6765, %v7728, %v7753
    %v7770 = vsel %vm6765, %v7730, %v7754
    %v7771 = vsel %vm6765, %v7732, %v7755
    %v7772 = vsel %vm6765, %v7734, %v7756
    %v7773 = vsel %vm6765, %v7736, %v7757
    %v7774 = vsel %vm6765, %v7738, %v7758
    %v7775 = vsel %vm6765, %v7740, %v7759
    %v7776 = vsel %vm6765, %v7742, %v7760
    %v7777 = vsel %vm6765, %v7744, %v7761
    %v7794 = vadd.f32 %v6766, %v7762
    %v7795 = vadd.f32 %v6767, %v7763
    %v7796 = vadd.f32 %v6768, %v7764
    %v7797 = vadd.f32 %v6769, %v7765
    %v7798 = vadd.f32 %v6770, %v7766
    %v7799 = vadd.f32 %v6771, %v7767
    %v7800 = vadd.f32 %v6772, %v7768
    %v7801 = vadd.f32 %v6773, %v7769
    %v7802 = vadd.f32 %v6775, %v7770
    %v7803 = vadd.f32 %v6777, %v7771
    %v7804 = vadd.f32 %v6779, %v7772
    %v7805 = vadd.f32 %v6781, %v7773
    %v7806 = vadd.f32 %v6783, %v7774
    %v7807 = vadd.f32 %v6785, %v7775
    %v7808 = vadd.f32 %v6787, %v7776
    %v7809 = vadd.f32 %v6789, %v7777
    %v7810 = vrot.slane %v661, 4
    %v7811 = vrot.slane %v663, 4
    %v7812 = vrot.slane %v665, 4
    %v7813 = vrot.slane %v667, 4
    %v7814 = vrot.slane %v669, 4
    %v7815 = vrot.slane %v671, 4
    %v7816 = vrot.slane %v673, 4
    %v7817 = vrot.slane %v675, 4
    %v7818 = vsel %vm6765, %v660, %v7810
    %v7819 = vsel %vm6765, %v662, %v7811
    %v7820 = vsel %vm6765, %v664, %v7812
    %v7821 = vsel %vm6765, %v666, %v7813
    %v7822 = vsel %vm6765, %v668, %v7814
    %v7823 = vsel %vm6765, %v670, %v7815
    %v7824 = vsel %vm6765, %v672, %v7816
    %v7825 = vsel %vm6765, %v674, %v7817
    %v7834 = vadd.f32 %v7794, %v7818
    %v7835 = vadd.f32 %v7795, %v7819
    %v7836 = vadd.f32 %v7796, %v7820
    %v7837 = vadd.f32 %v7797, %v7821
    %v7838 = vadd.f32 %v7798, %v7822
    %v7839 = vadd.f32 %v7799, %v7823
    %v7840 = vadd.f32 %v7800, %v7824
    %v7841 = vadd.f32 %v7801, %v7825
    %v7842 = vadd.f32 %v7802, %v7818
    %v7843 = vadd.f32 %v7803, %v7819
    %v7844 = vadd.f32 %v7804, %v7820
    %v7845 = vadd.f32 %v7805, %v7821
    %v7846 = vadd.f32 %v7806, %v7822
    %v7847 = vadd.f32 %v7807, %v7823
    %v7848 = vadd.f32 %v7808, %v7824
    %v7849 = vadd.f32 %v7809, %v7825
    %v7850 = vxor.u32 %v7834, 2147483648
    %v7851 = vxor.u32 %v7835, 2147483648
    %v7852 = vxor.u32 %v7842, 2147483648
    %v7853 = vxor.u32 %v7843, 2147483648
    %v7854 = vmul.f32 %v7850, 1.442695
    %v7855 = vpow.pop %v7854
    %v7856 = vmul.f32 %v7851, 1.442695
    %v7857 = vpow.pop %v7856
    %v7858 = vmul.f32 %v7852, 1.442695
    %v7859 = vpow.pop %v7858
    %v7860 = vmul.f32 %v7853, 1.442695
    %v7861 = vpow.pop %v7860
    %v7862 = vadd.f32 %v7855, 1.0
    %v7863 = vadd.f32 %v7857, 1.0
    %v7864 = vadd.f32 %v7859, 1.0
    %v7865 = vadd.f32 %v7861, 1.0
    %v7866 = vrcp.pop %v7862
    %v7867 = vmul.f32 %v7862, %v7866
    %v7868 = vsub.f32 1.0, %v7867
    %v7869 = vmul.f32 %v7866, %v7868
    %v7870 = vadd.f32 %v7866, %v7869
    %vm7871 = vweird.f32 %v7862
    %vm7872 = vweird.f32 %v7866
    %vm7873 = vmor %vm7871, %vm7872
    %v7874 = vsel %vm7873, %v7866, %v7870
    %v7875 = vand.u32 2147483647, %v7862
    %vm7876 = vcmp.eq.f32.partialorder %v7875, 8.507059e+37
    %v7877 = vand.u32 %v7862, 2147483648
    %v7878 = vor.u32 1.1754944e-38, %v7877
    %v7879 = vsel %vm7876, %v7878, %v7874
    %v7880 = vmul.f32 1.0, %v7879
    %v7881 = vrcp.pop %v7863
    %v7882 = vmul.f32 %v7863, %v7881
    %v7883 = vsub.f32 1.0, %v7882
    %v7884 = vmul.f32 %v7881, %v7883
    %v7885 = vadd.f32 %v7881, %v7884
    %vm7886 = vweird.f32 %v7863
    %vm7887 = vweird.f32 %v7881
    %vm7888 = vmor %vm7886, %vm7887
    %v7889 = vsel %vm7888, %v7881, %v7885
    %v7890 = vand.u32 2147483647, %v7863
    %vm7891 = vcmp.eq.f32.partialorder %v7890, 8.507059e+37
    %v7892 = vand.u32 %v7863, 2147483648
    %v7893 = vor.u32 1.1754944e-38, %v7892
    %v7894 = vsel %vm7891, %v7893, %v7889
    %v7895 = vmul.f32 1.0, %v7894
    %v7896 = vrcp.pop %v7864
    %v7897 = vmul.f32 %v7864, %v7896
    %v7898 = vsub.f32 1.0, %v7897
    %v7899 = vmul.f32 %v7896, %v7898
    %v7900 = vadd.f32 %v7896, %v7899
    %vm7901 = vweird.f32 %v7864
    %vm7902 = vweird.f32 %v7896
    %vm7903 = vmor %vm7901, %vm7902
    %v7904 = vsel %vm7903, %v7896, %v7900
    %v7905 = vand.u32 2147483647, %v7864
    %vm7906 = vcmp.eq.f32.partialorder %v7905, 8.507059e+37
    %v7907 = vand.u32 %v7864, 2147483648
    %v7908 = vor.u32 1.1754944e-38, %v7907
    %v7909 = vsel %vm7906, %v7908, %v7904
    %v7910 = vmul.f32 1.0, %v7909
    %v7911 = vrcp.pop %v7865
    %v7912 = vmul.f32 %v7865, %v7911
    %v7913 = vsub.f32 1.0, %v7912
    %v7914 = vmul.f32 %v7911, %v7913
    %v7915 = vadd.f32 %v7911, %v7914
    %vm7916 = vweird.f32 %v7865
    %vm7917 = vweird.f32 %v7911
    %vm7918 = vmor %vm7916, %vm7917
    %v7919 = vsel %vm7918, %v7911, %v7915
    %v7920 = vand.u32 2147483647, %v7865
    %vm7921 = vcmp.eq.f32.partialorder %v7920, 8.507059e+37
    %v7922 = vand.u32 %v7865, 2147483648
    %v7923 = vor.u32 1.1754944e-38, %v7922
    %v7924 = vsel %vm7921, %v7923, %v7919
    %v7925 = vmul.f32 1.0, %v7924
    %v7926 = vxor.u32 %v7836, 2147483648
    %v7927 = vxor.u32 %v7837, 2147483648
    %v7928 = vxor.u32 %v7844, 2147483648
    %v7929 = vxor.u32 %v7845, 2147483648
    %v7930 = vmul.f32 %v7926, 1.442695
    %v7931 = vpow.pop %v7930
    %v7932 = vmul.f32 %v7927, 1.442695
    %v7933 = vpow.pop %v7932
    %v7934 = vmul.f32 %v7928, 1.442695
    %v7935 = vpow.pop %v7934
    %v7936 = vmul.f32 %v7929, 1.442695
    %v7937 = vpow.pop %v7936
    %v7938 = vadd.f32 %v7931, 1.0
    %v7939 = vadd.f32 %v7933, 1.0
    %v7940 = vadd.f32 %v7935, 1.0
    %v7941 = vadd.f32 %v7937, 1.0
    %v7942 = vrcp.pop %v7938
    %v7943 = vmul.f32 %v7938, %v7942
    %v7944 = vsub.f32 1.0, %v7943
    %v7945 = vmul.f32 %v7942, %v7944
    %v7946 = vadd.f32 %v7942, %v7945
    %vm7947 = vweird.f32 %v7938
    %vm7948 = vweird.f32 %v7942
    %vm7949 = vmor %vm7947, %vm7948
    %v7950 = vsel %vm7949, %v7942, %v7946
    %v7951 = vand.u32 2147483647, %v7938
    %vm7952 = vcmp.eq.f32.partialorder %v7951, 8.507059e+37
    %v7953 = vand.u32 %v7938, 2147483648
    %v7954 = vor.u32 1.1754944e-38, %v7953
    %v7955 = vsel %vm7952, %v7954, %v7950
    %v7956 = vmul.f32 1.0, %v7955
    %v7957 = vrcp.pop %v7939
    %v7958 = vmul.f32 %v7939, %v7957
    %v7959 = vsub.f32 1.0, %v7958
    %v7960 = vmul.f32 %v7957, %v7959
    %v7961 = vadd.f32 %v7957, %v7960
    %vm7962 = vweird.f32 %v7939
    %vm7963 = vweird.f32 %v7957
    %vm7964 = vmor %vm7962, %vm7963
    %v7965 = vsel %vm7964, %v7957, %v7961
    %v7966 = vand.u32 2147483647, %v7939
    %vm7967 = vcmp.eq.f32.partialorder %v7966, 8.507059e+37
    %v7968 = vand.u32 %v7939, 2147483648
    %v7969 = vor.u32 1.1754944e-38, %v7968
    %v7970 = vsel %vm7967, %v7969, %v7965
    %v7971 = vmul.f32 1.0, %v7970
    %v7972 = vrcp.pop %v7940
    %v7973 = vmul.f32 %v7940, %v7972
    %v7974 = vsub.f32 1.0, %v7973
    %v7975 = vmul.f32 %v7972, %v7974
    %v7976 = vadd.f32 %v7972, %v7975
    %vm7977 = vweird.f32 %v7940
    %vm7978 = vweird.f32 %v7972
    %vm7979 = vmor %vm7977, %vm7978
    %v7980 = vsel %vm7979, %v7972, %v7976
    %v7981 = vand.u32 2147483647, %v7940
    %vm7982 = vcmp.eq.f32.partialorder %v7981, 8.507059e+37
    %v7983 = vand.u32 %v7940, 2147483648
    %v7984 = vor.u32 1.1754944e-38, %v7983
    %v7985 = vsel %vm7982, %v7984, %v7980
    %v7986 = vmul.f32 1.0, %v7985
    %v7987 = vrcp.pop %v7941
    %v7988 = vmul.f32 %v7941, %v7987
    %v7989 = vsub.f32 1.0, %v7988
    %v7990 = vmul.f32 %v7987, %v7989
    %v7991 = vadd.f32 %v7987, %v7990
    %vm7992 = vweird.f32 %v7941
    %vm7993 = vweird.f32 %v7987
    %vm7994 = vmor %vm7992, %vm7993
    %v7995 = vsel %vm7994, %v7987, %v7991
    %v7996 = vand.u32 2147483647, %v7941
    %vm7997 = vcmp.eq.f32.partialorder %v7996, 8.507059e+37
    %v7998 = vand.u32 %v7941, 2147483648
    %v7999 = vor.u32 1.1754944e-38, %v7998
    %v8000 = vsel %vm7997, %v7999, %v7995
    %v8001 = vmul.f32 1.0, %v8000
    %v8002 = vtanh.pop %v7838
    %v8003 = vtanh.pop %v7839
    %v8004 = vtanh.pop %v7846
    %v8005 = vtanh.pop %v7847
    %v8006 = vxor.u32 %v7840, 2147483648
    %v8007 = vxor.u32 %v7841, 2147483648
    %v8008 = vxor.u32 %v7848, 2147483648
    %v8009 = vxor.u32 %v7849, 2147483648
    %v8010 = vmul.f32 %v8006, 1.442695
    %v8011 = vpow.pop %v8010
    %v8012 = vmul.f32 %v8007, 1.442695
    %v8013 = vpow.pop %v8012
    %v8014 = vmul.f32 %v8008, 1.442695
    %v8015 = vpow.pop %v8014
    %v8016 = vmul.f32 %v8009, 1.442695
    %v8017 = vpow.pop %v8016
    %v8018 = vadd.f32 %v8011, 1.0
    %v8019 = vadd.f32 %v8013, 1.0
    %v8020 = vadd.f32 %v8015, 1.0
    %v8021 = vadd.f32 %v8017, 1.0
    %v8022 = vrcp.pop %v8018
    %v8023 = vmul.f32 %v8018, %v8022
    %v8024 = vsub.f32 1.0, %v8023
    %v8025 = vmul.f32 %v8022, %v8024
    %v8026 = vadd.f32 %v8022, %v8025
    %vm8027 = vweird.f32 %v8018
    %vm8028 = vweird.f32 %v8022
    %vm8029 = vmor %vm8027, %vm8028
    %v8030 = vsel %vm8029, %v8022, %v8026
    %v8031 = vand.u32 2147483647, %v8018
    %vm8032 = vcmp.eq.f32.partialorder %v8031, 8.507059e+37
    %v8033 = vand.u32 %v8018, 2147483648
    %v8034 = vor.u32 1.1754944e-38, %v8033
    %v8035 = vsel %vm8032, %v8034, %v8030
    %v8036 = vmul.f32 1.0, %v8035
    %v8037 = vrcp.pop %v8019
    %v8038 = vmul.f32 %v8019, %v8037
    %v8039 = vsub.f32 1.0, %v8038
    %v8040 = vmul.f32 %v8037, %v8039
    %v8041 = vadd.f32 %v8037, %v8040
    %vm8042 = vweird.f32 %v8019
    %vm8043 = vweird.f32 %v8037
    %vm8044 = vmor %vm8042, %vm8043
    %v8045 = vsel %vm8044, %v8037, %v8041
    %v8046 = vand.u32 2147483647, %v8019
    %vm8047 = vcmp.eq.f32.partialorder %v8046, 8.507059e+37
    %v8048 = vand.u32 %v8019, 2147483648
    %v8049 = vor.u32 1.1754944e-38, %v8048
    %v8050 = vsel %vm8047, %v8049, %v8045
    %v8051 = vmul.f32 1.0, %v8050
    %v8052 = vrcp.pop %v8020
    %v8053 = vmul.f32 %v8020, %v8052
    %v8054 = vsub.f32 1.0, %v8053
    %v8055 = vmul.f32 %v8052, %v8054
    %v8056 = vadd.f32 %v8052, %v8055
    %vm8057 = vweird.f32 %v8020
    %vm8058 = vweird.f32 %v8052
    %vm8059 = vmor %vm8057, %vm8058
    %v8060 = vsel %vm8059, %v8052, %v8056
    %v8061 = vand.u32 2147483647, %v8020
    %vm8062 = vcmp.eq.f32.partialorder %v8061, 8.507059e+37
    %v8063 = vand.u32 %v8020, 2147483648
    %v8064 = vor.u32 1.1754944e-38, %v8063
    %v8065 = vsel %vm8062, %v8064, %v8060
    %v8066 = vmul.f32 1.0, %v8065
    %v8067 = vrcp.pop %v8021
    %v8068 = vmul.f32 %v8021, %v8067
    %v8069 = vsub.f32 1.0, %v8068
    %v8070 = vmul.f32 %v8067, %v8069
    %v8071 = vadd.f32 %v8067, %v8070
    %vm8072 = vweird.f32 %v8021
    %vm8073 = vweird.f32 %v8067
    %vm8074 = vmor %vm8072, %vm8073
    %v8075 = vsel %vm8074, %v8067, %v8071
    %v8076 = vand.u32 2147483647, %v8021
    %vm8077 = vcmp.eq.f32.partialorder %v8076, 8.507059e+37
    %v8078 = vand.u32 %v8021, 2147483648
    %v8079 = vor.u32 1.1754944e-38, %v8078
    %v8080 = vsel %vm8077, %v8079, %v8075
    %v8081 = vmul.f32 1.0, %v8080
    %v8086 = vrot.slane %v6514, 7
    %v8087 = vrot.slane %v6515, 6
    %v8088 = vrot.slane %v6516, 5
    %v8089 = vsel %vm7672, %v6513, %v8086
    %v8090 = vsel %vm7674, %v8087, %v8088
    %v8091 = vsel %vm7676, %v8089, %v8090
    %v8092 = vsel %vm701, %v6513, %v8086
    %v8093 = vsel %vm7693, %v8087, %v8088
    %v8094 = vsel %vm7695, %v8092, %v8093
    %v8095 = vrot.slane %v8094, 1
    %v8096 = vperm.slane %v8091, 0
    %v8097 = vperm.slane %v8091, 1
    %v8098 = vperm.slane %v8091, 2
    %v8099 = vperm.slane %v8091, 3
    %v8100 = vperm.slane %v8095, 0
    %v8101 = vperm.slane %v8095, 1
    %v8102 = vperm.slane %v8095, 2
    %v8103 = vperm.slane %v8095, 3
    %v8104 = vrot.slane %v8097, 4
    %v8105 = vrot.slane %v8099, 4
    %v8106 = vrot.slane %v8101, 4
    %v8107 = vrot.slane %v8103, 4
    %v8108 = vsel %vm6765, %v8096, %v8104
    %v8109 = vsel %vm6765, %v8098, %v8105
    %v8110 = vsel %vm6765, %v8100, %v8106
    %v8111 = vsel %vm6765, %v8102, %v8107
    %v8116 = vmul.f32 %v7956, %v8108
    %v8117 = vmul.f32 %v7971, %v8109
    %v8118 = vmul.f32 %v7986, %v8110
    %v8119 = vmul.f32 %v8001, %v8111
    %v8120 = vmul.f32 %v7880, %v8002
    %v8121 = vmul.f32 %v7895, %v8003
    %v8122 = vmul.f32 %v7910, %v8004
    %v8123 = vmul.f32 %v7925, %v8005
    %v8124 = vadd.f32 %v8116, %v8120
    %v8125 = vadd.f32 %v8117, %v8121
    %v8126 = vadd.f32 %v8118, %v8122
    %v8127 = vadd.f32 %v8119, %v8123
    %v8128 = vtanh.pop %v8124
    %v8129 = vtanh.pop %v8125
    %v8130 = vtanh.pop %v8126
    %v8131 = vtanh.pop %v8127
    %v8132 = vmul.f32 %v8036, %v8128
    %v8133 = vmul.f32 %v8051, %v8129
    %v8134 = vmul.f32 %v8066, %v8130
    %v8135 = vmul.f32 %v8081, %v8131
    %v8136 = vld [vmem:[#allocation11] sm:$0xf]
    %v8138 = vperm.slane %v8136, 0
    %v8139 = vperm.slane %v8136, 1
    %v8140 = vperm.slane %v8136, 2
    %v8141 = vperm.slane %v8136, 3
    %v8142 = vrot.slane %v8139, 4
    %v8143 = vrot.slane %v8141, 4
    %v8144 = vsel %vm6765, %v8138, %v8142
    %v8145 = vsel %vm6765, %v8140, %v8143
    %v8148 = vmul.f32 %v8132, %v8144
    %v8149 = vmul.f32 %v8133, %v8145
    %v8150 = vmul.f32 %v8134, %v8144
    %v8151 = vmul.f32 %v8135, %v8145
    %8156 = vst [vmem:[#allocation1] ss:$2 sm:$0xff] %v8148
    %s8157 = scalar_lea.vmem [#allocation1], 16
    %8158 = vst [vmem:[%s8157] ss:$2 sm:$0xff] %v8149
    %v8159 = vld.sshfl [vmem:[#allocation1] sm:$0xff pattern:$0x75316420]
    %v8160 = vld.sshfl [vmem:[#allocation1 + $0x8] sm:$0xff pattern:$0x75316420]
    %v8161 = vld.sshfl [vmem:[#allocation1 + $0x10] sm:$0xff pattern:$0x75316420]
    %v8162 = vld.sshfl [vmem:[#allocation1 + $0x18] sm:$0xff pattern:$0x75316420]
    %s8163 = scalar_lea.vmem [#allocation1], 32
    %8164 = vst [vmem:[%s8163] ss:$2 sm:$0xff] %v8150
    %s8165 = scalar_lea.vmem [#allocation1], 48
    %8166 = vst [vmem:[%s8165] ss:$2 sm:$0xff] %v8151
    %v8167 = vld.sshfl [vmem:[#allocation1 + $0x20] sm:$0xff pattern:$0x75316420]
    %v8168 = vld.sshfl [vmem:[#allocation1 + $0x28] sm:$0xff pattern:$0x75316420]
    %v8169 = vld.sshfl [vmem:[#allocation1 + $0x30] sm:$0xff pattern:$0x75316420]
    %v8170 = vld.sshfl [vmem:[#allocation1 + $0x38] sm:$0xff pattern:$0x75316420]
    %v8179 = vsel %vm6765, %v8159, 0.0
    %v8180 = vsel %vm6765, %v8160, 0.0
    %v8181 = vadd.f32 %v8179, %v8180
    %v8182 = vsel %vm6765, %v8161, 0.0
    %v8183 = vadd.f32 %v8181, %v8182
    %v8184 = vsel %vm6765, %v8162, 0.0
    %v8185 = vadd.f32 %v8183, %v8184
    %8186 = vadd.xlane.f32.xlu0 %v8185
    %v8187 = vpop.xlane.xlu0 %8186
    %v8188 = vsel %vm6765, %v8167, 0.0
    %v8189 = vsel %vm6765, %v8168, 0.0
    %v8190 = vadd.f32 %v8188, %v8189
    %v8191 = vsel %vm6765, %v8169, 0.0
    %v8192 = vadd.f32 %v8190, %v8191
    %v8193 = vsel %vm6765, %v8170, 0.0
    %v8194 = vadd.f32 %v8192, %v8193
    %8195 = vadd.xlane.f32.xlu0 %v8194
    %v8196 = vpop.xlane.xlu0 %8195
    %v8197 = vld [vmem:[#allocation2] sm:$0x1]
    %v8199 = vperm.slane %v8197, 0
    %8200 = vset.pattern.permute.xlu0 0
    %8201 = vperm.xlu0 %8200, %v8199
    %v8202 = vpop.permute.xlu0 %8201
    %v8204 = vadd.f32 %v8187, %v8202
    %v8205 = vadd.f32 %v8196, %v8202
    %v8208 = vlaneseq
    %v8209 = vand.u32 %v8208, 127
    %v8210 = vperm.slane %v8204, %v8209
    %v8211 = vperm.slane %v8205, %v8209
    %v8212 = vsel %vm701, %v8211, %v8210
    %vm8214 = vcmask 25600
    %8215 = vst.msk [vmem:[#allocation12] sm:$0x3] %vm8214, %v8212
    // Predicated region
    $region50: #{tpu_custom_call.1} parent=1 // pred_check
      _
    $region51: #{tpu_custom_call.1} parent=1 // pred_check_branch
      %8217 = sbr.rel (0) target = $region53
    $region52: #{tpu_custom_call.1} parent=1 // pred_region
      %8219 = vsyncadd [#allocation5], 0
      %s8221 = sshll.u32 [#allocation12], 4
      %s8222 = int_to_ptr.vmem [resolvable:$true] %s8221
      %s8223 = sshll.u32 %s7, 4
      %s8224 = int_to_ptr.hbm [resolvable:$true] %s8223
      %8226 = dma.vmem_to_hbm [thread:$0]  %s8222, 32, %s8224, [#allocation5]
    $region53: #{tpu_custom_call.1} parent=1 // pred_fallthru
      _
    // Predicated region
    $region54: #{tpu_custom_call.1} parent=1 // pred_check
      _
    $region55: #{tpu_custom_call.1} parent=1 // pred_check_branch
      %8228 = sbr.rel (0) target = $region57
    $region56: #{tpu_custom_call.1} parent=1 // pred_region
      %8230 = dma.done [#allocation5], 32
    $region57: #{tpu_custom_call.1} parent=1 // pred_fallthru
      _
    %8231 = vsyncpa [#allocation4], 1
    %8232 = vsyncpa [#allocation7], 1
    %8233 = vsyncpa [#allocation10], 1
    %8234 = vsyncpa [#allocation5], 1

</llo_original>
